<compile_context>
chip_gen: v7x
topology: tpu7x:2x2x1
jax: 0.10.0
libtpu: 0.0.40
codegen_flags: <defaults>
</compile_context>

<pallas_src>
import functools
import math

import jax
import jax.numpy as jnp
from jax.experimental import pallas as pl
from jax.experimental.pallas import tpu as pltpu

_MAX_TILE = 512              # row tile cap (review: 256-1024; 512 fits VMEM on all gens)
_VMEM_LIMIT_BYTES = 32 * 1024 * 1024   # raise v5e's 16 MiB default; safe on v7x (64 MiB)
_NORM_EPS = 1e-8             # gvp _norm_no_nan eps
_LN_EPS = 1e-5               # torch.nn.LayerNorm default eps


# ----------------------------------------------------------------------------
# In-kernel building blocks (operate on loaded values, compose inside kernels)
# ----------------------------------------------------------------------------
def _ln_compute(s, v0, v1, v2, gamma, beta):
    """GVPLayerNorm: torch LayerNorm over scalar channels; vectors divided by
    sqrt(mean_channels(||v||^2))."""
    mu = jnp.mean(s, axis=-1, keepdims=True)
    var = jnp.mean((s - mu) ** 2, axis=-1, keepdims=True)
    s_out = (s - mu) * jax.lax.rsqrt(var + _LN_EPS) * gamma + beta
    vn2 = jnp.maximum(v0 * v0 + v1 * v1 + v2 * v2, _NORM_EPS)   # per-channel ||v||^2
    inv = jax.lax.rsqrt(jnp.mean(vn2, axis=-1, keepdims=True))
    return s_out, v0 * inv, v1 * inv, v2 * inv


def _gvp_compute(s, v0, v1, v2, wh, ws_s, ws_v, bs, wv, wsv, bsv, use_silu):
    """One Geometric Vector Perceptron (vector_gate=True, vector_act=None).

    s: (T, si); v0/v1/v2: (T, vi) xyz components.  The xyz components are
    stacked along the sublane (row) axis so each weight matrix is used in
    exactly one MXU matmul.
    """
    t = s.shape[0]
    v_all = jnp.concatenate([v0, v1, v2], axis=0)                       # (3T, vi)
    vh = jnp.dot(v_all, wh, preferred_element_type=jnp.float32)         # (3T, h)
    vh0, vh1, vh2 = vh[:t], vh[t:2 * t], vh[2 * t:]
    # _norm_no_nan over the xyz axis
    vn = jnp.sqrt(jnp.maximum(vh0 * vh0 + vh1 * vh1 + vh2 * vh2, _NORM_EPS))
    # ws(concat([s, vn], -1)) split into two matmuls (same math)
    s_mid = (jnp.dot(s, ws_s, preferred_element_type=jnp.float32)
             + jnp.dot(vn, ws_v, preferred_element_type=jnp.float32) + bs)
    if use_silu:
        s_out = s_mid * jax.nn.sigmoid(s_mid)   # F.silu
        gate_in = s_out   # review fix: gate uses activated scalars when scalar_act given
    else:
        s_out = s_mid
        gate_in = s_mid
    gate = jax.nn.sigmoid(
        jnp.dot(gate_in, wsv, preferred_element_type=jnp.float32) + bsv)   # (T, vo)
    v_out = jnp.dot(vh, wv, preferred_element_type=jnp.float32)            # (3T, vo)
    return s_out, v_out[:t] * gate, v_out[t:2 * t] * gate, v_out[2 * t:] * gate


# ----------------------------------------------------------------------------
# Fused Pallas kernels (row-tiled; one grid axis over nodes or edges)
# ----------------------------------------------------------------------------
def _embed_kernel(s_ref, v_ref,
                  gamma_ref, beta_ref,
                  wh_ref, ws_s_ref, ws_v_ref, bs_ref, wv_ref, wsv_ref, bsv_ref,
                  s_out_ref, v_out_ref, *, use_silu):
    """GVPLayerNorm -> GVP (embedding_in / embedding_out)."""
    s, v0, v1, v2 = _ln_compute(s_ref[...], v_ref[0], v_ref[1], v_ref[2],
                                gamma_ref[...], beta_ref[...])
    s, v0, v1, v2 = _gvp_compute(
        s, v0, v1, v2,
        wh_ref[...], ws_s_ref[...], ws_v_ref[...], bs_ref[...],
        wv_ref[...], wsv_ref[...], bsv_ref[...], use_silu)
    s_out_ref[...] = s
    v_out_ref[0] = v0
    v_out_ref[1] = v1
    v_out_ref[2] = v2


def _message_kernel(s_ref, v_ref, *refs):
    """GVPConv message function: GVP(act) -> GVP(act) -> GVP(no act), per edge."""
    w = [r[...] for r in refs[:21]]
    s_out_ref, v_out_ref = refs[21], refs[22]
    s, v0, v1, v2 = s_ref[...], v_ref[0], v_ref[1], v_ref[2]
    s, v0, v1, v2 = _gvp_compute(s, v0, v1, v2, *w[0:7], True)
    s, v0, v1, v2 = _gvp_compute(s, v0, v1, v2, *w[7:14], True)
    s, v0, v1, v2 = _gvp_compute(s, v0, v1, v2, *w[14:21], False)
    s_out_ref[...] = s
    v_out_ref[0] = v0
    v_out_ref[1] = v1
    v_out_ref[2] = v2


def _node_update_kernel(s_ref, as_ref, v_ref, av_ref, *refs):
    """Residual + LN0 -> feed-forward GVP(act) -> GVP(no act) -> residual + LN1."""
    w = [r[...] for r in refs[:18]]
    s_out_ref, v_out_ref = refs[18], refs[19]
    s = s_ref[...] + as_ref[...]
    v0 = v_ref[0] + av_ref[0]
    v1 = v_ref[1] + av_ref[1]
    v2 = v_ref[2] + av_ref[2]
    x_s, x_v0, x_v1, x_v2 = _ln_compute(s, v0, v1, v2, w[0], w[1])
    f_s, f_v0, f_v1, f_v2 = _gvp_compute(x_s, x_v0, x_v1, x_v2, *w[2:9], True)
    f_s, f_v0, f_v1, f_v2 = _gvp_compute(f_s, f_v0, f_v1, f_v2, *w[9:16], False)
    s, v0, v1, v2 = _ln_compute(x_s + f_s, x_v0 + f_v0, x_v1 + f_v1, x_v2 + f_v2,
                                w[16], w[17])
    s_out_ref[...] = s
    v_out_ref[0] = v0
    v_out_ref[1] = v1
    v_out_ref[2] = v2


# ----------------------------------------------------------------------------
# pallas_call plumbing
# ----------------------------------------------------------------------------
def _row_tiling(n):
    """Pick a row tile (multiple of 8, <= _MAX_TILE) and the padded row count."""
    if n >= _MAX_TILE:
        tile = _MAX_TILE
    else:
        tile = max(8, ((n + 7) // 8) * 8)
    n_pad = ((n + tile - 1) // tile) * tile
    return tile, n_pad


def _pad_rows_to(a, axis, target):
    pad = target - a.shape[axis]
    if pad == 0:
        return a
    widths = [(0, 0)] * a.ndim
    widths[axis] = (0, pad)
    return jnp.pad(a, widths)


def _gvp_weights(p):
    return (p["wh"], p["ws_s"], p["ws_v"], p["bs"], p["wv"], p["wsv"], p["bsv"])


def _ln_weights(p):
    return (p["gamma"], p["beta"])


def _rowwise_call(kernel, *, tile, scalars, vectors, weights, out_s, out_v):
    """Run a fused row-tiled kernel.

    scalars: list of (R, C) f32 arrays; vectors: list of (3, R, C) f32 arrays
    (R divisible by `tile`); weights: flat tuple of small 2-D arrays broadcast
    to every tile.  Returns ((R, out_s), (3, R, out_v))."""
    rows = scalars[0].shape[0]
    assert rows % tile == 0
    grid = (rows // tile,)
    in_specs = ([pl.BlockSpec((tile, a.shape[-1]), lambda i: (i, 0)) for a in scalars]
                + [pl.BlockSpec((3, tile, a.shape[-1]), lambda i: (0, i, 0))
                   for a in vectors]
                + [pl.BlockSpec(w.shape, lambda i: (0, 0)) for w in weights])
    out_shape = (jax.ShapeDtypeStruct((rows, out_s), jnp.float32),
                 jax.ShapeDtypeStruct((3, rows, out_v), jnp.float32))
    out_specs = (pl.BlockSpec((tile, out_s), lambda i: (i, 0)),
                 pl.BlockSpec((3, tile, out_v), lambda i: (0, i, 0)))
    return pl.pallas_call(
        kernel,
        out_shape=out_shape,
        grid=grid,
        in_specs=in_specs,
        out_specs=out_specs,
        compiler_params=pltpu.CompilerParams(
            dimension_semantics=("parallel",),        # rows independent; v7x 2 TCs
            vmem_limit_bytes=_VMEM_LIMIT_BYTES),
    )(*scalars, *vectors, *weights)


def apply_embed(ln_p, gvp_p, s, v, use_silu, tile):
    so = gvp_p["ws_s"].shape[1]
    vo = gvp_p["wv"].shape[1]
    return _rowwise_call(
        functools.partial(_embed_kernel, use_silu=use_silu),
        tile=tile, scalars=[s], vectors=[v],
        weights=_ln_weights(ln_p) + _gvp_weights(gvp_p),
        out_s=so, out_v=vo)


def apply_message(lp, m_s, m_v, tile):
    so = lp["msg2"]["ws_s"].shape[1]
    vo = lp["msg2"]["wv"].shape[1]
    return _rowwise_call(
        _message_kernel, tile=tile, scalars=[m_s], vectors=[m_v],
        weights=(_gvp_weights(lp["msg0"]) + _gvp_weights(lp["msg1"])
                 + _gvp_weights(lp["msg2"])),
        out_s=so, out_v=vo)


def apply_node_update(lp, s, v, agg_s, agg_v, tile):
    so = lp["ff1"]["ws_s"].shape[1]
    vo = lp["ff1"]["wv"].shape[1]
    return _rowwise_call(
        _node_update_kernel, tile=tile, scalars=[s, agg_s], vectors=[v, agg_v],
        weights=(_ln_weights(lp["ln0"]) + _gvp_weights(lp["ff0"])
                 + _gvp_weights(lp["ff1"]) + _ln_weights(lp["ln1"])),
        out_s=so, out_v=vo)


# ----------------------------------------------------------------------------
# Degenerate edge embedding ((1,1) -> (hs,1)) in plain JAX (per perf review:
# K=1 matmuls are a pure-overhead MXU case).
# ----------------------------------------------------------------------------
def _edge_embedding_jax(ln_p, gvp_p, e_s, e_v):
    # GVPLayerNorm over (1, 1) dims
    mu = jnp.mean(e_s, axis=-1, keepdims=True)
    var = jnp.mean((e_s - mu) ** 2, axis=-1, keepdims=True)
    s = (e_s - mu) * jax.lax.rsqrt(var + _LN_EPS) * ln_p["gamma"] + ln_p["beta"]
    vn2 = jnp.maximum(jnp.sum(e_v * e_v, axis=0), _NORM_EPS)          # (E, 1)
    inv = jax.lax.rsqrt(jnp.mean(vn2, axis=-1, keepdims=True))        # (E, 1)
    v = e_v * inv[None]
    # GVP (1,1)->(hs,1), activations=(None,None), vector_gate=True
    wh, ws_s, ws_v, bs, wv, wsv, bsv = _gvp_weights(gvp_p)
    vh = jnp.einsum("xec,ch->xeh", v, wh)                             # (3, E, 1)
    vn = jnp.sqrt(jnp.maximum(jnp.sum(vh * vh, axis=0), _NORM_EPS))   # (E, 1)
    s_mid = s @ ws_s + vn @ ws_v + bs                                 # (E, hs)
    gate = jax.nn.sigmoid(s_mid @ wsv + bsv)                          # (E, 1)
    v_out = jnp.einsum("xeh,hv->xev", vh, wv) * gate[None]            # (3, E, 1)
    return s_mid, v_out


# ----------------------------------------------------------------------------
# Parameter init (deterministic, PyTorch nn.Linear-style uniform)
# ----------------------------------------------------------------------------
def _init_linear(key, fan_in, fan_out, bias=True):
    k1, k2 = jax.random.split(key)
    bound = 1.0 / math.sqrt(fan_in)
    w = jax.random.uniform(k1, (fan_in, fan_out), jnp.float32, -bound, bound)
    b = (jax.random.uniform(k2, (1, fan_out), jnp.float32, -bound, bound)
         if bias else None)
    return w, b


def init_gvp(key, in_dims, out_dims):
    si, vi = in_dims
    so, vo = out_dims
    h = max(vi, vo)
    ks = jax.random.split(key, 4)
    wh, _ = _init_linear(ks[0], vi, h, bias=False)
    ws, bs = _init_linear(ks[1], si + h, so)        # ws acts on cat([s, vn])
    wv, _ = _init_linear(ks[2], h, vo, bias=False)
    wsv, bsv = _init_linear(ks[3], so, vo)
    return dict(wh=wh, ws_s=ws[:si], ws_v=ws[si:], bs=bs, wv=wv, wsv=wsv, bsv=bsv)


def init_ln(ds):
    return dict(gamma=jnp.ones((1, ds), jnp.float32),
                beta=jnp.zeros((1, ds), jnp.float32))


def init_gvp_network(key, in_dims, out_dims, hidden_dims, num_layers):
    hs, hv = hidden_dims
    keys = iter(jax.random.split(key, 8 + 8 * num_layers))
    params = {
        "emb_in_ln": init_ln(in_dims[0]),
        "emb_in_gvp": init_gvp(next(keys), in_dims, hidden_dims),
        "emb_out_ln": init_ln(hs),
        "emb_out_gvp": init_gvp(next(keys), hidden_dims, out_dims),
        "edge_ln": init_ln(1),
        "edge_gvp": init_gvp(next(keys), (1, 1), (hs, 1)),
    }
    edge_dims = (hs, 1)
    msg_in = (2 * hs + edge_dims[0], 2 * hv + edge_dims[1])
    ff_hid = (4 * hs, 2 * hv)
    layers = []
    for _ in range(num_layers):
        layers.append(dict(
            msg0=init_gvp(next(keys), msg_in, hidden_dims),
            msg1=init_gvp(next(keys), hidden_dims, hidden_dims),
            msg2=init_gvp(next(keys), hidden_dims, hidden_dims),
            ln0=init_ln(hs),
            ff0=init_gvp(next(keys), hidden_dims, ff_hid),
            ff1=init_gvp(next(keys), ff_hid, hidden_dims),
            ln1=init_ln(hs),
        ))
    params["layers"] = layers
    return params


# ----------------------------------------------------------------------------
# GVPNetwork forward
# ----------------------------------------------------------------------------
def gvp_conv_layer(lp, s, v, src, dst, es, ev, edge_mask, n_pad, tile_n, tile_e,
                   normalization_factor, aggr):
    # message inputs: tuple_cat((s_j, v_j), edge_attr, (s_i, v_i))  -- JAX gather glue
    s_j, s_i = s[src], s[dst]
    v_j, v_i = v[:, src, :], v[:, dst, :]
    m_s = jnp.concatenate([s_j, es, s_i], axis=-1)
    m_v = jnp.concatenate([v_j, ev, v_i], axis=-1)

    # fused 3-GVP message kernel over edge tiles
    m_s, m_v = apply_message(lp, m_s, m_v, tile_e)

    # mask padded edges, then scatter-add at target nodes.
    # TODO(synk): scatter-add stays in jnp (.at[].add); no clean Pallas equivalent
    #             without first sorting/bucketing edges by destination.
    m_s = m_s * edge_mask
    m_v = m_v * edge_mask[None]
    agg_s = jnp.zeros((n_pad, m_s.shape[-1]), m_s.dtype).at[dst].add(m_s)
    agg_v = jnp.zeros((3, n_pad, m_v.shape[-1]), m_v.dtype).at[:, dst, :].add(m_v)
    if aggr == "add":
        agg_s = agg_s / normalization_factor
        agg_v = agg_v / normalization_factor
    else:  # 'mean'
        cnt = jnp.maximum(
            jnp.zeros((n_pad,), m_s.dtype).at[dst].add(edge_mask[:, 0]), 1.0)
        agg_s = agg_s / cnt[:, None]
        agg_v = agg_v / cnt[None, :, None]

    # residual + LN0 -> feed-forward GVPs -> residual + LN1 (one fused kernel)
    return apply_node_update(lp, s, v, agg_s, agg_v, tile_n)


def gvp_network_forward(params, x_s, x_v, pos, edge_index, *,
                        normalization_factor=100.0, aggr="add", eps=1e-4):
    src, dst = edge_index[0], edge_index[1]
    n = x_s.shape[0]
    e = src.shape[0]
    tile_n, n_pad = _row_tiling(n)
    tile_e, e_pad = _row_tiling(e)

    # --- get_edge_attr (JAX glue) ---
    rel = pos[src] - pos[dst]                                    # (E, 3)
    d = jnp.linalg.norm(rel, axis=-1, keepdims=True)             # (E, 1)
    e_dir = rel / jnp.maximum(d, eps)                            # (E, 3)

    # pad edge data / indices ONCE (review: no per-call padding)
    e_s = _pad_rows_to(d, 0, e_pad)                              # (E_pad, 1)
    e_v = _pad_rows_to(jnp.transpose(e_dir)[:, :, None], 1, e_pad)   # (3, E_pad, 1)
    src_p = _pad_rows_to(src, 0, e_pad)
    dst_p = _pad_rows_to(dst, 0, e_pad)
    edge_mask = (jnp.arange(e_pad) < e).astype(jnp.float32)[:, None]

    # edge_embedding = LN((1,1)) -> GVP((1,1)->(hs,1), no acts)  [plain JAX]
    es, ev = _edge_embedding_jax(params["edge_ln"], params["edge_gvp"], e_s, e_v)

    # pad node features ONCE; keep padded through all layers
    h_s = _pad_rows_to(x_s, 0, n_pad)
    h_v = _pad_rows_to(x_v, 1, n_pad)

    # embedding_in = LN(in_dims) -> GVP(in->hidden, no acts)   [fused kernel]
    h_s, h_v = apply_embed(params["emb_in_ln"], params["emb_in_gvp"],
                           h_s, h_v, use_silu=False, tile=tile_n)

    for lp in params["layers"]:
        h_s, h_v = gvp_conv_layer(lp, h_s, h_v, src_p, dst_p, es, ev, edge_mask,
                                  n_pad, tile_n, tile_e,
                                  normalization_factor, aggr)

    # embedding_out = LN(hidden) -> GVP(hidden->out, (silu, None))   [fused kernel]
    o_s, o_v = apply_embed(params["emb_out_ln"], params["emb_out_gvp"],
                           h_s, h_v, use_silu=True, tile=tile_n)
    return o_s[:n], o_v[:, :n, :]


# ----------------------------------------------------------------------------
if __name__ == "__main__":
    key = jax.random.PRNGKey(0)
    k_param, k_s, k_v, k_pos, k_e = jax.random.split(key, 5)

    # small config
    in_dims = (16, 4)      # (scalar channels, vector channels)
    hidden_dims = (32, 16)
    out_dims = (8, 2)
    num_layers = 2
    n_nodes, n_edges = 24, 48

    params = init_gvp_network(k_param, in_dims, out_dims, hidden_dims, num_layers)

    x_s = jax.random.normal(k_s, (n_nodes, in_dims[0]), jnp.float32)
    x_v = jax.random.normal(k_v, (3, n_nodes, in_dims[1]), jnp.float32)
    pos = jax.random.normal(k_pos, (n_nodes, 3), jnp.float32)
    edge_index = jax.random.randint(k_e, (2, n_edges), 0, n_nodes, jnp.int32)

    forward = jax.jit(functools.partial(gvp_network_forward,
                                        normalization_factor=100.0,
                                        aggr="add", eps=1e-4))
    out_s, out_v = forward(params, x_s, x_v, pos, edge_index)
    jax.block_until_ready(out_s)
    jax.block_until_ready(out_v)
    assert out_s.shape == (n_nodes, out_dims[0])
    assert out_v.shape == (3, n_nodes, out_dims[1])
    assert bool(jnp.all(jnp.isfinite(out_s))) and bool(jnp.all(jnp.isfinite(out_v)))
    print("KERNEL_OK")
</pallas_src>

<mosaic_0001>
module attributes {stable_mosaic.version = 11 : i64} {
  func.func @_embed_kernel(%arg0: i32, %arg1: memref<24x16xf32, #tpu.memory_space<vmem>>, %arg2: memref<3x24x4xf32, #tpu.memory_space<vmem>>, %arg3: memref<1x16xf32, #tpu.memory_space<vmem>>, %arg4: memref<1x16xf32, #tpu.memory_space<vmem>>, %arg5: memref<4x16xf32, #tpu.memory_space<vmem>>, %arg6: memref<16x32xf32, #tpu.memory_space<vmem>>, %arg7: memref<16x32xf32, #tpu.memory_space<vmem>>, %arg8: memref<1x32xf32, #tpu.memory_space<vmem>>, %arg9: memref<16x16xf32, #tpu.memory_space<vmem>>, %arg10: memref<32x16xf32, #tpu.memory_space<vmem>>, %arg11: memref<1x16xf32, #tpu.memory_space<vmem>>, %arg12: memref<24x32xf32, #tpu.memory_space<vmem>>, %arg13: memref<3x24x16xf32, #tpu.memory_space<vmem>>) attributes {dimension_semantics = [#tpu.dimension_semantics<parallel>], iteration_bounds = array<i64: 1>, scalar_prefetch = 0 : i64, scratch_operands = 0 : i64, tpu.core_type = #tpu.core_type<tc>, window_params = [{transform_indices = @transform_0, window_bounds = array<i64: 24, 16>}, {transform_indices = @transform_1, window_bounds = array<i64: 3, 24, 4>}, {pipeline_mode = #tpu.pipeline_mode<synchronous>, transform_indices = @transform_2, window_bounds = array<i64: 1, 16>}, {pipeline_mode = #tpu.pipeline_mode<synchronous>, transform_indices = @transform_3, window_bounds = array<i64: 1, 16>}, {pipeline_mode = #tpu.pipeline_mode<synchronous>, transform_indices = @transform_4, window_bounds = array<i64: 4, 16>}, {pipeline_mode = #tpu.pipeline_mode<synchronous>, transform_indices = @transform_5, window_bounds = array<i64: 16, 32>}, {pipeline_mode = #tpu.pipeline_mode<synchronous>, transform_indices = @transform_6, window_bounds = array<i64: 16, 32>}, {pipeline_mode = #tpu.pipeline_mode<synchronous>, transform_indices = @transform_7, window_bounds = array<i64: 1, 32>}, {pipeline_mode = #tpu.pipeline_mode<synchronous>, transform_indices = @transform_8, window_bounds = array<i64: 16, 16>}, {pipeline_mode = #tpu.pipeline_mode<synchronous>, transform_indices = @transform_9, window_bounds = array<i64: 32, 16>}, {pipeline_mode = #tpu.pipeline_mode<synchronous>, transform_indices = @transform_10, window_bounds = array<i64: 1, 16>}, {transform_indices = @transform_11, window_bounds = array<i64: 24, 32>}, {transform_indices = @transform_12, window_bounds = array<i64: 3, 24, 16>}]} {
    %c0 = arith.constant 0 : index
    %c0_0 = arith.constant 0 : index
    %0 = vector.load %arg1[%c0, %c0_0] : memref<24x16xf32, #tpu.memory_space<vmem>>, vector<24x16xf32>
    %c0_1 = arith.constant 0 : index
    %c0_2 = arith.constant 0 : index
    %c0_3 = arith.constant 0 : index
    %1 = vector.load %arg2[%c0_1, %c0_2, %c0_3] : memref<3x24x4xf32, #tpu.memory_space<vmem>>, vector<1x24x4xf32>
    %2 = vector.shape_cast %1 : vector<1x24x4xf32> to vector<24x4xf32>
    %c1 = arith.constant 1 : index
    %c0_4 = arith.constant 0 : index
    %c0_5 = arith.constant 0 : index
    %3 = vector.load %arg2[%c1, %c0_4, %c0_5] : memref<3x24x4xf32, #tpu.memory_space<vmem>>, vector<1x24x4xf32>
    %4 = vector.shape_cast %3 : vector<1x24x4xf32> to vector<24x4xf32>
    %c2 = arith.constant 2 : index
    %c0_6 = arith.constant 0 : index
    %c0_7 = arith.constant 0 : index
    %5 = vector.load %arg2[%c2, %c0_6, %c0_7] : memref<3x24x4xf32, #tpu.memory_space<vmem>>, vector<1x24x4xf32>
    %6 = vector.shape_cast %5 : vector<1x24x4xf32> to vector<24x4xf32>
    %c0_8 = arith.constant 0 : index
    %c0_9 = arith.constant 0 : index
    %7 = vector.load %arg3[%c0_8, %c0_9] : memref<1x16xf32, #tpu.memory_space<vmem>>, vector<1x16xf32>
    %c0_10 = arith.constant 0 : index
    %c0_11 = arith.constant 0 : index
    %8 = vector.load %arg4[%c0_10, %c0_11] : memref<1x16xf32, #tpu.memory_space<vmem>>, vector<1x16xf32>
    %cst = arith.constant dense<0.000000e+00> : vector<24xf32>
    %9 = vector.multi_reduction <add>, %0, %cst [1] : vector<24x16xf32> to vector<24xf32>
    %10 = vector.shape_cast %9 : vector<24xf32> to vector<24x1xf32>
    %cst_12 = arith.constant 1.600000e+01 : f32
    %11 = vector.broadcast %cst_12 : f32 to vector<24x1xf32>
    %12 = arith.divf %10, %11 : vector<24x1xf32>
    %13 = vector.broadcast %12 : vector<24x1xf32> to vector<24x16xf32>
    %14 = arith.subf %0, %13 : vector<24x16xf32>
    %15 = arith.mulf %14, %14 : vector<24x16xf32>
    %cst_13 = arith.constant dense<0.000000e+00> : vector<24xf32>
    %16 = vector.multi_reduction <add>, %15, %cst_13 [1] : vector<24x16xf32> to vector<24xf32>
    %17 = vector.shape_cast %16 : vector<24xf32> to vector<24x1xf32>
    %cst_14 = arith.constant 1.600000e+01 : f32
    %18 = vector.broadcast %cst_14 : f32 to vector<24x1xf32>
    %19 = arith.divf %17, %18 : vector<24x1xf32>
    %20 = vector.broadcast %12 : vector<24x1xf32> to vector<24x16xf32>
    %21 = arith.subf %0, %20 : vector<24x16xf32>
    %cst_15 = arith.constant 9.99999974E-6 : f32
    %22 = vector.broadcast %cst_15 : f32 to vector<24x1xf32>
    %23 = arith.addf %19, %22 : vector<24x1xf32>
    %24 = math.rsqrt %23 : vector<24x1xf32>
    %25 = vector.broadcast %24 : vector<24x1xf32> to vector<24x16xf32>
    %26 = arith.mulf %21, %25 : vector<24x16xf32>
    %27 = vector.broadcast %7 : vector<1x16xf32> to vector<24x16xf32>
    %28 = arith.mulf %26, %27 : vector<24x16xf32>
    %29 = vector.broadcast %8 : vector<1x16xf32> to vector<24x16xf32>
    %30 = arith.addf %28, %29 : vector<24x16xf32>
    %31 = arith.mulf %2, %2 : vector<24x4xf32>
    %32 = arith.mulf %4, %4 : vector<24x4xf32>
    %33 = arith.addf %31, %32 : vector<24x4xf32>
    %34 = arith.mulf %6, %6 : vector<24x4xf32>
    %35 = arith.addf %33, %34 : vector<24x4xf32>
    %cst_16 = arith.constant 9.99999993E-9 : f32
    %36 = vector.broadcast %cst_16 : f32 to vector<24x4xf32>
    %37 = arith.maximumf %35, %36 : vector<24x4xf32>
    %cst_17 = arith.constant dense<0.000000e+00> : vector<24xf32>
    %38 = vector.multi_reduction <add>, %37, %cst_17 [1] : vector<24x4xf32> to vector<24xf32>
    %39 = vector.shape_cast %38 : vector<24xf32> to vector<24x1xf32>
    %cst_18 = arith.constant 4.000000e+00 : f32
    %40 = vector.broadcast %cst_18 : f32 to vector<24x1xf32>
    %41 = arith.divf %39, %40 : vector<24x1xf32>
    %42 = math.rsqrt %41 : vector<24x1xf32>
    %43 = vector.broadcast %42 : vector<24x1xf32> to vector<24x4xf32>
    %44 = arith.mulf %2, %43 : vector<24x4xf32>
    %45 = vector.broadcast %42 : vector<24x1xf32> to vector<24x4xf32>
    %46 = arith.mulf %4, %45 : vector<24x4xf32>
    %47 = vector.broadcast %42 : vector<24x1xf32> to vector<24x4xf32>
    %48 = arith.mulf %6, %47 : vector<24x4xf32>
    %c0_19 = arith.constant 0 : index
    %c0_20 = arith.constant 0 : index
    %49 = vector.load %arg5[%c0_19, %c0_20] : memref<4x16xf32, #tpu.memory_space<vmem>>, vector<4x16xf32>
    %c0_21 = arith.constant 0 : index
    %c0_22 = arith.constant 0 : index
    %50 = vector.load %arg6[%c0_21, %c0_22] : memref<16x32xf32, #tpu.memory_space<vmem>>, vector<16x32xf32>
    %c0_23 = arith.constant 0 : index
    %c0_24 = arith.constant 0 : index
    %51 = vector.load %arg7[%c0_23, %c0_24] : memref<16x32xf32, #tpu.memory_space<vmem>>, vector<16x32xf32>
    %c0_25 = arith.constant 0 : index
    %c0_26 = arith.constant 0 : index
    %52 = vector.load %arg8[%c0_25, %c0_26] : memref<1x32xf32, #tpu.memory_space<vmem>>, vector<1x32xf32>
    %c0_27 = arith.constant 0 : index
    %c0_28 = arith.constant 0 : index
    %53 = vector.load %arg9[%c0_27, %c0_28] : memref<16x16xf32, #tpu.memory_space<vmem>>, vector<16x16xf32>
    %c0_29 = arith.constant 0 : index
    %c0_30 = arith.constant 0 : index
    %54 = vector.load %arg10[%c0_29, %c0_30] : memref<32x16xf32, #tpu.memory_space<vmem>>, vector<32x16xf32>
    %c0_31 = arith.constant 0 : index
    %c0_32 = arith.constant 0 : index
    %55 = vector.load %arg11[%c0_31, %c0_32] : memref<1x16xf32, #tpu.memory_space<vmem>>, vector<1x16xf32>
    %56 = tpu.concatenate %44, %46, %48 in 0 : vector<24x4xf32>, vector<24x4xf32>, vector<24x4xf32> -> vector<72x4xf32>
    %cst_33 = arith.constant dense<0.000000e+00> : vector<72x16xf32>
    %57 = tpu.matmul %56, %49, %cst_33 {dimension_numbers = #tpu.dot_dimension_numbers<[1], [0], [0], [1], [0, 0, 1, 1], [], []>} : vector<72x4xf32>, vector<4x16xf32>, vector<72x16xf32> -> vector<72x16xf32>
    %58 = vector.extract_strided_slice %57 {offsets = [0, 0], sizes = [24, 16], strides = [1, 1]} : vector<72x16xf32> to vector<24x16xf32>
    %59 = vector.extract_strided_slice %57 {offsets = [24, 0], sizes = [24, 16], strides = [1, 1]} : vector<72x16xf32> to vector<24x16xf32>
    %60 = vector.extract_strided_slice %57 {offsets = [48, 0], sizes = [24, 16], strides = [1, 1]} : vector<72x16xf32> to vector<24x16xf32>
    %61 = arith.mulf %58, %58 : vector<24x16xf32>
    %62 = arith.mulf %59, %59 : vector<24x16xf32>
    %63 = arith.addf %61, %62 : vector<24x16xf32>
    %64 = arith.mulf %60, %60 : vector<24x16xf32>
    %65 = arith.addf %63, %64 : vector<24x16xf32>
    %cst_34 = arith.constant 9.99999993E-9 : f32
    %66 = vector.broadcast %cst_34 : f32 to vector<24x16xf32>
    %67 = arith.maximumf %65, %66 : vector<24x16xf32>
    %68 = math.sqrt %67 : vector<24x16xf32>
    %cst_35 = arith.constant dense<0.000000e+00> : vector<24x32xf32>
    %69 = tpu.matmul %30, %50, %cst_35 {dimension_numbers = #tpu.dot_dimension_numbers<[1], [0], [0], [1], [0, 0, 1, 1], [], []>} : vector<24x16xf32>, vector<16x32xf32>, vector<24x32xf32> -> vector<24x32xf32>
    %cst_36 = arith.constant dense<0.000000e+00> : vector<24x32xf32>
    %70 = tpu.matmul %68, %51, %cst_36 {dimension_numbers = #tpu.dot_dimension_numbers<[1], [0], [0], [1], [0, 0, 1, 1], [], []>} : vector<24x16xf32>, vector<16x32xf32>, vector<24x32xf32> -> vector<24x32xf32>
    %71 = arith.addf %69, %70 : vector<24x32xf32>
    %72 = vector.broadcast %52 : vector<1x32xf32> to vector<24x32xf32>
    %73 = arith.addf %71, %72 : vector<24x32xf32>
    %cst_37 = arith.constant dense<0.000000e+00> : vector<24x16xf32>
    %74 = tpu.matmul %73, %54, %cst_37 {dimension_numbers = #tpu.dot_dimension_numbers<[1], [0], [0], [1], [0, 0, 1, 1], [], []>} : vector<24x32xf32>, vector<32x16xf32>, vector<24x16xf32> -> vector<24x16xf32>
    %75 = vector.broadcast %55 : vector<1x16xf32> to vector<24x16xf32>
    %76 = arith.addf %74, %75 : vector<24x16xf32>
    %77 = arith.negf %76 : vector<24x16xf32>
    %78 = math.exp %77 : vector<24x16xf32>
    %cst_38 = arith.constant 1.000000e+00 : f32
    %79 = vector.broadcast %cst_38 : f32 to vector<24x16xf32>
    %80 = arith.addf %79, %78 : vector<24x16xf32>
    %81 = arith.divf %79, %80 : vector<24x16xf32>
    %cst_39 = arith.constant dense<0.000000e+00> : vector<72x16xf32>
    %82 = tpu.matmul %57, %53, %cst_39 {dimension_numbers = #tpu.dot_dimension_numbers<[1], [0], [0], [1], [0, 0, 1, 1], [], []>} : vector<72x16xf32>, vector<16x16xf32>, vector<72x16xf32> -> vector<72x16xf32>
    %83 = vector.extract_strided_slice %82 {offsets = [0, 0], sizes = [24, 16], strides = [1, 1]} : vector<72x16xf32> to vector<24x16xf32>
    %84 = arith.mulf %83, %81 : vector<24x16xf32>
    %85 = vector.extract_strided_slice %82 {offsets = [24, 0], sizes = [24, 16], strides = [1, 1]} : vector<72x16xf32> to vector<24x16xf32>
    %86 = arith.mulf %85, %81 : vector<24x16xf32>
    %87 = vector.extract_strided_slice %82 {offsets = [48, 0], sizes = [24, 16], strides = [1, 1]} : vector<72x16xf32> to vector<24x16xf32>
    %88 = arith.mulf %87, %81 : vector<24x16xf32>
    %c0_40 = arith.constant 0 : index
    %c0_41 = arith.constant 0 : index
    %89 = vector.load %arg12[%c0_40, %c0_41] : memref<24x32xf32, #tpu.memory_space<vmem>>, vector<24x32xf32>
    tpu.vector_store %arg12[%c0_40, %c0_41], %73 {strides = array<i32>} : memref<24x32xf32, #tpu.memory_space<vmem>>, vector<24x32xf32>,
    %c0_42 = arith.constant 0 : index
    %c0_43 = arith.constant 0 : index
    %c0_44 = arith.constant 0 : index
    %90 = vector.load %arg13[%c0_42, %c0_43, %c0_44] : memref<3x24x16xf32, #tpu.memory_space<vmem>>, vector<1x24x16xf32>
    %91 = vector.shape_cast %90 : vector<1x24x16xf32> to vector<24x16xf32>
    %92 = vector.shape_cast %84 : vector<24x16xf32> to vector<1x24x16xf32>
    tpu.vector_store %arg13[%c0_42, %c0_43, %c0_44], %92 {strides = array<i32>} : memref<3x24x16xf32, #tpu.memory_space<vmem>>, vector<1x24x16xf32>,
    %c1_45 = arith.constant 1 : index
    %c0_46 = arith.constant 0 : index
    %c0_47 = arith.constant 0 : index
    %93 = vector.load %arg13[%c1_45, %c0_46, %c0_47] : memref<3x24x16xf32, #tpu.memory_space<vmem>>, vector<1x24x16xf32>
    %94 = vector.shape_cast %93 : vector<1x24x16xf32> to vector<24x16xf32>
    %95 = vector.shape_cast %86 : vector<24x16xf32> to vector<1x24x16xf32>
    tpu.vector_store %arg13[%c1_45, %c0_46, %c0_47], %95 {strides = array<i32>} : memref<3x24x16xf32, #tpu.memory_space<vmem>>, vector<1x24x16xf32>,
    %c2_48 = arith.constant 2 : index
    %c0_49 = arith.constant 0 : index
    %c0_50 = arith.constant 0 : index
    %96 = vector.load %arg13[%c2_48, %c0_49, %c0_50] : memref<3x24x16xf32, #tpu.memory_space<vmem>>, vector<1x24x16xf32>
    %97 = vector.shape_cast %96 : vector<1x24x16xf32> to vector<24x16xf32>
    %98 = vector.shape_cast %88 : vector<24x16xf32> to vector<1x24x16xf32>
    tpu.vector_store %arg13[%c2_48, %c0_49, %c0_50], %98 {strides = array<i32>} : memref<3x24x16xf32, #tpu.memory_space<vmem>>, vector<1x24x16xf32>,
    return
  }
  func.func @transform_0(%arg0: i32) -> (i32, i32) {
    %c0_i32 = arith.constant 0 : i32
    %c0_i32_0 = arith.constant 0 : i32
    return %arg0, %c0_i32 : i32, i32
  }
  func.func @transform_1(%arg0: i32) -> (i32, i32, i32) {
    %c0_i32 = arith.constant 0 : i32
    %c0_i32_0 = arith.constant 0 : i32
    %c0_i32_1 = arith.constant 0 : i32
    return %c0_i32, %arg0, %c0_i32_0 : i32, i32, i32
  }
  func.func @transform_2(%arg0: i32) -> (i32, i32) {
    %c0_i32 = arith.constant 0 : i32
    %c0_i32_0 = arith.constant 0 : i32
    %c0_i32_1 = arith.constant 0 : i32
    return %c0_i32, %c0_i32_0 : i32, i32
  }
  func.func @transform_3(%arg0: i32) -> (i32, i32) {
    %c0_i32 = arith.constant 0 : i32
    %c0_i32_0 = arith.constant 0 : i32
    %c0_i32_1 = arith.constant 0 : i32
    return %c0_i32, %c0_i32_0 : i32, i32
  }
  func.func @transform_4(%arg0: i32) -> (i32, i32) {
    %c0_i32 = arith.constant 0 : i32
    %c0_i32_0 = arith.constant 0 : i32
    %c0_i32_1 = arith.constant 0 : i32
    return %c0_i32, %c0_i32_0 : i32, i32
  }
  func.func @transform_5(%arg0: i32) -> (i32, i32) {
    %c0_i32 = arith.constant 0 : i32
    %c0_i32_0 = arith.constant 0 : i32
    %c0_i32_1 = arith.constant 0 : i32
    return %c0_i32, %c0_i32_0 : i32, i32
  }
  func.func @transform_6(%arg0: i32) -> (i32, i32) {
    %c0_i32 = arith.constant 0 : i32
    %c0_i32_0 = arith.constant 0 : i32
    %c0_i32_1 = arith.constant 0 : i32
    return %c0_i32, %c0_i32_0 : i32, i32
  }
  func.func @transform_7(%arg0: i32) -> (i32, i32) {
    %c0_i32 = arith.constant 0 : i32
    %c0_i32_0 = arith.constant 0 : i32
    %c0_i32_1 = arith.constant 0 : i32
    return %c0_i32, %c0_i32_0 : i32, i32
  }
  func.func @transform_8(%arg0: i32) -> (i32, i32) {
    %c0_i32 = arith.constant 0 : i32
    %c0_i32_0 = arith.constant 0 : i32
    %c0_i32_1 = arith.constant 0 : i32
    return %c0_i32, %c0_i32_0 : i32, i32
  }
  func.func @transform_9(%arg0: i32) -> (i32, i32) {
    %c0_i32 = arith.constant 0 : i32
    %c0_i32_0 = arith.constant 0 : i32
    %c0_i32_1 = arith.constant 0 : i32
    return %c0_i32, %c0_i32_0 : i32, i32
  }
  func.func @transform_10(%arg0: i32) -> (i32, i32) {
    %c0_i32 = arith.constant 0 : i32
    %c0_i32_0 = arith.constant 0 : i32
    %c0_i32_1 = arith.constant 0 : i32
    return %c0_i32, %c0_i32_0 : i32, i32
  }
  func.func @transform_11(%arg0: i32) -> (i32, i32) {
    %c0_i32 = arith.constant 0 : i32
    %c0_i32_0 = arith.constant 0 : i32
    return %arg0, %c0_i32 : i32, i32
  }
  func.func @transform_12(%arg0: i32) -> (i32, i32, i32) {
    %c0_i32 = arith.constant 0 : i32
    %c0_i32_0 = arith.constant 0 : i32
    %c0_i32_1 = arith.constant 0 : i32
    return %c0_i32, %arg0, %c0_i32_0 : i32, i32, i32
  }
}

module attributes {stable_mosaic.version = 11 : i64} {
  func.func @_message_kernel(%arg0: i32, %arg1: memref<48x96xf32, #tpu.memory_space<vmem>>, %arg2: memref<3x48x33xf32, #tpu.memory_space<vmem>>, %arg3: memref<33x33xf32, #tpu.memory_space<vmem>>, %arg4: memref<96x32xf32, #tpu.memory_space<vmem>>, %arg5: memref<33x32xf32, #tpu.memory_space<vmem>>, %arg6: memref<1x32xf32, #tpu.memory_space<vmem>>, %arg7: memref<33x16xf32, #tpu.memory_space<vmem>>, %arg8: memref<32x16xf32, #tpu.memory_space<vmem>>, %arg9: memref<1x16xf32, #tpu.memory_space<vmem>>, %arg10: memref<16x16xf32, #tpu.memory_space<vmem>>, %arg11: memref<32x32xf32, #tpu.memory_space<vmem>>, %arg12: memref<16x32xf32, #tpu.memory_space<vmem>>, %arg13: memref<1x32xf32, #tpu.memory_space<vmem>>, %arg14: memref<16x16xf32, #tpu.memory_space<vmem>>, %arg15: memref<32x16xf32, #tpu.memory_space<vmem>>, %arg16: memref<1x16xf32, #tpu.memory_space<vmem>>, %arg17: memref<16x16xf32, #tpu.memory_space<vmem>>, %arg18: memref<32x32xf32, #tpu.memory_space<vmem>>, %arg19: memref<16x32xf32, #tpu.memory_space<vmem>>, %arg20: memref<1x32xf32, #tpu.memory_space<vmem>>, %arg21: memref<16x16xf32, #tpu.memory_space<vmem>>, %arg22: memref<32x16xf32, #tpu.memory_space<vmem>>, %arg23: memref<1x16xf32, #tpu.memory_space<vmem>>, %arg24: memref<48x32xf32, #tpu.memory_space<vmem>>, %arg25: memref<3x48x16xf32, #tpu.memory_space<vmem>>) attributes {dimension_semantics = [#tpu.dimension_semantics<parallel>], iteration_bounds = array<i64: 1>, scalar_prefetch = 0 : i64, scratch_operands = 0 : i64, tpu.core_type = #tpu.core_type<tc>, window_params = [{transform_indices = @transform_0, window_bounds = array<i64: 48, 96>}, {transform_indices = @transform_1, window_bounds = array<i64: 3, 48, 33>}, {pipeline_mode = #tpu.pipeline_mode<synchronous>, transform_indices = @transform_2, window_bounds = array<i64: 33, 33>}, {pipeline_mode = #tpu.pipeline_mode<synchronous>, transform_indices = @transform_3, window_bounds = array<i64: 96, 32>}, {pipeline_mode = #tpu.pipeline_mode<synchronous>, transform_indices = @transform_4, window_bounds = array<i64: 33, 32>}, {pipeline_mode = #tpu.pipeline_mode<synchronous>, transform_indices = @transform_5, window_bounds = array<i64: 1, 32>}, {pipeline_mode = #tpu.pipeline_mode<synchronous>, transform_indices = @transform_6, window_bounds = array<i64: 33, 16>}, {pipeline_mode = #tpu.pipeline_mode<synchronous>, transform_indices = @transform_7, window_bounds = array<i64: 32, 16>}, {pipeline_mode = #tpu.pipeline_mode<synchronous>, transform_indices = @transform_8, window_bounds = array<i64: 1, 16>}, {pipeline_mode = #tpu.pipeline_mode<synchronous>, transform_indices = @transform_9, window_bounds = array<i64: 16, 16>}, {pipeline_mode = #tpu.pipeline_mode<synchronous>, transform_indices = @transform_10, window_bounds = array<i64: 32, 32>}, {pipeline_mode = #tpu.pipeline_mode<synchronous>, transform_indices = @transform_11, window_bounds = array<i64: 16, 32>}, {pipeline_mode = #tpu.pipeline_mode<synchronous>, transform_indices = @transform_12, window_bounds = array<i64: 1, 32>}, {pipeline_mode = #tpu.pipeline_mode<synchronous>, transform_indices = @transform_13, window_bounds = array<i64: 16, 16>}, {pipeline_mode = #tpu.pipeline_mode<synchronous>, transform_indices = @transform_14, window_bounds = array<i64: 32, 16>}, {pipeline_mode = #tpu.pipeline_mode<synchronous>, transform_indices = @transform_15, window_bounds = array<i64: 1, 16>}, {pipeline_mode = #tpu.pipeline_mode<synchronous>, transform_indices = @transform_16, window_bounds = array<i64: 16, 16>}, {pipeline_mode = #tpu.pipeline_mode<synchronous>, transform_indices = @transform_17, window_bounds = array<i64: 32, 32>}, {pipeline_mode = #tpu.pipeline_mode<synchronous>, transform_indices = @transform_18, window_bounds = array<i64: 16, 32>}, {pipeline_mode = #tpu.pipeline_mode<synchronous>, transform_indices = @transform_19, window_bounds = array<i64: 1, 32>}, {pipeline_mode = #tpu.pipeline_mode<synchronous>, transform_indices = @transform_20, window_bounds = array<i64: 16, 16>}, {pipeline_mode = #tpu.pipeline_mode<synchronous>, transform_indices = @transform_21, window_bounds = array<i64: 32, 16>}, {pipeline_mode = #tpu.pipeline_mode<synchronous>, transform_indices = @transform_22, window_bounds = array<i64: 1, 16>}, {transform_indices = @transform_23, window_bounds = array<i64: 48, 32>}, {transform_indices = @transform_24, window_bounds = array<i64: 3, 48, 16>}]} {
    %c0 = arith.constant 0 : index
    %c0_0 = arith.constant 0 : index
    %0 = vector.load %arg3[%c0, %c0_0] : memref<33x33xf32, #tpu.memory_space<vmem>>, vector<33x33xf32>
    %c0_1 = arith.constant 0 : index
    %c0_2 = arith.constant 0 : index
    %1 = vector.load %arg4[%c0_1, %c0_2] : memref<96x32xf32, #tpu.memory_space<vmem>>, vector<96x32xf32>
    %c0_3 = arith.constant 0 : index
    %c0_4 = arith.constant 0 : index
    %2 = vector.load %arg5[%c0_3, %c0_4] : memref<33x32xf32, #tpu.memory_space<vmem>>, vector<33x32xf32>
    %c0_5 = arith.constant 0 : index
    %c0_6 = arith.constant 0 : index
    %3 = vector.load %arg6[%c0_5, %c0_6] : memref<1x32xf32, #tpu.memory_space<vmem>>, vector<1x32xf32>
    %c0_7 = arith.constant 0 : index
    %c0_8 = arith.constant 0 : index
    %4 = vector.load %arg7[%c0_7, %c0_8] : memref<33x16xf32, #tpu.memory_space<vmem>>, vector<33x16xf32>
    %c0_9 = arith.constant 0 : index
    %c0_10 = arith.constant 0 : index
    %5 = vector.load %arg8[%c0_9, %c0_10] : memref<32x16xf32, #tpu.memory_space<vmem>>, vector<32x16xf32>
    %c0_11 = arith.constant 0 : index
    %c0_12 = arith.constant 0 : index
    %6 = vector.load %arg9[%c0_11, %c0_12] : memref<1x16xf32, #tpu.memory_space<vmem>>, vector<1x16xf32>
    %c0_13 = arith.constant 0 : index
    %c0_14 = arith.constant 0 : index
    %7 = vector.load %arg10[%c0_13, %c0_14] : memref<16x16xf32, #tpu.memory_space<vmem>>, vector<16x16xf32>
    %c0_15 = arith.constant 0 : index
    %c0_16 = arith.constant 0 : index
    %8 = vector.load %arg11[%c0_15, %c0_16] : memref<32x32xf32, #tpu.memory_space<vmem>>, vector<32x32xf32>
    %c0_17 = arith.constant 0 : index
    %c0_18 = arith.constant 0 : index
    %9 = vector.load %arg12[%c0_17, %c0_18] : memref<16x32xf32, #tpu.memory_space<vmem>>, vector<16x32xf32>
    %c0_19 = arith.constant 0 : index
    %c0_20 = arith.constant 0 : index
    %10 = vector.load %arg13[%c0_19, %c0_20] : memref<1x32xf32, #tpu.memory_space<vmem>>, vector<1x32xf32>
    %c0_21 = arith.constant 0 : index
    %c0_22 = arith.constant 0 : index
    %11 = vector.load %arg14[%c0_21, %c0_22] : memref<16x16xf32, #tpu.memory_space<vmem>>, vector<16x16xf32>
    %c0_23 = arith.constant 0 : index
    %c0_24 = arith.constant 0 : index
    %12 = vector.load %arg15[%c0_23, %c0_24] : memref<32x16xf32, #tpu.memory_space<vmem>>, vector<32x16xf32>
    %c0_25 = arith.constant 0 : index
    %c0_26 = arith.constant 0 : index
    %13 = vector.load %arg16[%c0_25, %c0_26] : memref<1x16xf32, #tpu.memory_space<vmem>>, vector<1x16xf32>
    %c0_27 = arith.constant 0 : index
    %c0_28 = arith.constant 0 : index
    %14 = vector.load %arg17[%c0_27, %c0_28] : memref<16x16xf32, #tpu.memory_space<vmem>>, vector<16x16xf32>
    %c0_29 = arith.constant 0 : index
    %c0_30 = arith.constant 0 : index
    %15 = vector.load %arg18[%c0_29, %c0_30] : memref<32x32xf32, #tpu.memory_space<vmem>>, vector<32x32xf32>
    %c0_31 = arith.constant 0 : index
    %c0_32 = arith.constant 0 : index
    %16 = vector.load %arg19[%c0_31, %c0_32] : memref<16x32xf32, #tpu.memory_space<vmem>>, vector<16x32xf32>
    %c0_33 = arith.constant 0 : index
    %c0_34 = arith.constant 0 : index
    %17 = vector.load %arg20[%c0_33, %c0_34] : memref<1x32xf32, #tpu.memory_space<vmem>>, vector<1x32xf32>
    %c0_35 = arith.constant 0 : index
    %c0_36 = arith.constant 0 : index
    %18 = vector.load %arg21[%c0_35, %c0_36] : memref<16x16xf32, #tpu.memory_space<vmem>>, vector<16x16xf32>
    %c0_37 = arith.constant 0 : index
    %c0_38 = arith.constant 0 : index
    %19 = vector.load %arg22[%c0_37, %c0_38] : memref<32x16xf32, #tpu.memory_space<vmem>>, vector<32x16xf32>
    %c0_39 = arith.constant 0 : index
    %c0_40 = arith.constant 0 : index
    %20 = vector.load %arg23[%c0_39, %c0_40] : memref<1x16xf32, #tpu.memory_space<vmem>>, vector<1x16xf32>
    %c0_41 = arith.constant 0 : index
    %c0_42 = arith.constant 0 : index
    %21 = vector.load %arg1[%c0_41, %c0_42] : memref<48x96xf32, #tpu.memory_space<vmem>>, vector<48x96xf32>
    %c0_43 = arith.constant 0 : index
    %c0_44 = arith.constant 0 : index
    %c0_45 = arith.constant 0 : index
    %22 = vector.load %arg2[%c0_43, %c0_44, %c0_45] : memref<3x48x33xf32, #tpu.memory_space<vmem>>, vector<1x48x33xf32>
    %23 = vector.shape_cast %22 : vector<1x48x33xf32> to vector<48x33xf32>
    %c1 = arith.constant 1 : index
    %c0_46 = arith.constant 0 : index
    %c0_47 = arith.constant 0 : index
    %24 = vector.load %arg2[%c1, %c0_46, %c0_47] : memref<3x48x33xf32, #tpu.memory_space<vmem>>, vector<1x48x33xf32>
    %25 = vector.shape_cast %24 : vector<1x48x33xf32> to vector<48x33xf32>
    %c2 = arith.constant 2 : index
    %c0_48 = arith.constant 0 : index
    %c0_49 = arith.constant 0 : index
    %26 = vector.load %arg2[%c2, %c0_48, %c0_49] : memref<3x48x33xf32, #tpu.memory_space<vmem>>, vector<1x48x33xf32>
    %27 = vector.shape_cast %26 : vector<1x48x33xf32> to vector<48x33xf32>
    %28 = tpu.concatenate %23, %25, %27 in 0 : vector<48x33xf32>, vector<48x33xf32>, vector<48x33xf32> -> vector<144x33xf32>
    %cst = arith.constant dense<0.000000e+00> : vector<144x33xf32>
    %29 = tpu.matmul %28, %0, %cst {dimension_numbers = #tpu.dot_dimension_numbers<[1], [0], [0], [1], [0, 0, 1, 1], [], []>} : vector<144x33xf32>, vector<33x33xf32>, vector<144x33xf32> -> vector<144x33xf32>
    %30 = vector.extract_strided_slice %29 {offsets = [0, 0], sizes = [48, 33], strides = [1, 1]} : vector<144x33xf32> to vector<48x33xf32>
    %31 = vector.extract_strided_slice %29 {offsets = [48, 0], sizes = [48, 33], strides = [1, 1]} : vector<144x33xf32> to vector<48x33xf32>
    %32 = vector.extract_strided_slice %29 {offsets = [96, 0], sizes = [48, 33], strides = [1, 1]} : vector<144x33xf32> to vector<48x33xf32>
    %33 = arith.mulf %30, %30 : vector<48x33xf32>
    %34 = arith.mulf %31, %31 : vector<48x33xf32>
    %35 = arith.addf %33, %34 : vector<48x33xf32>
    %36 = arith.mulf %32, %32 : vector<48x33xf32>
    %37 = arith.addf %35, %36 : vector<48x33xf32>
    %cst_50 = arith.constant 9.99999993E-9 : f32
    %38 = vector.broadcast %cst_50 : f32 to vector<48x33xf32>
    %39 = arith.maximumf %37, %38 : vector<48x33xf32>
    %40 = math.sqrt %39 : vector<48x33xf32>
    %cst_51 = arith.constant dense<0.000000e+00> : vector<48x32xf32>
    %41 = tpu.matmul %21, %1, %cst_51 {dimension_numbers = #tpu.dot_dimension_numbers<[1], [0], [0], [1], [0, 0, 1, 1], [], []>} : vector<48x96xf32>, vector<96x32xf32>, vector<48x32xf32> -> vector<48x32xf32>
    %cst_52 = arith.constant dense<0.000000e+00> : vector<48x32xf32>
    %42 = tpu.matmul %40, %2, %cst_52 {dimension_numbers = #tpu.dot_dimension_numbers<[1], [0], [0], [1], [0, 0, 1, 1], [], []>} : vector<48x33xf32>, vector<33x32xf32>, vector<48x32xf32> -> vector<48x32xf32>
    %43 = arith.addf %41, %42 : vector<48x32xf32>
    %44 = vector.broadcast %3 : vector<1x32xf32> to vector<48x32xf32>
    %45 = arith.addf %43, %44 : vector<48x32xf32>
    %46 = arith.negf %45 : vector<48x32xf32>
    %47 = math.exp %46 : vector<48x32xf32>
    %cst_53 = arith.constant 1.000000e+00 : f32
    %48 = vector.broadcast %cst_53 : f32 to vector<48x32xf32>
    %49 = arith.addf %48, %47 : vector<48x32xf32>
    %50 = arith.divf %48, %49 : vector<48x32xf32>
    %51 = arith.mulf %45, %50 : vector<48x32xf32>
    %cst_54 = arith.constant dense<0.000000e+00> : vector<48x16xf32>
    %52 = tpu.matmul %51, %5, %cst_54 {dimension_numbers = #tpu.dot_dimension_numbers<[1], [0], [0], [1], [0, 0, 1, 1], [], []>} : vector<48x32xf32>, vector<32x16xf32>, vector<48x16xf32> -> vector<48x16xf32>
    %53 = vector.broadcast %6 : vector<1x16xf32> to vector<48x16xf32>
    %54 = arith.addf %52, %53 : vector<48x16xf32>
    %55 = arith.negf %54 : vector<48x16xf32>
    %56 = math.exp %55 : vector<48x16xf32>
    %cst_55 = arith.constant 1.000000e+00 : f32
    %57 = vector.broadcast %cst_55 : f32 to vector<48x16xf32>
    %58 = arith.addf %57, %56 : vector<48x16xf32>
    %59 = arith.divf %57, %58 : vector<48x16xf32>
    %cst_56 = arith.constant dense<0.000000e+00> : vector<144x16xf32>
    %60 = tpu.matmul %29, %4, %cst_56 {dimension_numbers = #tpu.dot_dimension_numbers<[1], [0], [0], [1], [0, 0, 1, 1], [], []>} : vector<144x33xf32>, vector<33x16xf32>, vector<144x16xf32> -> vector<144x16xf32>
    %61 = vector.extract_strided_slice %60 {offsets = [0, 0], sizes = [48, 16], strides = [1, 1]} : vector<144x16xf32> to vector<48x16xf32>
    %62 = arith.mulf %61, %59 : vector<48x16xf32>
    %63 = vector.extract_strided_slice %60 {offsets = [48, 0], sizes = [48, 16], strides = [1, 1]} : vector<144x16xf32> to vector<48x16xf32>
    %64 = arith.mulf %63, %59 : vector<48x16xf32>
    %65 = vector.extract_strided_slice %60 {offsets = [96, 0], sizes = [48, 16], strides = [1, 1]} : vector<144x16xf32> to vector<48x16xf32>
    %66 = arith.mulf %65, %59 : vector<48x16xf32>
    %67 = tpu.concatenate %62, %64, %66 in 0 : vector<48x16xf32>, vector<48x16xf32>, vector<48x16xf32> -> vector<144x16xf32>
    %cst_57 = arith.constant dense<0.000000e+00> : vector<144x16xf32>
    %68 = tpu.matmul %67, %7, %cst_57 {dimension_numbers = #tpu.dot_dimension_numbers<[1], [0], [0], [1], [0, 0, 1, 1], [], []>} : vector<144x16xf32>, vector<16x16xf32>, vector<144x16xf32> -> vector<144x16xf32>
    %69 = vector.extract_strided_slice %68 {offsets = [0, 0], sizes = [48, 16], strides = [1, 1]} : vector<144x16xf32> to vector<48x16xf32>
    %70 = vector.extract_strided_slice %68 {offsets = [48, 0], sizes = [48, 16], strides = [1, 1]} : vector<144x16xf32> to vector<48x16xf32>
    %71 = vector.extract_strided_slice %68 {offsets = [96, 0], sizes = [48, 16], strides = [1, 1]} : vector<144x16xf32> to vector<48x16xf32>
    %72 = arith.mulf %69, %69 : vector<48x16xf32>
    %73 = arith.mulf %70, %70 : vector<48x16xf32>
    %74 = arith.addf %72, %73 : vector<48x16xf32>
    %75 = arith.mulf %71, %71 : vector<48x16xf32>
    %76 = arith.addf %74, %75 : vector<48x16xf32>
    %cst_58 = arith.constant 9.99999993E-9 : f32
    %77 = vector.broadcast %cst_58 : f32 to vector<48x16xf32>
    %78 = arith.maximumf %76, %77 : vector<48x16xf32>
    %79 = math.sqrt %78 : vector<48x16xf32>
    %cst_59 = arith.constant dense<0.000000e+00> : vector<48x32xf32>
    %80 = tpu.matmul %51, %8, %cst_59 {dimension_numbers = #tpu.dot_dimension_numbers<[1], [0], [0], [1], [0, 0, 1, 1], [], []>} : vector<48x32xf32>, vector<32x32xf32>, vector<48x32xf32> -> vector<48x32xf32>
    %cst_60 = arith.constant dense<0.000000e+00> : vector<48x32xf32>
    %81 = tpu.matmul %79, %9, %cst_60 {dimension_numbers = #tpu.dot_dimension_numbers<[1], [0], [0], [1], [0, 0, 1, 1], [], []>} : vector<48x16xf32>, vector<16x32xf32>, vector<48x32xf32> -> vector<48x32xf32>
    %82 = arith.addf %80, %81 : vector<48x32xf32>
    %83 = vector.broadcast %10 : vector<1x32xf32> to vector<48x32xf32>
    %84 = arith.addf %82, %83 : vector<48x32xf32>
    %85 = arith.negf %84 : vector<48x32xf32>
    %86 = math.exp %85 : vector<48x32xf32>
    %cst_61 = arith.constant 1.000000e+00 : f32
    %87 = vector.broadcast %cst_61 : f32 to vector<48x32xf32>
    %88 = arith.addf %87, %86 : vector<48x32xf32>
    %89 = arith.divf %87, %88 : vector<48x32xf32>
    %90 = arith.mulf %84, %89 : vector<48x32xf32>
    %cst_62 = arith.constant dense<0.000000e+00> : vector<48x16xf32>
    %91 = tpu.matmul %90, %12, %cst_62 {dimension_numbers = #tpu.dot_dimension_numbers<[1], [0], [0], [1], [0, 0, 1, 1], [], []>} : vector<48x32xf32>, vector<32x16xf32>, vector<48x16xf32> -> vector<48x16xf32>
    %92 = vector.broadcast %13 : vector<1x16xf32> to vector<48x16xf32>
    %93 = arith.addf %91, %92 : vector<48x16xf32>
    %94 = arith.negf %93 : vector<48x16xf32>
    %95 = math.exp %94 : vector<48x16xf32>
    %cst_63 = arith.constant 1.000000e+00 : f32
    %96 = vector.broadcast %cst_63 : f32 to vector<48x16xf32>
    %97 = arith.addf %96, %95 : vector<48x16xf32>
    %98 = arith.divf %96, %97 : vector<48x16xf32>
    %cst_64 = arith.constant dense<0.000000e+00> : vector<144x16xf32>
    %99 = tpu.matmul %68, %11, %cst_64 {dimension_numbers = #tpu.dot_dimension_numbers<[1], [0], [0], [1], [0, 0, 1, 1], [], []>} : vector<144x16xf32>, vector<16x16xf32>, vector<144x16xf32> -> vector<144x16xf32>
    %100 = vector.extract_strided_slice %99 {offsets = [0, 0], sizes = [48, 16], strides = [1, 1]} : vector<144x16xf32> to vector<48x16xf32>
    %101 = arith.mulf %100, %98 : vector<48x16xf32>
    %102 = vector.extract_strided_slice %99 {offsets = [48, 0], sizes = [48, 16], strides = [1, 1]} : vector<144x16xf32> to vector<48x16xf32>
    %103 = arith.mulf %102, %98 : vector<48x16xf32>
    %104 = vector.extract_strided_slice %99 {offsets = [96, 0], sizes = [48, 16], strides = [1, 1]} : vector<144x16xf32> to vector<48x16xf32>
    %105 = arith.mulf %104, %98 : vector<48x16xf32>
    %106 = tpu.concatenate %101, %103, %105 in 0 : vector<48x16xf32>, vector<48x16xf32>, vector<48x16xf32> -> vector<144x16xf32>
    %cst_65 = arith.constant dense<0.000000e+00> : vector<144x16xf32>
    %107 = tpu.matmul %106, %14, %cst_65 {dimension_numbers = #tpu.dot_dimension_numbers<[1], [0], [0], [1], [0, 0, 1, 1], [], []>} : vector<144x16xf32>, vector<16x16xf32>, vector<144x16xf32> -> vector<144x16xf32>
    %108 = vector.extract_strided_slice %107 {offsets = [0, 0], sizes = [48, 16], strides = [1, 1]} : vector<144x16xf32> to vector<48x16xf32>
    %109 = vector.extract_strided_slice %107 {offsets = [48, 0], sizes = [48, 16], strides = [1, 1]} : vector<144x16xf32> to vector<48x16xf32>
    %110 = vector.extract_strided_slice %107 {offsets = [96, 0], sizes = [48, 16], strides = [1, 1]} : vector<144x16xf32> to vector<48x16xf32>
    %111 = arith.mulf %108, %108 : vector<48x16xf32>
    %112 = arith.mulf %109, %109 : vector<48x16xf32>
    %113 = arith.addf %111, %112 : vector<48x16xf32>
    %114 = arith.mulf %110, %110 : vector<48x16xf32>
    %115 = arith.addf %113, %114 : vector<48x16xf32>
    %cst_66 = arith.constant 9.99999993E-9 : f32
    %116 = vector.broadcast %cst_66 : f32 to vector<48x16xf32>
    %117 = arith.maximumf %115, %116 : vector<48x16xf32>
    %118 = math.sqrt %117 : vector<48x16xf32>
    %cst_67 = arith.constant dense<0.000000e+00> : vector<48x32xf32>
    %119 = tpu.matmul %90, %15, %cst_67 {dimension_numbers = #tpu.dot_dimension_numbers<[1], [0], [0], [1], [0, 0, 1, 1], [], []>} : vector<48x32xf32>, vector<32x32xf32>, vector<48x32xf32> -> vector<48x32xf32>
    %cst_68 = arith.constant dense<0.000000e+00> : vector<48x32xf32>
    %120 = tpu.matmul %118, %16, %cst_68 {dimension_numbers = #tpu.dot_dimension_numbers<[1], [0], [0], [1], [0, 0, 1, 1], [], []>} : vector<48x16xf32>, vector<16x32xf32>, vector<48x32xf32> -> vector<48x32xf32>
    %121 = arith.addf %119, %120 : vector<48x32xf32>
    %122 = vector.broadcast %17 : vector<1x32xf32> to vector<48x32xf32>
    %123 = arith.addf %121, %122 : vector<48x32xf32>
    %cst_69 = arith.constant dense<0.000000e+00> : vector<48x16xf32>
    %124 = tpu.matmul %123, %19, %cst_69 {dimension_numbers = #tpu.dot_dimension_numbers<[1], [0], [0], [1], [0, 0, 1, 1], [], []>} : vector<48x32xf32>, vector<32x16xf32>, vector<48x16xf32> -> vector<48x16xf32>
    %125 = vector.broadcast %20 : vector<1x16xf32> to vector<48x16xf32>
    %126 = arith.addf %124, %125 : vector<48x16xf32>
    %127 = arith.negf %126 : vector<48x16xf32>
    %128 = math.exp %127 : vector<48x16xf32>
    %cst_70 = arith.constant 1.000000e+00 : f32
    %129 = vector.broadcast %cst_70 : f32 to vector<48x16xf32>
    %130 = arith.addf %129, %128 : vector<48x16xf32>
    %131 = arith.divf %129, %130 : vector<48x16xf32>
    %cst_71 = arith.constant dense<0.000000e+00> : vector<144x16xf32>
    %132 = tpu.matmul %107, %18, %cst_71 {dimension_numbers = #tpu.dot_dimension_numbers<[1], [0], [0], [1], [0, 0, 1, 1], [], []>} : vector<144x16xf32>, vector<16x16xf32>, vector<144x16xf32> -> vector<144x16xf32>
    %133 = vector.extract_strided_slice %132 {offsets = [0, 0], sizes = [48, 16], strides = [1, 1]} : vector<144x16xf32> to vector<48x16xf32>
    %134 = arith.mulf %133, %131 : vector<48x16xf32>
    %135 = vector.extract_strided_slice %132 {offsets = [48, 0], sizes = [48, 16], strides = [1, 1]} : vector<144x16xf32> to vector<48x16xf32>
    %136 = arith.mulf %135, %131 : vector<48x16xf32>
    %137 = vector.extract_strided_slice %132 {offsets = [96, 0], sizes = [48, 16], strides = [1, 1]} : vector<144x16xf32> to vector<48x16xf32>
    %138 = arith.mulf %137, %131 : vector<48x16xf32>
    %c0_72 = arith.constant 0 : index
    %c0_73 = arith.constant 0 : index
    %139 = vector.load %arg24[%c0_72, %c0_73] : memref<48x32xf32, #tpu.memory_space<vmem>>, vector<48x32xf32>
    tpu.vector_store %arg24[%c0_72, %c0_73], %123 {strides = array<i32>} : memref<48x32xf32, #tpu.memory_space<vmem>>, vector<48x32xf32>,
    %c0_74 = arith.constant 0 : index
    %c0_75 = arith.constant 0 : index
    %c0_76 = arith.constant 0 : index
    %140 = vector.load %arg25[%c0_74, %c0_75, %c0_76] : memref<3x48x16xf32, #tpu.memory_space<vmem>>, vector<1x48x16xf32>
    %141 = vector.shape_cast %140 : vector<1x48x16xf32> to vector<48x16xf32>
    %142 = vector.shape_cast %134 : vector<48x16xf32> to vector<1x48x16xf32>
    tpu.vector_store %arg25[%c0_74, %c0_75, %c0_76], %142 {strides = array<i32>} : memref<3x48x16xf32, #tpu.memory_space<vmem>>, vector<1x48x16xf32>,
    %c1_77 = arith.constant 1 : index
    %c0_78 = arith.constant 0 : index
    %c0_79 = arith.constant 0 : index
    %143 = vector.load %arg25[%c1_77, %c0_78, %c0_79] : memref<3x48x16xf32, #tpu.memory_space<vmem>>, vector<1x48x16xf32>
    %144 = vector.shape_cast %143 : vector<1x48x16xf32> to vector<48x16xf32>
    %145 = vector.shape_cast %136 : vector<48x16xf32> to vector<1x48x16xf32>
    tpu.vector_store %arg25[%c1_77, %c0_78, %c0_79], %145 {strides = array<i32>} : memref<3x48x16xf32, #tpu.memory_space<vmem>>, vector<1x48x16xf32>,
    %c2_80 = arith.constant 2 : index
    %c0_81 = arith.constant 0 : index
    %c0_82 = arith.constant 0 : index
    %146 = vector.load %arg25[%c2_80, %c0_81, %c0_82] : memref<3x48x16xf32, #tpu.memory_space<vmem>>, vector<1x48x16xf32>
    %147 = vector.shape_cast %146 : vector<1x48x16xf32> to vector<48x16xf32>
    %148 = vector.shape_cast %138 : vector<48x16xf32> to vector<1x48x16xf32>
    tpu.vector_store %arg25[%c2_80, %c0_81, %c0_82], %148 {strides = array<i32>} : memref<3x48x16xf32, #tpu.memory_space<vmem>>, vector<1x48x16xf32>,
    return
  }
  func.func @transform_0(%arg0: i32) -> (i32, i32) {
    %c0_i32 = arith.constant 0 : i32
    %c0_i32_0 = arith.constant 0 : i32
    return %arg0, %c0_i32 : i32, i32
  }
  func.func @transform_1(%arg0: i32) -> (i32, i32, i32) {
    %c0_i32 = arith.constant 0 : i32
    %c0_i32_0 = arith.constant 0 : i32
    %c0_i32_1 = arith.constant 0 : i32
    return %c0_i32, %arg0, %c0_i32_0 : i32, i32, i32
  }
  func.func @transform_2(%arg0: i32) -> (i32, i32) {
    %c0_i32 = arith.constant 0 : i32
    %c0_i32_0 = arith.constant 0 : i32
    %c0_i32_1 = arith.constant 0 : i32
    return %c0_i32, %c0_i32_0 : i32, i32
  }
  func.func @transform_3(%arg0: i32) -> (i32, i32) {
    %c0_i32 = arith.constant 0 : i32
    %c0_i32_0 = arith.constant 0 : i32
    %c0_i32_1 = arith.constant 0 : i32
    return %c0_i32, %c0_i32_0 : i32, i32
  }
  func.func @transform_4(%arg0: i32) -> (i32, i32) {
    %c0_i32 = arith.constant 0 : i32
    %c0_i32_0 = arith.constant 0 : i32
    %c0_i32_1 = arith.constant 0 : i32
    return %c0_i32, %c0_i32_0 : i32, i32
  }
  func.func @transform_5(%arg0: i32) -> (i32, i32) {
    %c0_i32 = arith.constant 0 : i32
    %c0_i32_0 = arith.constant 0 : i32
    %c0_i32_1 = arith.constant 0 : i32
    return %c0_i32, %c0_i32_0 : i32, i32
  }
  func.func @transform_6(%arg0: i32) -> (i32, i32) {
    %c0_i32 = arith.constant 0 : i32
    %c0_i32_0 = arith.constant 0 : i32
    %c0_i32_1 = arith.constant 0 : i32
    return %c0_i32, %c0_i32_0 : i32, i32
  }
  func.func @transform_7(%arg0: i32) -> (i32, i32) {
    %c0_i32 = arith.constant 0 : i32
    %c0_i32_0 = arith.constant 0 : i32
    %c0_i32_1 = arith.constant 0 : i32
    return %c0_i32, %c0_i32_0 : i32, i32
  }
  func.func @transform_8(%arg0: i32) -> (i32, i32) {
    %c0_i32 = arith.constant 0 : i32
    %c0_i32_0 = arith.constant 0 : i32
    %c0_i32_1 = arith.constant 0 : i32
    return %c0_i32, %c0_i32_0 : i32, i32
  }
  func.func @transform_9(%arg0: i32) -> (i32, i32) {
    %c0_i32 = arith.constant 0 : i32
    %c0_i32_0 = arith.constant 0 : i32
    %c0_i32_1 = arith.constant 0 : i32
    return %c0_i32, %c0_i32_0 : i32, i32
  }
  func.func @transform_10(%arg0: i32) -> (i32, i32) {
    %c0_i32 = arith.constant 0 : i32
    %c0_i32_0 = arith.constant 0 : i32
    %c0_i32_1 = arith.constant 0 : i32
    return %c0_i32, %c0_i32_0 : i32, i32
  }
  func.func @transform_11(%arg0: i32) -> (i32, i32) {
    %c0_i32 = arith.constant 0 : i32
    %c0_i32_0 = arith.constant 0 : i32
    %c0_i32_1 = arith.constant 0 : i32
    return %c0_i32, %c0_i32_0 : i32, i32
  }
  func.func @transform_12(%arg0: i32) -> (i32, i32) {
    %c0_i32 = arith.constant 0 : i32
    %c0_i32_0 = arith.constant 0 : i32
    %c0_i32_1 = arith.constant 0 : i32
    return %c0_i32, %c0_i32_0 : i32, i32
  }
  func.func @transform_13(%arg0: i32) -> (i32, i32) {
    %c0_i32 = arith.constant 0 : i32
    %c0_i32_0 = arith.constant 0 : i32
    %c0_i32_1 = arith.constant 0 : i32
    return %c0_i32, %c0_i32_0 : i32, i32
  }
  func.func @transform_14(%arg0: i32) -> (i32, i32) {
    %c0_i32 = arith.constant 0 : i32
    %c0_i32_0 = arith.constant 0 : i32
    %c0_i32_1 = arith.constant 0 : i32
    return %c0_i32, %c0_i32_0 : i32, i32
  }
  func.func @transform_15(%arg0: i32) -> (i32, i32) {
    %c0_i32 = arith.constant 0 : i32
    %c0_i32_0 = arith.constant 0 : i32
    %c0_i32_1 = arith.constant 0 : i32
    return %c0_i32, %c0_i32_0 : i32, i32
  }
  func.func @transform_16(%arg0: i32) -> (i32, i32) {
    %c0_i32 = arith.constant 0 : i32
    %c0_i32_0 = arith.constant 0 : i32
    %c0_i32_1 = arith.constant 0 : i32
    return %c0_i32, %c0_i32_0 : i32, i32
  }
  func.func @transform_17(%arg0: i32) -> (i32, i32) {
    %c0_i32 = arith.constant 0 : i32
    %c0_i32_0 = arith.constant 0 : i32
    %c0_i32_1 = arith.constant 0 : i32
    return %c0_i32, %c0_i32_0 : i32, i32
  }
  func.func @transform_18(%arg0: i32) -> (i32, i32) {
    %c0_i32 = arith.constant 0 : i32
    %c0_i32_0 = arith.constant 0 : i32
    %c0_i32_1 = arith.constant 0 : i32
    return %c0_i32, %c0_i32_0 : i32, i32
  }
  func.func @transform_19(%arg0: i32) -> (i32, i32) {
    %c0_i32 = arith.constant 0 : i32
    %c0_i32_0 = arith.constant 0 : i32
    %c0_i32_1 = arith.constant 0 : i32
    return %c0_i32, %c0_i32_0 : i32, i32
  }
  func.func @transform_20(%arg0: i32) -> (i32, i32) {
    %c0_i32 = arith.constant 0 : i32
    %c0_i32_0 = arith.constant 0 : i32
    %c0_i32_1 = arith.constant 0 : i32
    return %c0_i32, %c0_i32_0 : i32, i32
  }
  func.func @transform_21(%arg0: i32) -> (i32, i32) {
    %c0_i32 = arith.constant 0 : i32
    %c0_i32_0 = arith.constant 0 : i32
    %c0_i32_1 = arith.constant 0 : i32
    return %c0_i32, %c0_i32_0 : i32, i32
  }
  func.func @transform_22(%arg0: i32) -> (i32, i32) {
    %c0_i32 = arith.constant 0 : i32
    %c0_i32_0 = arith.constant 0 : i32
    %c0_i32_1 = arith.constant 0 : i32
    return %c0_i32, %c0_i32_0 : i32, i32
  }
  func.func @transform_23(%arg0: i32) -> (i32, i32) {
    %c0_i32 = arith.constant 0 : i32
    %c0_i32_0 = arith.constant 0 : i32
    return %arg0, %c0_i32 : i32, i32
  }
  func.func @transform_24(%arg0: i32) -> (i32, i32, i32) {
    %c0_i32 = arith.constant 0 : i32
    %c0_i32_0 = arith.constant 0 : i32
    %c0_i32_1 = arith.constant 0 : i32
    return %c0_i32, %arg0, %c0_i32_0 : i32, i32, i32
  }
}

module attributes {stable_mosaic.version = 11 : i64} {
  func.func @_node_update_kernel(%arg0: i32, %arg1: memref<24x32xf32, #tpu.memory_space<vmem>>, %arg2: memref<24x32xf32, #tpu.memory_space<vmem>>, %arg3: memref<3x24x16xf32, #tpu.memory_space<vmem>>, %arg4: memref<3x24x16xf32, #tpu.memory_space<vmem>>, %arg5: memref<1x32xf32, #tpu.memory_space<vmem>>, %arg6: memref<1x32xf32, #tpu.memory_space<vmem>>, %arg7: memref<16x32xf32, #tpu.memory_space<vmem>>, %arg8: memref<32x128xf32, #tpu.memory_space<vmem>>, %arg9: memref<32x128xf32, #tpu.memory_space<vmem>>, %arg10: memref<1x128xf32, #tpu.memory_space<vmem>>, %arg11: memref<32x32xf32, #tpu.memory_space<vmem>>, %arg12: memref<128x32xf32, #tpu.memory_space<vmem>>, %arg13: memref<1x32xf32, #tpu.memory_space<vmem>>, %arg14: memref<32x32xf32, #tpu.memory_space<vmem>>, %arg15: memref<128x32xf32, #tpu.memory_space<vmem>>, %arg16: memref<32x32xf32, #tpu.memory_space<vmem>>, %arg17: memref<1x32xf32, #tpu.memory_space<vmem>>, %arg18: memref<32x16xf32, #tpu.memory_space<vmem>>, %arg19: memref<32x16xf32, #tpu.memory_space<vmem>>, %arg20: memref<1x16xf32, #tpu.memory_space<vmem>>, %arg21: memref<1x32xf32, #tpu.memory_space<vmem>>, %arg22: memref<1x32xf32, #tpu.memory_space<vmem>>, %arg23: memref<24x32xf32, #tpu.memory_space<vmem>>, %arg24: memref<3x24x16xf32, #tpu.memory_space<vmem>>) attributes {dimension_semantics = [#tpu.dimension_semantics<parallel>], iteration_bounds = array<i64: 1>, scalar_prefetch = 0 : i64, scratch_operands = 0 : i64, tpu.core_type = #tpu.core_type<tc>, window_params = [{transform_indices = @transform_0, window_bounds = array<i64: 24, 32>}, {transform_indices = @transform_1, window_bounds = array<i64: 24, 32>}, {transform_indices = @transform_2, window_bounds = array<i64: 3, 24, 16>}, {transform_indices = @transform_3, window_bounds = array<i64: 3, 24, 16>}, {pipeline_mode = #tpu.pipeline_mode<synchronous>, transform_indices = @transform_4, window_bounds = array<i64: 1, 32>}, {pipeline_mode = #tpu.pipeline_mode<synchronous>, transform_indices = @transform_5, window_bounds = array<i64: 1, 32>}, {pipeline_mode = #tpu.pipeline_mode<synchronous>, transform_indices = @transform_6, window_bounds = array<i64: 16, 32>}, {pipeline_mode = #tpu.pipeline_mode<synchronous>, transform_indices = @transform_7, window_bounds = array<i64: 32, 128>}, {pipeline_mode = #tpu.pipeline_mode<synchronous>, transform_indices = @transform_8, window_bounds = array<i64: 32, 128>}, {pipeline_mode = #tpu.pipeline_mode<synchronous>, transform_indices = @transform_9, window_bounds = array<i64: 1, 128>}, {pipeline_mode = #tpu.pipeline_mode<synchronous>, transform_indices = @transform_10, window_bounds = array<i64: 32, 32>}, {pipeline_mode = #tpu.pipeline_mode<synchronous>, transform_indices = @transform_11, window_bounds = array<i64: 128, 32>}, {pipeline_mode = #tpu.pipeline_mode<synchronous>, transform_indices = @transform_12, window_bounds = array<i64: 1, 32>}, {pipeline_mode = #tpu.pipeline_mode<synchronous>, transform_indices = @transform_13, window_bounds = array<i64: 32, 32>}, {pipeline_mode = #tpu.pipeline_mode<synchronous>, transform_indices = @transform_14, window_bounds = array<i64: 128, 32>}, {pipeline_mode = #tpu.pipeline_mode<synchronous>, transform_indices = @transform_15, window_bounds = array<i64: 32, 32>}, {pipeline_mode = #tpu.pipeline_mode<synchronous>, transform_indices = @transform_16, window_bounds = array<i64: 1, 32>}, {pipeline_mode = #tpu.pipeline_mode<synchronous>, transform_indices = @transform_17, window_bounds = array<i64: 32, 16>}, {pipeline_mode = #tpu.pipeline_mode<synchronous>, transform_indices = @transform_18, window_bounds = array<i64: 32, 16>}, {pipeline_mode = #tpu.pipeline_mode<synchronous>, transform_indices = @transform_19, window_bounds = array<i64: 1, 16>}, {pipeline_mode = #tpu.pipeline_mode<synchronous>, transform_indices = @transform_20, window_bounds = array<i64: 1, 32>}, {pipeline_mode = #tpu.pipeline_mode<synchronous>, transform_indices = @transform_21, window_bounds = array<i64: 1, 32>}, {transform_indices = @transform_22, window_bounds = array<i64: 24, 32>}, {transform_indices = @transform_23, window_bounds = array<i64: 3, 24, 16>}]} {
    %c0 = arith.constant 0 : index
    %c0_0 = arith.constant 0 : index
    %0 = vector.load %arg5[%c0, %c0_0] : memref<1x32xf32, #tpu.memory_space<vmem>>, vector<1x32xf32>
    %c0_1 = arith.constant 0 : index
    %c0_2 = arith.constant 0 : index
    %1 = vector.load %arg6[%c0_1, %c0_2] : memref<1x32xf32, #tpu.memory_space<vmem>>, vector<1x32xf32>
    %c0_3 = arith.constant 0 : index
    %c0_4 = arith.constant 0 : index
    %2 = vector.load %arg7[%c0_3, %c0_4] : memref<16x32xf32, #tpu.memory_space<vmem>>, vector<16x32xf32>
    %c0_5 = arith.constant 0 : index
    %c0_6 = arith.constant 0 : index
    %3 = vector.load %arg8[%c0_5, %c0_6] : memref<32x128xf32, #tpu.memory_space<vmem>>, vector<32x128xf32>
    %c0_7 = arith.constant 0 : index
    %c0_8 = arith.constant 0 : index
    %4 = vector.load %arg9[%c0_7, %c0_8] : memref<32x128xf32, #tpu.memory_space<vmem>>, vector<32x128xf32>
    %c0_9 = arith.constant 0 : index
    %c0_10 = arith.constant 0 : index
    %5 = vector.load %arg10[%c0_9, %c0_10] : memref<1x128xf32, #tpu.memory_space<vmem>>, vector<1x128xf32>
    %c0_11 = arith.constant 0 : index
    %c0_12 = arith.constant 0 : index
    %6 = vector.load %arg11[%c0_11, %c0_12] : memref<32x32xf32, #tpu.memory_space<vmem>>, vector<32x32xf32>
    %c0_13 = arith.constant 0 : index
    %c0_14 = arith.constant 0 : index
    %7 = vector.load %arg12[%c0_13, %c0_14] : memref<128x32xf32, #tpu.memory_space<vmem>>, vector<128x32xf32>
    %c0_15 = arith.constant 0 : index
    %c0_16 = arith.constant 0 : index
    %8 = vector.load %arg13[%c0_15, %c0_16] : memref<1x32xf32, #tpu.memory_space<vmem>>, vector<1x32xf32>
    %c0_17 = arith.constant 0 : index
    %c0_18 = arith.constant 0 : index
    %9 = vector.load %arg14[%c0_17, %c0_18] : memref<32x32xf32, #tpu.memory_space<vmem>>, vector<32x32xf32>
    %c0_19 = arith.constant 0 : index
    %c0_20 = arith.constant 0 : index
    %10 = vector.load %arg15[%c0_19, %c0_20] : memref<128x32xf32, #tpu.memory_space<vmem>>, vector<128x32xf32>
    %c0_21 = arith.constant 0 : index
    %c0_22 = arith.constant 0 : index
    %11 = vector.load %arg16[%c0_21, %c0_22] : memref<32x32xf32, #tpu.memory_space<vmem>>, vector<32x32xf32>
    %c0_23 = arith.constant 0 : index
    %c0_24 = arith.constant 0 : index
    %12 = vector.load %arg17[%c0_23, %c0_24] : memref<1x32xf32, #tpu.memory_space<vmem>>, vector<1x32xf32>
    %c0_25 = arith.constant 0 : index
    %c0_26 = arith.constant 0 : index
    %13 = vector.load %arg18[%c0_25, %c0_26] : memref<32x16xf32, #tpu.memory_space<vmem>>, vector<32x16xf32>
    %c0_27 = arith.constant 0 : index
    %c0_28 = arith.constant 0 : index
    %14 = vector.load %arg19[%c0_27, %c0_28] : memref<32x16xf32, #tpu.memory_space<vmem>>, vector<32x16xf32>
    %c0_29 = arith.constant 0 : index
    %c0_30 = arith.constant 0 : index
    %15 = vector.load %arg20[%c0_29, %c0_30] : memref<1x16xf32, #tpu.memory_space<vmem>>, vector<1x16xf32>
    %c0_31 = arith.constant 0 : index
    %c0_32 = arith.constant 0 : index
    %16 = vector.load %arg21[%c0_31, %c0_32] : memref<1x32xf32, #tpu.memory_space<vmem>>, vector<1x32xf32>
    %c0_33 = arith.constant 0 : index
    %c0_34 = arith.constant 0 : index
    %17 = vector.load %arg22[%c0_33, %c0_34] : memref<1x32xf32, #tpu.memory_space<vmem>>, vector<1x32xf32>
    %c0_35 = arith.constant 0 : index
    %c0_36 = arith.constant 0 : index
    %18 = vector.load %arg1[%c0_35, %c0_36] : memref<24x32xf32, #tpu.memory_space<vmem>>, vector<24x32xf32>
    %c0_37 = arith.constant 0 : index
    %c0_38 = arith.constant 0 : index
    %19 = vector.load %arg2[%c0_37, %c0_38] : memref<24x32xf32, #tpu.memory_space<vmem>>, vector<24x32xf32>
    %20 = arith.addf %18, %19 : vector<24x32xf32>
    %c0_39 = arith.constant 0 : index
    %c0_40 = arith.constant 0 : index
    %c0_41 = arith.constant 0 : index
    %21 = vector.load %arg3[%c0_39, %c0_40, %c0_41] : memref<3x24x16xf32, #tpu.memory_space<vmem>>, vector<1x24x16xf32>
    %22 = vector.shape_cast %21 : vector<1x24x16xf32> to vector<24x16xf32>
    %c0_42 = arith.constant 0 : index
    %c0_43 = arith.constant 0 : index
    %c0_44 = arith.constant 0 : index
    %23 = vector.load %arg4[%c0_42, %c0_43, %c0_44] : memref<3x24x16xf32, #tpu.memory_space<vmem>>, vector<1x24x16xf32>
    %24 = vector.shape_cast %23 : vector<1x24x16xf32> to vector<24x16xf32>
    %25 = arith.addf %22, %24 : vector<24x16xf32>
    %c1 = arith.constant 1 : index
    %c0_45 = arith.constant 0 : index
    %c0_46 = arith.constant 0 : index
    %26 = vector.load %arg3[%c1, %c0_45, %c0_46] : memref<3x24x16xf32, #tpu.memory_space<vmem>>, vector<1x24x16xf32>
    %27 = vector.shape_cast %26 : vector<1x24x16xf32> to vector<24x16xf32>
    %c1_47 = arith.constant 1 : index
    %c0_48 = arith.constant 0 : index
    %c0_49 = arith.constant 0 : index
    %28 = vector.load %arg4[%c1_47, %c0_48, %c0_49] : memref<3x24x16xf32, #tpu.memory_space<vmem>>, vector<1x24x16xf32>
    %29 = vector.shape_cast %28 : vector<1x24x16xf32> to vector<24x16xf32>
    %30 = arith.addf %27, %29 : vector<24x16xf32>
    %c2 = arith.constant 2 : index
    %c0_50 = arith.constant 0 : index
    %c0_51 = arith.constant 0 : index
    %31 = vector.load %arg3[%c2, %c0_50, %c0_51] : memref<3x24x16xf32, #tpu.memory_space<vmem>>, vector<1x24x16xf32>
    %32 = vector.shape_cast %31 : vector<1x24x16xf32> to vector<24x16xf32>
    %c2_52 = arith.constant 2 : index
    %c0_53 = arith.constant 0 : index
    %c0_54 = arith.constant 0 : index
    %33 = vector.load %arg4[%c2_52, %c0_53, %c0_54] : memref<3x24x16xf32, #tpu.memory_space<vmem>>, vector<1x24x16xf32>
    %34 = vector.shape_cast %33 : vector<1x24x16xf32> to vector<24x16xf32>
    %35 = arith.addf %32, %34 : vector<24x16xf32>
    %cst = arith.constant dense<0.000000e+00> : vector<24xf32>
    %36 = vector.multi_reduction <add>, %20, %cst [1] : vector<24x32xf32> to vector<24xf32>
    %37 = vector.shape_cast %36 : vector<24xf32> to vector<24x1xf32>
    %cst_55 = arith.constant 3.200000e+01 : f32
    %38 = vector.broadcast %cst_55 : f32 to vector<24x1xf32>
    %39 = arith.divf %37, %38 : vector<24x1xf32>
    %40 = vector.broadcast %39 : vector<24x1xf32> to vector<24x32xf32>
    %41 = arith.subf %20, %40 : vector<24x32xf32>
    %42 = arith.mulf %41, %41 : vector<24x32xf32>
    %cst_56 = arith.constant dense<0.000000e+00> : vector<24xf32>
    %43 = vector.multi_reduction <add>, %42, %cst_56 [1] : vector<24x32xf32> to vector<24xf32>
    %44 = vector.shape_cast %43 : vector<24xf32> to vector<24x1xf32>
    %cst_57 = arith.constant 3.200000e+01 : f32
    %45 = vector.broadcast %cst_57 : f32 to vector<24x1xf32>
    %46 = arith.divf %44, %45 : vector<24x1xf32>
    %47 = vector.broadcast %39 : vector<24x1xf32> to vector<24x32xf32>
    %48 = arith.subf %20, %47 : vector<24x32xf32>
    %cst_58 = arith.constant 9.99999974E-6 : f32
    %49 = vector.broadcast %cst_58 : f32 to vector<24x1xf32>
    %50 = arith.addf %46, %49 : vector<24x1xf32>
    %51 = math.rsqrt %50 : vector<24x1xf32>
    %52 = vector.broadcast %51 : vector<24x1xf32> to vector<24x32xf32>
    %53 = arith.mulf %48, %52 : vector<24x32xf32>
    %54 = vector.broadcast %0 : vector<1x32xf32> to vector<24x32xf32>
    %55 = arith.mulf %53, %54 : vector<24x32xf32>
    %56 = vector.broadcast %1 : vector<1x32xf32> to vector<24x32xf32>
    %57 = arith.addf %55, %56 : vector<24x32xf32>
    %58 = arith.mulf %25, %25 : vector<24x16xf32>
    %59 = arith.mulf %30, %30 : vector<24x16xf32>
    %60 = arith.addf %58, %59 : vector<24x16xf32>
    %61 = arith.mulf %35, %35 : vector<24x16xf32>
    %62 = arith.addf %60, %61 : vector<24x16xf32>
    %cst_59 = arith.constant 9.99999993E-9 : f32
    %63 = vector.broadcast %cst_59 : f32 to vector<24x16xf32>
    %64 = arith.maximumf %62, %63 : vector<24x16xf32>
    %cst_60 = arith.constant dense<0.000000e+00> : vector<24xf32>
    %65 = vector.multi_reduction <add>, %64, %cst_60 [1] : vector<24x16xf32> to vector<24xf32>
    %66 = vector.shape_cast %65 : vector<24xf32> to vector<24x1xf32>
    %cst_61 = arith.constant 1.600000e+01 : f32
    %67 = vector.broadcast %cst_61 : f32 to vector<24x1xf32>
    %68 = arith.divf %66, %67 : vector<24x1xf32>
    %69 = math.rsqrt %68 : vector<24x1xf32>
    %70 = vector.broadcast %69 : vector<24x1xf32> to vector<24x16xf32>
    %71 = arith.mulf %25, %70 : vector<24x16xf32>
    %72 = vector.broadcast %69 : vector<24x1xf32> to vector<24x16xf32>
    %73 = arith.mulf %30, %72 : vector<24x16xf32>
    %74 = vector.broadcast %69 : vector<24x1xf32> to vector<24x16xf32>
    %75 = arith.mulf %35, %74 : vector<24x16xf32>
    %76 = tpu.concatenate %71, %73, %75 in 0 : vector<24x16xf32>, vector<24x16xf32>, vector<24x16xf32> -> vector<72x16xf32>
    %cst_62 = arith.constant dense<0.000000e+00> : vector<72x32xf32>
    %77 = tpu.matmul %76, %2, %cst_62 {dimension_numbers = #tpu.dot_dimension_numbers<[1], [0], [0], [1], [0, 0, 1, 1], [], []>} : vector<72x16xf32>, vector<16x32xf32>, vector<72x32xf32> -> vector<72x32xf32>
    %78 = vector.extract_strided_slice %77 {offsets = [0, 0], sizes = [24, 32], strides = [1, 1]} : vector<72x32xf32> to vector<24x32xf32>
    %79 = vector.extract_strided_slice %77 {offsets = [24, 0], sizes = [24, 32], strides = [1, 1]} : vector<72x32xf32> to vector<24x32xf32>
    %80 = vector.extract_strided_slice %77 {offsets = [48, 0], sizes = [24, 32], strides = [1, 1]} : vector<72x32xf32> to vector<24x32xf32>
    %81 = arith.mulf %78, %78 : vector<24x32xf32>
    %82 = arith.mulf %79, %79 : vector<24x32xf32>
    %83 = arith.addf %81, %82 : vector<24x32xf32>
    %84 = arith.mulf %80, %80 : vector<24x32xf32>
    %85 = arith.addf %83, %84 : vector<24x32xf32>
    %cst_63 = arith.constant 9.99999993E-9 : f32
    %86 = vector.broadcast %cst_63 : f32 to vector<24x32xf32>
    %87 = arith.maximumf %85, %86 : vector<24x32xf32>
    %88 = math.sqrt %87 : vector<24x32xf32>
    %cst_64 = arith.constant dense<0.000000e+00> : vector<24x128xf32>
    %89 = tpu.matmul %57, %3, %cst_64 {dimension_numbers = #tpu.dot_dimension_numbers<[1], [0], [0], [1], [0, 0, 1, 1], [], []>} : vector<24x32xf32>, vector<32x128xf32>, vector<24x128xf32> -> vector<24x128xf32>
    %cst_65 = arith.constant dense<0.000000e+00> : vector<24x128xf32>
    %90 = tpu.matmul %88, %4, %cst_65 {dimension_numbers = #tpu.dot_dimension_numbers<[1], [0], [0], [1], [0, 0, 1, 1], [], []>} : vector<24x32xf32>, vector<32x128xf32>, vector<24x128xf32> -> vector<24x128xf32>
    %91 = arith.addf %89, %90 : vector<24x128xf32>
    %92 = vector.broadcast %5 : vector<1x128xf32> to vector<24x128xf32>
    %93 = arith.addf %91, %92 : vector<24x128xf32>
    %94 = arith.negf %93 : vector<24x128xf32>
    %95 = math.exp %94 : vector<24x128xf32>
    %cst_66 = arith.constant 1.000000e+00 : f32
    %96 = vector.broadcast %cst_66 : f32 to vector<24x128xf32>
    %97 = arith.addf %96, %95 : vector<24x128xf32>
    %98 = arith.divf %96, %97 : vector<24x128xf32>
    %99 = arith.mulf %93, %98 : vector<24x128xf32>
    %cst_67 = arith.constant dense<0.000000e+00> : vector<24x32xf32>
    %100 = tpu.matmul %99, %7, %cst_67 {dimension_numbers = #tpu.dot_dimension_numbers<[1], [0], [0], [1], [0, 0, 1, 1], [], []>} : vector<24x128xf32>, vector<128x32xf32>, vector<24x32xf32> -> vector<24x32xf32>
    %101 = vector.broadcast %8 : vector<1x32xf32> to vector<24x32xf32>
    %102 = arith.addf %100, %101 : vector<24x32xf32>
    %103 = arith.negf %102 : vector<24x32xf32>
    %104 = math.exp %103 : vector<24x32xf32>
    %cst_68 = arith.constant 1.000000e+00 : f32
    %105 = vector.broadcast %cst_68 : f32 to vector<24x32xf32>
    %106 = arith.addf %105, %104 : vector<24x32xf32>
    %107 = arith.divf %105, %106 : vector<24x32xf32>
    %cst_69 = arith.constant dense<0.000000e+00> : vector<72x32xf32>
    %108 = tpu.matmul %77, %6, %cst_69 {dimension_numbers = #tpu.dot_dimension_numbers<[1], [0], [0], [1], [0, 0, 1, 1], [], []>} : vector<72x32xf32>, vector<32x32xf32>, vector<72x32xf32> -> vector<72x32xf32>
    %109 = vector.extract_strided_slice %108 {offsets = [0, 0], sizes = [24, 32], strides = [1, 1]} : vector<72x32xf32> to vector<24x32xf32>
    %110 = arith.mulf %109, %107 : vector<24x32xf32>
    %111 = vector.extract_strided_slice %108 {offsets = [24, 0], sizes = [24, 32], strides = [1, 1]} : vector<72x32xf32> to vector<24x32xf32>
    %112 = arith.mulf %111, %107 : vector<24x32xf32>
    %113 = vector.extract_strided_slice %108 {offsets = [48, 0], sizes = [24, 32], strides = [1, 1]} : vector<72x32xf32> to vector<24x32xf32>
    %114 = arith.mulf %113, %107 : vector<24x32xf32>
    %115 = tpu.concatenate %110, %112, %114 in 0 : vector<24x32xf32>, vector<24x32xf32>, vector<24x32xf32> -> vector<72x32xf32>
    %cst_70 = arith.constant dense<0.000000e+00> : vector<72x32xf32>
    %116 = tpu.matmul %115, %9, %cst_70 {dimension_numbers = #tpu.dot_dimension_numbers<[1], [0], [0], [1], [0, 0, 1, 1], [], []>} : vector<72x32xf32>, vector<32x32xf32>, vector<72x32xf32> -> vector<72x32xf32>
    %117 = vector.extract_strided_slice %116 {offsets = [0, 0], sizes = [24, 32], strides = [1, 1]} : vector<72x32xf32> to vector<24x32xf32>
    %118 = vector.extract_strided_slice %116 {offsets = [24, 0], sizes = [24, 32], strides = [1, 1]} : vector<72x32xf32> to vector<24x32xf32>
    %119 = vector.extract_strided_slice %116 {offsets = [48, 0], sizes = [24, 32], strides = [1, 1]} : vector<72x32xf32> to vector<24x32xf32>
    %120 = arith.mulf %117, %117 : vector<24x32xf32>
    %121 = arith.mulf %118, %118 : vector<24x32xf32>
    %122 = arith.addf %120, %121 : vector<24x32xf32>
    %123 = arith.mulf %119, %119 : vector<24x32xf32>
    %124 = arith.addf %122, %123 : vector<24x32xf32>
    %cst_71 = arith.constant 9.99999993E-9 : f32
    %125 = vector.broadcast %cst_71 : f32 to vector<24x32xf32>
    %126 = arith.maximumf %124, %125 : vector<24x32xf32>
    %127 = math.sqrt %126 : vector<24x32xf32>
    %cst_72 = arith.constant dense<0.000000e+00> : vector<24x32xf32>
    %128 = tpu.matmul %99, %10, %cst_72 {dimension_numbers = #tpu.dot_dimension_numbers<[1], [0], [0], [1], [0, 0, 1, 1], [], []>} : vector<24x128xf32>, vector<128x32xf32>, vector<24x32xf32> -> vector<24x32xf32>
    %cst_73 = arith.constant dense<0.000000e+00> : vector<24x32xf32>
    %129 = tpu.matmul %127, %11, %cst_73 {dimension_numbers = #tpu.dot_dimension_numbers<[1], [0], [0], [1], [0, 0, 1, 1], [], []>} : vector<24x32xf32>, vector<32x32xf32>, vector<24x32xf32> -> vector<24x32xf32>
    %130 = arith.addf %128, %129 : vector<24x32xf32>
    %131 = vector.broadcast %12 : vector<1x32xf32> to vector<24x32xf32>
    %132 = arith.addf %130, %131 : vector<24x32xf32>
    %cst_74 = arith.constant dense<0.000000e+00> : vector<24x16xf32>
    %133 = tpu.matmul %132, %14, %cst_74 {dimension_numbers = #tpu.dot_dimension_numbers<[1], [0], [0], [1], [0, 0, 1, 1], [], []>} : vector<24x32xf32>, vector<32x16xf32>, vector<24x16xf32> -> vector<24x16xf32>
    %134 = vector.broadcast %15 : vector<1x16xf32> to vector<24x16xf32>
    %135 = arith.addf %133, %134 : vector<24x16xf32>
    %136 = arith.negf %135 : vector<24x16xf32>
    %137 = math.exp %136 : vector<24x16xf32>
    %cst_75 = arith.constant 1.000000e+00 : f32
    %138 = vector.broadcast %cst_75 : f32 to vector<24x16xf32>
    %139 = arith.addf %138, %137 : vector<24x16xf32>
    %140 = arith.divf %138, %139 : vector<24x16xf32>
    %cst_76 = arith.constant dense<0.000000e+00> : vector<72x16xf32>
    %141 = tpu.matmul %116, %13, %cst_76 {dimension_numbers = #tpu.dot_dimension_numbers<[1], [0], [0], [1], [0, 0, 1, 1], [], []>} : vector<72x32xf32>, vector<32x16xf32>, vector<72x16xf32> -> vector<72x16xf32>
    %142 = vector.extract_strided_slice %141 {offsets = [0, 0], sizes = [24, 16], strides = [1, 1]} : vector<72x16xf32> to vector<24x16xf32>
    %143 = arith.mulf %142, %140 : vector<24x16xf32>
    %144 = vector.extract_strided_slice %141 {offsets = [24, 0], sizes = [24, 16], strides = [1, 1]} : vector<72x16xf32> to vector<24x16xf32>
    %145 = arith.mulf %144, %140 : vector<24x16xf32>
    %146 = vector.extract_strided_slice %141 {offsets = [48, 0], sizes = [24, 16], strides = [1, 1]} : vector<72x16xf32> to vector<24x16xf32>
    %147 = arith.mulf %146, %140 : vector<24x16xf32>
    %148 = arith.addf %57, %132 : vector<24x32xf32>
    %149 = arith.addf %71, %143 : vector<24x16xf32>
    %150 = arith.addf %73, %145 : vector<24x16xf32>
    %151 = arith.addf %75, %147 : vector<24x16xf32>
    %cst_77 = arith.constant dense<0.000000e+00> : vector<24xf32>
    %152 = vector.multi_reduction <add>, %148, %cst_77 [1] : vector<24x32xf32> to vector<24xf32>
    %153 = vector.shape_cast %152 : vector<24xf32> to vector<24x1xf32>
    %cst_78 = arith.constant 3.200000e+01 : f32
    %154 = vector.broadcast %cst_78 : f32 to vector<24x1xf32>
    %155 = arith.divf %153, %154 : vector<24x1xf32>
    %156 = vector.broadcast %155 : vector<24x1xf32> to vector<24x32xf32>
    %157 = arith.subf %148, %156 : vector<24x32xf32>
    %158 = arith.mulf %157, %157 : vector<24x32xf32>
    %cst_79 = arith.constant dense<0.000000e+00> : vector<24xf32>
    %159 = vector.multi_reduction <add>, %158, %cst_79 [1] : vector<24x32xf32> to vector<24xf32>
    %160 = vector.shape_cast %159 : vector<24xf32> to vector<24x1xf32>
    %cst_80 = arith.constant 3.200000e+01 : f32
    %161 = vector.broadcast %cst_80 : f32 to vector<24x1xf32>
    %162 = arith.divf %160, %161 : vector<24x1xf32>
    %163 = vector.broadcast %155 : vector<24x1xf32> to vector<24x32xf32>
    %164 = arith.subf %148, %163 : vector<24x32xf32>
    %cst_81 = arith.constant 9.99999974E-6 : f32
    %165 = vector.broadcast %cst_81 : f32 to vector<24x1xf32>
    %166 = arith.addf %162, %165 : vector<24x1xf32>
    %167 = math.rsqrt %166 : vector<24x1xf32>
    %168 = vector.broadcast %167 : vector<24x1xf32> to vector<24x32xf32>
    %169 = arith.mulf %164, %168 : vector<24x32xf32>
    %170 = vector.broadcast %16 : vector<1x32xf32> to vector<24x32xf32>
    %171 = arith.mulf %169, %170 : vector<24x32xf32>
    %172 = vector.broadcast %17 : vector<1x32xf32> to vector<24x32xf32>
    %173 = arith.addf %171, %172 : vector<24x32xf32>
    %174 = arith.mulf %149, %149 : vector<24x16xf32>
    %175 = arith.mulf %150, %150 : vector<24x16xf32>
    %176 = arith.addf %174, %175 : vector<24x16xf32>
    %177 = arith.mulf %151, %151 : vector<24x16xf32>
    %178 = arith.addf %176, %177 : vector<24x16xf32>
    %cst_82 = arith.constant 9.99999993E-9 : f32
    %179 = vector.broadcast %cst_82 : f32 to vector<24x16xf32>
    %180 = arith.maximumf %178, %179 : vector<24x16xf32>
    %cst_83 = arith.constant dense<0.000000e+00> : vector<24xf32>
    %181 = vector.multi_reduction <add>, %180, %cst_83 [1] : vector<24x16xf32> to vector<24xf32>
    %182 = vector.shape_cast %181 : vector<24xf32> to vector<24x1xf32>
    %cst_84 = arith.constant 1.600000e+01 : f32
    %183 = vector.broadcast %cst_84 : f32 to vector<24x1xf32>
    %184 = arith.divf %182, %183 : vector<24x1xf32>
    %185 = math.rsqrt %184 : vector<24x1xf32>
    %186 = vector.broadcast %185 : vector<24x1xf32> to vector<24x16xf32>
    %187 = arith.mulf %149, %186 : vector<24x16xf32>
    %188 = vector.broadcast %185 : vector<24x1xf32> to vector<24x16xf32>
    %189 = arith.mulf %150, %188 : vector<24x16xf32>
    %190 = vector.broadcast %185 : vector<24x1xf32> to vector<24x16xf32>
    %191 = arith.mulf %151, %190 : vector<24x16xf32>
    %c0_85 = arith.constant 0 : index
    %c0_86 = arith.constant 0 : index
    %192 = vector.load %arg23[%c0_85, %c0_86] : memref<24x32xf32, #tpu.memory_space<vmem>>, vector<24x32xf32>
    tpu.vector_store %arg23[%c0_85, %c0_86], %173 {strides = array<i32>} : memref<24x32xf32, #tpu.memory_space<vmem>>, vector<24x32xf32>,
    %c0_87 = arith.constant 0 : index
    %c0_88 = arith.constant 0 : index
    %c0_89 = arith.constant 0 : index
    %193 = vector.load %arg24[%c0_87, %c0_88, %c0_89] : memref<3x24x16xf32, #tpu.memory_space<vmem>>, vector<1x24x16xf32>
    %194 = vector.shape_cast %193 : vector<1x24x16xf32> to vector<24x16xf32>
    %195 = vector.shape_cast %187 : vector<24x16xf32> to vector<1x24x16xf32>
    tpu.vector_store %arg24[%c0_87, %c0_88, %c0_89], %195 {strides = array<i32>} : memref<3x24x16xf32, #tpu.memory_space<vmem>>, vector<1x24x16xf32>,
    %c1_90 = arith.constant 1 : index
    %c0_91 = arith.constant 0 : index
    %c0_92 = arith.constant 0 : index
    %196 = vector.load %arg24[%c1_90, %c0_91, %c0_92] : memref<3x24x16xf32, #tpu.memory_space<vmem>>, vector<1x24x16xf32>
    %197 = vector.shape_cast %196 : vector<1x24x16xf32> to vector<24x16xf32>
    %198 = vector.shape_cast %189 : vector<24x16xf32> to vector<1x24x16xf32>
    tpu.vector_store %arg24[%c1_90, %c0_91, %c0_92], %198 {strides = array<i32>} : memref<3x24x16xf32, #tpu.memory_space<vmem>>, vector<1x24x16xf32>,
    %c2_93 = arith.constant 2 : index
    %c0_94 = arith.constant 0 : index
    %c0_95 = arith.constant 0 : index
    %199 = vector.load %arg24[%c2_93, %c0_94, %c0_95] : memref<3x24x16xf32, #tpu.memory_space<vmem>>, vector<1x24x16xf32>
    %200 = vector.shape_cast %199 : vector<1x24x16xf32> to vector<24x16xf32>
    %201 = vector.shape_cast %191 : vector<24x16xf32> to vector<1x24x16xf32>
    tpu.vector_store %arg24[%c2_93, %c0_94, %c0_95], %201 {strides = array<i32>} : memref<3x24x16xf32, #tpu.memory_space<vmem>>, vector<1x24x16xf32>,
    return
  }
  func.func @transform_0(%arg0: i32) -> (i32, i32) {
    %c0_i32 = arith.constant 0 : i32
    %c0_i32_0 = arith.constant 0 : i32
    return %arg0, %c0_i32 : i32, i32
  }
  func.func @transform_1(%arg0: i32) -> (i32, i32) {
    %c0_i32 = arith.constant 0 : i32
    %c0_i32_0 = arith.constant 0 : i32
    return %arg0, %c0_i32 : i32, i32
  }
  func.func @transform_2(%arg0: i32) -> (i32, i32, i32) {
    %c0_i32 = arith.constant 0 : i32
    %c0_i32_0 = arith.constant 0 : i32
    %c0_i32_1 = arith.constant 0 : i32
    return %c0_i32, %arg0, %c0_i32_0 : i32, i32, i32
  }
  func.func @transform_3(%arg0: i32) -> (i32, i32, i32) {
    %c0_i32 = arith.constant 0 : i32
    %c0_i32_0 = arith.constant 0 : i32
    %c0_i32_1 = arith.constant 0 : i32
    return %c0_i32, %arg0, %c0_i32_0 : i32, i32, i32
  }
  func.func @transform_4(%arg0: i32) -> (i32, i32) {
    %c0_i32 = arith.constant 0 : i32
    %c0_i32_0 = arith.constant 0 : i32
    %c0_i32_1 = arith.constant 0 : i32
    return %c0_i32, %c0_i32_0 : i32, i32
  }
  func.func @transform_5(%arg0: i32) -> (i32, i32) {
    %c0_i32 = arith.constant 0 : i32
    %c0_i32_0 = arith.constant 0 : i32
    %c0_i32_1 = arith.constant 0 : i32
    return %c0_i32, %c0_i32_0 : i32, i32
  }
  func.func @transform_6(%arg0: i32) -> (i32, i32) {
    %c0_i32 = arith.constant 0 : i32
    %c0_i32_0 = arith.constant 0 : i32
    %c0_i32_1 = arith.constant 0 : i32
    return %c0_i32, %c0_i32_0 : i32, i32
  }
  func.func @transform_7(%arg0: i32) -> (i32, i32) {
    %c0_i32 = arith.constant 0 : i32
    %c0_i32_0 = arith.constant 0 : i32
    %c0_i32_1 = arith.constant 0 : i32
    return %c0_i32, %c0_i32_0 : i32, i32
  }
  func.func @transform_8(%arg0: i32) -> (i32, i32) {
    %c0_i32 = arith.constant 0 : i32
    %c0_i32_0 = arith.constant 0 : i32
    %c0_i32_1 = arith.constant 0 : i32
    return %c0_i32, %c0_i32_0 : i32, i32
  }
  func.func @transform_9(%arg0: i32) -> (i32, i32) {
    %c0_i32 = arith.constant 0 : i32
    %c0_i32_0 = arith.constant 0 : i32
    %c0_i32_1 = arith.constant 0 : i32
    return %c0_i32, %c0_i32_0 : i32, i32
  }
  func.func @transform_10(%arg0: i32) -> (i32, i32) {
    %c0_i32 = arith.constant 0 : i32
    %c0_i32_0 = arith.constant 0 : i32
    %c0_i32_1 = arith.constant 0 : i32
    return %c0_i32, %c0_i32_0 : i32, i32
  }
  func.func @transform_11(%arg0: i32) -> (i32, i32) {
    %c0_i32 = arith.constant 0 : i32
    %c0_i32_0 = arith.constant 0 : i32
    %c0_i32_1 = arith.constant 0 : i32
    return %c0_i32, %c0_i32_0 : i32, i32
  }
  func.func @transform_12(%arg0: i32) -> (i32, i32) {
    %c0_i32 = arith.constant 0 : i32
    %c0_i32_0 = arith.constant 0 : i32
    %c0_i32_1 = arith.constant 0 : i32
    return %c0_i32, %c0_i32_0 : i32, i32
  }
  func.func @transform_13(%arg0: i32) -> (i32, i32) {
    %c0_i32 = arith.constant 0 : i32
    %c0_i32_0 = arith.constant 0 : i32
    %c0_i32_1 = arith.constant 0 : i32
    return %c0_i32, %c0_i32_0 : i32, i32
  }
  func.func @transform_14(%arg0: i32) -> (i32, i32) {
    %c0_i32 = arith.constant 0 : i32
    %c0_i32_0 = arith.constant 0 : i32
    %c0_i32_1 = arith.constant 0 : i32
    return %c0_i32, %c0_i32_0 : i32, i32
  }
  func.func @transform_15(%arg0: i32) -> (i32, i32) {
    %c0_i32 = arith.constant 0 : i32
    %c0_i32_0 = arith.constant 0 : i32
    %c0_i32_1 = arith.constant 0 : i32
    return %c0_i32, %c0_i32_0 : i32, i32
  }
  func.func @transform_16(%arg0: i32) -> (i32, i32) {
    %c0_i32 = arith.constant 0 : i32
    %c0_i32_0 = arith.constant 0 : i32
    %c0_i32_1 = arith.constant 0 : i32
    return %c0_i32, %c0_i32_0 : i32, i32
  }
  func.func @transform_17(%arg0: i32) -> (i32, i32) {
    %c0_i32 = arith.constant 0 : i32
    %c0_i32_0 = arith.constant 0 : i32
    %c0_i32_1 = arith.constant 0 : i32
    return %c0_i32, %c0_i32_0 : i32, i32
  }
  func.func @transform_18(%arg0: i32) -> (i32, i32) {
    %c0_i32 = arith.constant 0 : i32
    %c0_i32_0 = arith.constant 0 : i32
    %c0_i32_1 = arith.constant 0 : i32
    return %c0_i32, %c0_i32_0 : i32, i32
  }
  func.func @transform_19(%arg0: i32) -> (i32, i32) {
    %c0_i32 = arith.constant 0 : i32
    %c0_i32_0 = arith.constant 0 : i32
    %c0_i32_1 = arith.constant 0 : i32
    return %c0_i32, %c0_i32_0 : i32, i32
  }
  func.func @transform_20(%arg0: i32) -> (i32, i32) {
    %c0_i32 = arith.constant 0 : i32
    %c0_i32_0 = arith.constant 0 : i32
    %c0_i32_1 = arith.constant 0 : i32
    return %c0_i32, %c0_i32_0 : i32, i32
  }
  func.func @transform_21(%arg0: i32) -> (i32, i32) {
    %c0_i32 = arith.constant 0 : i32
    %c0_i32_0 = arith.constant 0 : i32
    %c0_i32_1 = arith.constant 0 : i32
    return %c0_i32, %c0_i32_0 : i32, i32
  }
  func.func @transform_22(%arg0: i32) -> (i32, i32) {
    %c0_i32 = arith.constant 0 : i32
    %c0_i32_0 = arith.constant 0 : i32
    return %arg0, %c0_i32 : i32, i32
  }
  func.func @transform_23(%arg0: i32) -> (i32, i32, i32) {
    %c0_i32 = arith.constant 0 : i32
    %c0_i32_0 = arith.constant 0 : i32
    %c0_i32_1 = arith.constant 0 : i32
    return %c0_i32, %arg0, %c0_i32_0 : i32, i32, i32
  }
}

module attributes {stable_mosaic.version = 11 : i64} {
  func.func @_embed_kernel(%arg0: i32, %arg1: memref<24x32xf32, #tpu.memory_space<vmem>>, %arg2: memref<3x24x16xf32, #tpu.memory_space<vmem>>, %arg3: memref<1x32xf32, #tpu.memory_space<vmem>>, %arg4: memref<1x32xf32, #tpu.memory_space<vmem>>, %arg5: memref<16x16xf32, #tpu.memory_space<vmem>>, %arg6: memref<32x8xf32, #tpu.memory_space<vmem>>, %arg7: memref<16x8xf32, #tpu.memory_space<vmem>>, %arg8: memref<1x8xf32, #tpu.memory_space<vmem>>, %arg9: memref<16x2xf32, #tpu.memory_space<vmem>>, %arg10: memref<8x2xf32, #tpu.memory_space<vmem>>, %arg11: memref<1x2xf32, #tpu.memory_space<vmem>>, %arg12: memref<24x8xf32, #tpu.memory_space<vmem>>, %arg13: memref<3x24x2xf32, #tpu.memory_space<vmem>>) attributes {dimension_semantics = [#tpu.dimension_semantics<parallel>], iteration_bounds = array<i64: 1>, scalar_prefetch = 0 : i64, scratch_operands = 0 : i64, tpu.core_type = #tpu.core_type<tc>, window_params = [{transform_indices = @transform_0, window_bounds = array<i64: 24, 32>}, {transform_indices = @transform_1, window_bounds = array<i64: 3, 24, 16>}, {pipeline_mode = #tpu.pipeline_mode<synchronous>, transform_indices = @transform_2, window_bounds = array<i64: 1, 32>}, {pipeline_mode = #tpu.pipeline_mode<synchronous>, transform_indices = @transform_3, window_bounds = array<i64: 1, 32>}, {pipeline_mode = #tpu.pipeline_mode<synchronous>, transform_indices = @transform_4, window_bounds = array<i64: 16, 16>}, {pipeline_mode = #tpu.pipeline_mode<synchronous>, transform_indices = @transform_5, window_bounds = array<i64: 32, 8>}, {pipeline_mode = #tpu.pipeline_mode<synchronous>, transform_indices = @transform_6, window_bounds = array<i64: 16, 8>}, {pipeline_mode = #tpu.pipeline_mode<synchronous>, transform_indices = @transform_7, window_bounds = array<i64: 1, 8>}, {pipeline_mode = #tpu.pipeline_mode<synchronous>, transform_indices = @transform_8, window_bounds = array<i64: 16, 2>}, {pipeline_mode = #tpu.pipeline_mode<synchronous>, transform_indices = @transform_9, window_bounds = array<i64: 8, 2>}, {pipeline_mode = #tpu.pipeline_mode<synchronous>, transform_indices = @transform_10, window_bounds = array<i64: 1, 2>}, {transform_indices = @transform_11, window_bounds = array<i64: 24, 8>}, {transform_indices = @transform_12, window_bounds = array<i64: 3, 24, 2>}]} {
    %c0 = arith.constant 0 : index
    %c0_0 = arith.constant 0 : index
    %0 = vector.load %arg1[%c0, %c0_0] : memref<24x32xf32, #tpu.memory_space<vmem>>, vector<24x32xf32>
    %c0_1 = arith.constant 0 : index
    %c0_2 = arith.constant 0 : index
    %c0_3 = arith.constant 0 : index
    %1 = vector.load %arg2[%c0_1, %c0_2, %c0_3] : memref<3x24x16xf32, #tpu.memory_space<vmem>>, vector<1x24x16xf32>
    %2 = vector.shape_cast %1 : vector<1x24x16xf32> to vector<24x16xf32>
    %c1 = arith.constant 1 : index
    %c0_4 = arith.constant 0 : index
    %c0_5 = arith.constant 0 : index
    %3 = vector.load %arg2[%c1, %c0_4, %c0_5] : memref<3x24x16xf32, #tpu.memory_space<vmem>>, vector<1x24x16xf32>
    %4 = vector.shape_cast %3 : vector<1x24x16xf32> to vector<24x16xf32>
    %c2 = arith.constant 2 : index
    %c0_6 = arith.constant 0 : index
    %c0_7 = arith.constant 0 : index
    %5 = vector.load %arg2[%c2, %c0_6, %c0_7] : memref<3x24x16xf32, #tpu.memory_space<vmem>>, vector<1x24x16xf32>
    %6 = vector.shape_cast %5 : vector<1x24x16xf32> to vector<24x16xf32>
    %c0_8 = arith.constant 0 : index
    %c0_9 = arith.constant 0 : index
    %7 = vector.load %arg3[%c0_8, %c0_9] : memref<1x32xf32, #tpu.memory_space<vmem>>, vector<1x32xf32>
    %c0_10 = arith.constant 0 : index
    %c0_11 = arith.constant 0 : index
    %8 = vector.load %arg4[%c0_10, %c0_11] : memref<1x32xf32, #tpu.memory_space<vmem>>, vector<1x32xf32>
    %cst = arith.constant dense<0.000000e+00> : vector<24xf32>
    %9 = vector.multi_reduction <add>, %0, %cst [1] : vector<24x32xf32> to vector<24xf32>
    %10 = vector.shape_cast %9 : vector<24xf32> to vector<24x1xf32>
    %cst_12 = arith.constant 3.200000e+01 : f32
    %11 = vector.broadcast %cst_12 : f32 to vector<24x1xf32>
    %12 = arith.divf %10, %11 : vector<24x1xf32>
    %13 = vector.broadcast %12 : vector<24x1xf32> to vector<24x32xf32>
    %14 = arith.subf %0, %13 : vector<24x32xf32>
    %15 = arith.mulf %14, %14 : vector<24x32xf32>
    %cst_13 = arith.constant dense<0.000000e+00> : vector<24xf32>
    %16 = vector.multi_reduction <add>, %15, %cst_13 [1] : vector<24x32xf32> to vector<24xf32>
    %17 = vector.shape_cast %16 : vector<24xf32> to vector<24x1xf32>
    %cst_14 = arith.constant 3.200000e+01 : f32
    %18 = vector.broadcast %cst_14 : f32 to vector<24x1xf32>
    %19 = arith.divf %17, %18 : vector<24x1xf32>
    %20 = vector.broadcast %12 : vector<24x1xf32> to vector<24x32xf32>
    %21 = arith.subf %0, %20 : vector<24x32xf32>
    %cst_15 = arith.constant 9.99999974E-6 : f32
    %22 = vector.broadcast %cst_15 : f32 to vector<24x1xf32>
    %23 = arith.addf %19, %22 : vector<24x1xf32>
    %24 = math.rsqrt %23 : vector<24x1xf32>
    %25 = vector.broadcast %24 : vector<24x1xf32> to vector<24x32xf32>
    %26 = arith.mulf %21, %25 : vector<24x32xf32>
    %27 = vector.broadcast %7 : vector<1x32xf32> to vector<24x32xf32>
    %28 = arith.mulf %26, %27 : vector<24x32xf32>
    %29 = vector.broadcast %8 : vector<1x32xf32> to vector<24x32xf32>
    %30 = arith.addf %28, %29 : vector<24x32xf32>
    %31 = arith.mulf %2, %2 : vector<24x16xf32>
    %32 = arith.mulf %4, %4 : vector<24x16xf32>
    %33 = arith.addf %31, %32 : vector<24x16xf32>
    %34 = arith.mulf %6, %6 : vector<24x16xf32>
    %35 = arith.addf %33, %34 : vector<24x16xf32>
    %cst_16 = arith.constant 9.99999993E-9 : f32
    %36 = vector.broadcast %cst_16 : f32 to vector<24x16xf32>
    %37 = arith.maximumf %35, %36 : vector<24x16xf32>
    %cst_17 = arith.constant dense<0.000000e+00> : vector<24xf32>
    %38 = vector.multi_reduction <add>, %37, %cst_17 [1] : vector<24x16xf32> to vector<24xf32>
    %39 = vector.shape_cast %38 : vector<24xf32> to vector<24x1xf32>
    %cst_18 = arith.constant 1.600000e+01 : f32
    %40 = vector.broadcast %cst_18 : f32 to vector<24x1xf32>
    %41 = arith.divf %39, %40 : vector<24x1xf32>
    %42 = math.rsqrt %41 : vector<24x1xf32>
    %43 = vector.broadcast %42 : vector<24x1xf32> to vector<24x16xf32>
    %44 = arith.mulf %2, %43 : vector<24x16xf32>
    %45 = vector.broadcast %42 : vector<24x1xf32> to vector<24x16xf32>
    %46 = arith.mulf %4, %45 : vector<24x16xf32>
    %47 = vector.broadcast %42 : vector<24x1xf32> to vector<24x16xf32>
    %48 = arith.mulf %6, %47 : vector<24x16xf32>
    %c0_19 = arith.constant 0 : index
    %c0_20 = arith.constant 0 : index
    %49 = vector.load %arg5[%c0_19, %c0_20] : memref<16x16xf32, #tpu.memory_space<vmem>>, vector<16x16xf32>
    %c0_21 = arith.constant 0 : index
    %c0_22 = arith.constant 0 : index
    %50 = vector.load %arg6[%c0_21, %c0_22] : memref<32x8xf32, #tpu.memory_space<vmem>>, vector<32x8xf32>
    %c0_23 = arith.constant 0 : index
    %c0_24 = arith.constant 0 : index
    %51 = vector.load %arg7[%c0_23, %c0_24] : memref<16x8xf32, #tpu.memory_space<vmem>>, vector<16x8xf32>
    %c0_25 = arith.constant 0 : index
    %c0_26 = arith.constant 0 : index
    %52 = vector.load %arg8[%c0_25, %c0_26] : memref<1x8xf32, #tpu.memory_space<vmem>>, vector<1x8xf32>
    %c0_27 = arith.constant 0 : index
    %c0_28 = arith.constant 0 : index
    %53 = vector.load %arg9[%c0_27, %c0_28] : memref<16x2xf32, #tpu.memory_space<vmem>>, vector<16x2xf32>
    %c0_29 = arith.constant 0 : index
    %c0_30 = arith.constant 0 : index
    %54 = vector.load %arg10[%c0_29, %c0_30] : memref<8x2xf32, #tpu.memory_space<vmem>>, vector<8x2xf32>
    %c0_31 = arith.constant 0 : index
    %c0_32 = arith.constant 0 : index
    %55 = vector.load %arg11[%c0_31, %c0_32] : memref<1x2xf32, #tpu.memory_space<vmem>>, vector<1x2xf32>
    %56 = tpu.concatenate %44, %46, %48 in 0 : vector<24x16xf32>, vector<24x16xf32>, vector<24x16xf32> -> vector<72x16xf32>
    %cst_33 = arith.constant dense<0.000000e+00> : vector<72x16xf32>
    %57 = tpu.matmul %56, %49, %cst_33 {dimension_numbers = #tpu.dot_dimension_numbers<[1], [0], [0], [1], [0, 0, 1, 1], [], []>} : vector<72x16xf32>, vector<16x16xf32>, vector<72x16xf32> -> vector<72x16xf32>
    %58 = vector.extract_strided_slice %57 {offsets = [0, 0], sizes = [24, 16], strides = [1, 1]} : vector<72x16xf32> to vector<24x16xf32>
    %59 = vector.extract_strided_slice %57 {offsets = [24, 0], sizes = [24, 16], strides = [1, 1]} : vector<72x16xf32> to vector<24x16xf32>
    %60 = vector.extract_strided_slice %57 {offsets = [48, 0], sizes = [24, 16], strides = [1, 1]} : vector<72x16xf32> to vector<24x16xf32>
    %61 = arith.mulf %58, %58 : vector<24x16xf32>
    %62 = arith.mulf %59, %59 : vector<24x16xf32>
    %63 = arith.addf %61, %62 : vector<24x16xf32>
    %64 = arith.mulf %60, %60 : vector<24x16xf32>
    %65 = arith.addf %63, %64 : vector<24x16xf32>
    %cst_34 = arith.constant 9.99999993E-9 : f32
    %66 = vector.broadcast %cst_34 : f32 to vector<24x16xf32>
    %67 = arith.maximumf %65, %66 : vector<24x16xf32>
    %68 = math.sqrt %67 : vector<24x16xf32>
    %cst_35 = arith.constant dense<0.000000e+00> : vector<24x8xf32>
    %69 = tpu.matmul %30, %50, %cst_35 {dimension_numbers = #tpu.dot_dimension_numbers<[1], [0], [0], [1], [0, 0, 1, 1], [], []>} : vector<24x32xf32>, vector<32x8xf32>, vector<24x8xf32> -> vector<24x8xf32>
    %cst_36 = arith.constant dense<0.000000e+00> : vector<24x8xf32>
    %70 = tpu.matmul %68, %51, %cst_36 {dimension_numbers = #tpu.dot_dimension_numbers<[1], [0], [0], [1], [0, 0, 1, 1], [], []>} : vector<24x16xf32>, vector<16x8xf32>, vector<24x8xf32> -> vector<24x8xf32>
    %71 = arith.addf %69, %70 : vector<24x8xf32>
    %72 = vector.broadcast %52 : vector<1x8xf32> to vector<24x8xf32>
    %73 = arith.addf %71, %72 : vector<24x8xf32>
    %74 = arith.negf %73 : vector<24x8xf32>
    %75 = math.exp %74 : vector<24x8xf32>
    %cst_37 = arith.constant 1.000000e+00 : f32
    %76 = vector.broadcast %cst_37 : f32 to vector<24x8xf32>
    %77 = arith.addf %76, %75 : vector<24x8xf32>
    %78 = arith.divf %76, %77 : vector<24x8xf32>
    %79 = arith.mulf %73, %78 : vector<24x8xf32>
    %cst_38 = arith.constant dense<0.000000e+00> : vector<24x2xf32>
    %80 = tpu.matmul %79, %54, %cst_38 {dimension_numbers = #tpu.dot_dimension_numbers<[1], [0], [0], [1], [0, 0, 1, 1], [], []>} : vector<24x8xf32>, vector<8x2xf32>, vector<24x2xf32> -> vector<24x2xf32>
    %81 = vector.broadcast %55 : vector<1x2xf32> to vector<24x2xf32>
    %82 = arith.addf %80, %81 : vector<24x2xf32>
    %83 = arith.negf %82 : vector<24x2xf32>
    %84 = math.exp %83 : vector<24x2xf32>
    %cst_39 = arith.constant 1.000000e+00 : f32
    %85 = vector.broadcast %cst_39 : f32 to vector<24x2xf32>
    %86 = arith.addf %85, %84 : vector<24x2xf32>
    %87 = arith.divf %85, %86 : vector<24x2xf32>
    %cst_40 = arith.constant dense<0.000000e+00> : vector<72x2xf32>
    %88 = tpu.matmul %57, %53, %cst_40 {dimension_numbers = #tpu.dot_dimension_numbers<[1], [0], [0], [1], [0, 0, 1, 1], [], []>} : vector<72x16xf32>, vector<16x2xf32>, vector<72x2xf32> -> vector<72x2xf32>
    %89 = vector.extract_strided_slice %88 {offsets = [0, 0], sizes = [24, 2], strides = [1, 1]} : vector<72x2xf32> to vector<24x2xf32>
    %90 = arith.mulf %89, %87 : vector<24x2xf32>
    %91 = vector.extract_strided_slice %88 {offsets = [24, 0], sizes = [24, 2], strides = [1, 1]} : vector<72x2xf32> to vector<24x2xf32>
    %92 = arith.mulf %91, %87 : vector<24x2xf32>
    %93 = vector.extract_strided_slice %88 {offsets = [48, 0], sizes = [24, 2], strides = [1, 1]} : vector<72x2xf32> to vector<24x2xf32>
    %94 = arith.mulf %93, %87 : vector<24x2xf32>
    %c0_41 = arith.constant 0 : index
    %c0_42 = arith.constant 0 : index
    %95 = vector.load %arg12[%c0_41, %c0_42] : memref<24x8xf32, #tpu.memory_space<vmem>>, vector<24x8xf32>
    tpu.vector_store %arg12[%c0_41, %c0_42], %79 {strides = array<i32>} : memref<24x8xf32, #tpu.memory_space<vmem>>, vector<24x8xf32>,
    %c0_43 = arith.constant 0 : index
    %c0_44 = arith.constant 0 : index
    %c0_45 = arith.constant 0 : index
    %96 = vector.load %arg13[%c0_43, %c0_44, %c0_45] : memref<3x24x2xf32, #tpu.memory_space<vmem>>, vector<1x24x2xf32>
    %97 = vector.shape_cast %96 : vector<1x24x2xf32> to vector<24x2xf32>
    %98 = vector.shape_cast %90 : vector<24x2xf32> to vector<1x24x2xf32>
    tpu.vector_store %arg13[%c0_43, %c0_44, %c0_45], %98 {strides = array<i32>} : memref<3x24x2xf32, #tpu.memory_space<vmem>>, vector<1x24x2xf32>,
    %c1_46 = arith.constant 1 : index
    %c0_47 = arith.constant 0 : index
    %c0_48 = arith.constant 0 : index
    %99 = vector.load %arg13[%c1_46, %c0_47, %c0_48] : memref<3x24x2xf32, #tpu.memory_space<vmem>>, vector<1x24x2xf32>
    %100 = vector.shape_cast %99 : vector<1x24x2xf32> to vector<24x2xf32>
    %101 = vector.shape_cast %92 : vector<24x2xf32> to vector<1x24x2xf32>
    tpu.vector_store %arg13[%c1_46, %c0_47, %c0_48], %101 {strides = array<i32>} : memref<3x24x2xf32, #tpu.memory_space<vmem>>, vector<1x24x2xf32>,
    %c2_49 = arith.constant 2 : index
    %c0_50 = arith.constant 0 : index
    %c0_51 = arith.constant 0 : index
    %102 = vector.load %arg13[%c2_49, %c0_50, %c0_51] : memref<3x24x2xf32, #tpu.memory_space<vmem>>, vector<1x24x2xf32>
    %103 = vector.shape_cast %102 : vector<1x24x2xf32> to vector<24x2xf32>
    %104 = vector.shape_cast %94 : vector<24x2xf32> to vector<1x24x2xf32>
    tpu.vector_store %arg13[%c2_49, %c0_50, %c0_51], %104 {strides = array<i32>} : memref<3x24x2xf32, #tpu.memory_space<vmem>>, vector<1x24x2xf32>,
    return
  }
  func.func @transform_0(%arg0: i32) -> (i32, i32) {
    %c0_i32 = arith.constant 0 : i32
    %c0_i32_0 = arith.constant 0 : i32
    return %arg0, %c0_i32 : i32, i32
  }
  func.func @transform_1(%arg0: i32) -> (i32, i32, i32) {
    %c0_i32 = arith.constant 0 : i32
    %c0_i32_0 = arith.constant 0 : i32
    %c0_i32_1 = arith.constant 0 : i32
    return %c0_i32, %arg0, %c0_i32_0 : i32, i32, i32
  }
  func.func @transform_2(%arg0: i32) -> (i32, i32) {
    %c0_i32 = arith.constant 0 : i32
    %c0_i32_0 = arith.constant 0 : i32
    %c0_i32_1 = arith.constant 0 : i32
    return %c0_i32, %c0_i32_0 : i32, i32
  }
  func.func @transform_3(%arg0: i32) -> (i32, i32) {
    %c0_i32 = arith.constant 0 : i32
    %c0_i32_0 = arith.constant 0 : i32
    %c0_i32_1 = arith.constant 0 : i32
    return %c0_i32, %c0_i32_0 : i32, i32
  }
  func.func @transform_4(%arg0: i32) -> (i32, i32) {
    %c0_i32 = arith.constant 0 : i32
    %c0_i32_0 = arith.constant 0 : i32
    %c0_i32_1 = arith.constant 0 : i32
    return %c0_i32, %c0_i32_0 : i32, i32
  }
  func.func @transform_5(%arg0: i32) -> (i32, i32) {
    %c0_i32 = arith.constant 0 : i32
    %c0_i32_0 = arith.constant 0 : i32
    %c0_i32_1 = arith.constant 0 : i32
    return %c0_i32, %c0_i32_0 : i32, i32
  }
  func.func @transform_6(%arg0: i32) -> (i32, i32) {
    %c0_i32 = arith.constant 0 : i32
    %c0_i32_0 = arith.constant 0 : i32
    %c0_i32_1 = arith.constant 0 : i32
    return %c0_i32, %c0_i32_0 : i32, i32
  }
  func.func @transform_7(%arg0: i32) -> (i32, i32) {
    %c0_i32 = arith.constant 0 : i32
    %c0_i32_0 = arith.constant 0 : i32
    %c0_i32_1 = arith.constant 0 : i32
    return %c0_i32, %c0_i32_0 : i32, i32
  }
  func.func @transform_8(%arg0: i32) -> (i32, i32) {
    %c0_i32 = arith.constant 0 : i32
    %c0_i32_0 = arith.constant 0 : i32
    %c0_i32_1 = arith.constant 0 : i32
    return %c0_i32, %c0_i32_0 : i32, i32
  }
  func.func @transform_9(%arg0: i32) -> (i32, i32) {
    %c0_i32 = arith.constant 0 : i32
    %c0_i32_0 = arith.constant 0 : i32
    %c0_i32_1 = arith.constant 0 : i32
    return %c0_i32, %c0_i32_0 : i32, i32
  }
  func.func @transform_10(%arg0: i32) -> (i32, i32) {
    %c0_i32 = arith.constant 0 : i32
    %c0_i32_0 = arith.constant 0 : i32
    %c0_i32_1 = arith.constant 0 : i32
    return %c0_i32, %c0_i32_0 : i32, i32
  }
  func.func @transform_11(%arg0: i32) -> (i32, i32) {
    %c0_i32 = arith.constant 0 : i32
    %c0_i32_0 = arith.constant 0 : i32
    return %arg0, %c0_i32 : i32, i32
  }
  func.func @transform_12(%arg0: i32) -> (i32, i32, i32) {
    %c0_i32 = arith.constant 0 : i32
    %c0_i32_0 = arith.constant 0 : i32
    %c0_i32_1 = arith.constant 0 : i32
    return %c0_i32, %arg0, %c0_i32_0 : i32, i32, i32
  }
}

</mosaic_0001>

<llo_original>
// kernel: gvp_network_forward.6
$region0: #{gvp_network_forward.6}
  #allocation0 [shape = 'u32[]', space=smem, size = 0x4, offset = 0x4, fixed_abs, tag = 'smem constant byte address 0x4 - core index']
  #allocation1 [shape = 'u32[144,128]{1,0:T(1,128)}', space=vmem, size = 0x12000, scoped, tag = 'internal scratch']
  %s0 = inlined_call_operand.vmem [shape: f32[24,16], index: 0, kind: input, shape index: {}]
  %s1 = inlined_call_operand.vmem [shape: f32[3,24,4], index: 1, kind: input, shape index: {}]
  %s2 = inlined_call_operand.vmem [shape: f32[1,16], index: 2, kind: input, shape index: {}]
  %s3 = inlined_call_operand.vmem [shape: f32[1,16], index: 3, kind: input, shape index: {}]
  %s4 = inlined_call_operand.vmem [shape: f32[4,16], index: 4, kind: input, shape index: {}]
  %s5 = inlined_call_operand.vmem [shape: f32[16,32], index: 5, kind: input, shape index: {}]
  %s6 = inlined_call_operand.vmem [shape: f32[16,32], index: 6, kind: input, shape index: {}]
  %s7 = inlined_call_operand.vmem [shape: f32[1,32], index: 7, kind: input, shape index: {}]
  %s8 = inlined_call_operand.vmem [shape: f32[16,16], index: 8, kind: input, shape index: {}]
  %s9 = inlined_call_operand.vmem [shape: f32[32,16], index: 9, kind: input, shape index: {}]
  %s10 = inlined_call_operand.vmem [shape: f32[1,16], index: 10, kind: input, shape index: {}]
  %s11 = inlined_call_operand.vmem [shape: f32[24,32], index: 11, kind: output, shape index: {0}]
  %s12 = inlined_call_operand.vmem [shape: f32[3,24,16], index: 12, kind: output, shape index: {1}]
  %13 = xla_tuple %s11, %s12
  %s14 = sld [smem:[#allocation0]]
  $region62: #{gvp_network_forward.6} parent=0
    _
  %s16 = ssub.s32 1, %s14
  %s17 = scalar_select 0, %s16, %s14
  // Predicated region
  $region2: #{gvp_network_forward.6} parent=0 // pred_check
    _
  $region3: #{gvp_network_forward.6} parent=0 // pred_check_branch
    %19 = sbr.rel (0) target = $region5
  $region4: #{gvp_network_forward.6} parent=0 // pred_region
    _
  $region5: #{gvp_network_forward.6} parent=0 // pred_fallthru
    _
  // Predicated region
  $region6: #{gvp_network_forward.6} parent=0 // pred_check
    _
  $region7: #{gvp_network_forward.6} parent=0 // pred_check_branch
    %21 = sbr.rel (0) target = $region9
  $region8: #{gvp_network_forward.6} parent=0 // pred_region
    _
  $region9: #{gvp_network_forward.6} parent=0 // pred_fallthru
    _
  // Predicated region
  $region10: #{gvp_network_forward.6} parent=0 // pred_check
    _
  $region11: #{gvp_network_forward.6} parent=0 // pred_check_branch
    %23 = sbr.rel (0) target = $region13
  $region12: #{gvp_network_forward.6} parent=0 // pred_region
    _
  $region13: #{gvp_network_forward.6} parent=0 // pred_fallthru
    _
  // Predicated region
  $region14: #{gvp_network_forward.6} parent=0 // pred_check
    _
  $region15: #{gvp_network_forward.6} parent=0 // pred_check_branch
    %25 = sbr.rel (0) target = $region17
  $region16: #{gvp_network_forward.6} parent=0 // pred_region
    _
  $region17: #{gvp_network_forward.6} parent=0 // pred_fallthru
    _
  // Predicated region
  $region18: #{gvp_network_forward.6} parent=0 // pred_check
    _
  $region19: #{gvp_network_forward.6} parent=0 // pred_check_branch
    %27 = sbr.rel (0) target = $region21
  $region20: #{gvp_network_forward.6} parent=0 // pred_region
    _
  $region21: #{gvp_network_forward.6} parent=0 // pred_fallthru
    _
  // Predicated region
  $region22: #{gvp_network_forward.6} parent=0 // pred_check
    _
  $region23: #{gvp_network_forward.6} parent=0 // pred_check_branch
    %29 = sbr.rel (0) target = $region25
  $region24: #{gvp_network_forward.6} parent=0 // pred_region
    _
  $region25: #{gvp_network_forward.6} parent=0 // pred_fallthru
    _
  // Predicated region
  $region26: #{gvp_network_forward.6} parent=0 // pred_check
    _
  $region27: #{gvp_network_forward.6} parent=0 // pred_check_branch
    %31 = sbr.rel (0) target = $region29
  $region28: #{gvp_network_forward.6} parent=0 // pred_region
    _
  $region29: #{gvp_network_forward.6} parent=0 // pred_fallthru
    _
  // Predicated region
  $region30: #{gvp_network_forward.6} parent=0 // pred_check
    _
  $region31: #{gvp_network_forward.6} parent=0 // pred_check_branch
    %33 = sbr.rel (0) target = $region33
  $region32: #{gvp_network_forward.6} parent=0 // pred_region
    _
  $region33: #{gvp_network_forward.6} parent=0 // pred_fallthru
    _
  // Predicated region
  $region34: #{gvp_network_forward.6} parent=0 // pred_check
    _
  $region35: #{gvp_network_forward.6} parent=0 // pred_check_branch
    %35 = sbr.rel (0) target = $region37
  $region36: #{gvp_network_forward.6} parent=0 // pred_region
    _
  $region37: #{gvp_network_forward.6} parent=0 // pred_fallthru
    _
  // Predicated region
  $region38: #{gvp_network_forward.6} parent=0 // pred_check
    _
  $region39: #{gvp_network_forward.6} parent=0 // pred_check_branch
    %37 = sbr.rel (0) target = $region41
  $region40: #{gvp_network_forward.6} parent=0 // pred_region
    _
  $region41: #{gvp_network_forward.6} parent=0 // pred_fallthru
    _
  // Predicated region
  $region42: #{gvp_network_forward.6} parent=0 // pred_check
    _
  $region43: #{gvp_network_forward.6} parent=0 // pred_check_branch
    %39 = sbr.rel (0) target = $region45
  $region44: #{gvp_network_forward.6} parent=0 // pred_region
    _
  $region45: #{gvp_network_forward.6} parent=0 // pred_fallthru
    _
  %v40 = vld [vmem:[%s0] sm:$0xff]
  %v41 = vld [vmem:[%s0 + $0x8] sm:$0xff]
  %v42 = vld [vmem:[%s0 + $0x10] sm:$0xff]
  %v43 = vld [vmem:[%s1] sm:$0xff]
  %v44 = vld [vmem:[%s1 + $0x8] sm:$0xff]
  %v45 = vld [vmem:[%s1 + $0x10] sm:$0xff]
  %s46 = scalar_lea.vmem %s1, 24
  %v47 = vld [vmem:[%s46] sm:$0xff]
  %v48 = vld [vmem:[%s46 + $0x8] sm:$0xff]
  %v49 = vld [vmem:[%s46 + $0x10] sm:$0xff]
  %s50 = scalar_lea.vmem %s1, 48
  %v51 = vld [vmem:[%s50] sm:$0xff]
  %v52 = vld [vmem:[%s50 + $0x8] sm:$0xff]
  %v53 = vld [vmem:[%s50 + $0x10] sm:$0xff]
  %v54 = vld [vmem:[%s2] sm:$0x1]
  %v55 = vld [vmem:[%s3] sm:$0x1]
  %vm56 = vcmask 130048
  %v57 = vsel %vm56, %v40, 0.0
  %58 = vadd.xlane.f32.xlu0 %v57
  %v59 = vpop.xlane.xlu0 %58
  %v60 = vsel %vm56, %v41, 0.0
  %61 = vadd.xlane.f32.xlu0 %v60
  %v62 = vpop.xlane.xlu0 %61
  %v63 = vsel %vm56, %v42, 0.0
  %64 = vadd.xlane.f32.xlu0 %v63
  %v65 = vpop.xlane.xlu0 %64
  %v66 = vrcp.pop 16.0
  %v67 = vmul.f32 %v59, %v66
  %v68 = vmul.f32 %v62, %v66
  %v69 = vmul.f32 %v65, %v66
  %v70 = vsub.f32 %v40, %v67
  %v71 = vsub.f32 %v41, %v68
  %v72 = vsub.f32 %v42, %v69
  %v73 = vmul.f32 %v70, %v70
  %v74 = vmul.f32 %v71, %v71
  %v75 = vmul.f32 %v72, %v72
  %v76 = vsel %vm56, %v73, 0.0
  %77 = vadd.xlane.f32.xlu0 %v76
  %v78 = vpop.xlane.xlu0 %77
  %v79 = vsel %vm56, %v74, 0.0
  %80 = vadd.xlane.f32.xlu0 %v79
  %v81 = vpop.xlane.xlu0 %80
  %v82 = vsel %vm56, %v75, 0.0
  %83 = vadd.xlane.f32.xlu0 %v82
  %v84 = vpop.xlane.xlu0 %83
  %v85 = vmul.f32 %v78, %v66
  %v86 = vmul.f32 %v81, %v66
  %v87 = vmul.f32 %v84, %v66
  %v88 = vadd.f32 %v85, 1e-05
  %v89 = vadd.f32 %v86, 1e-05
  %v90 = vadd.f32 %v87, 1e-05
  %v91 = vrsqrt.pop %v88
  %v92 = vrsqrt.pop %v89
  %v93 = vrsqrt.pop %v90
  %v94 = vmul.f32 %v70, %v91
  %v95 = vmul.f32 %v71, %v92
  %v96 = vmul.f32 %v72, %v93
  %v98 = vlaneseq
  %v99 = vshrl.u32 %v98, 7
  %v100 = vsub.s32 0, %v99
  %v101 = vrot.slane %v54, %v100
  %v103 = vmul.f32 %v94, %v101
  %v104 = vmul.f32 %v95, %v101
  %v105 = vmul.f32 %v96, %v101
  %v107 = vlaneseq
  %v108 = vshrl.u32 %v107, 7
  %v109 = vsub.s32 0, %v108
  %v110 = vrot.slane %v55, %v109
  %v112 = vadd.f32 %v103, %v110
  %v113 = vadd.f32 %v104, %v110
  %v114 = vadd.f32 %v105, %v110
  %v115 = vmul.f32 %v43, %v43
  %v116 = vmul.f32 %v44, %v44
  %v117 = vmul.f32 %v45, %v45
  %v118 = vmul.f32 %v47, %v47
  %v119 = vmul.f32 %v48, %v48
  %v120 = vmul.f32 %v49, %v49
  %v121 = vadd.f32 %v115, %v118
  %v122 = vadd.f32 %v116, %v119
  %v123 = vadd.f32 %v117, %v120
  %v124 = vmul.f32 %v51, %v51
  %v125 = vmul.f32 %v52, %v52
  %v126 = vmul.f32 %v53, %v53
  %v127 = vadd.f32 %v121, %v124
  %v128 = vadd.f32 %v122, %v125
  %v129 = vadd.f32 %v123, %v126
  %v130 = vmax.f32 %v127, 1e-08
  %v131 = vmax.f32 %v128, 1e-08
  %v132 = vmax.f32 %v129, 1e-08
  %vm133 = vcmask 31744
  %v134 = vsel %vm133, %v130, 0.0
  %135 = vadd.xlane.f32.xlu0 %v134
  %v136 = vpop.xlane.xlu0 %135
  %v137 = vsel %vm133, %v131, 0.0
  %138 = vadd.xlane.f32.xlu0 %v137
  %v139 = vpop.xlane.xlu0 %138
  %v140 = vsel %vm133, %v132, 0.0
  %141 = vadd.xlane.f32.xlu0 %v140
  %v142 = vpop.xlane.xlu0 %141
  %v143 = vrcp.pop 4.0
  %v144 = vmul.f32 %v136, %v143
  %v145 = vmul.f32 %v139, %v143
  %v146 = vmul.f32 %v142, %v143
  %v147 = vrsqrt.pop %v144
  %v148 = vrsqrt.pop %v145
  %v149 = vrsqrt.pop %v146
  %v150 = vmul.f32 %v43, %v147
  %v151 = vmul.f32 %v44, %v148
  %v152 = vmul.f32 %v45, %v149
  %v153 = vmul.f32 %v47, %v147
  %v154 = vmul.f32 %v48, %v148
  %v155 = vmul.f32 %v49, %v149
  %v156 = vmul.f32 %v51, %v147
  %v157 = vmul.f32 %v52, %v148
  %v158 = vmul.f32 %v53, %v149
  %v159 = vld [vmem:[%s4] sm:$0xf]
  %v160 = vld [vmem:[%s5] sm:$0xff]
  %v161 = vld [vmem:[%s5 + $0x8] sm:$0xff]
  %v162 = vld [vmem:[%s6] sm:$0xff]
  %v163 = vld [vmem:[%s6 + $0x8] sm:$0xff]
  %v164 = vld [vmem:[%s7] sm:$0x1]
  %v165 = vld [vmem:[%s8] sm:$0xff]
  %v166 = vld [vmem:[%s8 + $0x8] sm:$0xff]
  %v167 = vld [vmem:[%s9] sm:$0xff]
  %v168 = vld [vmem:[%s9 + $0x8] sm:$0xff]
  %v169 = vld [vmem:[%s9 + $0x10] sm:$0xff]
  %v170 = vld [vmem:[%s9 + $0x18] sm:$0xff]
  %v171 = vld [vmem:[%s10] sm:$0x1]
  %v173 = vsel %vm133, %v150, 0
  %v176 = vsel %vm133, %v151, 0
  %v179 = vsel %vm133, %v152, 0
  %v182 = vsel %vm133, %v153, 0
  %v185 = vsel %vm133, %v154, 0
  %v188 = vsel %vm133, %v155, 0
  %v191 = vsel %vm133, %v156, 0
  %v194 = vsel %vm133, %v157, 0
  %v197 = vsel %vm133, %v158, 0
  %vm199 = vcmask 1043456
  %v201 = vsel %vm199, %v159, 0
  %203 = vmatprep.subr.mxu0 0.0
  %204 = vmatpush1.msra.mxu0 %v201
  %205 = vmatprep.subr.mxu0 0.0
  %206 = vmatpush1.msra.mxu0 0.0
  %207 = vmatprep.subr.mxu0 0.0
  %208 = vmatpush1.msra.mxu0 0.0
  %209 = vmatprep.subr.mxu0 0.0
  %210 = vmatpush1.msra.mxu0 0.0
  %211 = vmatprep.subr.mxu0 0.0
  %212 = vmatpush1.msra.mxu0 0.0
  %213 = vmatprep.subr.mxu0 0.0
  %214 = vmatpush1.msra.mxu0 0.0
  %215 = vmatprep.subr.mxu0 0.0
  %216 = vmatpush1.msra.mxu0 0.0
  %217 = vmatprep.subr.mxu0 0.0
  %218 = vmatpush1.msra.mxu0 0.0
  %219 = vmatprep.subr.mxu0 0.0
  %220 = vmatpush1.msra.mxu0 0.0
  %221 = vmatprep.subr.mxu0 0.0
  %222 = vmatpush1.msra.mxu0 0.0
  %223 = vmatprep.subr.mxu0 0.0
  %224 = vmatpush1.msra.mxu0 0.0
  %225 = vmatprep.subr.mxu0 0.0
  %226 = vmatpush1.msra.mxu0 0.0
  %227 = vmatprep.subr.mxu0 0.0
  %228 = vmatpush1.msra.mxu0 0.0
  %229 = vmatprep.subr.mxu0 0.0
  %230 = vmatpush1.msra.mxu0 0.0
  %231 = vmatprep.subr.mxu0 0.0
  %232 = vmatpush1.msra.mxu0 0.0
  %233 = vmatprep.subr.mxu0 0.0
  %234 = vmatpush1.msra.mxu0 0.0
  %235 = vmatprep.subr.mxu0 0.0
  %236 = vmatpush1.msra.mxu0 0.0
  %237 = vmatprep.subr.mxu0 0.0
  %238 = vmatpush1.msra.mxu0 0.0
  %239 = vmatprep.subr.mxu0 0.0
  %240 = vmatpush1.msra.mxu0 0.0
  %241 = vmatprep.subr.mxu0 0.0
  %242 = vmatpush1.msra.mxu0 0.0
  %243 = vmatprep.subr.mxu0 0.0
  %244 = vmatpush1.msra.mxu0 0.0
  %245 = vmatprep.subr.mxu0 0.0
  %246 = vmatpush1.msra.mxu0 0.0
  %247 = vmatprep.subr.mxu0 0.0
  %248 = vmatpush1.msra.mxu0 0.0
  %249 = vmatprep.subr.mxu0 0.0
  %250 = vmatpush1.msra.mxu0 0.0
  %251 = vmatprep.subr.mxu0 0.0
  %252 = vmatpush1.msra.mxu0 0.0
  %253 = vmatprep.subr.mxu0 0.0
  %254 = vmatpush1.msra.mxu0 0.0
  %255 = vmatprep.subr.mxu0 0.0
  %256 = vmatpush1.msra.mxu0 0.0
  %257 = vmatprep.subr.mxu0 0.0
  %258 = vmatpush1.msra.mxu0 0.0
  %259 = vmatprep.subr.mxu0 0.0
  %260 = vmatpush1.msra.mxu0 0.0
  %261 = vmatprep.subr.mxu0 0.0
  %262 = vmatpush1.msra.mxu0 0.0
  %263 = vmatprep.subr.mxu0 0.0
  %264 = vmatpush1.msra.mxu0 0.0
  %265 = vmatprep.subr.mxu0 0.0
  %266 = vmatpush1.msra.mxu0 0.0
  %267 = vmatprep.mubr.f32.mxu0 0.0
  %268 = vmatmul.mubr.f32.gmra.mrb[0].mxu0 %v173
  %v269 = vpop.f32.mrb[0].mxu0
  %v270 = vadd.f32 0.0, %v269
  %v271 = vpop.f32.mrb[0].mxu0
  %272 = vmatprep.mubr.f32.mxu0 0.0
  %273 = vmatmul.mubr.f32.gmra.mrb[0].mxu0 %v176
  %v274 = vpop.f32.mrb[0].mxu0
  %v275 = vadd.f32 0.0, %v274
  %v276 = vpop.f32.mrb[0].mxu0
  %277 = vmatprep.mubr.f32.mxu0 0.0
  %278 = vmatmul.mubr.f32.gmra.mrb[0].mxu0 %v179
  %v279 = vpop.f32.mrb[0].mxu0
  %v280 = vadd.f32 0.0, %v279
  %v281 = vpop.f32.mrb[0].mxu0
  %282 = vmatprep.mubr.f32.mxu0 0.0
  %283 = vmatmul.mubr.f32.gmra.mrb[0].mxu0 %v182
  %v284 = vpop.f32.mrb[0].mxu0
  %v285 = vadd.f32 0.0, %v284
  %v286 = vpop.f32.mrb[0].mxu0
  %287 = vmatprep.mubr.f32.mxu0 0.0
  %288 = vmatmul.mubr.f32.gmra.mrb[0].mxu0 %v185
  %v289 = vpop.f32.mrb[0].mxu0
  %v290 = vadd.f32 0.0, %v289
  %v291 = vpop.f32.mrb[0].mxu0
  %292 = vmatprep.mubr.f32.mxu0 0.0
  %293 = vmatmul.mubr.f32.gmra.mrb[0].mxu0 %v188
  %v294 = vpop.f32.mrb[0].mxu0
  %v295 = vadd.f32 0.0, %v294
  %v296 = vpop.f32.mrb[0].mxu0
  %297 = vmatprep.mubr.f32.mxu0 0.0
  %298 = vmatmul.mubr.f32.gmra.mrb[0].mxu0 %v191
  %v299 = vpop.f32.mrb[0].mxu0
  %v300 = vadd.f32 0.0, %v299
  %v301 = vpop.f32.mrb[0].mxu0
  %302 = vmatprep.mubr.f32.mxu0 0.0
  %303 = vmatmul.mubr.f32.gmra.mrb[0].mxu0 %v194
  %v304 = vpop.f32.mrb[0].mxu0
  %v305 = vadd.f32 0.0, %v304
  %v306 = vpop.f32.mrb[0].mxu0
  %307 = vmatprep.mubr.f32.mxu0 0.0
  %308 = vmatmul.mubr.f32.gmra.mrb[0].mxu0 %v197
  %v309 = vpop.f32.mrb[0].mxu0
  %v310 = vadd.f32 0.0, %v309
  %v311 = vpop.f32.mrb[0].mxu0
  %312 = vdwg.mxu0
  %v313 = vmul.f32 %v270, %v270
  %v314 = vmul.f32 %v275, %v275
  %v315 = vmul.f32 %v280, %v280
  %v316 = vmul.f32 %v285, %v285
  %v317 = vmul.f32 %v290, %v290
  %v318 = vmul.f32 %v295, %v295
  %v319 = vadd.f32 %v313, %v316
  %v320 = vadd.f32 %v314, %v317
  %v321 = vadd.f32 %v315, %v318
  %v322 = vmul.f32 %v300, %v300
  %v323 = vmul.f32 %v305, %v305
  %v324 = vmul.f32 %v310, %v310
  %v325 = vadd.f32 %v319, %v322
  %v326 = vadd.f32 %v320, %v323
  %v327 = vadd.f32 %v321, %v324
  %v328 = vmax.f32 %v325, 1e-08
  %v329 = vmax.f32 %v326, 1e-08
  %v330 = vmax.f32 %v327, 1e-08
  %v331 = vrsqrt.pop %v328
  %v332 = vmul.f32 %v328, %v331
  %vm333 = vcmp.eq.f32.partialorder %v328, inf
  %v334 = vsel %vm333, %v328, %v332
  %vm335 = vcmp.eq.f32.partialorder %v328, 0.0
  %v336 = vand.u32 %v328, 2147483648
  %v337 = vsel %vm335, %v336, %v334
  %v338 = vrsqrt.pop %v329
  %v339 = vmul.f32 %v329, %v338
  %vm340 = vcmp.eq.f32.partialorder %v329, inf
  %v341 = vsel %vm340, %v329, %v339
  %vm342 = vcmp.eq.f32.partialorder %v329, 0.0
  %v343 = vand.u32 %v329, 2147483648
  %v344 = vsel %vm342, %v343, %v341
  %v345 = vrsqrt.pop %v330
  %v346 = vmul.f32 %v330, %v345
  %vm347 = vcmp.eq.f32.partialorder %v330, inf
  %v348 = vsel %vm347, %v330, %v346
  %vm349 = vcmp.eq.f32.partialorder %v330, 0.0
  %v350 = vand.u32 %v330, 2147483648
  %v351 = vsel %vm349, %v350, %v348
  %v353 = vsel %vm56, %v337, 0
  %v356 = vsel %vm56, %v344, 0
  %v359 = vsel %vm56, %v351, 0
  %361 = vmatprep.subr.mxu0 0.0
  %362 = vmatpush1.msra.mxu0 %v162
  %363 = vmatprep.subr.mxu0 0.0
  %364 = vmatpush1.msra.mxu0 %v163
  %365 = vmatprep.subr.mxu0 0.0
  %366 = vmatpush1.msra.mxu0 0.0
  %367 = vmatprep.subr.mxu0 0.0
  %368 = vmatpush1.msra.mxu0 0.0
  %369 = vmatprep.subr.mxu0 0.0
  %370 = vmatpush1.msra.mxu0 0.0
  %371 = vmatprep.subr.mxu0 0.0
  %372 = vmatpush1.msra.mxu0 0.0
  %373 = vmatprep.subr.mxu0 0.0
  %374 = vmatpush1.msra.mxu0 0.0
  %375 = vmatprep.subr.mxu0 0.0
  %376 = vmatpush1.msra.mxu0 0.0
  %377 = vmatprep.subr.mxu0 0.0
  %378 = vmatpush1.msra.mxu0 0.0
  %379 = vmatprep.subr.mxu0 0.0
  %380 = vmatpush1.msra.mxu0 0.0
  %381 = vmatprep.subr.mxu0 0.0
  %382 = vmatpush1.msra.mxu0 0.0
  %383 = vmatprep.subr.mxu0 0.0
  %384 = vmatpush1.msra.mxu0 0.0
  %385 = vmatprep.subr.mxu0 0.0
  %386 = vmatpush1.msra.mxu0 0.0
  %387 = vmatprep.subr.mxu0 0.0
  %388 = vmatpush1.msra.mxu0 0.0
  %389 = vmatprep.subr.mxu0 0.0
  %390 = vmatpush1.msra.mxu0 0.0
  %391 = vmatprep.subr.mxu0 0.0
  %392 = vmatpush1.msra.mxu0 0.0
  %393 = vmatprep.subr.mxu0 0.0
  %394 = vmatpush1.msra.mxu0 0.0
  %395 = vmatprep.subr.mxu0 0.0
  %396 = vmatpush1.msra.mxu0 0.0
  %397 = vmatprep.subr.mxu0 0.0
  %398 = vmatpush1.msra.mxu0 0.0
  %399 = vmatprep.subr.mxu0 0.0
  %400 = vmatpush1.msra.mxu0 0.0
  %401 = vmatprep.subr.mxu0 0.0
  %402 = vmatpush1.msra.mxu0 0.0
  %403 = vmatprep.subr.mxu0 0.0
  %404 = vmatpush1.msra.mxu0 0.0
  %405 = vmatprep.subr.mxu0 0.0
  %406 = vmatpush1.msra.mxu0 0.0
  %407 = vmatprep.subr.mxu0 0.0
  %408 = vmatpush1.msra.mxu0 0.0
  %409 = vmatprep.subr.mxu0 0.0
  %410 = vmatpush1.msra.mxu0 0.0
  %411 = vmatprep.subr.mxu0 0.0
  %412 = vmatpush1.msra.mxu0 0.0
  %413 = vmatprep.subr.mxu0 0.0
  %414 = vmatpush1.msra.mxu0 0.0
  %415 = vmatprep.subr.mxu0 0.0
  %416 = vmatpush1.msra.mxu0 0.0
  %417 = vmatprep.subr.mxu0 0.0
  %418 = vmatpush1.msra.mxu0 0.0
  %419 = vmatprep.subr.mxu0 0.0
  %420 = vmatpush1.msra.mxu0 0.0
  %421 = vmatprep.subr.mxu0 0.0
  %422 = vmatpush1.msra.mxu0 0.0
  %423 = vmatprep.subr.mxu0 0.0
  %424 = vmatpush1.msra.mxu0 0.0
  %425 = vmatprep.mubr.f32.mxu0 0.0
  %426 = vmatmul.mubr.f32.gmra.mrb[0].mxu0 %v353
  %v427 = vpop.f32.mrb[0].mxu0
  %v428 = vadd.f32 0.0, %v427
  %v429 = vpop.f32.mrb[0].mxu0
  %430 = vmatprep.mubr.f32.mxu0 0.0
  %431 = vmatmul.mubr.f32.gmra.mrb[0].mxu0 %v356
  %v432 = vpop.f32.mrb[0].mxu0
  %v433 = vadd.f32 0.0, %v432
  %v434 = vpop.f32.mrb[0].mxu0
  %435 = vmatprep.mubr.f32.mxu0 0.0
  %436 = vmatmul.mubr.f32.gmra.mrb[0].mxu0 %v359
  %v437 = vpop.f32.mrb[0].mxu0
  %v438 = vadd.f32 0.0, %v437
  %v439 = vpop.f32.mrb[0].mxu0
  %440 = vdwg.mxu0
  %v442 = vsel %vm56, %v112, 0
  %v445 = vsel %vm56, %v113, 0
  %v448 = vsel %vm56, %v114, 0
  %450 = vmatprep.subr.mxu0 0.0
  %451 = vmatpush1.msra.mxu0 %v160
  %452 = vmatprep.subr.mxu0 0.0
  %453 = vmatpush1.msra.mxu0 %v161
  %454 = vmatprep.subr.mxu0 0.0
  %455 = vmatpush1.msra.mxu0 0.0
  %456 = vmatprep.subr.mxu0 0.0
  %457 = vmatpush1.msra.mxu0 0.0
  %458 = vmatprep.subr.mxu0 0.0
  %459 = vmatpush1.msra.mxu0 0.0
  %460 = vmatprep.subr.mxu0 0.0
  %461 = vmatpush1.msra.mxu0 0.0
  %462 = vmatprep.subr.mxu0 0.0
  %463 = vmatpush1.msra.mxu0 0.0
  %464 = vmatprep.subr.mxu0 0.0
  %465 = vmatpush1.msra.mxu0 0.0
  %466 = vmatprep.subr.mxu0 0.0
  %467 = vmatpush1.msra.mxu0 0.0
  %468 = vmatprep.subr.mxu0 0.0
  %469 = vmatpush1.msra.mxu0 0.0
  %470 = vmatprep.subr.mxu0 0.0
  %471 = vmatpush1.msra.mxu0 0.0
  %472 = vmatprep.subr.mxu0 0.0
  %473 = vmatpush1.msra.mxu0 0.0
  %474 = vmatprep.subr.mxu0 0.0
  %475 = vmatpush1.msra.mxu0 0.0
  %476 = vmatprep.subr.mxu0 0.0
  %477 = vmatpush1.msra.mxu0 0.0
  %478 = vmatprep.subr.mxu0 0.0
  %479 = vmatpush1.msra.mxu0 0.0
  %480 = vmatprep.subr.mxu0 0.0
  %481 = vmatpush1.msra.mxu0 0.0
  %482 = vmatprep.subr.mxu0 0.0
  %483 = vmatpush1.msra.mxu0 0.0
  %484 = vmatprep.subr.mxu0 0.0
  %485 = vmatpush1.msra.mxu0 0.0
  %486 = vmatprep.subr.mxu0 0.0
  %487 = vmatpush1.msra.mxu0 0.0
  %488 = vmatprep.subr.mxu0 0.0
  %489 = vmatpush1.msra.mxu0 0.0
  %490 = vmatprep.subr.mxu0 0.0
  %491 = vmatpush1.msra.mxu0 0.0
  %492 = vmatprep.subr.mxu0 0.0
  %493 = vmatpush1.msra.mxu0 0.0
  %494 = vmatprep.subr.mxu0 0.0
  %495 = vmatpush1.msra.mxu0 0.0
  %496 = vmatprep.subr.mxu0 0.0
  %497 = vmatpush1.msra.mxu0 0.0
  %498 = vmatprep.subr.mxu0 0.0
  %499 = vmatpush1.msra.mxu0 0.0
  %500 = vmatprep.subr.mxu0 0.0
  %501 = vmatpush1.msra.mxu0 0.0
  %502 = vmatprep.subr.mxu0 0.0
  %503 = vmatpush1.msra.mxu0 0.0
  %504 = vmatprep.subr.mxu0 0.0
  %505 = vmatpush1.msra.mxu0 0.0
  %506 = vmatprep.subr.mxu0 0.0
  %507 = vmatpush1.msra.mxu0 0.0
  %508 = vmatprep.subr.mxu0 0.0
  %509 = vmatpush1.msra.mxu0 0.0
  %510 = vmatprep.subr.mxu0 0.0
  %511 = vmatpush1.msra.mxu0 0.0
  %512 = vmatprep.subr.mxu0 0.0
  %513 = vmatpush1.msra.mxu0 0.0
  %514 = vmatprep.mubr.f32.mxu0 0.0
  %515 = vmatmul.mubr.f32.gmra.mrb[0].mxu0 %v442
  %v516 = vpop.f32.mrb[0].mxu0
  %v517 = vadd.f32 %v428, %v516
  %v518 = vpop.f32.mrb[0].mxu0
  %519 = vmatprep.mubr.f32.mxu0 0.0
  %520 = vmatmul.mubr.f32.gmra.mrb[0].mxu0 %v445
  %v521 = vpop.f32.mrb[0].mxu0
  %v522 = vadd.f32 %v433, %v521
  %v523 = vpop.f32.mrb[0].mxu0
  %524 = vmatprep.mubr.f32.mxu0 0.0
  %525 = vmatmul.mubr.f32.gmra.mrb[0].mxu0 %v448
  %v526 = vpop.f32.mrb[0].mxu0
  %v527 = vadd.f32 %v438, %v526
  %v528 = vpop.f32.mrb[0].mxu0
  %529 = vdwg.mxu0
  %v531 = vlaneseq
  %v532 = vshrl.u32 %v531, 7
  %v533 = vsub.s32 0, %v532
  %v534 = vrot.slane %v164, %v533
  %v536 = vadd.f32 %v517, %v534
  %v537 = vadd.f32 %v522, %v534
  %v538 = vadd.f32 %v527, %v534
  %v540 = vlaneseq
  %v541 = vshrl.u32 %v540, 7
  %v542 = vsub.s32 0, %v541
  %v543 = vrot.slane %v171, %v542
  %vm545 = vcmask 261120
  %v547 = vsel %vm545, %v536, 0
  %v550 = vsel %vm545, %v537, 0
  %v553 = vsel %vm545, %v538, 0
  %555 = vmatprep.subr.mxu0 0.0
  %556 = vmatpush1.msra.mxu0 %v167
  %557 = vmatprep.subr.mxu0 0.0
  %558 = vmatpush1.msra.mxu0 %v168
  %559 = vmatprep.subr.mxu0 0.0
  %560 = vmatpush1.msra.mxu0 %v169
  %561 = vmatprep.subr.mxu0 0.0
  %562 = vmatpush1.msra.mxu0 %v170
  %563 = vmatprep.subr.mxu0 0.0
  %564 = vmatpush1.msra.mxu0 0.0
  %565 = vmatprep.subr.mxu0 0.0
  %566 = vmatpush1.msra.mxu0 0.0
  %567 = vmatprep.subr.mxu0 0.0
  %568 = vmatpush1.msra.mxu0 0.0
  %569 = vmatprep.subr.mxu0 0.0
  %570 = vmatpush1.msra.mxu0 0.0
  %571 = vmatprep.subr.mxu0 0.0
  %572 = vmatpush1.msra.mxu0 0.0
  %573 = vmatprep.subr.mxu0 0.0
  %574 = vmatpush1.msra.mxu0 0.0
  %575 = vmatprep.subr.mxu0 0.0
  %576 = vmatpush1.msra.mxu0 0.0
  %577 = vmatprep.subr.mxu0 0.0
  %578 = vmatpush1.msra.mxu0 0.0
  %579 = vmatprep.subr.mxu0 0.0
  %580 = vmatpush1.msra.mxu0 0.0
  %581 = vmatprep.subr.mxu0 0.0
  %582 = vmatpush1.msra.mxu0 0.0
  %583 = vmatprep.subr.mxu0 0.0
  %584 = vmatpush1.msra.mxu0 0.0
  %585 = vmatprep.subr.mxu0 0.0
  %586 = vmatpush1.msra.mxu0 0.0
  %587 = vmatprep.subr.mxu0 0.0
  %588 = vmatpush1.msra.mxu0 0.0
  %589 = vmatprep.subr.mxu0 0.0
  %590 = vmatpush1.msra.mxu0 0.0
  %591 = vmatprep.subr.mxu0 0.0
  %592 = vmatpush1.msra.mxu0 0.0
  %593 = vmatprep.subr.mxu0 0.0
  %594 = vmatpush1.msra.mxu0 0.0
  %595 = vmatprep.subr.mxu0 0.0
  %596 = vmatpush1.msra.mxu0 0.0
  %597 = vmatprep.subr.mxu0 0.0
  %598 = vmatpush1.msra.mxu0 0.0
  %599 = vmatprep.subr.mxu0 0.0
  %600 = vmatpush1.msra.mxu0 0.0
  %601 = vmatprep.subr.mxu0 0.0
  %602 = vmatpush1.msra.mxu0 0.0
  %603 = vmatprep.subr.mxu0 0.0
  %604 = vmatpush1.msra.mxu0 0.0
  %605 = vmatprep.subr.mxu0 0.0
  %606 = vmatpush1.msra.mxu0 0.0
  %607 = vmatprep.subr.mxu0 0.0
  %608 = vmatpush1.msra.mxu0 0.0
  %609 = vmatprep.subr.mxu0 0.0
  %610 = vmatpush1.msra.mxu0 0.0
  %611 = vmatprep.subr.mxu0 0.0
  %612 = vmatpush1.msra.mxu0 0.0
  %613 = vmatprep.subr.mxu0 0.0
  %614 = vmatpush1.msra.mxu0 0.0
  %615 = vmatprep.subr.mxu0 0.0
  %616 = vmatpush1.msra.mxu0 0.0
  %617 = vmatprep.subr.mxu0 0.0
  %618 = vmatpush1.msra.mxu0 0.0
  %619 = vmatprep.mubr.f32.mxu0 0.0
  %620 = vmatmul.mubr.f32.gmra.mrb[0].mxu0 %v547
  %v621 = vpop.f32.mrb[0].mxu0
  %v622 = vadd.f32 %v543, %v621
  %v623 = vpop.f32.mrb[0].mxu0
  %624 = vmatprep.mubr.f32.mxu0 0.0
  %625 = vmatmul.mubr.f32.gmra.mrb[0].mxu0 %v550
  %v626 = vpop.f32.mrb[0].mxu0
  %v627 = vadd.f32 %v543, %v626
  %v628 = vpop.f32.mrb[0].mxu0
  %629 = vmatprep.mubr.f32.mxu0 0.0
  %630 = vmatmul.mubr.f32.gmra.mrb[0].mxu0 %v553
  %v631 = vpop.f32.mrb[0].mxu0
  %v632 = vadd.f32 %v543, %v631
  %v633 = vpop.f32.mrb[0].mxu0
  %634 = vdwg.mxu0
  %v635 = vxor.u32 %v622, 2147483648
  %v636 = vxor.u32 %v627, 2147483648
  %v637 = vxor.u32 %v632, 2147483648
  %v638 = vmul.f32 %v635, 1.442695
  %v639 = vpow.pop %v638
  %v640 = vmul.f32 %v636, 1.442695
  %v641 = vpow.pop %v640
  %v642 = vmul.f32 %v637, 1.442695
  %v643 = vpow.pop %v642
  %v644 = vadd.f32 %v639, 1.0
  %v645 = vadd.f32 %v641, 1.0
  %v646 = vadd.f32 %v643, 1.0
  %v647 = vrcp.pop %v644
  %v648 = vmul.f32 1.0, %v647
  %v649 = vrcp.pop %v645
  %v650 = vmul.f32 1.0, %v649
  %v651 = vrcp.pop %v646
  %v652 = vmul.f32 1.0, %v651
  %v654 = vsel %vm56, %v270, 0
  %v657 = vsel %vm56, %v275, 0
  %v660 = vsel %vm56, %v280, 0
  %v663 = vsel %vm56, %v285, 0
  %v666 = vsel %vm56, %v290, 0
  %v669 = vsel %vm56, %v295, 0
  %v672 = vsel %vm56, %v300, 0
  %v675 = vsel %vm56, %v305, 0
  %v678 = vsel %vm56, %v310, 0
  %680 = vmatprep.subr.mxu0 0.0
  %681 = vmatpush1.msra.mxu0 %v165
  %682 = vmatprep.subr.mxu0 0.0
  %683 = vmatpush1.msra.mxu0 %v166
  %684 = vmatprep.subr.mxu0 0.0
  %685 = vmatpush1.msra.mxu0 0.0
  %686 = vmatprep.subr.mxu0 0.0
  %687 = vmatpush1.msra.mxu0 0.0
  %688 = vmatprep.subr.mxu0 0.0
  %689 = vmatpush1.msra.mxu0 0.0
  %690 = vmatprep.subr.mxu0 0.0
  %691 = vmatpush1.msra.mxu0 0.0
  %692 = vmatprep.subr.mxu0 0.0
  %693 = vmatpush1.msra.mxu0 0.0
  %694 = vmatprep.subr.mxu0 0.0
  %695 = vmatpush1.msra.mxu0 0.0
  %696 = vmatprep.subr.mxu0 0.0
  %697 = vmatpush1.msra.mxu0 0.0
  %698 = vmatprep.subr.mxu0 0.0
  %699 = vmatpush1.msra.mxu0 0.0
  %700 = vmatprep.subr.mxu0 0.0
  %701 = vmatpush1.msra.mxu0 0.0
  %702 = vmatprep.subr.mxu0 0.0
  %703 = vmatpush1.msra.mxu0 0.0
  %704 = vmatprep.subr.mxu0 0.0
  %705 = vmatpush1.msra.mxu0 0.0
  %706 = vmatprep.subr.mxu0 0.0
  %707 = vmatpush1.msra.mxu0 0.0
  %708 = vmatprep.subr.mxu0 0.0
  %709 = vmatpush1.msra.mxu0 0.0
  %710 = vmatprep.subr.mxu0 0.0
  %711 = vmatpush1.msra.mxu0 0.0
  %712 = vmatprep.subr.mxu0 0.0
  %713 = vmatpush1.msra.mxu0 0.0
  %714 = vmatprep.subr.mxu0 0.0
  %715 = vmatpush1.msra.mxu0 0.0
  %716 = vmatprep.subr.mxu0 0.0
  %717 = vmatpush1.msra.mxu0 0.0
  %718 = vmatprep.subr.mxu0 0.0
  %719 = vmatpush1.msra.mxu0 0.0
  %720 = vmatprep.subr.mxu0 0.0
  %721 = vmatpush1.msra.mxu0 0.0
  %722 = vmatprep.subr.mxu0 0.0
  %723 = vmatpush1.msra.mxu0 0.0
  %724 = vmatprep.subr.mxu0 0.0
  %725 = vmatpush1.msra.mxu0 0.0
  %726 = vmatprep.subr.mxu0 0.0
  %727 = vmatpush1.msra.mxu0 0.0
  %728 = vmatprep.subr.mxu0 0.0
  %729 = vmatpush1.msra.mxu0 0.0
  %730 = vmatprep.subr.mxu0 0.0
  %731 = vmatpush1.msra.mxu0 0.0
  %732 = vmatprep.subr.mxu0 0.0
  %733 = vmatpush1.msra.mxu0 0.0
  %734 = vmatprep.subr.mxu0 0.0
  %735 = vmatpush1.msra.mxu0 0.0
  %736 = vmatprep.subr.mxu0 0.0
  %737 = vmatpush1.msra.mxu0 0.0
  %738 = vmatprep.subr.mxu0 0.0
  %739 = vmatpush1.msra.mxu0 0.0
  %740 = vmatprep.subr.mxu0 0.0
  %741 = vmatpush1.msra.mxu0 0.0
  %742 = vmatprep.subr.mxu0 0.0
  %743 = vmatpush1.msra.mxu0 0.0
  %744 = vmatprep.mubr.f32.mxu0 0.0
  %745 = vmatmul.mubr.f32.gmra.mrb[0].mxu0 %v654
  %v746 = vpop.f32.mrb[0].mxu0
  %v747 = vadd.f32 0.0, %v746
  %v748 = vpop.f32.mrb[0].mxu0
  %749 = vmatprep.mubr.f32.mxu0 0.0
  %750 = vmatmul.mubr.f32.gmra.mrb[0].mxu0 %v657
  %v751 = vpop.f32.mrb[0].mxu0
  %v752 = vadd.f32 0.0, %v751
  %v753 = vpop.f32.mrb[0].mxu0
  %754 = vmatprep.mubr.f32.mxu0 0.0
  %755 = vmatmul.mubr.f32.gmra.mrb[0].mxu0 %v660
  %v756 = vpop.f32.mrb[0].mxu0
  %v757 = vadd.f32 0.0, %v756
  %v758 = vpop.f32.mrb[0].mxu0
  %759 = vmatprep.mubr.f32.mxu0 0.0
  %760 = vmatmul.mubr.f32.gmra.mrb[0].mxu0 %v663
  %v761 = vpop.f32.mrb[0].mxu0
  %v762 = vadd.f32 0.0, %v761
  %v763 = vpop.f32.mrb[0].mxu0
  %764 = vmatprep.mubr.f32.mxu0 0.0
  %765 = vmatmul.mubr.f32.gmra.mrb[0].mxu0 %v666
  %v766 = vpop.f32.mrb[0].mxu0
  %v767 = vadd.f32 0.0, %v766
  %v768 = vpop.f32.mrb[0].mxu0
  %769 = vmatprep.mubr.f32.mxu0 0.0
  %770 = vmatmul.mubr.f32.gmra.mrb[0].mxu0 %v669
  %v771 = vpop.f32.mrb[0].mxu0
  %v772 = vadd.f32 0.0, %v771
  %v773 = vpop.f32.mrb[0].mxu0
  %774 = vmatprep.mubr.f32.mxu0 0.0
  %775 = vmatmul.mubr.f32.gmra.mrb[0].mxu0 %v672
  %v776 = vpop.f32.mrb[0].mxu0
  %v777 = vadd.f32 0.0, %v776
  %v778 = vpop.f32.mrb[0].mxu0
  %779 = vmatprep.mubr.f32.mxu0 0.0
  %780 = vmatmul.mubr.f32.gmra.mrb[0].mxu0 %v675
  %v781 = vpop.f32.mrb[0].mxu0
  %v782 = vadd.f32 0.0, %v781
  %v783 = vpop.f32.mrb[0].mxu0
  %784 = vmatprep.mubr.f32.mxu0 0.0
  %785 = vmatmul.mubr.f32.gmra.mrb[0].mxu0 %v678
  %v786 = vpop.f32.mrb[0].mxu0
  %v787 = vadd.f32 0.0, %v786
  %v788 = vpop.f32.mrb[0].mxu0
  %789 = vdwg.mxu0
  %v790 = vmul.f32 %v747, %v648
  %v791 = vmul.f32 %v752, %v650
  %v792 = vmul.f32 %v757, %v652
  %v793 = vmul.f32 %v762, %v648
  %v794 = vmul.f32 %v767, %v650
  %v795 = vmul.f32 %v772, %v652
  %v796 = vmul.f32 %v777, %v648
  %v797 = vmul.f32 %v782, %v650
  %v798 = vmul.f32 %v787, %v652
  %799 = vst.msk [vmem:[%s11] sm:$0xff] %vm545, %v536
  %800 = vst.msk [vmem:[%s11 + $0x8] sm:$0xff] %vm545, %v537
  %801 = vst.msk [vmem:[%s11 + $0x10] sm:$0xff] %vm545, %v538
  %802 = vst.msk [vmem:[%s12] sm:$0xff] %vm56, %v790
  %803 = vst.msk [vmem:[%s12 + $0x8] sm:$0xff] %vm56, %v791
  %804 = vst.msk [vmem:[%s12 + $0x10] sm:$0xff] %vm56, %v792
  %s805 = scalar_lea.vmem %s12, 24
  %806 = vst.msk [vmem:[%s805] sm:$0xff] %vm56, %v793
  %807 = vst.msk [vmem:[%s805 + $0x8] sm:$0xff] %vm56, %v794
  %808 = vst.msk [vmem:[%s805 + $0x10] sm:$0xff] %vm56, %v795
  %s809 = scalar_lea.vmem %s12, 48
  %810 = vst.msk [vmem:[%s809] sm:$0xff] %vm56, %v796
  %811 = vst.msk [vmem:[%s809 + $0x8] sm:$0xff] %vm56, %v797
  %812 = vst.msk [vmem:[%s809 + $0x10] sm:$0xff] %vm56, %v798
  // Predicated region
  $region46: #{gvp_network_forward.6} parent=0 // pred_check
    _
  $region47: #{gvp_network_forward.6} parent=0 // pred_check_branch
    %814 = sbr.rel (0) target = $region49
  $region48: #{gvp_network_forward.6} parent=0 // pred_region
    _
  $region49: #{gvp_network_forward.6} parent=0 // pred_fallthru
    _
  // Predicated region
  $region50: #{gvp_network_forward.6} parent=0 // pred_check
    _
  $region51: #{gvp_network_forward.6} parent=0 // pred_check_branch
    %816 = sbr.rel (0) target = $region53
  $region52: #{gvp_network_forward.6} parent=0 // pred_region
    _
  $region53: #{gvp_network_forward.6} parent=0 // pred_fallthru
    _
  // Predicated region
  $region54: #{gvp_network_forward.6} parent=0 // pred_check
    _
  $region55: #{gvp_network_forward.6} parent=0 // pred_check_branch
    %818 = sbr.rel (0) target = $region57
  $region56: #{gvp_network_forward.6} parent=0 // pred_region
    _
  $region57: #{gvp_network_forward.6} parent=0 // pred_fallthru
    _
  // Predicated region
  $region58: #{gvp_network_forward.6} parent=0 // pred_check
    _
  $region59: #{gvp_network_forward.6} parent=0 // pred_check_branch
    %820 = sbr.rel (0) target = $region61
  $region60: #{gvp_network_forward.6} parent=0 // pred_region
    _
  $region61: #{gvp_network_forward.6} parent=0 // pred_fallthru
    _

// kernel: gvp_network_forward.7
$region0: #{gvp_network_forward.7}
  #allocation0 [shape = 'u32[]', space=smem, size = 0x4, offset = 0x4, fixed_abs, tag = 'smem constant byte address 0x4 - core index']
  #allocation1 [shape = 'u32[144,128]{1,0:T(1,128)}', space=vmem, size = 0x12000, scoped, tag = 'internal scratch']
  %s0 = inlined_call_operand.vmem [shape: f32[48,96], index: 0, kind: input, shape index: {}]
  %s1 = inlined_call_operand.vmem [shape: f32[3,48,33], index: 1, kind: input, shape index: {}]
  %s2 = inlined_call_operand.vmem [shape: f32[33,33], index: 2, kind: input, shape index: {}]
  %s3 = inlined_call_operand.vmem [shape: f32[96,32], index: 3, kind: input, shape index: {}]
  %s4 = inlined_call_operand.vmem [shape: f32[33,32], index: 4, kind: input, shape index: {}]
  %s5 = inlined_call_operand.vmem [shape: f32[1,32], index: 5, kind: input, shape index: {}]
  %s6 = inlined_call_operand.vmem [shape: f32[33,16], index: 6, kind: input, shape index: {}]
  %s7 = inlined_call_operand.vmem [shape: f32[32,16], index: 7, kind: input, shape index: {}]
  %s8 = inlined_call_operand.vmem [shape: f32[1,16], index: 8, kind: input, shape index: {}]
  %s9 = inlined_call_operand.vmem [shape: f32[16,16], index: 9, kind: input, shape index: {}]
  %s10 = inlined_call_operand.vmem [shape: f32[32,32], index: 10, kind: input, shape index: {}]
  %s11 = inlined_call_operand.vmem [shape: f32[16,32], index: 11, kind: input, shape index: {}]
  %s12 = inlined_call_operand.vmem [shape: f32[1,32], index: 12, kind: input, shape index: {}]
  %s13 = inlined_call_operand.vmem [shape: f32[16,16], index: 13, kind: input, shape index: {}]
  %s14 = inlined_call_operand.vmem [shape: f32[32,16], index: 14, kind: input, shape index: {}]
  %s15 = inlined_call_operand.vmem [shape: f32[1,16], index: 15, kind: input, shape index: {}]
  %s16 = inlined_call_operand.vmem [shape: f32[16,16], index: 16, kind: input, shape index: {}]
  %s17 = inlined_call_operand.vmem [shape: f32[32,32], index: 17, kind: input, shape index: {}]
  %s18 = inlined_call_operand.vmem [shape: f32[16,32], index: 18, kind: input, shape index: {}]
  %s19 = inlined_call_operand.vmem [shape: f32[1,32], index: 19, kind: input, shape index: {}]
  %s20 = inlined_call_operand.vmem [shape: f32[16,16], index: 20, kind: input, shape index: {}]
  %s21 = inlined_call_operand.vmem [shape: f32[32,16], index: 21, kind: input, shape index: {}]
  %s22 = inlined_call_operand.vmem [shape: f32[1,16], index: 22, kind: input, shape index: {}]
  %s23 = inlined_call_operand.vmem [shape: f32[48,32], index: 23, kind: output, shape index: {0}]
  %s24 = inlined_call_operand.vmem [shape: f32[3,48,16], index: 24, kind: output, shape index: {1}]
  %25 = xla_tuple %s23, %s24
  %s26 = sld [smem:[#allocation0]]
  $region110: #{gvp_network_forward.7} parent=0
    _
  %s28 = ssub.s32 1, %s26
  %s29 = scalar_select 0, %s28, %s26
  // Predicated region
  $region2: #{gvp_network_forward.7} parent=0 // pred_check
    _
  $region3: #{gvp_network_forward.7} parent=0 // pred_check_branch
    %31 = sbr.rel (0) target = $region5
  $region4: #{gvp_network_forward.7} parent=0 // pred_region
    _
  $region5: #{gvp_network_forward.7} parent=0 // pred_fallthru
    _
  // Predicated region
  $region6: #{gvp_network_forward.7} parent=0 // pred_check
    _
  $region7: #{gvp_network_forward.7} parent=0 // pred_check_branch
    %33 = sbr.rel (0) target = $region9
  $region8: #{gvp_network_forward.7} parent=0 // pred_region
    _
  $region9: #{gvp_network_forward.7} parent=0 // pred_fallthru
    _
  // Predicated region
  $region10: #{gvp_network_forward.7} parent=0 // pred_check
    _
  $region11: #{gvp_network_forward.7} parent=0 // pred_check_branch
    %35 = sbr.rel (0) target = $region13
  $region12: #{gvp_network_forward.7} parent=0 // pred_region
    _
  $region13: #{gvp_network_forward.7} parent=0 // pred_fallthru
    _
  // Predicated region
  $region14: #{gvp_network_forward.7} parent=0 // pred_check
    _
  $region15: #{gvp_network_forward.7} parent=0 // pred_check_branch
    %37 = sbr.rel (0) target = $region17
  $region16: #{gvp_network_forward.7} parent=0 // pred_region
    _
  $region17: #{gvp_network_forward.7} parent=0 // pred_fallthru
    _
  // Predicated region
  $region18: #{gvp_network_forward.7} parent=0 // pred_check
    _
  $region19: #{gvp_network_forward.7} parent=0 // pred_check_branch
    %39 = sbr.rel (0) target = $region21
  $region20: #{gvp_network_forward.7} parent=0 // pred_region
    _
  $region21: #{gvp_network_forward.7} parent=0 // pred_fallthru
    _
  // Predicated region
  $region22: #{gvp_network_forward.7} parent=0 // pred_check
    _
  $region23: #{gvp_network_forward.7} parent=0 // pred_check_branch
    %41 = sbr.rel (0) target = $region25
  $region24: #{gvp_network_forward.7} parent=0 // pred_region
    _
  $region25: #{gvp_network_forward.7} parent=0 // pred_fallthru
    _
  // Predicated region
  $region26: #{gvp_network_forward.7} parent=0 // pred_check
    _
  $region27: #{gvp_network_forward.7} parent=0 // pred_check_branch
    %43 = sbr.rel (0) target = $region29
  $region28: #{gvp_network_forward.7} parent=0 // pred_region
    _
  $region29: #{gvp_network_forward.7} parent=0 // pred_fallthru
    _
  // Predicated region
  $region30: #{gvp_network_forward.7} parent=0 // pred_check
    _
  $region31: #{gvp_network_forward.7} parent=0 // pred_check_branch
    %45 = sbr.rel (0) target = $region33
  $region32: #{gvp_network_forward.7} parent=0 // pred_region
    _
  $region33: #{gvp_network_forward.7} parent=0 // pred_fallthru
    _
  // Predicated region
  $region34: #{gvp_network_forward.7} parent=0 // pred_check
    _
  $region35: #{gvp_network_forward.7} parent=0 // pred_check_branch
    %47 = sbr.rel (0) target = $region37
  $region36: #{gvp_network_forward.7} parent=0 // pred_region
    _
  $region37: #{gvp_network_forward.7} parent=0 // pred_fallthru
    _
  // Predicated region
  $region38: #{gvp_network_forward.7} parent=0 // pred_check
    _
  $region39: #{gvp_network_forward.7} parent=0 // pred_check_branch
    %49 = sbr.rel (0) target = $region41
  $region40: #{gvp_network_forward.7} parent=0 // pred_region
    _
  $region41: #{gvp_network_forward.7} parent=0 // pred_fallthru
    _
  // Predicated region
  $region42: #{gvp_network_forward.7} parent=0 // pred_check
    _
  $region43: #{gvp_network_forward.7} parent=0 // pred_check_branch
    %51 = sbr.rel (0) target = $region45
  $region44: #{gvp_network_forward.7} parent=0 // pred_region
    _
  $region45: #{gvp_network_forward.7} parent=0 // pred_fallthru
    _
  // Predicated region
  $region46: #{gvp_network_forward.7} parent=0 // pred_check
    _
  $region47: #{gvp_network_forward.7} parent=0 // pred_check_branch
    %53 = sbr.rel (0) target = $region49
  $region48: #{gvp_network_forward.7} parent=0 // pred_region
    _
  $region49: #{gvp_network_forward.7} parent=0 // pred_fallthru
    _
  // Predicated region
  $region50: #{gvp_network_forward.7} parent=0 // pred_check
    _
  $region51: #{gvp_network_forward.7} parent=0 // pred_check_branch
    %55 = sbr.rel (0) target = $region53
  $region52: #{gvp_network_forward.7} parent=0 // pred_region
    _
  $region53: #{gvp_network_forward.7} parent=0 // pred_fallthru
    _
  // Predicated region
  $region54: #{gvp_network_forward.7} parent=0 // pred_check
    _
  $region55: #{gvp_network_forward.7} parent=0 // pred_check_branch
    %57 = sbr.rel (0) target = $region57
  $region56: #{gvp_network_forward.7} parent=0 // pred_region
    _
  $region57: #{gvp_network_forward.7} parent=0 // pred_fallthru
    _
  // Predicated region
  $region58: #{gvp_network_forward.7} parent=0 // pred_check
    _
  $region59: #{gvp_network_forward.7} parent=0 // pred_check_branch
    %59 = sbr.rel (0) target = $region61
  $region60: #{gvp_network_forward.7} parent=0 // pred_region
    _
  $region61: #{gvp_network_forward.7} parent=0 // pred_fallthru
    _
  // Predicated region
  $region62: #{gvp_network_forward.7} parent=0 // pred_check
    _
  $region63: #{gvp_network_forward.7} parent=0 // pred_check_branch
    %61 = sbr.rel (0) target = $region65
  $region64: #{gvp_network_forward.7} parent=0 // pred_region
    _
  $region65: #{gvp_network_forward.7} parent=0 // pred_fallthru
    _
  // Predicated region
  $region66: #{gvp_network_forward.7} parent=0 // pred_check
    _
  $region67: #{gvp_network_forward.7} parent=0 // pred_check_branch
    %63 = sbr.rel (0) target = $region69
  $region68: #{gvp_network_forward.7} parent=0 // pred_region
    _
  $region69: #{gvp_network_forward.7} parent=0 // pred_fallthru
    _
  // Predicated region
  $region70: #{gvp_network_forward.7} parent=0 // pred_check
    _
  $region71: #{gvp_network_forward.7} parent=0 // pred_check_branch
    %65 = sbr.rel (0) target = $region73
  $region72: #{gvp_network_forward.7} parent=0 // pred_region
    _
  $region73: #{gvp_network_forward.7} parent=0 // pred_fallthru
    _
  // Predicated region
  $region74: #{gvp_network_forward.7} parent=0 // pred_check
    _
  $region75: #{gvp_network_forward.7} parent=0 // pred_check_branch
    %67 = sbr.rel (0) target = $region77
  $region76: #{gvp_network_forward.7} parent=0 // pred_region
    _
  $region77: #{gvp_network_forward.7} parent=0 // pred_fallthru
    _
  // Predicated region
  $region78: #{gvp_network_forward.7} parent=0 // pred_check
    _
  $region79: #{gvp_network_forward.7} parent=0 // pred_check_branch
    %69 = sbr.rel (0) target = $region81
  $region80: #{gvp_network_forward.7} parent=0 // pred_region
    _
  $region81: #{gvp_network_forward.7} parent=0 // pred_fallthru
    _
  // Predicated region
  $region82: #{gvp_network_forward.7} parent=0 // pred_check
    _
  $region83: #{gvp_network_forward.7} parent=0 // pred_check_branch
    %71 = sbr.rel (0) target = $region85
  $region84: #{gvp_network_forward.7} parent=0 // pred_region
    _
  $region85: #{gvp_network_forward.7} parent=0 // pred_fallthru
    _
  // Predicated region
  $region86: #{gvp_network_forward.7} parent=0 // pred_check
    _
  $region87: #{gvp_network_forward.7} parent=0 // pred_check_branch
    %73 = sbr.rel (0) target = $region89
  $region88: #{gvp_network_forward.7} parent=0 // pred_region
    _
  $region89: #{gvp_network_forward.7} parent=0 // pred_fallthru
    _
  // Predicated region
  $region90: #{gvp_network_forward.7} parent=0 // pred_check
    _
  $region91: #{gvp_network_forward.7} parent=0 // pred_check_branch
    %75 = sbr.rel (0) target = $region93
  $region92: #{gvp_network_forward.7} parent=0 // pred_region
    _
  $region93: #{gvp_network_forward.7} parent=0 // pred_fallthru
    _
  %v76 = vld [vmem:[%s2] sm:$0xff]
  %v77 = vld [vmem:[%s2 + $0x8] sm:$0xff]
  %v78 = vld [vmem:[%s2 + $0x10] sm:$0xff]
  %v79 = vld [vmem:[%s2 + $0x18] sm:$0xff]
  %v80 = vld [vmem:[%s2 + $0x20] sm:$0x1]
  %v81 = vld [vmem:[%s3] sm:$0xff]
  %v82 = vld [vmem:[%s3 + $0x8] sm:$0xff]
  %v83 = vld [vmem:[%s3 + $0x10] sm:$0xff]
  %v84 = vld [vmem:[%s3 + $0x18] sm:$0xff]
  %v85 = vld [vmem:[%s3 + $0x20] sm:$0xff]
  %v86 = vld [vmem:[%s3 + $0x28] sm:$0xff]
  %v87 = vld [vmem:[%s3 + $0x30] sm:$0xff]
  %v88 = vld [vmem:[%s3 + $0x38] sm:$0xff]
  %v89 = vld [vmem:[%s3 + $0x40] sm:$0xff]
  %v90 = vld [vmem:[%s3 + $0x48] sm:$0xff]
  %v91 = vld [vmem:[%s3 + $0x50] sm:$0xff]
  %v92 = vld [vmem:[%s3 + $0x58] sm:$0xff]
  %v93 = vld [vmem:[%s4] sm:$0xff]
  %v94 = vld [vmem:[%s4 + $0x8] sm:$0xff]
  %v95 = vld [vmem:[%s4 + $0x10] sm:$0xff]
  %v96 = vld [vmem:[%s4 + $0x18] sm:$0xff]
  %v97 = vld [vmem:[%s4 + $0x20] sm:$0x1]
  %v98 = vld [vmem:[%s5] sm:$0x1]
  %v99 = vld [vmem:[%s6] sm:$0xff]
  %v100 = vld [vmem:[%s6 + $0x8] sm:$0xff]
  %v101 = vld [vmem:[%s6 + $0x10] sm:$0xff]
  %v102 = vld [vmem:[%s6 + $0x18] sm:$0xff]
  %v103 = vld [vmem:[%s6 + $0x20] sm:$0x1]
  %v104 = vld [vmem:[%s7] sm:$0xff]
  %v105 = vld [vmem:[%s7 + $0x8] sm:$0xff]
  %v106 = vld [vmem:[%s7 + $0x10] sm:$0xff]
  %v107 = vld [vmem:[%s7 + $0x18] sm:$0xff]
  %v108 = vld [vmem:[%s8] sm:$0x1]
  %v109 = vld [vmem:[%s9] sm:$0xff]
  %v110 = vld [vmem:[%s9 + $0x8] sm:$0xff]
  %v111 = vld [vmem:[%s10] sm:$0xff]
  %v112 = vld [vmem:[%s10 + $0x8] sm:$0xff]
  %v113 = vld [vmem:[%s10 + $0x10] sm:$0xff]
  %v114 = vld [vmem:[%s10 + $0x18] sm:$0xff]
  %v115 = vld [vmem:[%s11] sm:$0xff]
  %v116 = vld [vmem:[%s11 + $0x8] sm:$0xff]
  %v117 = vld [vmem:[%s12] sm:$0x1]
  %v118 = vld [vmem:[%s13] sm:$0xff]
  %v119 = vld [vmem:[%s13 + $0x8] sm:$0xff]
  %v120 = vld [vmem:[%s14] sm:$0xff]
  %v121 = vld [vmem:[%s14 + $0x8] sm:$0xff]
  %v122 = vld [vmem:[%s14 + $0x10] sm:$0xff]
  %v123 = vld [vmem:[%s14 + $0x18] sm:$0xff]
  %v124 = vld [vmem:[%s15] sm:$0x1]
  %v125 = vld [vmem:[%s16] sm:$0xff]
  %v126 = vld [vmem:[%s16 + $0x8] sm:$0xff]
  %v127 = vld [vmem:[%s17] sm:$0xff]
  %v128 = vld [vmem:[%s17 + $0x8] sm:$0xff]
  %v129 = vld [vmem:[%s17 + $0x10] sm:$0xff]
  %v130 = vld [vmem:[%s17 + $0x18] sm:$0xff]
  %v131 = vld [vmem:[%s18] sm:$0xff]
  %v132 = vld [vmem:[%s18 + $0x8] sm:$0xff]
  %v133 = vld [vmem:[%s19] sm:$0x1]
  %v134 = vld [vmem:[%s20] sm:$0xff]
  %v135 = vld [vmem:[%s20 + $0x8] sm:$0xff]
  %v136 = vld [vmem:[%s21] sm:$0xff]
  %v137 = vld [vmem:[%s21 + $0x8] sm:$0xff]
  %v138 = vld [vmem:[%s21 + $0x10] sm:$0xff]
  %v139 = vld [vmem:[%s21 + $0x18] sm:$0xff]
  %v140 = vld [vmem:[%s22] sm:$0x1]
  %v141 = vld [vmem:[%s0] sm:$0xff]
  %v142 = vld [vmem:[%s0 + $0x8] sm:$0xff]
  %v143 = vld [vmem:[%s0 + $0x10] sm:$0xff]
  %v144 = vld [vmem:[%s0 + $0x18] sm:$0xff]
  %v145 = vld [vmem:[%s0 + $0x20] sm:$0xff]
  %v146 = vld [vmem:[%s0 + $0x28] sm:$0xff]
  %v147 = vld [vmem:[%s1] sm:$0xff]
  %v148 = vld [vmem:[%s1 + $0x8] sm:$0xff]
  %v149 = vld [vmem:[%s1 + $0x10] sm:$0xff]
  %v150 = vld [vmem:[%s1 + $0x18] sm:$0xff]
  %v151 = vld [vmem:[%s1 + $0x20] sm:$0xff]
  %v152 = vld [vmem:[%s1 + $0x28] sm:$0xff]
  %s153 = scalar_lea.vmem %s1, 48
  %v154 = vld [vmem:[%s153] sm:$0xff]
  %v155 = vld [vmem:[%s153 + $0x8] sm:$0xff]
  %v156 = vld [vmem:[%s153 + $0x10] sm:$0xff]
  %v157 = vld [vmem:[%s153 + $0x18] sm:$0xff]
  %v158 = vld [vmem:[%s153 + $0x20] sm:$0xff]
  %v159 = vld [vmem:[%s153 + $0x28] sm:$0xff]
  %s160 = scalar_lea.vmem %s1, 96
  %v161 = vld [vmem:[%s160] sm:$0xff]
  %v162 = vld [vmem:[%s160 + $0x8] sm:$0xff]
  %v163 = vld [vmem:[%s160 + $0x10] sm:$0xff]
  %v164 = vld [vmem:[%s160 + $0x18] sm:$0xff]
  %v165 = vld [vmem:[%s160 + $0x20] sm:$0xff]
  %v166 = vld [vmem:[%s160 + $0x28] sm:$0xff]
  %vm167 = vcmask 269312
  %v169 = vsel %vm167, %v147, 0
  %v172 = vsel %vm167, %v148, 0
  %v175 = vsel %vm167, %v149, 0
  %v178 = vsel %vm167, %v150, 0
  %v181 = vsel %vm167, %v151, 0
  %v184 = vsel %vm167, %v152, 0
  %v187 = vsel %vm167, %v154, 0
  %v190 = vsel %vm167, %v155, 0
  %v193 = vsel %vm167, %v156, 0
  %v196 = vsel %vm167, %v157, 0
  %v199 = vsel %vm167, %v158, 0
  %v202 = vsel %vm167, %v159, 0
  %v205 = vsel %vm167, %v161, 0
  %v208 = vsel %vm167, %v162, 0
  %v211 = vsel %vm167, %v163, 0
  %v214 = vsel %vm167, %v164, 0
  %v217 = vsel %vm167, %v165, 0
  %v220 = vsel %vm167, %v166, 0
  %vm222 = vcmask 1040384
  %v224 = vsel %vm222, %v80, 0
  %226 = vmatprep.subr.mxu0 0.0
  %227 = vmatpush1.msra.mxu0 %v76
  %228 = vmatprep.subr.mxu0 0.0
  %229 = vmatpush1.msra.mxu0 %v77
  %230 = vmatprep.subr.mxu0 0.0
  %231 = vmatpush1.msra.mxu0 %v78
  %232 = vmatprep.subr.mxu0 0.0
  %233 = vmatpush1.msra.mxu0 %v79
  %234 = vmatprep.subr.mxu0 0.0
  %235 = vmatpush1.msra.mxu0 %v224
  %236 = vmatprep.subr.mxu0 0.0
  %237 = vmatpush1.msra.mxu0 0.0
  %238 = vmatprep.subr.mxu0 0.0
  %239 = vmatpush1.msra.mxu0 0.0
  %240 = vmatprep.subr.mxu0 0.0
  %241 = vmatpush1.msra.mxu0 0.0
  %242 = vmatprep.subr.mxu0 0.0
  %243 = vmatpush1.msra.mxu0 0.0
  %244 = vmatprep.subr.mxu0 0.0
  %245 = vmatpush1.msra.mxu0 0.0
  %246 = vmatprep.subr.mxu0 0.0
  %247 = vmatpush1.msra.mxu0 0.0
  %248 = vmatprep.subr.mxu0 0.0
  %249 = vmatpush1.msra.mxu0 0.0
  %250 = vmatprep.subr.mxu0 0.0
  %251 = vmatpush1.msra.mxu0 0.0
  %252 = vmatprep.subr.mxu0 0.0
  %253 = vmatpush1.msra.mxu0 0.0
  %254 = vmatprep.subr.mxu0 0.0
  %255 = vmatpush1.msra.mxu0 0.0
  %256 = vmatprep.subr.mxu0 0.0
  %257 = vmatpush1.msra.mxu0 0.0
  %258 = vmatprep.subr.mxu0 0.0
  %259 = vmatpush1.msra.mxu0 0.0
  %260 = vmatprep.subr.mxu0 0.0
  %261 = vmatpush1.msra.mxu0 0.0
  %262 = vmatprep.subr.mxu0 0.0
  %263 = vmatpush1.msra.mxu0 0.0
  %264 = vmatprep.subr.mxu0 0.0
  %265 = vmatpush1.msra.mxu0 0.0
  %266 = vmatprep.subr.mxu0 0.0
  %267 = vmatpush1.msra.mxu0 0.0
  %268 = vmatprep.subr.mxu0 0.0
  %269 = vmatpush1.msra.mxu0 0.0
  %270 = vmatprep.subr.mxu0 0.0
  %271 = vmatpush1.msra.mxu0 0.0
  %272 = vmatprep.subr.mxu0 0.0
  %273 = vmatpush1.msra.mxu0 0.0
  %274 = vmatprep.subr.mxu0 0.0
  %275 = vmatpush1.msra.mxu0 0.0
  %276 = vmatprep.subr.mxu0 0.0
  %277 = vmatpush1.msra.mxu0 0.0
  %278 = vmatprep.subr.mxu0 0.0
  %279 = vmatpush1.msra.mxu0 0.0
  %280 = vmatprep.subr.mxu0 0.0
  %281 = vmatpush1.msra.mxu0 0.0
  %282 = vmatprep.subr.mxu0 0.0
  %283 = vmatpush1.msra.mxu0 0.0
  %284 = vmatprep.subr.mxu0 0.0
  %285 = vmatpush1.msra.mxu0 0.0
  %286 = vmatprep.subr.mxu0 0.0
  %287 = vmatpush1.msra.mxu0 0.0
  %288 = vmatprep.subr.mxu0 0.0
  %289 = vmatpush1.msra.mxu0 0.0
  %290 = vmatprep.mubr.f32.mxu0 0.0
  %291 = vmatmul.mubr.f32.gmra.mrb[0].mxu0 %v169
  %v292 = vpop.f32.mrb[0].mxu0
  %v293 = vadd.f32 0.0, %v292
  %v294 = vpop.f32.mrb[0].mxu0
  %295 = vmatprep.mubr.f32.mxu0 0.0
  %296 = vmatmul.mubr.f32.gmra.mrb[0].mxu0 %v172
  %v297 = vpop.f32.mrb[0].mxu0
  %v298 = vadd.f32 0.0, %v297
  %v299 = vpop.f32.mrb[0].mxu0
  %300 = vmatprep.mubr.f32.mxu0 0.0
  %301 = vmatmul.mubr.f32.gmra.mrb[0].mxu0 %v175
  %v302 = vpop.f32.mrb[0].mxu0
  %v303 = vadd.f32 0.0, %v302
  %v304 = vpop.f32.mrb[0].mxu0
  %305 = vmatprep.mubr.f32.mxu0 0.0
  %306 = vmatmul.mubr.f32.gmra.mrb[0].mxu0 %v178
  %v307 = vpop.f32.mrb[0].mxu0
  %v308 = vadd.f32 0.0, %v307
  %v309 = vpop.f32.mrb[0].mxu0
  %310 = vmatprep.mubr.f32.mxu0 0.0
  %311 = vmatmul.mubr.f32.gmra.mrb[0].mxu0 %v181
  %v312 = vpop.f32.mrb[0].mxu0
  %v313 = vadd.f32 0.0, %v312
  %v314 = vpop.f32.mrb[0].mxu0
  %315 = vmatprep.mubr.f32.mxu0 0.0
  %316 = vmatmul.mubr.f32.gmra.mrb[0].mxu0 %v184
  %v317 = vpop.f32.mrb[0].mxu0
  %v318 = vadd.f32 0.0, %v317
  %v319 = vpop.f32.mrb[0].mxu0
  %320 = vmatprep.mubr.f32.mxu0 0.0
  %321 = vmatmul.mubr.f32.gmra.mrb[0].mxu0 %v187
  %v322 = vpop.f32.mrb[0].mxu0
  %v323 = vadd.f32 0.0, %v322
  %v324 = vpop.f32.mrb[0].mxu0
  %325 = vmatprep.mubr.f32.mxu0 0.0
  %326 = vmatmul.mubr.f32.gmra.mrb[0].mxu0 %v190
  %v327 = vpop.f32.mrb[0].mxu0
  %v328 = vadd.f32 0.0, %v327
  %v329 = vpop.f32.mrb[0].mxu0
  %330 = vmatprep.mubr.f32.mxu0 0.0
  %331 = vmatmul.mubr.f32.gmra.mrb[0].mxu0 %v193
  %v332 = vpop.f32.mrb[0].mxu0
  %v333 = vadd.f32 0.0, %v332
  %v334 = vpop.f32.mrb[0].mxu0
  %335 = vmatprep.mubr.f32.mxu0 0.0
  %336 = vmatmul.mubr.f32.gmra.mrb[0].mxu0 %v196
  %v337 = vpop.f32.mrb[0].mxu0
  %v338 = vadd.f32 0.0, %v337
  %v339 = vpop.f32.mrb[0].mxu0
  %340 = vmatprep.mubr.f32.mxu0 0.0
  %341 = vmatmul.mubr.f32.gmra.mrb[0].mxu0 %v199
  %v342 = vpop.f32.mrb[0].mxu0
  %v343 = vadd.f32 0.0, %v342
  %v344 = vpop.f32.mrb[0].mxu0
  %345 = vmatprep.mubr.f32.mxu0 0.0
  %346 = vmatmul.mubr.f32.gmra.mrb[0].mxu0 %v202
  %v347 = vpop.f32.mrb[0].mxu0
  %v348 = vadd.f32 0.0, %v347
  %v349 = vpop.f32.mrb[0].mxu0
  %350 = vmatprep.mubr.f32.mxu0 0.0
  %351 = vmatmul.mubr.f32.gmra.mrb[0].mxu0 %v205
  %v352 = vpop.f32.mrb[0].mxu0
  %v353 = vadd.f32 0.0, %v352
  %v354 = vpop.f32.mrb[0].mxu0
  %355 = vmatprep.mubr.f32.mxu0 0.0
  %356 = vmatmul.mubr.f32.gmra.mrb[0].mxu0 %v208
  %v357 = vpop.f32.mrb[0].mxu0
  %v358 = vadd.f32 0.0, %v357
  %v359 = vpop.f32.mrb[0].mxu0
  %360 = vmatprep.mubr.f32.mxu0 0.0
  %361 = vmatmul.mubr.f32.gmra.mrb[0].mxu0 %v211
  %v362 = vpop.f32.mrb[0].mxu0
  %v363 = vadd.f32 0.0, %v362
  %v364 = vpop.f32.mrb[0].mxu0
  %365 = vmatprep.mubr.f32.mxu0 0.0
  %366 = vmatmul.mubr.f32.gmra.mrb[0].mxu0 %v214
  %v367 = vpop.f32.mrb[0].mxu0
  %v368 = vadd.f32 0.0, %v367
  %v369 = vpop.f32.mrb[0].mxu0
  %370 = vmatprep.mubr.f32.mxu0 0.0
  %371 = vmatmul.mubr.f32.gmra.mrb[0].mxu0 %v217
  %v372 = vpop.f32.mrb[0].mxu0
  %v373 = vadd.f32 0.0, %v372
  %v374 = vpop.f32.mrb[0].mxu0
  %375 = vmatprep.mubr.f32.mxu0 0.0
  %376 = vmatmul.mubr.f32.gmra.mrb[0].mxu0 %v220
  %v377 = vpop.f32.mrb[0].mxu0
  %v378 = vadd.f32 0.0, %v377
  %v379 = vpop.f32.mrb[0].mxu0
  %380 = vdwg.mxu0
  %v381 = vmul.f32 %v293, %v293
  %v382 = vmul.f32 %v298, %v298
  %v383 = vmul.f32 %v303, %v303
  %v384 = vmul.f32 %v308, %v308
  %v385 = vmul.f32 %v313, %v313
  %v386 = vmul.f32 %v318, %v318
  %v387 = vmul.f32 %v323, %v323
  %v388 = vmul.f32 %v328, %v328
  %v389 = vmul.f32 %v333, %v333
  %v390 = vmul.f32 %v338, %v338
  %v391 = vmul.f32 %v343, %v343
  %v392 = vmul.f32 %v348, %v348
  %v393 = vadd.f32 %v381, %v387
  %v394 = vadd.f32 %v382, %v388
  %v395 = vadd.f32 %v383, %v389
  %v396 = vadd.f32 %v384, %v390
  %v397 = vadd.f32 %v385, %v391
  %v398 = vadd.f32 %v386, %v392
  %v399 = vmul.f32 %v353, %v353
  %v400 = vmul.f32 %v358, %v358
  %v401 = vmul.f32 %v363, %v363
  %v402 = vmul.f32 %v368, %v368
  %v403 = vmul.f32 %v373, %v373
  %v404 = vmul.f32 %v378, %v378
  %v405 = vadd.f32 %v393, %v399
  %v406 = vadd.f32 %v394, %v400
  %v407 = vadd.f32 %v395, %v401
  %v408 = vadd.f32 %v396, %v402
  %v409 = vadd.f32 %v397, %v403
  %v410 = vadd.f32 %v398, %v404
  %v411 = vmax.f32 %v405, 1e-08
  %v412 = vmax.f32 %v406, 1e-08
  %v413 = vmax.f32 %v407, 1e-08
  %v414 = vmax.f32 %v408, 1e-08
  %v415 = vmax.f32 %v409, 1e-08
  %v416 = vmax.f32 %v410, 1e-08
  %v417 = vrsqrt.pop %v411
  %v418 = vmul.f32 %v411, %v417
  %vm419 = vcmp.eq.f32.partialorder %v411, inf
  %v420 = vsel %vm419, %v411, %v418
  %vm421 = vcmp.eq.f32.partialorder %v411, 0.0
  %v422 = vand.u32 %v411, 2147483648
  %v423 = vsel %vm421, %v422, %v420
  %v424 = vrsqrt.pop %v412
  %v425 = vmul.f32 %v412, %v424
  %vm426 = vcmp.eq.f32.partialorder %v412, inf
  %v427 = vsel %vm426, %v412, %v425
  %vm428 = vcmp.eq.f32.partialorder %v412, 0.0
  %v429 = vand.u32 %v412, 2147483648
  %v430 = vsel %vm428, %v429, %v427
  %v431 = vrsqrt.pop %v413
  %v432 = vmul.f32 %v413, %v431
  %vm433 = vcmp.eq.f32.partialorder %v413, inf
  %v434 = vsel %vm433, %v413, %v432
  %vm435 = vcmp.eq.f32.partialorder %v413, 0.0
  %v436 = vand.u32 %v413, 2147483648
  %v437 = vsel %vm435, %v436, %v434
  %v438 = vrsqrt.pop %v414
  %v439 = vmul.f32 %v414, %v438
  %vm440 = vcmp.eq.f32.partialorder %v414, inf
  %v441 = vsel %vm440, %v414, %v439
  %vm442 = vcmp.eq.f32.partialorder %v414, 0.0
  %v443 = vand.u32 %v414, 2147483648
  %v444 = vsel %vm442, %v443, %v441
  %v445 = vrsqrt.pop %v415
  %v446 = vmul.f32 %v415, %v445
  %vm447 = vcmp.eq.f32.partialorder %v415, inf
  %v448 = vsel %vm447, %v415, %v446
  %vm449 = vcmp.eq.f32.partialorder %v415, 0.0
  %v450 = vand.u32 %v415, 2147483648
  %v451 = vsel %vm449, %v450, %v448
  %v452 = vrsqrt.pop %v416
  %v453 = vmul.f32 %v416, %v452
  %vm454 = vcmp.eq.f32.partialorder %v416, inf
  %v455 = vsel %vm454, %v416, %v453
  %vm456 = vcmp.eq.f32.partialorder %v416, 0.0
  %v457 = vand.u32 %v416, 2147483648
  %v458 = vsel %vm456, %v457, %v455
  %v460 = vsel %vm167, %v423, 0
  %v463 = vsel %vm167, %v430, 0
  %v466 = vsel %vm167, %v437, 0
  %v469 = vsel %vm167, %v444, 0
  %v472 = vsel %vm167, %v451, 0
  %v475 = vsel %vm167, %v458, 0
  %v478 = vsel %vm222, %v97, 0
  %480 = vmatprep.subr.mxu0 0.0
  %481 = vmatpush1.msra.mxu0 %v93
  %482 = vmatprep.subr.mxu0 0.0
  %483 = vmatpush1.msra.mxu0 %v94
  %484 = vmatprep.subr.mxu0 0.0
  %485 = vmatpush1.msra.mxu0 %v95
  %486 = vmatprep.subr.mxu0 0.0
  %487 = vmatpush1.msra.mxu0 %v96
  %488 = vmatprep.subr.mxu0 0.0
  %489 = vmatpush1.msra.mxu0 %v478
  %490 = vmatprep.subr.mxu0 0.0
  %491 = vmatpush1.msra.mxu0 0.0
  %492 = vmatprep.subr.mxu0 0.0
  %493 = vmatpush1.msra.mxu0 0.0
  %494 = vmatprep.subr.mxu0 0.0
  %495 = vmatpush1.msra.mxu0 0.0
  %496 = vmatprep.subr.mxu0 0.0
  %497 = vmatpush1.msra.mxu0 0.0
  %498 = vmatprep.subr.mxu0 0.0
  %499 = vmatpush1.msra.mxu0 0.0
  %500 = vmatprep.subr.mxu0 0.0
  %501 = vmatpush1.msra.mxu0 0.0
  %502 = vmatprep.subr.mxu0 0.0
  %503 = vmatpush1.msra.mxu0 0.0
  %504 = vmatprep.subr.mxu0 0.0
  %505 = vmatpush1.msra.mxu0 0.0
  %506 = vmatprep.subr.mxu0 0.0
  %507 = vmatpush1.msra.mxu0 0.0
  %508 = vmatprep.subr.mxu0 0.0
  %509 = vmatpush1.msra.mxu0 0.0
  %510 = vmatprep.subr.mxu0 0.0
  %511 = vmatpush1.msra.mxu0 0.0
  %512 = vmatprep.subr.mxu0 0.0
  %513 = vmatpush1.msra.mxu0 0.0
  %514 = vmatprep.subr.mxu0 0.0
  %515 = vmatpush1.msra.mxu0 0.0
  %516 = vmatprep.subr.mxu0 0.0
  %517 = vmatpush1.msra.mxu0 0.0
  %518 = vmatprep.subr.mxu0 0.0
  %519 = vmatpush1.msra.mxu0 0.0
  %520 = vmatprep.subr.mxu0 0.0
  %521 = vmatpush1.msra.mxu0 0.0
  %522 = vmatprep.subr.mxu0 0.0
  %523 = vmatpush1.msra.mxu0 0.0
  %524 = vmatprep.subr.mxu0 0.0
  %525 = vmatpush1.msra.mxu0 0.0
  %526 = vmatprep.subr.mxu0 0.0
  %527 = vmatpush1.msra.mxu0 0.0
  %528 = vmatprep.subr.mxu0 0.0
  %529 = vmatpush1.msra.mxu0 0.0
  %530 = vmatprep.subr.mxu0 0.0
  %531 = vmatpush1.msra.mxu0 0.0
  %532 = vmatprep.subr.mxu0 0.0
  %533 = vmatpush1.msra.mxu0 0.0
  %534 = vmatprep.subr.mxu0 0.0
  %535 = vmatpush1.msra.mxu0 0.0
  %536 = vmatprep.subr.mxu0 0.0
  %537 = vmatpush1.msra.mxu0 0.0
  %538 = vmatprep.subr.mxu0 0.0
  %539 = vmatpush1.msra.mxu0 0.0
  %540 = vmatprep.subr.mxu0 0.0
  %541 = vmatpush1.msra.mxu0 0.0
  %542 = vmatprep.subr.mxu0 0.0
  %543 = vmatpush1.msra.mxu0 0.0
  %544 = vmatprep.mubr.f32.mxu0 0.0
  %545 = vmatmul.mubr.f32.gmra.mrb[0].mxu0 %v460
  %v546 = vpop.f32.mrb[0].mxu0
  %v547 = vadd.f32 0.0, %v546
  %v548 = vpop.f32.mrb[0].mxu0
  %549 = vmatprep.mubr.f32.mxu0 0.0
  %550 = vmatmul.mubr.f32.gmra.mrb[0].mxu0 %v463
  %v551 = vpop.f32.mrb[0].mxu0
  %v552 = vadd.f32 0.0, %v551
  %v553 = vpop.f32.mrb[0].mxu0
  %554 = vmatprep.mubr.f32.mxu0 0.0
  %555 = vmatmul.mubr.f32.gmra.mrb[0].mxu0 %v466
  %v556 = vpop.f32.mrb[0].mxu0
  %v557 = vadd.f32 0.0, %v556
  %v558 = vpop.f32.mrb[0].mxu0
  %559 = vmatprep.mubr.f32.mxu0 0.0
  %560 = vmatmul.mubr.f32.gmra.mrb[0].mxu0 %v469
  %v561 = vpop.f32.mrb[0].mxu0
  %v562 = vadd.f32 0.0, %v561
  %v563 = vpop.f32.mrb[0].mxu0
  %564 = vmatprep.mubr.f32.mxu0 0.0
  %565 = vmatmul.mubr.f32.gmra.mrb[0].mxu0 %v472
  %v566 = vpop.f32.mrb[0].mxu0
  %v567 = vadd.f32 0.0, %v566
  %v568 = vpop.f32.mrb[0].mxu0
  %569 = vmatprep.mubr.f32.mxu0 0.0
  %570 = vmatmul.mubr.f32.gmra.mrb[0].mxu0 %v475
  %v571 = vpop.f32.mrb[0].mxu0
  %v572 = vadd.f32 0.0, %v571
  %v573 = vpop.f32.mrb[0].mxu0
  %574 = vdwg.mxu0
  %vm575 = vcmask 785408
  %v577 = vsel %vm575, %v141, 0
  %v580 = vsel %vm575, %v142, 0
  %v583 = vsel %vm575, %v143, 0
  %v586 = vsel %vm575, %v144, 0
  %v589 = vsel %vm575, %v145, 0
  %v592 = vsel %vm575, %v146, 0
  %594 = vmatprep.subr.mxu0 0.0
  %595 = vmatpush1.msra.mxu0 %v81
  %596 = vmatprep.subr.mxu0 0.0
  %597 = vmatpush1.msra.mxu0 %v82
  %598 = vmatprep.subr.mxu0 0.0
  %599 = vmatpush1.msra.mxu0 %v83
  %600 = vmatprep.subr.mxu0 0.0
  %601 = vmatpush1.msra.mxu0 %v84
  %602 = vmatprep.subr.mxu0 0.0
  %603 = vmatpush1.msra.mxu0 %v85
  %604 = vmatprep.subr.mxu0 0.0
  %605 = vmatpush1.msra.mxu0 %v86
  %606 = vmatprep.subr.mxu0 0.0
  %607 = vmatpush1.msra.mxu0 %v87
  %608 = vmatprep.subr.mxu0 0.0
  %609 = vmatpush1.msra.mxu0 %v88
  %610 = vmatprep.subr.mxu0 0.0
  %611 = vmatpush1.msra.mxu0 %v89
  %612 = vmatprep.subr.mxu0 0.0
  %613 = vmatpush1.msra.mxu0 %v90
  %614 = vmatprep.subr.mxu0 0.0
  %615 = vmatpush1.msra.mxu0 %v91
  %616 = vmatprep.subr.mxu0 0.0
  %617 = vmatpush1.msra.mxu0 %v92
  %618 = vmatprep.subr.mxu0 0.0
  %619 = vmatpush1.msra.mxu0 0.0
  %620 = vmatprep.subr.mxu0 0.0
  %621 = vmatpush1.msra.mxu0 0.0
  %622 = vmatprep.subr.mxu0 0.0
  %623 = vmatpush1.msra.mxu0 0.0
  %624 = vmatprep.subr.mxu0 0.0
  %625 = vmatpush1.msra.mxu0 0.0
  %626 = vmatprep.subr.mxu0 0.0
  %627 = vmatpush1.msra.mxu0 0.0
  %628 = vmatprep.subr.mxu0 0.0
  %629 = vmatpush1.msra.mxu0 0.0
  %630 = vmatprep.subr.mxu0 0.0
  %631 = vmatpush1.msra.mxu0 0.0
  %632 = vmatprep.subr.mxu0 0.0
  %633 = vmatpush1.msra.mxu0 0.0
  %634 = vmatprep.subr.mxu0 0.0
  %635 = vmatpush1.msra.mxu0 0.0
  %636 = vmatprep.subr.mxu0 0.0
  %637 = vmatpush1.msra.mxu0 0.0
  %638 = vmatprep.subr.mxu0 0.0
  %639 = vmatpush1.msra.mxu0 0.0
  %640 = vmatprep.subr.mxu0 0.0
  %641 = vmatpush1.msra.mxu0 0.0
  %642 = vmatprep.subr.mxu0 0.0
  %643 = vmatpush1.msra.mxu0 0.0
  %644 = vmatprep.subr.mxu0 0.0
  %645 = vmatpush1.msra.mxu0 0.0
  %646 = vmatprep.subr.mxu0 0.0
  %647 = vmatpush1.msra.mxu0 0.0
  %648 = vmatprep.subr.mxu0 0.0
  %649 = vmatpush1.msra.mxu0 0.0
  %650 = vmatprep.subr.mxu0 0.0
  %651 = vmatpush1.msra.mxu0 0.0
  %652 = vmatprep.subr.mxu0 0.0
  %653 = vmatpush1.msra.mxu0 0.0
  %654 = vmatprep.subr.mxu0 0.0
  %655 = vmatpush1.msra.mxu0 0.0
  %656 = vmatprep.subr.mxu0 0.0
  %657 = vmatpush1.msra.mxu0 0.0
  %658 = vmatprep.mubr.f32.mxu0 0.0
  %659 = vmatmul.mubr.f32.gmra.mrb[0].mxu0 %v577
  %v660 = vpop.f32.mrb[0].mxu0
  %v661 = vadd.f32 %v547, %v660
  %v662 = vpop.f32.mrb[0].mxu0
  %663 = vmatprep.mubr.f32.mxu0 0.0
  %664 = vmatmul.mubr.f32.gmra.mrb[0].mxu0 %v580
  %v665 = vpop.f32.mrb[0].mxu0
  %v666 = vadd.f32 %v552, %v665
  %v667 = vpop.f32.mrb[0].mxu0
  %668 = vmatprep.mubr.f32.mxu0 0.0
  %669 = vmatmul.mubr.f32.gmra.mrb[0].mxu0 %v583
  %v670 = vpop.f32.mrb[0].mxu0
  %v671 = vadd.f32 %v557, %v670
  %v672 = vpop.f32.mrb[0].mxu0
  %673 = vmatprep.mubr.f32.mxu0 0.0
  %674 = vmatmul.mubr.f32.gmra.mrb[0].mxu0 %v586
  %v675 = vpop.f32.mrb[0].mxu0
  %v676 = vadd.f32 %v562, %v675
  %v677 = vpop.f32.mrb[0].mxu0
  %678 = vmatprep.mubr.f32.mxu0 0.0
  %679 = vmatmul.mubr.f32.gmra.mrb[0].mxu0 %v589
  %v680 = vpop.f32.mrb[0].mxu0
  %v681 = vadd.f32 %v567, %v680
  %v682 = vpop.f32.mrb[0].mxu0
  %683 = vmatprep.mubr.f32.mxu0 0.0
  %684 = vmatmul.mubr.f32.gmra.mrb[0].mxu0 %v592
  %v685 = vpop.f32.mrb[0].mxu0
  %v686 = vadd.f32 %v572, %v685
  %v687 = vpop.f32.mrb[0].mxu0
  %688 = vdwg.mxu0
  %v690 = vlaneseq
  %v691 = vshrl.u32 %v690, 7
  %v692 = vsub.s32 0, %v691
  %v693 = vrot.slane %v98, %v692
  %v695 = vadd.f32 %v661, %v693
  %v696 = vadd.f32 %v666, %v693
  %v697 = vadd.f32 %v671, %v693
  %v698 = vadd.f32 %v676, %v693
  %v699 = vadd.f32 %v681, %v693
  %v700 = vadd.f32 %v686, %v693
  %v701 = vxor.u32 %v695, 2147483648
  %v702 = vxor.u32 %v696, 2147483648
  %v703 = vxor.u32 %v697, 2147483648
  %v704 = vxor.u32 %v698, 2147483648
  %v705 = vxor.u32 %v699, 2147483648
  %v706 = vxor.u32 %v700, 2147483648
  %v707 = vmul.f32 %v701, 1.442695
  %v708 = vpow.pop %v707
  %v709 = vmul.f32 %v702, 1.442695
  %v710 = vpow.pop %v709
  %v711 = vmul.f32 %v703, 1.442695
  %v712 = vpow.pop %v711
  %v713 = vmul.f32 %v704, 1.442695
  %v714 = vpow.pop %v713
  %v715 = vmul.f32 %v705, 1.442695
  %v716 = vpow.pop %v715
  %v717 = vmul.f32 %v706, 1.442695
  %v718 = vpow.pop %v717
  %v719 = vadd.f32 %v708, 1.0
  %v720 = vadd.f32 %v710, 1.0
  %v721 = vadd.f32 %v712, 1.0
  %v722 = vadd.f32 %v714, 1.0
  %v723 = vadd.f32 %v716, 1.0
  %v724 = vadd.f32 %v718, 1.0
  %v725 = vrcp.pop %v719
  %v726 = vmul.f32 1.0, %v725
  %v727 = vrcp.pop %v720
  %v728 = vmul.f32 1.0, %v727
  %v729 = vrcp.pop %v721
  %v730 = vmul.f32 1.0, %v729
  %v731 = vrcp.pop %v722
  %v732 = vmul.f32 1.0, %v731
  %v733 = vrcp.pop %v723
  %v734 = vmul.f32 1.0, %v733
  %v735 = vrcp.pop %v724
  %v736 = vmul.f32 1.0, %v735
  %v737 = vmul.f32 %v695, %v726
  %v738 = vmul.f32 %v696, %v728
  %v739 = vmul.f32 %v697, %v730
  %v740 = vmul.f32 %v698, %v732
  %v741 = vmul.f32 %v699, %v734
  %v742 = vmul.f32 %v700, %v736
  %v744 = vlaneseq
  %v745 = vshrl.u32 %v744, 7
  %v746 = vsub.s32 0, %v745
  %v747 = vrot.slane %v108, %v746
  %vm749 = vcmask 261120
  %v751 = vsel %vm749, %v737, 0
  %v754 = vsel %vm749, %v738, 0
  %v757 = vsel %vm749, %v739, 0
  %v760 = vsel %vm749, %v740, 0
  %v763 = vsel %vm749, %v741, 0
  %v766 = vsel %vm749, %v742, 0
  %768 = vmatprep.subr.mxu0 0.0
  %769 = vmatpush1.msra.mxu0 %v104
  %770 = vmatprep.subr.mxu0 0.0
  %771 = vmatpush1.msra.mxu0 %v105
  %772 = vmatprep.subr.mxu0 0.0
  %773 = vmatpush1.msra.mxu0 %v106
  %774 = vmatprep.subr.mxu0 0.0
  %775 = vmatpush1.msra.mxu0 %v107
  %776 = vmatprep.subr.mxu0 0.0
  %777 = vmatpush1.msra.mxu0 0.0
  %778 = vmatprep.subr.mxu0 0.0
  %779 = vmatpush1.msra.mxu0 0.0
  %780 = vmatprep.subr.mxu0 0.0
  %781 = vmatpush1.msra.mxu0 0.0
  %782 = vmatprep.subr.mxu0 0.0
  %783 = vmatpush1.msra.mxu0 0.0
  %784 = vmatprep.subr.mxu0 0.0
  %785 = vmatpush1.msra.mxu0 0.0
  %786 = vmatprep.subr.mxu0 0.0
  %787 = vmatpush1.msra.mxu0 0.0
  %788 = vmatprep.subr.mxu0 0.0
  %789 = vmatpush1.msra.mxu0 0.0
  %790 = vmatprep.subr.mxu0 0.0
  %791 = vmatpush1.msra.mxu0 0.0
  %792 = vmatprep.subr.mxu0 0.0
  %793 = vmatpush1.msra.mxu0 0.0
  %794 = vmatprep.subr.mxu0 0.0
  %795 = vmatpush1.msra.mxu0 0.0
  %796 = vmatprep.subr.mxu0 0.0
  %797 = vmatpush1.msra.mxu0 0.0
  %798 = vmatprep.subr.mxu0 0.0
  %799 = vmatpush1.msra.mxu0 0.0
  %800 = vmatprep.subr.mxu0 0.0
  %801 = vmatpush1.msra.mxu0 0.0
  %802 = vmatprep.subr.mxu0 0.0
  %803 = vmatpush1.msra.mxu0 0.0
  %804 = vmatprep.subr.mxu0 0.0
  %805 = vmatpush1.msra.mxu0 0.0
  %806 = vmatprep.subr.mxu0 0.0
  %807 = vmatpush1.msra.mxu0 0.0
  %808 = vmatprep.subr.mxu0 0.0
  %809 = vmatpush1.msra.mxu0 0.0
  %810 = vmatprep.subr.mxu0 0.0
  %811 = vmatpush1.msra.mxu0 0.0
  %812 = vmatprep.subr.mxu0 0.0
  %813 = vmatpush1.msra.mxu0 0.0
  %814 = vmatprep.subr.mxu0 0.0
  %815 = vmatpush1.msra.mxu0 0.0
  %816 = vmatprep.subr.mxu0 0.0
  %817 = vmatpush1.msra.mxu0 0.0
  %818 = vmatprep.subr.mxu0 0.0
  %819 = vmatpush1.msra.mxu0 0.0
  %820 = vmatprep.subr.mxu0 0.0
  %821 = vmatpush1.msra.mxu0 0.0
  %822 = vmatprep.subr.mxu0 0.0
  %823 = vmatpush1.msra.mxu0 0.0
  %824 = vmatprep.subr.mxu0 0.0
  %825 = vmatpush1.msra.mxu0 0.0
  %826 = vmatprep.subr.mxu0 0.0
  %827 = vmatpush1.msra.mxu0 0.0
  %828 = vmatprep.subr.mxu0 0.0
  %829 = vmatpush1.msra.mxu0 0.0
  %830 = vmatprep.subr.mxu0 0.0
  %831 = vmatpush1.msra.mxu0 0.0
  %832 = vmatprep.mubr.f32.mxu0 0.0
  %833 = vmatmul.mubr.f32.gmra.mrb[0].mxu0 %v751
  %v834 = vpop.f32.mrb[0].mxu0
  %v835 = vadd.f32 %v747, %v834
  %v836 = vpop.f32.mrb[0].mxu0
  %837 = vmatprep.mubr.f32.mxu0 0.0
  %838 = vmatmul.mubr.f32.gmra.mrb[0].mxu0 %v754
  %v839 = vpop.f32.mrb[0].mxu0
  %v840 = vadd.f32 %v747, %v839
  %v841 = vpop.f32.mrb[0].mxu0
  %842 = vmatprep.mubr.f32.mxu0 0.0
  %843 = vmatmul.mubr.f32.gmra.mrb[0].mxu0 %v757
  %v844 = vpop.f32.mrb[0].mxu0
  %v845 = vadd.f32 %v747, %v844
  %v846 = vpop.f32.mrb[0].mxu0
  %847 = vmatprep.mubr.f32.mxu0 0.0
  %848 = vmatmul.mubr.f32.gmra.mrb[0].mxu0 %v760
  %v849 = vpop.f32.mrb[0].mxu0
  %v850 = vadd.f32 %v747, %v849
  %v851 = vpop.f32.mrb[0].mxu0
  %852 = vmatprep.mubr.f32.mxu0 0.0
  %853 = vmatmul.mubr.f32.gmra.mrb[0].mxu0 %v763
  %v854 = vpop.f32.mrb[0].mxu0
  %v855 = vadd.f32 %v747, %v854
  %v856 = vpop.f32.mrb[0].mxu0
  %857 = vmatprep.mubr.f32.mxu0 0.0
  %858 = vmatmul.mubr.f32.gmra.mrb[0].mxu0 %v766
  %v859 = vpop.f32.mrb[0].mxu0
  %v860 = vadd.f32 %v747, %v859
  %v861 = vpop.f32.mrb[0].mxu0
  %862 = vdwg.mxu0
  %v863 = vxor.u32 %v835, 2147483648
  %v864 = vxor.u32 %v840, 2147483648
  %v865 = vxor.u32 %v845, 2147483648
  %v866 = vxor.u32 %v850, 2147483648
  %v867 = vxor.u32 %v855, 2147483648
  %v868 = vxor.u32 %v860, 2147483648
  %v869 = vmul.f32 %v863, 1.442695
  %v870 = vpow.pop %v869
  %v871 = vmul.f32 %v864, 1.442695
  %v872 = vpow.pop %v871
  %v873 = vmul.f32 %v865, 1.442695
  %v874 = vpow.pop %v873
  %v875 = vmul.f32 %v866, 1.442695
  %v876 = vpow.pop %v875
  %v877 = vmul.f32 %v867, 1.442695
  %v878 = vpow.pop %v877
  %v879 = vmul.f32 %v868, 1.442695
  %v880 = vpow.pop %v879
  %v881 = vadd.f32 %v870, 1.0
  %v882 = vadd.f32 %v872, 1.0
  %v883 = vadd.f32 %v874, 1.0
  %v884 = vadd.f32 %v876, 1.0
  %v885 = vadd.f32 %v878, 1.0
  %v886 = vadd.f32 %v880, 1.0
  %v887 = vrcp.pop %v881
  %v888 = vmul.f32 1.0, %v887
  %v889 = vrcp.pop %v882
  %v890 = vmul.f32 1.0, %v889
  %v891 = vrcp.pop %v883
  %v892 = vmul.f32 1.0, %v891
  %v893 = vrcp.pop %v884
  %v894 = vmul.f32 1.0, %v893
  %v895 = vrcp.pop %v885
  %v896 = vmul.f32 1.0, %v895
  %v897 = vrcp.pop %v886
  %v898 = vmul.f32 1.0, %v897
  %v900 = vsel %vm167, %v293, 0
  %v903 = vsel %vm167, %v298, 0
  %v906 = vsel %vm167, %v303, 0
  %v909 = vsel %vm167, %v308, 0
  %v912 = vsel %vm167, %v313, 0
  %v915 = vsel %vm167, %v318, 0
  %v918 = vsel %vm167, %v323, 0
  %v921 = vsel %vm167, %v328, 0
  %v924 = vsel %vm167, %v333, 0
  %v927 = vsel %vm167, %v338, 0
  %v930 = vsel %vm167, %v343, 0
  %v933 = vsel %vm167, %v348, 0
  %v936 = vsel %vm167, %v353, 0
  %v939 = vsel %vm167, %v358, 0
  %v942 = vsel %vm167, %v363, 0
  %v945 = vsel %vm167, %v368, 0
  %v948 = vsel %vm167, %v373, 0
  %v951 = vsel %vm167, %v378, 0
  %v954 = vsel %vm222, %v103, 0
  %956 = vmatprep.subr.mxu0 0.0
  %957 = vmatpush1.msra.mxu0 %v99
  %958 = vmatprep.subr.mxu0 0.0
  %959 = vmatpush1.msra.mxu0 %v100
  %960 = vmatprep.subr.mxu0 0.0
  %961 = vmatpush1.msra.mxu0 %v101
  %962 = vmatprep.subr.mxu0 0.0
  %963 = vmatpush1.msra.mxu0 %v102
  %964 = vmatprep.subr.mxu0 0.0
  %965 = vmatpush1.msra.mxu0 %v954
  %966 = vmatprep.subr.mxu0 0.0
  %967 = vmatpush1.msra.mxu0 0.0
  %968 = vmatprep.subr.mxu0 0.0
  %969 = vmatpush1.msra.mxu0 0.0
  %970 = vmatprep.subr.mxu0 0.0
  %971 = vmatpush1.msra.mxu0 0.0
  %972 = vmatprep.subr.mxu0 0.0
  %973 = vmatpush1.msra.mxu0 0.0
  %974 = vmatprep.subr.mxu0 0.0
  %975 = vmatpush1.msra.mxu0 0.0
  %976 = vmatprep.subr.mxu0 0.0
  %977 = vmatpush1.msra.mxu0 0.0
  %978 = vmatprep.subr.mxu0 0.0
  %979 = vmatpush1.msra.mxu0 0.0
  %980 = vmatprep.subr.mxu0 0.0
  %981 = vmatpush1.msra.mxu0 0.0
  %982 = vmatprep.subr.mxu0 0.0
  %983 = vmatpush1.msra.mxu0 0.0
  %984 = vmatprep.subr.mxu0 0.0
  %985 = vmatpush1.msra.mxu0 0.0
  %986 = vmatprep.subr.mxu0 0.0
  %987 = vmatpush1.msra.mxu0 0.0
  %988 = vmatprep.subr.mxu0 0.0
  %989 = vmatpush1.msra.mxu0 0.0
  %990 = vmatprep.subr.mxu0 0.0
  %991 = vmatpush1.msra.mxu0 0.0
  %992 = vmatprep.subr.mxu0 0.0
  %993 = vmatpush1.msra.mxu0 0.0
  %994 = vmatprep.subr.mxu0 0.0
  %995 = vmatpush1.msra.mxu0 0.0
  %996 = vmatprep.subr.mxu0 0.0
  %997 = vmatpush1.msra.mxu0 0.0
  %998 = vmatprep.subr.mxu0 0.0
  %999 = vmatpush1.msra.mxu0 0.0
  %1000 = vmatprep.subr.mxu0 0.0
  %1001 = vmatpush1.msra.mxu0 0.0
  %1002 = vmatprep.subr.mxu0 0.0
  %1003 = vmatpush1.msra.mxu0 0.0
  %1004 = vmatprep.subr.mxu0 0.0
  %1005 = vmatpush1.msra.mxu0 0.0
  %1006 = vmatprep.subr.mxu0 0.0
  %1007 = vmatpush1.msra.mxu0 0.0
  %1008 = vmatprep.subr.mxu0 0.0
  %1009 = vmatpush1.msra.mxu0 0.0
  %1010 = vmatprep.subr.mxu0 0.0
  %1011 = vmatpush1.msra.mxu0 0.0
  %1012 = vmatprep.subr.mxu0 0.0
  %1013 = vmatpush1.msra.mxu0 0.0
  %1014 = vmatprep.subr.mxu0 0.0
  %1015 = vmatpush1.msra.mxu0 0.0
  %1016 = vmatprep.subr.mxu0 0.0
  %1017 = vmatpush1.msra.mxu0 0.0
  %1018 = vmatprep.subr.mxu0 0.0
  %1019 = vmatpush1.msra.mxu0 0.0
  %1020 = vmatprep.mubr.f32.mxu0 0.0
  %1021 = vmatmul.mubr.f32.gmra.mrb[0].mxu0 %v900
  %v1022 = vpop.f32.mrb[0].mxu0
  %v1023 = vadd.f32 0.0, %v1022
  %v1024 = vpop.f32.mrb[0].mxu0
  %1025 = vmatprep.mubr.f32.mxu0 0.0
  %1026 = vmatmul.mubr.f32.gmra.mrb[0].mxu0 %v903
  %v1027 = vpop.f32.mrb[0].mxu0
  %v1028 = vadd.f32 0.0, %v1027
  %v1029 = vpop.f32.mrb[0].mxu0
  %1030 = vmatprep.mubr.f32.mxu0 0.0
  %1031 = vmatmul.mubr.f32.gmra.mrb[0].mxu0 %v906
  %v1032 = vpop.f32.mrb[0].mxu0
  %v1033 = vadd.f32 0.0, %v1032
  %v1034 = vpop.f32.mrb[0].mxu0
  %1035 = vmatprep.mubr.f32.mxu0 0.0
  %1036 = vmatmul.mubr.f32.gmra.mrb[0].mxu0 %v909
  %v1037 = vpop.f32.mrb[0].mxu0
  %v1038 = vadd.f32 0.0, %v1037
  %v1039 = vpop.f32.mrb[0].mxu0
  %1040 = vmatprep.mubr.f32.mxu0 0.0
  %1041 = vmatmul.mubr.f32.gmra.mrb[0].mxu0 %v912
  %v1042 = vpop.f32.mrb[0].mxu0
  %v1043 = vadd.f32 0.0, %v1042
  %v1044 = vpop.f32.mrb[0].mxu0
  %1045 = vmatprep.mubr.f32.mxu0 0.0
  %1046 = vmatmul.mubr.f32.gmra.mrb[0].mxu0 %v915
  %v1047 = vpop.f32.mrb[0].mxu0
  %v1048 = vadd.f32 0.0, %v1047
  %v1049 = vpop.f32.mrb[0].mxu0
  %1050 = vmatprep.mubr.f32.mxu0 0.0
  %1051 = vmatmul.mubr.f32.gmra.mrb[0].mxu0 %v918
  %v1052 = vpop.f32.mrb[0].mxu0
  %v1053 = vadd.f32 0.0, %v1052
  %v1054 = vpop.f32.mrb[0].mxu0
  %1055 = vmatprep.mubr.f32.mxu0 0.0
  %1056 = vmatmul.mubr.f32.gmra.mrb[0].mxu0 %v921
  %v1057 = vpop.f32.mrb[0].mxu0
  %v1058 = vadd.f32 0.0, %v1057
  %v1059 = vpop.f32.mrb[0].mxu0
  %1060 = vmatprep.mubr.f32.mxu0 0.0
  %1061 = vmatmul.mubr.f32.gmra.mrb[0].mxu0 %v924
  %v1062 = vpop.f32.mrb[0].mxu0
  %v1063 = vadd.f32 0.0, %v1062
  %v1064 = vpop.f32.mrb[0].mxu0
  %1065 = vmatprep.mubr.f32.mxu0 0.0
  %1066 = vmatmul.mubr.f32.gmra.mrb[0].mxu0 %v927
  %v1067 = vpop.f32.mrb[0].mxu0
  %v1068 = vadd.f32 0.0, %v1067
  %v1069 = vpop.f32.mrb[0].mxu0
  %1070 = vmatprep.mubr.f32.mxu0 0.0
  %1071 = vmatmul.mubr.f32.gmra.mrb[0].mxu0 %v930
  %v1072 = vpop.f32.mrb[0].mxu0
  %v1073 = vadd.f32 0.0, %v1072
  %v1074 = vpop.f32.mrb[0].mxu0
  %1075 = vmatprep.mubr.f32.mxu0 0.0
  %1076 = vmatmul.mubr.f32.gmra.mrb[0].mxu0 %v933
  %v1077 = vpop.f32.mrb[0].mxu0
  %v1078 = vadd.f32 0.0, %v1077
  %v1079 = vpop.f32.mrb[0].mxu0
  %1080 = vmatprep.mubr.f32.mxu0 0.0
  %1081 = vmatmul.mubr.f32.gmra.mrb[0].mxu0 %v936
  %v1082 = vpop.f32.mrb[0].mxu0
  %v1083 = vadd.f32 0.0, %v1082
  %v1084 = vpop.f32.mrb[0].mxu0
  %1085 = vmatprep.mubr.f32.mxu0 0.0
  %1086 = vmatmul.mubr.f32.gmra.mrb[0].mxu0 %v939
  %v1087 = vpop.f32.mrb[0].mxu0
  %v1088 = vadd.f32 0.0, %v1087
  %v1089 = vpop.f32.mrb[0].mxu0
  %1090 = vmatprep.mubr.f32.mxu0 0.0
  %1091 = vmatmul.mubr.f32.gmra.mrb[0].mxu0 %v942
  %v1092 = vpop.f32.mrb[0].mxu0
  %v1093 = vadd.f32 0.0, %v1092
  %v1094 = vpop.f32.mrb[0].mxu0
  %1095 = vmatprep.mubr.f32.mxu0 0.0
  %1096 = vmatmul.mubr.f32.gmra.mrb[0].mxu0 %v945
  %v1097 = vpop.f32.mrb[0].mxu0
  %v1098 = vadd.f32 0.0, %v1097
  %v1099 = vpop.f32.mrb[0].mxu0
  %1100 = vmatprep.mubr.f32.mxu0 0.0
  %1101 = vmatmul.mubr.f32.gmra.mrb[0].mxu0 %v948
  %v1102 = vpop.f32.mrb[0].mxu0
  %v1103 = vadd.f32 0.0, %v1102
  %v1104 = vpop.f32.mrb[0].mxu0
  %1105 = vmatprep.mubr.f32.mxu0 0.0
  %1106 = vmatmul.mubr.f32.gmra.mrb[0].mxu0 %v951
  %v1107 = vpop.f32.mrb[0].mxu0
  %v1108 = vadd.f32 0.0, %v1107
  %v1109 = vpop.f32.mrb[0].mxu0
  %1110 = vdwg.mxu0
  %v1111 = vmul.f32 %v1023, %v888
  %v1112 = vmul.f32 %v1028, %v890
  %v1113 = vmul.f32 %v1033, %v892
  %v1114 = vmul.f32 %v1038, %v894
  %v1115 = vmul.f32 %v1043, %v896
  %v1116 = vmul.f32 %v1048, %v898
  %v1117 = vmul.f32 %v1053, %v888
  %v1118 = vmul.f32 %v1058, %v890
  %v1119 = vmul.f32 %v1063, %v892
  %v1120 = vmul.f32 %v1068, %v894
  %v1121 = vmul.f32 %v1073, %v896
  %v1122 = vmul.f32 %v1078, %v898
  %v1123 = vmul.f32 %v1083, %v888
  %v1124 = vmul.f32 %v1088, %v890
  %v1125 = vmul.f32 %v1093, %v892
  %v1126 = vmul.f32 %v1098, %v894
  %v1127 = vmul.f32 %v1103, %v896
  %v1128 = vmul.f32 %v1108, %v898
  %vm1129 = vcmask 130048
  %v1131 = vsel %vm1129, %v1111, 0
  %v1134 = vsel %vm1129, %v1112, 0
  %v1137 = vsel %vm1129, %v1113, 0
  %v1140 = vsel %vm1129, %v1114, 0
  %v1143 = vsel %vm1129, %v1115, 0
  %v1146 = vsel %vm1129, %v1116, 0
  %v1149 = vsel %vm1129, %v1117, 0
  %v1152 = vsel %vm1129, %v1118, 0
  %v1155 = vsel %vm1129, %v1119, 0
  %v1158 = vsel %vm1129, %v1120, 0
  %v1161 = vsel %vm1129, %v1121, 0
  %v1164 = vsel %vm1129, %v1122, 0
  %v1167 = vsel %vm1129, %v1123, 0
  %v1170 = vsel %vm1129, %v1124, 0
  %v1173 = vsel %vm1129, %v1125, 0
  %v1176 = vsel %vm1129, %v1126, 0
  %v1179 = vsel %vm1129, %v1127, 0
  %v1182 = vsel %vm1129, %v1128, 0
  %1184 = vmatprep.subr.mxu0 0.0
  %1185 = vmatpush1.msra.mxu0 %v109
  %1186 = vmatprep.subr.mxu0 0.0
  %1187 = vmatpush1.msra.mxu0 %v110
  %1188 = vmatprep.subr.mxu0 0.0
  %1189 = vmatpush1.msra.mxu0 0.0
  %1190 = vmatprep.subr.mxu0 0.0
  %1191 = vmatpush1.msra.mxu0 0.0
  %1192 = vmatprep.subr.mxu0 0.0
  %1193 = vmatpush1.msra.mxu0 0.0
  %1194 = vmatprep.subr.mxu0 0.0
  %1195 = vmatpush1.msra.mxu0 0.0
  %1196 = vmatprep.subr.mxu0 0.0
  %1197 = vmatpush1.msra.mxu0 0.0
  %1198 = vmatprep.subr.mxu0 0.0
  %1199 = vmatpush1.msra.mxu0 0.0
  %1200 = vmatprep.subr.mxu0 0.0
  %1201 = vmatpush1.msra.mxu0 0.0
  %1202 = vmatprep.subr.mxu0 0.0
  %1203 = vmatpush1.msra.mxu0 0.0
  %1204 = vmatprep.subr.mxu0 0.0
  %1205 = vmatpush1.msra.mxu0 0.0
  %1206 = vmatprep.subr.mxu0 0.0
  %1207 = vmatpush1.msra.mxu0 0.0
  %1208 = vmatprep.subr.mxu0 0.0
  %1209 = vmatpush1.msra.mxu0 0.0
  %1210 = vmatprep.subr.mxu0 0.0
  %1211 = vmatpush1.msra.mxu0 0.0
  %1212 = vmatprep.subr.mxu0 0.0
  %1213 = vmatpush1.msra.mxu0 0.0
  %1214 = vmatprep.subr.mxu0 0.0
  %1215 = vmatpush1.msra.mxu0 0.0
  %1216 = vmatprep.subr.mxu0 0.0
  %1217 = vmatpush1.msra.mxu0 0.0
  %1218 = vmatprep.subr.mxu0 0.0
  %1219 = vmatpush1.msra.mxu0 0.0
  %1220 = vmatprep.subr.mxu0 0.0
  %1221 = vmatpush1.msra.mxu0 0.0
  %1222 = vmatprep.subr.mxu0 0.0
  %1223 = vmatpush1.msra.mxu0 0.0
  %1224 = vmatprep.subr.mxu0 0.0
  %1225 = vmatpush1.msra.mxu0 0.0
  %1226 = vmatprep.subr.mxu0 0.0
  %1227 = vmatpush1.msra.mxu0 0.0
  %1228 = vmatprep.subr.mxu0 0.0
  %1229 = vmatpush1.msra.mxu0 0.0
  %1230 = vmatprep.subr.mxu0 0.0
  %1231 = vmatpush1.msra.mxu0 0.0
  %1232 = vmatprep.subr.mxu0 0.0
  %1233 = vmatpush1.msra.mxu0 0.0
  %1234 = vmatprep.subr.mxu0 0.0
  %1235 = vmatpush1.msra.mxu0 0.0
  %1236 = vmatprep.subr.mxu0 0.0
  %1237 = vmatpush1.msra.mxu0 0.0
  %1238 = vmatprep.subr.mxu0 0.0
  %1239 = vmatpush1.msra.mxu0 0.0
  %1240 = vmatprep.subr.mxu0 0.0
  %1241 = vmatpush1.msra.mxu0 0.0
  %1242 = vmatprep.subr.mxu0 0.0
  %1243 = vmatpush1.msra.mxu0 0.0
  %1244 = vmatprep.subr.mxu0 0.0
  %1245 = vmatpush1.msra.mxu0 0.0
  %1246 = vmatprep.subr.mxu0 0.0
  %1247 = vmatpush1.msra.mxu0 0.0
  %1248 = vmatprep.mubr.f32.mxu0 0.0
  %1249 = vmatmul.mubr.f32.gmra.mrb[0].mxu0 %v1131
  %v1250 = vpop.f32.mrb[0].mxu0
  %v1251 = vadd.f32 0.0, %v1250
  %v1252 = vpop.f32.mrb[0].mxu0
  %1253 = vmatprep.mubr.f32.mxu0 0.0
  %1254 = vmatmul.mubr.f32.gmra.mrb[0].mxu0 %v1134
  %v1255 = vpop.f32.mrb[0].mxu0
  %v1256 = vadd.f32 0.0, %v1255
  %v1257 = vpop.f32.mrb[0].mxu0
  %1258 = vmatprep.mubr.f32.mxu0 0.0
  %1259 = vmatmul.mubr.f32.gmra.mrb[0].mxu0 %v1137
  %v1260 = vpop.f32.mrb[0].mxu0
  %v1261 = vadd.f32 0.0, %v1260
  %v1262 = vpop.f32.mrb[0].mxu0
  %1263 = vmatprep.mubr.f32.mxu0 0.0
  %1264 = vmatmul.mubr.f32.gmra.mrb[0].mxu0 %v1140
  %v1265 = vpop.f32.mrb[0].mxu0
  %v1266 = vadd.f32 0.0, %v1265
  %v1267 = vpop.f32.mrb[0].mxu0
  %1268 = vmatprep.mubr.f32.mxu0 0.0
  %1269 = vmatmul.mubr.f32.gmra.mrb[0].mxu0 %v1143
  %v1270 = vpop.f32.mrb[0].mxu0
  %v1271 = vadd.f32 0.0, %v1270
  %v1272 = vpop.f32.mrb[0].mxu0
  %1273 = vmatprep.mubr.f32.mxu0 0.0
  %1274 = vmatmul.mubr.f32.gmra.mrb[0].mxu0 %v1146
  %v1275 = vpop.f32.mrb[0].mxu0
  %v1276 = vadd.f32 0.0, %v1275
  %v1277 = vpop.f32.mrb[0].mxu0
  %1278 = vmatprep.mubr.f32.mxu0 0.0
  %1279 = vmatmul.mubr.f32.gmra.mrb[0].mxu0 %v1149
  %v1280 = vpop.f32.mrb[0].mxu0
  %v1281 = vadd.f32 0.0, %v1280
  %v1282 = vpop.f32.mrb[0].mxu0
  %1283 = vmatprep.mubr.f32.mxu0 0.0
  %1284 = vmatmul.mubr.f32.gmra.mrb[0].mxu0 %v1152
  %v1285 = vpop.f32.mrb[0].mxu0
  %v1286 = vadd.f32 0.0, %v1285
  %v1287 = vpop.f32.mrb[0].mxu0
  %1288 = vmatprep.mubr.f32.mxu0 0.0
  %1289 = vmatmul.mubr.f32.gmra.mrb[0].mxu0 %v1155
  %v1290 = vpop.f32.mrb[0].mxu0
  %v1291 = vadd.f32 0.0, %v1290
  %v1292 = vpop.f32.mrb[0].mxu0
  %1293 = vmatprep.mubr.f32.mxu0 0.0
  %1294 = vmatmul.mubr.f32.gmra.mrb[0].mxu0 %v1158
  %v1295 = vpop.f32.mrb[0].mxu0
  %v1296 = vadd.f32 0.0, %v1295
  %v1297 = vpop.f32.mrb[0].mxu0
  %1298 = vmatprep.mubr.f32.mxu0 0.0
  %1299 = vmatmul.mubr.f32.gmra.mrb[0].mxu0 %v1161
  %v1300 = vpop.f32.mrb[0].mxu0
  %v1301 = vadd.f32 0.0, %v1300
  %v1302 = vpop.f32.mrb[0].mxu0
  %1303 = vmatprep.mubr.f32.mxu0 0.0
  %1304 = vmatmul.mubr.f32.gmra.mrb[0].mxu0 %v1164
  %v1305 = vpop.f32.mrb[0].mxu0
  %v1306 = vadd.f32 0.0, %v1305
  %v1307 = vpop.f32.mrb[0].mxu0
  %1308 = vmatprep.mubr.f32.mxu0 0.0
  %1309 = vmatmul.mubr.f32.gmra.mrb[0].mxu0 %v1167
  %v1310 = vpop.f32.mrb[0].mxu0
  %v1311 = vadd.f32 0.0, %v1310
  %v1312 = vpop.f32.mrb[0].mxu0
  %1313 = vmatprep.mubr.f32.mxu0 0.0
  %1314 = vmatmul.mubr.f32.gmra.mrb[0].mxu0 %v1170
  %v1315 = vpop.f32.mrb[0].mxu0
  %v1316 = vadd.f32 0.0, %v1315
  %v1317 = vpop.f32.mrb[0].mxu0
  %1318 = vmatprep.mubr.f32.mxu0 0.0
  %1319 = vmatmul.mubr.f32.gmra.mrb[0].mxu0 %v1173
  %v1320 = vpop.f32.mrb[0].mxu0
  %v1321 = vadd.f32 0.0, %v1320
  %v1322 = vpop.f32.mrb[0].mxu0
  %1323 = vmatprep.mubr.f32.mxu0 0.0
  %1324 = vmatmul.mubr.f32.gmra.mrb[0].mxu0 %v1176
  %v1325 = vpop.f32.mrb[0].mxu0
  %v1326 = vadd.f32 0.0, %v1325
  %v1327 = vpop.f32.mrb[0].mxu0
  %1328 = vmatprep.mubr.f32.mxu0 0.0
  %1329 = vmatmul.mubr.f32.gmra.mrb[0].mxu0 %v1179
  %v1330 = vpop.f32.mrb[0].mxu0
  %v1331 = vadd.f32 0.0, %v1330
  %v1332 = vpop.f32.mrb[0].mxu0
  %1333 = vmatprep.mubr.f32.mxu0 0.0
  %1334 = vmatmul.mubr.f32.gmra.mrb[0].mxu0 %v1182
  %v1335 = vpop.f32.mrb[0].mxu0
  %v1336 = vadd.f32 0.0, %v1335
  %v1337 = vpop.f32.mrb[0].mxu0
  %1338 = vdwg.mxu0
  %v1339 = vmul.f32 %v1251, %v1251
  %v1340 = vmul.f32 %v1256, %v1256
  %v1341 = vmul.f32 %v1261, %v1261
  %v1342 = vmul.f32 %v1266, %v1266
  %v1343 = vmul.f32 %v1271, %v1271
  %v1344 = vmul.f32 %v1276, %v1276
  %v1345 = vmul.f32 %v1281, %v1281
  %v1346 = vmul.f32 %v1286, %v1286
  %v1347 = vmul.f32 %v1291, %v1291
  %v1348 = vmul.f32 %v1296, %v1296
  %v1349 = vmul.f32 %v1301, %v1301
  %v1350 = vmul.f32 %v1306, %v1306
  %v1351 = vadd.f32 %v1339, %v1345
  %v1352 = vadd.f32 %v1340, %v1346
  %v1353 = vadd.f32 %v1341, %v1347
  %v1354 = vadd.f32 %v1342, %v1348
  %v1355 = vadd.f32 %v1343, %v1349
  %v1356 = vadd.f32 %v1344, %v1350
  %v1357 = vmul.f32 %v1311, %v1311
  %v1358 = vmul.f32 %v1316, %v1316
  %v1359 = vmul.f32 %v1321, %v1321
  %v1360 = vmul.f32 %v1326, %v1326
  %v1361 = vmul.f32 %v1331, %v1331
  %v1362 = vmul.f32 %v1336, %v1336
  %v1363 = vadd.f32 %v1351, %v1357
  %v1364 = vadd.f32 %v1352, %v1358
  %v1365 = vadd.f32 %v1353, %v1359
  %v1366 = vadd.f32 %v1354, %v1360
  %v1367 = vadd.f32 %v1355, %v1361
  %v1368 = vadd.f32 %v1356, %v1362
  %v1369 = vmax.f32 %v1363, 1e-08
  %v1370 = vmax.f32 %v1364, 1e-08
  %v1371 = vmax.f32 %v1365, 1e-08
  %v1372 = vmax.f32 %v1366, 1e-08
  %v1373 = vmax.f32 %v1367, 1e-08
  %v1374 = vmax.f32 %v1368, 1e-08
  %v1375 = vrsqrt.pop %v1369
  %v1376 = vmul.f32 %v1369, %v1375
  %vm1377 = vcmp.eq.f32.partialorder %v1369, inf
  %v1378 = vsel %vm1377, %v1369, %v1376
  %vm1379 = vcmp.eq.f32.partialorder %v1369, 0.0
  %v1380 = vand.u32 %v1369, 2147483648
  %v1381 = vsel %vm1379, %v1380, %v1378
  %v1382 = vrsqrt.pop %v1370
  %v1383 = vmul.f32 %v1370, %v1382
  %vm1384 = vcmp.eq.f32.partialorder %v1370, inf
  %v1385 = vsel %vm1384, %v1370, %v1383
  %vm1386 = vcmp.eq.f32.partialorder %v1370, 0.0
  %v1387 = vand.u32 %v1370, 2147483648
  %v1388 = vsel %vm1386, %v1387, %v1385
  %v1389 = vrsqrt.pop %v1371
  %v1390 = vmul.f32 %v1371, %v1389
  %vm1391 = vcmp.eq.f32.partialorder %v1371, inf
  %v1392 = vsel %vm1391, %v1371, %v1390
  %vm1393 = vcmp.eq.f32.partialorder %v1371, 0.0
  %v1394 = vand.u32 %v1371, 2147483648
  %v1395 = vsel %vm1393, %v1394, %v1392
  %v1396 = vrsqrt.pop %v1372
  %v1397 = vmul.f32 %v1372, %v1396
  %vm1398 = vcmp.eq.f32.partialorder %v1372, inf
  %v1399 = vsel %vm1398, %v1372, %v1397
  %vm1400 = vcmp.eq.f32.partialorder %v1372, 0.0
  %v1401 = vand.u32 %v1372, 2147483648
  %v1402 = vsel %vm1400, %v1401, %v1399
  %v1403 = vrsqrt.pop %v1373
  %v1404 = vmul.f32 %v1373, %v1403
  %vm1405 = vcmp.eq.f32.partialorder %v1373, inf
  %v1406 = vsel %vm1405, %v1373, %v1404
  %vm1407 = vcmp.eq.f32.partialorder %v1373, 0.0
  %v1408 = vand.u32 %v1373, 2147483648
  %v1409 = vsel %vm1407, %v1408, %v1406
  %v1410 = vrsqrt.pop %v1374
  %v1411 = vmul.f32 %v1374, %v1410
  %vm1412 = vcmp.eq.f32.partialorder %v1374, inf
  %v1413 = vsel %vm1412, %v1374, %v1411
  %vm1414 = vcmp.eq.f32.partialorder %v1374, 0.0
  %v1415 = vand.u32 %v1374, 2147483648
  %v1416 = vsel %vm1414, %v1415, %v1413
  %v1418 = vsel %vm1129, %v1381, 0
  %v1421 = vsel %vm1129, %v1388, 0
  %v1424 = vsel %vm1129, %v1395, 0
  %v1427 = vsel %vm1129, %v1402, 0
  %v1430 = vsel %vm1129, %v1409, 0
  %v1433 = vsel %vm1129, %v1416, 0
  %1435 = vmatprep.subr.mxu0 0.0
  %1436 = vmatpush1.msra.mxu0 %v115
  %1437 = vmatprep.subr.mxu0 0.0
  %1438 = vmatpush1.msra.mxu0 %v116
  %1439 = vmatprep.subr.mxu0 0.0
  %1440 = vmatpush1.msra.mxu0 0.0
  %1441 = vmatprep.subr.mxu0 0.0
  %1442 = vmatpush1.msra.mxu0 0.0
  %1443 = vmatprep.subr.mxu0 0.0
  %1444 = vmatpush1.msra.mxu0 0.0
  %1445 = vmatprep.subr.mxu0 0.0
  %1446 = vmatpush1.msra.mxu0 0.0
  %1447 = vmatprep.subr.mxu0 0.0
  %1448 = vmatpush1.msra.mxu0 0.0
  %1449 = vmatprep.subr.mxu0 0.0
  %1450 = vmatpush1.msra.mxu0 0.0
  %1451 = vmatprep.subr.mxu0 0.0
  %1452 = vmatpush1.msra.mxu0 0.0
  %1453 = vmatprep.subr.mxu0 0.0
  %1454 = vmatpush1.msra.mxu0 0.0
  %1455 = vmatprep.subr.mxu0 0.0
  %1456 = vmatpush1.msra.mxu0 0.0
  %1457 = vmatprep.subr.mxu0 0.0
  %1458 = vmatpush1.msra.mxu0 0.0
  %1459 = vmatprep.subr.mxu0 0.0
  %1460 = vmatpush1.msra.mxu0 0.0
  %1461 = vmatprep.subr.mxu0 0.0
  %1462 = vmatpush1.msra.mxu0 0.0
  %1463 = vmatprep.subr.mxu0 0.0
  %1464 = vmatpush1.msra.mxu0 0.0
  %1465 = vmatprep.subr.mxu0 0.0
  %1466 = vmatpush1.msra.mxu0 0.0
  %1467 = vmatprep.subr.mxu0 0.0
  %1468 = vmatpush1.msra.mxu0 0.0
  %1469 = vmatprep.subr.mxu0 0.0
  %1470 = vmatpush1.msra.mxu0 0.0
  %1471 = vmatprep.subr.mxu0 0.0
  %1472 = vmatpush1.msra.mxu0 0.0
  %1473 = vmatprep.subr.mxu0 0.0
  %1474 = vmatpush1.msra.mxu0 0.0
  %1475 = vmatprep.subr.mxu0 0.0
  %1476 = vmatpush1.msra.mxu0 0.0
  %1477 = vmatprep.subr.mxu0 0.0
  %1478 = vmatpush1.msra.mxu0 0.0
  %1479 = vmatprep.subr.mxu0 0.0
  %1480 = vmatpush1.msra.mxu0 0.0
  %1481 = vmatprep.subr.mxu0 0.0
  %1482 = vmatpush1.msra.mxu0 0.0
  %1483 = vmatprep.subr.mxu0 0.0
  %1484 = vmatpush1.msra.mxu0 0.0
  %1485 = vmatprep.subr.mxu0 0.0
  %1486 = vmatpush1.msra.mxu0 0.0
  %1487 = vmatprep.subr.mxu0 0.0
  %1488 = vmatpush1.msra.mxu0 0.0
  %1489 = vmatprep.subr.mxu0 0.0
  %1490 = vmatpush1.msra.mxu0 0.0
  %1491 = vmatprep.subr.mxu0 0.0
  %1492 = vmatpush1.msra.mxu0 0.0
  %1493 = vmatprep.subr.mxu0 0.0
  %1494 = vmatpush1.msra.mxu0 0.0
  %1495 = vmatprep.subr.mxu0 0.0
  %1496 = vmatpush1.msra.mxu0 0.0
  %1497 = vmatprep.subr.mxu0 0.0
  %1498 = vmatpush1.msra.mxu0 0.0
  %1499 = vmatprep.mubr.f32.mxu0 0.0
  %1500 = vmatmul.mubr.f32.gmra.mrb[0].mxu0 %v1418
  %v1501 = vpop.f32.mrb[0].mxu0
  %v1502 = vadd.f32 0.0, %v1501
  %v1503 = vpop.f32.mrb[0].mxu0
  %1504 = vmatprep.mubr.f32.mxu0 0.0
  %1505 = vmatmul.mubr.f32.gmra.mrb[0].mxu0 %v1421
  %v1506 = vpop.f32.mrb[0].mxu0
  %v1507 = vadd.f32 0.0, %v1506
  %v1508 = vpop.f32.mrb[0].mxu0
  %1509 = vmatprep.mubr.f32.mxu0 0.0
  %1510 = vmatmul.mubr.f32.gmra.mrb[0].mxu0 %v1424
  %v1511 = vpop.f32.mrb[0].mxu0
  %v1512 = vadd.f32 0.0, %v1511
  %v1513 = vpop.f32.mrb[0].mxu0
  %1514 = vmatprep.mubr.f32.mxu0 0.0
  %1515 = vmatmul.mubr.f32.gmra.mrb[0].mxu0 %v1427
  %v1516 = vpop.f32.mrb[0].mxu0
  %v1517 = vadd.f32 0.0, %v1516
  %v1518 = vpop.f32.mrb[0].mxu0
  %1519 = vmatprep.mubr.f32.mxu0 0.0
  %1520 = vmatmul.mubr.f32.gmra.mrb[0].mxu0 %v1430
  %v1521 = vpop.f32.mrb[0].mxu0
  %v1522 = vadd.f32 0.0, %v1521
  %v1523 = vpop.f32.mrb[0].mxu0
  %1524 = vmatprep.mubr.f32.mxu0 0.0
  %1525 = vmatmul.mubr.f32.gmra.mrb[0].mxu0 %v1433
  %v1526 = vpop.f32.mrb[0].mxu0
  %v1527 = vadd.f32 0.0, %v1526
  %v1528 = vpop.f32.mrb[0].mxu0
  %1529 = vdwg.mxu0
  %1530 = vmatprep.subr.mxu0 0.0
  %1531 = vmatpush1.msra.mxu0 %v111
  %1532 = vmatprep.subr.mxu0 0.0
  %1533 = vmatpush1.msra.mxu0 %v112
  %1534 = vmatprep.subr.mxu0 0.0
  %1535 = vmatpush1.msra.mxu0 %v113
  %1536 = vmatprep.subr.mxu0 0.0
  %1537 = vmatpush1.msra.mxu0 %v114
  %1538 = vmatprep.subr.mxu0 0.0
  %1539 = vmatpush1.msra.mxu0 0.0
  %1540 = vmatprep.subr.mxu0 0.0
  %1541 = vmatpush1.msra.mxu0 0.0
  %1542 = vmatprep.subr.mxu0 0.0
  %1543 = vmatpush1.msra.mxu0 0.0
  %1544 = vmatprep.subr.mxu0 0.0
  %1545 = vmatpush1.msra.mxu0 0.0
  %1546 = vmatprep.subr.mxu0 0.0
  %1547 = vmatpush1.msra.mxu0 0.0
  %1548 = vmatprep.subr.mxu0 0.0
  %1549 = vmatpush1.msra.mxu0 0.0
  %1550 = vmatprep.subr.mxu0 0.0
  %1551 = vmatpush1.msra.mxu0 0.0
  %1552 = vmatprep.subr.mxu0 0.0
  %1553 = vmatpush1.msra.mxu0 0.0
  %1554 = vmatprep.subr.mxu0 0.0
  %1555 = vmatpush1.msra.mxu0 0.0
  %1556 = vmatprep.subr.mxu0 0.0
  %1557 = vmatpush1.msra.mxu0 0.0
  %1558 = vmatprep.subr.mxu0 0.0
  %1559 = vmatpush1.msra.mxu0 0.0
  %1560 = vmatprep.subr.mxu0 0.0
  %1561 = vmatpush1.msra.mxu0 0.0
  %1562 = vmatprep.subr.mxu0 0.0
  %1563 = vmatpush1.msra.mxu0 0.0
  %1564 = vmatprep.subr.mxu0 0.0
  %1565 = vmatpush1.msra.mxu0 0.0
  %1566 = vmatprep.subr.mxu0 0.0
  %1567 = vmatpush1.msra.mxu0 0.0
  %1568 = vmatprep.subr.mxu0 0.0
  %1569 = vmatpush1.msra.mxu0 0.0
  %1570 = vmatprep.subr.mxu0 0.0
  %1571 = vmatpush1.msra.mxu0 0.0
  %1572 = vmatprep.subr.mxu0 0.0
  %1573 = vmatpush1.msra.mxu0 0.0
  %1574 = vmatprep.subr.mxu0 0.0
  %1575 = vmatpush1.msra.mxu0 0.0
  %1576 = vmatprep.subr.mxu0 0.0
  %1577 = vmatpush1.msra.mxu0 0.0
  %1578 = vmatprep.subr.mxu0 0.0
  %1579 = vmatpush1.msra.mxu0 0.0
  %1580 = vmatprep.subr.mxu0 0.0
  %1581 = vmatpush1.msra.mxu0 0.0
  %1582 = vmatprep.subr.mxu0 0.0
  %1583 = vmatpush1.msra.mxu0 0.0
  %1584 = vmatprep.subr.mxu0 0.0
  %1585 = vmatpush1.msra.mxu0 0.0
  %1586 = vmatprep.subr.mxu0 0.0
  %1587 = vmatpush1.msra.mxu0 0.0
  %1588 = vmatprep.subr.mxu0 0.0
  %1589 = vmatpush1.msra.mxu0 0.0
  %1590 = vmatprep.subr.mxu0 0.0
  %1591 = vmatpush1.msra.mxu0 0.0
  %1592 = vmatprep.subr.mxu0 0.0
  %1593 = vmatpush1.msra.mxu0 0.0
  %1594 = vmatprep.mubr.f32.mxu0 0.0
  %1595 = vmatmul.mubr.f32.gmra.mrb[0].mxu0 %v751
  %v1596 = vpop.f32.mrb[0].mxu0
  %v1597 = vadd.f32 %v1502, %v1596
  %v1598 = vpop.f32.mrb[0].mxu0
  %1599 = vmatprep.mubr.f32.mxu0 0.0
  %1600 = vmatmul.mubr.f32.gmra.mrb[0].mxu0 %v754
  %v1601 = vpop.f32.mrb[0].mxu0
  %v1602 = vadd.f32 %v1507, %v1601
  %v1603 = vpop.f32.mrb[0].mxu0
  %1604 = vmatprep.mubr.f32.mxu0 0.0
  %1605 = vmatmul.mubr.f32.gmra.mrb[0].mxu0 %v757
  %v1606 = vpop.f32.mrb[0].mxu0
  %v1607 = vadd.f32 %v1512, %v1606
  %v1608 = vpop.f32.mrb[0].mxu0
  %1609 = vmatprep.mubr.f32.mxu0 0.0
  %1610 = vmatmul.mubr.f32.gmra.mrb[0].mxu0 %v760
  %v1611 = vpop.f32.mrb[0].mxu0
  %v1612 = vadd.f32 %v1517, %v1611
  %v1613 = vpop.f32.mrb[0].mxu0
  %1614 = vmatprep.mubr.f32.mxu0 0.0
  %1615 = vmatmul.mubr.f32.gmra.mrb[0].mxu0 %v763
  %v1616 = vpop.f32.mrb[0].mxu0
  %v1617 = vadd.f32 %v1522, %v1616
  %v1618 = vpop.f32.mrb[0].mxu0
  %1619 = vmatprep.mubr.f32.mxu0 0.0
  %1620 = vmatmul.mubr.f32.gmra.mrb[0].mxu0 %v766
  %v1621 = vpop.f32.mrb[0].mxu0
  %v1622 = vadd.f32 %v1527, %v1621
  %v1623 = vpop.f32.mrb[0].mxu0
  %1624 = vdwg.mxu0
  %v1626 = vlaneseq
  %v1627 = vshrl.u32 %v1626, 7
  %v1628 = vsub.s32 0, %v1627
  %v1629 = vrot.slane %v117, %v1628
  %v1631 = vadd.f32 %v1597, %v1629
  %v1632 = vadd.f32 %v1602, %v1629
  %v1633 = vadd.f32 %v1607, %v1629
  %v1634 = vadd.f32 %v1612, %v1629
  %v1635 = vadd.f32 %v1617, %v1629
  %v1636 = vadd.f32 %v1622, %v1629
  %v1637 = vxor.u32 %v1631, 2147483648
  %v1638 = vxor.u32 %v1632, 2147483648
  %v1639 = vxor.u32 %v1633, 2147483648
  %v1640 = vxor.u32 %v1634, 2147483648
  %v1641 = vxor.u32 %v1635, 2147483648
  %v1642 = vxor.u32 %v1636, 2147483648
  %v1643 = vmul.f32 %v1637, 1.442695
  %v1644 = vpow.pop %v1643
  %v1645 = vmul.f32 %v1638, 1.442695
  %v1646 = vpow.pop %v1645
  %v1647 = vmul.f32 %v1639, 1.442695
  %v1648 = vpow.pop %v1647
  %v1649 = vmul.f32 %v1640, 1.442695
  %v1650 = vpow.pop %v1649
  %v1651 = vmul.f32 %v1641, 1.442695
  %v1652 = vpow.pop %v1651
  %v1653 = vmul.f32 %v1642, 1.442695
  %v1654 = vpow.pop %v1653
  %v1655 = vadd.f32 %v1644, 1.0
  %v1656 = vadd.f32 %v1646, 1.0
  %v1657 = vadd.f32 %v1648, 1.0
  %v1658 = vadd.f32 %v1650, 1.0
  %v1659 = vadd.f32 %v1652, 1.0
  %v1660 = vadd.f32 %v1654, 1.0
  %v1661 = vrcp.pop %v1655
  %v1662 = vmul.f32 1.0, %v1661
  %v1663 = vrcp.pop %v1656
  %v1664 = vmul.f32 1.0, %v1663
  %v1665 = vrcp.pop %v1657
  %v1666 = vmul.f32 1.0, %v1665
  %v1667 = vrcp.pop %v1658
  %v1668 = vmul.f32 1.0, %v1667
  %v1669 = vrcp.pop %v1659
  %v1670 = vmul.f32 1.0, %v1669
  %v1671 = vrcp.pop %v1660
  %v1672 = vmul.f32 1.0, %v1671
  %v1673 = vmul.f32 %v1631, %v1662
  %v1674 = vmul.f32 %v1632, %v1664
  %v1675 = vmul.f32 %v1633, %v1666
  %v1676 = vmul.f32 %v1634, %v1668
  %v1677 = vmul.f32 %v1635, %v1670
  %v1678 = vmul.f32 %v1636, %v1672
  %v1680 = vlaneseq
  %v1681 = vshrl.u32 %v1680, 7
  %v1682 = vsub.s32 0, %v1681
  %v1683 = vrot.slane %v124, %v1682
  %v1686 = vsel %vm749, %v1673, 0
  %v1689 = vsel %vm749, %v1674, 0
  %v1692 = vsel %vm749, %v1675, 0
  %v1695 = vsel %vm749, %v1676, 0
  %v1698 = vsel %vm749, %v1677, 0
  %v1701 = vsel %vm749, %v1678, 0
  %1703 = vmatprep.subr.mxu0 0.0
  %1704 = vmatpush1.msra.mxu0 %v120
  %1705 = vmatprep.subr.mxu0 0.0
  %1706 = vmatpush1.msra.mxu0 %v121
  %1707 = vmatprep.subr.mxu0 0.0
  %1708 = vmatpush1.msra.mxu0 %v122
  %1709 = vmatprep.subr.mxu0 0.0
  %1710 = vmatpush1.msra.mxu0 %v123
  %1711 = vmatprep.subr.mxu0 0.0
  %1712 = vmatpush1.msra.mxu0 0.0
  %1713 = vmatprep.subr.mxu0 0.0
  %1714 = vmatpush1.msra.mxu0 0.0
  %1715 = vmatprep.subr.mxu0 0.0
  %1716 = vmatpush1.msra.mxu0 0.0
  %1717 = vmatprep.subr.mxu0 0.0
  %1718 = vmatpush1.msra.mxu0 0.0
  %1719 = vmatprep.subr.mxu0 0.0
  %1720 = vmatpush1.msra.mxu0 0.0
  %1721 = vmatprep.subr.mxu0 0.0
  %1722 = vmatpush1.msra.mxu0 0.0
  %1723 = vmatprep.subr.mxu0 0.0
  %1724 = vmatpush1.msra.mxu0 0.0
  %1725 = vmatprep.subr.mxu0 0.0
  %1726 = vmatpush1.msra.mxu0 0.0
  %1727 = vmatprep.subr.mxu0 0.0
  %1728 = vmatpush1.msra.mxu0 0.0
  %1729 = vmatprep.subr.mxu0 0.0
  %1730 = vmatpush1.msra.mxu0 0.0
  %1731 = vmatprep.subr.mxu0 0.0
  %1732 = vmatpush1.msra.mxu0 0.0
  %1733 = vmatprep.subr.mxu0 0.0
  %1734 = vmatpush1.msra.mxu0 0.0
  %1735 = vmatprep.subr.mxu0 0.0
  %1736 = vmatpush1.msra.mxu0 0.0
  %1737 = vmatprep.subr.mxu0 0.0
  %1738 = vmatpush1.msra.mxu0 0.0
  %1739 = vmatprep.subr.mxu0 0.0
  %1740 = vmatpush1.msra.mxu0 0.0
  %1741 = vmatprep.subr.mxu0 0.0
  %1742 = vmatpush1.msra.mxu0 0.0
  %1743 = vmatprep.subr.mxu0 0.0
  %1744 = vmatpush1.msra.mxu0 0.0
  %1745 = vmatprep.subr.mxu0 0.0
  %1746 = vmatpush1.msra.mxu0 0.0
  %1747 = vmatprep.subr.mxu0 0.0
  %1748 = vmatpush1.msra.mxu0 0.0
  %1749 = vmatprep.subr.mxu0 0.0
  %1750 = vmatpush1.msra.mxu0 0.0
  %1751 = vmatprep.subr.mxu0 0.0
  %1752 = vmatpush1.msra.mxu0 0.0
  %1753 = vmatprep.subr.mxu0 0.0
  %1754 = vmatpush1.msra.mxu0 0.0
  %1755 = vmatprep.subr.mxu0 0.0
  %1756 = vmatpush1.msra.mxu0 0.0
  %1757 = vmatprep.subr.mxu0 0.0
  %1758 = vmatpush1.msra.mxu0 0.0
  %1759 = vmatprep.subr.mxu0 0.0
  %1760 = vmatpush1.msra.mxu0 0.0
  %1761 = vmatprep.subr.mxu0 0.0
  %1762 = vmatpush1.msra.mxu0 0.0
  %1763 = vmatprep.subr.mxu0 0.0
  %1764 = vmatpush1.msra.mxu0 0.0
  %1765 = vmatprep.subr.mxu0 0.0
  %1766 = vmatpush1.msra.mxu0 0.0
  %1767 = vmatprep.mubr.f32.mxu0 0.0
  %1768 = vmatmul.mubr.f32.gmra.mrb[0].mxu0 %v1686
  %v1769 = vpop.f32.mrb[0].mxu0
  %v1770 = vadd.f32 %v1683, %v1769
  %v1771 = vpop.f32.mrb[0].mxu0
  %1772 = vmatprep.mubr.f32.mxu0 0.0
  %1773 = vmatmul.mubr.f32.gmra.mrb[0].mxu0 %v1689
  %v1774 = vpop.f32.mrb[0].mxu0
  %v1775 = vadd.f32 %v1683, %v1774
  %v1776 = vpop.f32.mrb[0].mxu0
  %1777 = vmatprep.mubr.f32.mxu0 0.0
  %1778 = vmatmul.mubr.f32.gmra.mrb[0].mxu0 %v1692
  %v1779 = vpop.f32.mrb[0].mxu0
  %v1780 = vadd.f32 %v1683, %v1779
  %v1781 = vpop.f32.mrb[0].mxu0
  %1782 = vmatprep.mubr.f32.mxu0 0.0
  %1783 = vmatmul.mubr.f32.gmra.mrb[0].mxu0 %v1695
  %v1784 = vpop.f32.mrb[0].mxu0
  %v1785 = vadd.f32 %v1683, %v1784
  %v1786 = vpop.f32.mrb[0].mxu0
  %1787 = vmatprep.mubr.f32.mxu0 0.0
  %1788 = vmatmul.mubr.f32.gmra.mrb[0].mxu0 %v1698
  %v1789 = vpop.f32.mrb[0].mxu0
  %v1790 = vadd.f32 %v1683, %v1789
  %v1791 = vpop.f32.mrb[0].mxu0
  %1792 = vmatprep.mubr.f32.mxu0 0.0
  %1793 = vmatmul.mubr.f32.gmra.mrb[0].mxu0 %v1701
  %v1794 = vpop.f32.mrb[0].mxu0
  %v1795 = vadd.f32 %v1683, %v1794
  %v1796 = vpop.f32.mrb[0].mxu0
  %1797 = vdwg.mxu0
  %v1798 = vxor.u32 %v1770, 2147483648
  %v1799 = vxor.u32 %v1775, 2147483648
  %v1800 = vxor.u32 %v1780, 2147483648
  %v1801 = vxor.u32 %v1785, 2147483648
  %v1802 = vxor.u32 %v1790, 2147483648
  %v1803 = vxor.u32 %v1795, 2147483648
  %v1804 = vmul.f32 %v1798, 1.442695
  %v1805 = vpow.pop %v1804
  %v1806 = vmul.f32 %v1799, 1.442695
  %v1807 = vpow.pop %v1806
  %v1808 = vmul.f32 %v1800, 1.442695
  %v1809 = vpow.pop %v1808
  %v1810 = vmul.f32 %v1801, 1.442695
  %v1811 = vpow.pop %v1810
  %v1812 = vmul.f32 %v1802, 1.442695
  %v1813 = vpow.pop %v1812
  %v1814 = vmul.f32 %v1803, 1.442695
  %v1815 = vpow.pop %v1814
  %v1816 = vadd.f32 %v1805, 1.0
  %v1817 = vadd.f32 %v1807, 1.0
  %v1818 = vadd.f32 %v1809, 1.0
  %v1819 = vadd.f32 %v1811, 1.0
  %v1820 = vadd.f32 %v1813, 1.0
  %v1821 = vadd.f32 %v1815, 1.0
  %v1822 = vrcp.pop %v1816
  %v1823 = vmul.f32 1.0, %v1822
  %v1824 = vrcp.pop %v1817
  %v1825 = vmul.f32 1.0, %v1824
  %v1826 = vrcp.pop %v1818
  %v1827 = vmul.f32 1.0, %v1826
  %v1828 = vrcp.pop %v1819
  %v1829 = vmul.f32 1.0, %v1828
  %v1830 = vrcp.pop %v1820
  %v1831 = vmul.f32 1.0, %v1830
  %v1832 = vrcp.pop %v1821
  %v1833 = vmul.f32 1.0, %v1832
  %v1835 = vsel %vm1129, %v1251, 0
  %v1838 = vsel %vm1129, %v1256, 0
  %v1841 = vsel %vm1129, %v1261, 0
  %v1844 = vsel %vm1129, %v1266, 0
  %v1847 = vsel %vm1129, %v1271, 0
  %v1850 = vsel %vm1129, %v1276, 0
  %v1853 = vsel %vm1129, %v1281, 0
  %v1856 = vsel %vm1129, %v1286, 0
  %v1859 = vsel %vm1129, %v1291, 0
  %v1862 = vsel %vm1129, %v1296, 0
  %v1865 = vsel %vm1129, %v1301, 0
  %v1868 = vsel %vm1129, %v1306, 0
  %v1871 = vsel %vm1129, %v1311, 0
  %v1874 = vsel %vm1129, %v1316, 0
  %v1877 = vsel %vm1129, %v1321, 0
  %v1880 = vsel %vm1129, %v1326, 0
  %v1883 = vsel %vm1129, %v1331, 0
  %v1886 = vsel %vm1129, %v1336, 0
  %1888 = vmatprep.subr.mxu0 0.0
  %1889 = vmatpush1.msra.mxu0 %v118
  %1890 = vmatprep.subr.mxu0 0.0
  %1891 = vmatpush1.msra.mxu0 %v119
  %1892 = vmatprep.subr.mxu0 0.0
  %1893 = vmatpush1.msra.mxu0 0.0
  %1894 = vmatprep.subr.mxu0 0.0
  %1895 = vmatpush1.msra.mxu0 0.0
  %1896 = vmatprep.subr.mxu0 0.0
  %1897 = vmatpush1.msra.mxu0 0.0
  %1898 = vmatprep.subr.mxu0 0.0
  %1899 = vmatpush1.msra.mxu0 0.0
  %1900 = vmatprep.subr.mxu0 0.0
  %1901 = vmatpush1.msra.mxu0 0.0
  %1902 = vmatprep.subr.mxu0 0.0
  %1903 = vmatpush1.msra.mxu0 0.0
  %1904 = vmatprep.subr.mxu0 0.0
  %1905 = vmatpush1.msra.mxu0 0.0
  %1906 = vmatprep.subr.mxu0 0.0
  %1907 = vmatpush1.msra.mxu0 0.0
  %1908 = vmatprep.subr.mxu0 0.0
  %1909 = vmatpush1.msra.mxu0 0.0
  %1910 = vmatprep.subr.mxu0 0.0
  %1911 = vmatpush1.msra.mxu0 0.0
  %1912 = vmatprep.subr.mxu0 0.0
  %1913 = vmatpush1.msra.mxu0 0.0
  %1914 = vmatprep.subr.mxu0 0.0
  %1915 = vmatpush1.msra.mxu0 0.0
  %1916 = vmatprep.subr.mxu0 0.0
  %1917 = vmatpush1.msra.mxu0 0.0
  %1918 = vmatprep.subr.mxu0 0.0
  %1919 = vmatpush1.msra.mxu0 0.0
  %1920 = vmatprep.subr.mxu0 0.0
  %1921 = vmatpush1.msra.mxu0 0.0
  %1922 = vmatprep.subr.mxu0 0.0
  %1923 = vmatpush1.msra.mxu0 0.0
  %1924 = vmatprep.subr.mxu0 0.0
  %1925 = vmatpush1.msra.mxu0 0.0
  %1926 = vmatprep.subr.mxu0 0.0
  %1927 = vmatpush1.msra.mxu0 0.0
  %1928 = vmatprep.subr.mxu0 0.0
  %1929 = vmatpush1.msra.mxu0 0.0
  %1930 = vmatprep.subr.mxu0 0.0
  %1931 = vmatpush1.msra.mxu0 0.0
  %1932 = vmatprep.subr.mxu0 0.0
  %1933 = vmatpush1.msra.mxu0 0.0
  %1934 = vmatprep.subr.mxu0 0.0
  %1935 = vmatpush1.msra.mxu0 0.0
  %1936 = vmatprep.subr.mxu0 0.0
  %1937 = vmatpush1.msra.mxu0 0.0
  %1938 = vmatprep.subr.mxu0 0.0
  %1939 = vmatpush1.msra.mxu0 0.0
  %1940 = vmatprep.subr.mxu0 0.0
  %1941 = vmatpush1.msra.mxu0 0.0
  %1942 = vmatprep.subr.mxu0 0.0
  %1943 = vmatpush1.msra.mxu0 0.0
  %1944 = vmatprep.subr.mxu0 0.0
  %1945 = vmatpush1.msra.mxu0 0.0
  %1946 = vmatprep.subr.mxu0 0.0
  %1947 = vmatpush1.msra.mxu0 0.0
  %1948 = vmatprep.subr.mxu0 0.0
  %1949 = vmatpush1.msra.mxu0 0.0
  %1950 = vmatprep.subr.mxu0 0.0
  %1951 = vmatpush1.msra.mxu0 0.0
  %1952 = vmatprep.mubr.f32.mxu0 0.0
  %1953 = vmatmul.mubr.f32.gmra.mrb[0].mxu0 %v1835
  %v1954 = vpop.f32.mrb[0].mxu0
  %v1955 = vadd.f32 0.0, %v1954
  %v1956 = vpop.f32.mrb[0].mxu0
  %1957 = vmatprep.mubr.f32.mxu0 0.0
  %1958 = vmatmul.mubr.f32.gmra.mrb[0].mxu0 %v1838
  %v1959 = vpop.f32.mrb[0].mxu0
  %v1960 = vadd.f32 0.0, %v1959
  %v1961 = vpop.f32.mrb[0].mxu0
  %1962 = vmatprep.mubr.f32.mxu0 0.0
  %1963 = vmatmul.mubr.f32.gmra.mrb[0].mxu0 %v1841
  %v1964 = vpop.f32.mrb[0].mxu0
  %v1965 = vadd.f32 0.0, %v1964
  %v1966 = vpop.f32.mrb[0].mxu0
  %1967 = vmatprep.mubr.f32.mxu0 0.0
  %1968 = vmatmul.mubr.f32.gmra.mrb[0].mxu0 %v1844
  %v1969 = vpop.f32.mrb[0].mxu0
  %v1970 = vadd.f32 0.0, %v1969
  %v1971 = vpop.f32.mrb[0].mxu0
  %1972 = vmatprep.mubr.f32.mxu0 0.0
  %1973 = vmatmul.mubr.f32.gmra.mrb[0].mxu0 %v1847
  %v1974 = vpop.f32.mrb[0].mxu0
  %v1975 = vadd.f32 0.0, %v1974
  %v1976 = vpop.f32.mrb[0].mxu0
  %1977 = vmatprep.mubr.f32.mxu0 0.0
  %1978 = vmatmul.mubr.f32.gmra.mrb[0].mxu0 %v1850
  %v1979 = vpop.f32.mrb[0].mxu0
  %v1980 = vadd.f32 0.0, %v1979
  %v1981 = vpop.f32.mrb[0].mxu0
  %1982 = vmatprep.mubr.f32.mxu0 0.0
  %1983 = vmatmul.mubr.f32.gmra.mrb[0].mxu0 %v1853
  %v1984 = vpop.f32.mrb[0].mxu0
  %v1985 = vadd.f32 0.0, %v1984
  %v1986 = vpop.f32.mrb[0].mxu0
  %1987 = vmatprep.mubr.f32.mxu0 0.0
  %1988 = vmatmul.mubr.f32.gmra.mrb[0].mxu0 %v1856
  %v1989 = vpop.f32.mrb[0].mxu0
  %v1990 = vadd.f32 0.0, %v1989
  %v1991 = vpop.f32.mrb[0].mxu0
  %1992 = vmatprep.mubr.f32.mxu0 0.0
  %1993 = vmatmul.mubr.f32.gmra.mrb[0].mxu0 %v1859
  %v1994 = vpop.f32.mrb[0].mxu0
  %v1995 = vadd.f32 0.0, %v1994
  %v1996 = vpop.f32.mrb[0].mxu0
  %1997 = vmatprep.mubr.f32.mxu0 0.0
  %1998 = vmatmul.mubr.f32.gmra.mrb[0].mxu0 %v1862
  %v1999 = vpop.f32.mrb[0].mxu0
  %v2000 = vadd.f32 0.0, %v1999
  %v2001 = vpop.f32.mrb[0].mxu0
  %2002 = vmatprep.mubr.f32.mxu0 0.0
  %2003 = vmatmul.mubr.f32.gmra.mrb[0].mxu0 %v1865
  %v2004 = vpop.f32.mrb[0].mxu0
  %v2005 = vadd.f32 0.0, %v2004
  %v2006 = vpop.f32.mrb[0].mxu0
  %2007 = vmatprep.mubr.f32.mxu0 0.0
  %2008 = vmatmul.mubr.f32.gmra.mrb[0].mxu0 %v1868
  %v2009 = vpop.f32.mrb[0].mxu0
  %v2010 = vadd.f32 0.0, %v2009
  %v2011 = vpop.f32.mrb[0].mxu0
  %2012 = vmatprep.mubr.f32.mxu0 0.0
  %2013 = vmatmul.mubr.f32.gmra.mrb[0].mxu0 %v1871
  %v2014 = vpop.f32.mrb[0].mxu0
  %v2015 = vadd.f32 0.0, %v2014
  %v2016 = vpop.f32.mrb[0].mxu0
  %2017 = vmatprep.mubr.f32.mxu0 0.0
  %2018 = vmatmul.mubr.f32.gmra.mrb[0].mxu0 %v1874
  %v2019 = vpop.f32.mrb[0].mxu0
  %v2020 = vadd.f32 0.0, %v2019
  %v2021 = vpop.f32.mrb[0].mxu0
  %2022 = vmatprep.mubr.f32.mxu0 0.0
  %2023 = vmatmul.mubr.f32.gmra.mrb[0].mxu0 %v1877
  %v2024 = vpop.f32.mrb[0].mxu0
  %v2025 = vadd.f32 0.0, %v2024
  %v2026 = vpop.f32.mrb[0].mxu0
  %2027 = vmatprep.mubr.f32.mxu0 0.0
  %2028 = vmatmul.mubr.f32.gmra.mrb[0].mxu0 %v1880
  %v2029 = vpop.f32.mrb[0].mxu0
  %v2030 = vadd.f32 0.0, %v2029
  %v2031 = vpop.f32.mrb[0].mxu0
  %2032 = vmatprep.mubr.f32.mxu0 0.0
  %2033 = vmatmul.mubr.f32.gmra.mrb[0].mxu0 %v1883
  %v2034 = vpop.f32.mrb[0].mxu0
  %v2035 = vadd.f32 0.0, %v2034
  %v2036 = vpop.f32.mrb[0].mxu0
  %2037 = vmatprep.mubr.f32.mxu0 0.0
  %2038 = vmatmul.mubr.f32.gmra.mrb[0].mxu0 %v1886
  %v2039 = vpop.f32.mrb[0].mxu0
  %v2040 = vadd.f32 0.0, %v2039
  %v2041 = vpop.f32.mrb[0].mxu0
  %2042 = vdwg.mxu0
  %v2043 = vmul.f32 %v1955, %v1823
  %v2044 = vmul.f32 %v1960, %v1825
  %v2045 = vmul.f32 %v1965, %v1827
  %v2046 = vmul.f32 %v1970, %v1829
  %v2047 = vmul.f32 %v1975, %v1831
  %v2048 = vmul.f32 %v1980, %v1833
  %v2049 = vmul.f32 %v1985, %v1823
  %v2050 = vmul.f32 %v1990, %v1825
  %v2051 = vmul.f32 %v1995, %v1827
  %v2052 = vmul.f32 %v2000, %v1829
  %v2053 = vmul.f32 %v2005, %v1831
  %v2054 = vmul.f32 %v2010, %v1833
  %v2055 = vmul.f32 %v2015, %v1823
  %v2056 = vmul.f32 %v2020, %v1825
  %v2057 = vmul.f32 %v2025, %v1827
  %v2058 = vmul.f32 %v2030, %v1829
  %v2059 = vmul.f32 %v2035, %v1831
  %v2060 = vmul.f32 %v2040, %v1833
  %v2062 = vsel %vm1129, %v2043, 0
  %v2065 = vsel %vm1129, %v2044, 0
  %v2068 = vsel %vm1129, %v2045, 0
  %v2071 = vsel %vm1129, %v2046, 0
  %v2074 = vsel %vm1129, %v2047, 0
  %v2077 = vsel %vm1129, %v2048, 0
  %v2080 = vsel %vm1129, %v2049, 0
  %v2083 = vsel %vm1129, %v2050, 0
  %v2086 = vsel %vm1129, %v2051, 0
  %v2089 = vsel %vm1129, %v2052, 0
  %v2092 = vsel %vm1129, %v2053, 0
  %v2095 = vsel %vm1129, %v2054, 0
  %v2098 = vsel %vm1129, %v2055, 0
  %v2101 = vsel %vm1129, %v2056, 0
  %v2104 = vsel %vm1129, %v2057, 0
  %v2107 = vsel %vm1129, %v2058, 0
  %v2110 = vsel %vm1129, %v2059, 0
  %v2113 = vsel %vm1129, %v2060, 0
  %2115 = vmatprep.subr.mxu0 0.0
  %2116 = vmatpush1.msra.mxu0 %v125
  %2117 = vmatprep.subr.mxu0 0.0
  %2118 = vmatpush1.msra.mxu0 %v126
  %2119 = vmatprep.subr.mxu0 0.0
  %2120 = vmatpush1.msra.mxu0 0.0
  %2121 = vmatprep.subr.mxu0 0.0
  %2122 = vmatpush1.msra.mxu0 0.0
  %2123 = vmatprep.subr.mxu0 0.0
  %2124 = vmatpush1.msra.mxu0 0.0
  %2125 = vmatprep.subr.mxu0 0.0
  %2126 = vmatpush1.msra.mxu0 0.0
  %2127 = vmatprep.subr.mxu0 0.0
  %2128 = vmatpush1.msra.mxu0 0.0
  %2129 = vmatprep.subr.mxu0 0.0
  %2130 = vmatpush1.msra.mxu0 0.0
  %2131 = vmatprep.subr.mxu0 0.0
  %2132 = vmatpush1.msra.mxu0 0.0
  %2133 = vmatprep.subr.mxu0 0.0
  %2134 = vmatpush1.msra.mxu0 0.0
  %2135 = vmatprep.subr.mxu0 0.0
  %2136 = vmatpush1.msra.mxu0 0.0
  %2137 = vmatprep.subr.mxu0 0.0
  %2138 = vmatpush1.msra.mxu0 0.0
  %2139 = vmatprep.subr.mxu0 0.0
  %2140 = vmatpush1.msra.mxu0 0.0
  %2141 = vmatprep.subr.mxu0 0.0
  %2142 = vmatpush1.msra.mxu0 0.0
  %2143 = vmatprep.subr.mxu0 0.0
  %2144 = vmatpush1.msra.mxu0 0.0
  %2145 = vmatprep.subr.mxu0 0.0
  %2146 = vmatpush1.msra.mxu0 0.0
  %2147 = vmatprep.subr.mxu0 0.0
  %2148 = vmatpush1.msra.mxu0 0.0
  %2149 = vmatprep.subr.mxu0 0.0
  %2150 = vmatpush1.msra.mxu0 0.0
  %2151 = vmatprep.subr.mxu0 0.0
  %2152 = vmatpush1.msra.mxu0 0.0
  %2153 = vmatprep.subr.mxu0 0.0
  %2154 = vmatpush1.msra.mxu0 0.0
  %2155 = vmatprep.subr.mxu0 0.0
  %2156 = vmatpush1.msra.mxu0 0.0
  %2157 = vmatprep.subr.mxu0 0.0
  %2158 = vmatpush1.msra.mxu0 0.0
  %2159 = vmatprep.subr.mxu0 0.0
  %2160 = vmatpush1.msra.mxu0 0.0
  %2161 = vmatprep.subr.mxu0 0.0
  %2162 = vmatpush1.msra.mxu0 0.0
  %2163 = vmatprep.subr.mxu0 0.0
  %2164 = vmatpush1.msra.mxu0 0.0
  %2165 = vmatprep.subr.mxu0 0.0
  %2166 = vmatpush1.msra.mxu0 0.0
  %2167 = vmatprep.subr.mxu0 0.0
  %2168 = vmatpush1.msra.mxu0 0.0
  %2169 = vmatprep.subr.mxu0 0.0
  %2170 = vmatpush1.msra.mxu0 0.0
  %2171 = vmatprep.subr.mxu0 0.0
  %2172 = vmatpush1.msra.mxu0 0.0
  %2173 = vmatprep.subr.mxu0 0.0
  %2174 = vmatpush1.msra.mxu0 0.0
  %2175 = vmatprep.subr.mxu0 0.0
  %2176 = vmatpush1.msra.mxu0 0.0
  %2177 = vmatprep.subr.mxu0 0.0
  %2178 = vmatpush1.msra.mxu0 0.0
  %2179 = vmatprep.mubr.f32.mxu0 0.0
  %2180 = vmatmul.mubr.f32.gmra.mrb[0].mxu0 %v2062
  %v2181 = vpop.f32.mrb[0].mxu0
  %v2182 = vadd.f32 0.0, %v2181
  %v2183 = vpop.f32.mrb[0].mxu0
  %2184 = vmatprep.mubr.f32.mxu0 0.0
  %2185 = vmatmul.mubr.f32.gmra.mrb[0].mxu0 %v2065
  %v2186 = vpop.f32.mrb[0].mxu0
  %v2187 = vadd.f32 0.0, %v2186
  %v2188 = vpop.f32.mrb[0].mxu0
  %2189 = vmatprep.mubr.f32.mxu0 0.0
  %2190 = vmatmul.mubr.f32.gmra.mrb[0].mxu0 %v2068
  %v2191 = vpop.f32.mrb[0].mxu0
  %v2192 = vadd.f32 0.0, %v2191
  %v2193 = vpop.f32.mrb[0].mxu0
  %2194 = vmatprep.mubr.f32.mxu0 0.0
  %2195 = vmatmul.mubr.f32.gmra.mrb[0].mxu0 %v2071
  %v2196 = vpop.f32.mrb[0].mxu0
  %v2197 = vadd.f32 0.0, %v2196
  %v2198 = vpop.f32.mrb[0].mxu0
  %2199 = vmatprep.mubr.f32.mxu0 0.0
  %2200 = vmatmul.mubr.f32.gmra.mrb[0].mxu0 %v2074
  %v2201 = vpop.f32.mrb[0].mxu0
  %v2202 = vadd.f32 0.0, %v2201
  %v2203 = vpop.f32.mrb[0].mxu0
  %2204 = vmatprep.mubr.f32.mxu0 0.0
  %2205 = vmatmul.mubr.f32.gmra.mrb[0].mxu0 %v2077
  %v2206 = vpop.f32.mrb[0].mxu0
  %v2207 = vadd.f32 0.0, %v2206
  %v2208 = vpop.f32.mrb[0].mxu0
  %2209 = vmatprep.mubr.f32.mxu0 0.0
  %2210 = vmatmul.mubr.f32.gmra.mrb[0].mxu0 %v2080
  %v2211 = vpop.f32.mrb[0].mxu0
  %v2212 = vadd.f32 0.0, %v2211
  %v2213 = vpop.f32.mrb[0].mxu0
  %2214 = vmatprep.mubr.f32.mxu0 0.0
  %2215 = vmatmul.mubr.f32.gmra.mrb[0].mxu0 %v2083
  %v2216 = vpop.f32.mrb[0].mxu0
  %v2217 = vadd.f32 0.0, %v2216
  %v2218 = vpop.f32.mrb[0].mxu0
  %2219 = vmatprep.mubr.f32.mxu0 0.0
  %2220 = vmatmul.mubr.f32.gmra.mrb[0].mxu0 %v2086
  %v2221 = vpop.f32.mrb[0].mxu0
  %v2222 = vadd.f32 0.0, %v2221
  %v2223 = vpop.f32.mrb[0].mxu0
  %2224 = vmatprep.mubr.f32.mxu0 0.0
  %2225 = vmatmul.mubr.f32.gmra.mrb[0].mxu0 %v2089
  %v2226 = vpop.f32.mrb[0].mxu0
  %v2227 = vadd.f32 0.0, %v2226
  %v2228 = vpop.f32.mrb[0].mxu0
  %2229 = vmatprep.mubr.f32.mxu0 0.0
  %2230 = vmatmul.mubr.f32.gmra.mrb[0].mxu0 %v2092
  %v2231 = vpop.f32.mrb[0].mxu0
  %v2232 = vadd.f32 0.0, %v2231
  %v2233 = vpop.f32.mrb[0].mxu0
  %2234 = vmatprep.mubr.f32.mxu0 0.0
  %2235 = vmatmul.mubr.f32.gmra.mrb[0].mxu0 %v2095
  %v2236 = vpop.f32.mrb[0].mxu0
  %v2237 = vadd.f32 0.0, %v2236
  %v2238 = vpop.f32.mrb[0].mxu0
  %2239 = vmatprep.mubr.f32.mxu0 0.0
  %2240 = vmatmul.mubr.f32.gmra.mrb[0].mxu0 %v2098
  %v2241 = vpop.f32.mrb[0].mxu0
  %v2242 = vadd.f32 0.0, %v2241
  %v2243 = vpop.f32.mrb[0].mxu0
  %2244 = vmatprep.mubr.f32.mxu0 0.0
  %2245 = vmatmul.mubr.f32.gmra.mrb[0].mxu0 %v2101
  %v2246 = vpop.f32.mrb[0].mxu0
  %v2247 = vadd.f32 0.0, %v2246
  %v2248 = vpop.f32.mrb[0].mxu0
  %2249 = vmatprep.mubr.f32.mxu0 0.0
  %2250 = vmatmul.mubr.f32.gmra.mrb[0].mxu0 %v2104
  %v2251 = vpop.f32.mrb[0].mxu0
  %v2252 = vadd.f32 0.0, %v2251
  %v2253 = vpop.f32.mrb[0].mxu0
  %2254 = vmatprep.mubr.f32.mxu0 0.0
  %2255 = vmatmul.mubr.f32.gmra.mrb[0].mxu0 %v2107
  %v2256 = vpop.f32.mrb[0].mxu0
  %v2257 = vadd.f32 0.0, %v2256
  %v2258 = vpop.f32.mrb[0].mxu0
  %2259 = vmatprep.mubr.f32.mxu0 0.0
  %2260 = vmatmul.mubr.f32.gmra.mrb[0].mxu0 %v2110
  %v2261 = vpop.f32.mrb[0].mxu0
  %v2262 = vadd.f32 0.0, %v2261
  %v2263 = vpop.f32.mrb[0].mxu0
  %2264 = vmatprep.mubr.f32.mxu0 0.0
  %2265 = vmatmul.mubr.f32.gmra.mrb[0].mxu0 %v2113
  %v2266 = vpop.f32.mrb[0].mxu0
  %v2267 = vadd.f32 0.0, %v2266
  %v2268 = vpop.f32.mrb[0].mxu0
  %2269 = vdwg.mxu0
  %v2270 = vmul.f32 %v2182, %v2182
  %v2271 = vmul.f32 %v2187, %v2187
  %v2272 = vmul.f32 %v2192, %v2192
  %v2273 = vmul.f32 %v2197, %v2197
  %v2274 = vmul.f32 %v2202, %v2202
  %v2275 = vmul.f32 %v2207, %v2207
  %v2276 = vmul.f32 %v2212, %v2212
  %v2277 = vmul.f32 %v2217, %v2217
  %v2278 = vmul.f32 %v2222, %v2222
  %v2279 = vmul.f32 %v2227, %v2227
  %v2280 = vmul.f32 %v2232, %v2232
  %v2281 = vmul.f32 %v2237, %v2237
  %v2282 = vadd.f32 %v2270, %v2276
  %v2283 = vadd.f32 %v2271, %v2277
  %v2284 = vadd.f32 %v2272, %v2278
  %v2285 = vadd.f32 %v2273, %v2279
  %v2286 = vadd.f32 %v2274, %v2280
  %v2287 = vadd.f32 %v2275, %v2281
  %v2288 = vmul.f32 %v2242, %v2242
  %v2289 = vmul.f32 %v2247, %v2247
  %v2290 = vmul.f32 %v2252, %v2252
  %v2291 = vmul.f32 %v2257, %v2257
  %v2292 = vmul.f32 %v2262, %v2262
  %v2293 = vmul.f32 %v2267, %v2267
  %v2294 = vadd.f32 %v2282, %v2288
  %v2295 = vadd.f32 %v2283, %v2289
  %v2296 = vadd.f32 %v2284, %v2290
  %v2297 = vadd.f32 %v2285, %v2291
  %v2298 = vadd.f32 %v2286, %v2292
  %v2299 = vadd.f32 %v2287, %v2293
  %v2300 = vmax.f32 %v2294, 1e-08
  %v2301 = vmax.f32 %v2295, 1e-08
  %v2302 = vmax.f32 %v2296, 1e-08
  %v2303 = vmax.f32 %v2297, 1e-08
  %v2304 = vmax.f32 %v2298, 1e-08
  %v2305 = vmax.f32 %v2299, 1e-08
  %v2306 = vrsqrt.pop %v2300
  %v2307 = vmul.f32 %v2300, %v2306
  %vm2308 = vcmp.eq.f32.partialorder %v2300, inf
  %v2309 = vsel %vm2308, %v2300, %v2307
  %vm2310 = vcmp.eq.f32.partialorder %v2300, 0.0
  %v2311 = vand.u32 %v2300, 2147483648
  %v2312 = vsel %vm2310, %v2311, %v2309
  %v2313 = vrsqrt.pop %v2301
  %v2314 = vmul.f32 %v2301, %v2313
  %vm2315 = vcmp.eq.f32.partialorder %v2301, inf
  %v2316 = vsel %vm2315, %v2301, %v2314
  %vm2317 = vcmp.eq.f32.partialorder %v2301, 0.0
  %v2318 = vand.u32 %v2301, 2147483648
  %v2319 = vsel %vm2317, %v2318, %v2316
  %v2320 = vrsqrt.pop %v2302
  %v2321 = vmul.f32 %v2302, %v2320
  %vm2322 = vcmp.eq.f32.partialorder %v2302, inf
  %v2323 = vsel %vm2322, %v2302, %v2321
  %vm2324 = vcmp.eq.f32.partialorder %v2302, 0.0
  %v2325 = vand.u32 %v2302, 2147483648
  %v2326 = vsel %vm2324, %v2325, %v2323
  %v2327 = vrsqrt.pop %v2303
  %v2328 = vmul.f32 %v2303, %v2327
  %vm2329 = vcmp.eq.f32.partialorder %v2303, inf
  %v2330 = vsel %vm2329, %v2303, %v2328
  %vm2331 = vcmp.eq.f32.partialorder %v2303, 0.0
  %v2332 = vand.u32 %v2303, 2147483648
  %v2333 = vsel %vm2331, %v2332, %v2330
  %v2334 = vrsqrt.pop %v2304
  %v2335 = vmul.f32 %v2304, %v2334
  %vm2336 = vcmp.eq.f32.partialorder %v2304, inf
  %v2337 = vsel %vm2336, %v2304, %v2335
  %vm2338 = vcmp.eq.f32.partialorder %v2304, 0.0
  %v2339 = vand.u32 %v2304, 2147483648
  %v2340 = vsel %vm2338, %v2339, %v2337
  %v2341 = vrsqrt.pop %v2305
  %v2342 = vmul.f32 %v2305, %v2341
  %vm2343 = vcmp.eq.f32.partialorder %v2305, inf
  %v2344 = vsel %vm2343, %v2305, %v2342
  %vm2345 = vcmp.eq.f32.partialorder %v2305, 0.0
  %v2346 = vand.u32 %v2305, 2147483648
  %v2347 = vsel %vm2345, %v2346, %v2344
  %v2349 = vsel %vm1129, %v2312, 0
  %v2352 = vsel %vm1129, %v2319, 0
  %v2355 = vsel %vm1129, %v2326, 0
  %v2358 = vsel %vm1129, %v2333, 0
  %v2361 = vsel %vm1129, %v2340, 0
  %v2364 = vsel %vm1129, %v2347, 0
  %2366 = vmatprep.subr.mxu0 0.0
  %2367 = vmatpush1.msra.mxu0 %v131
  %2368 = vmatprep.subr.mxu0 0.0
  %2369 = vmatpush1.msra.mxu0 %v132
  %2370 = vmatprep.subr.mxu0 0.0
  %2371 = vmatpush1.msra.mxu0 0.0
  %2372 = vmatprep.subr.mxu0 0.0
  %2373 = vmatpush1.msra.mxu0 0.0
  %2374 = vmatprep.subr.mxu0 0.0
  %2375 = vmatpush1.msra.mxu0 0.0
  %2376 = vmatprep.subr.mxu0 0.0
  %2377 = vmatpush1.msra.mxu0 0.0
  %2378 = vmatprep.subr.mxu0 0.0
  %2379 = vmatpush1.msra.mxu0 0.0
  %2380 = vmatprep.subr.mxu0 0.0
  %2381 = vmatpush1.msra.mxu0 0.0
  %2382 = vmatprep.subr.mxu0 0.0
  %2383 = vmatpush1.msra.mxu0 0.0
  %2384 = vmatprep.subr.mxu0 0.0
  %2385 = vmatpush1.msra.mxu0 0.0
  %2386 = vmatprep.subr.mxu0 0.0
  %2387 = vmatpush1.msra.mxu0 0.0
  %2388 = vmatprep.subr.mxu0 0.0
  %2389 = vmatpush1.msra.mxu0 0.0
  %2390 = vmatprep.subr.mxu0 0.0
  %2391 = vmatpush1.msra.mxu0 0.0
  %2392 = vmatprep.subr.mxu0 0.0
  %2393 = vmatpush1.msra.mxu0 0.0
  %2394 = vmatprep.subr.mxu0 0.0
  %2395 = vmatpush1.msra.mxu0 0.0
  %2396 = vmatprep.subr.mxu0 0.0
  %2397 = vmatpush1.msra.mxu0 0.0
  %2398 = vmatprep.subr.mxu0 0.0
  %2399 = vmatpush1.msra.mxu0 0.0
  %2400 = vmatprep.subr.mxu0 0.0
  %2401 = vmatpush1.msra.mxu0 0.0
  %2402 = vmatprep.subr.mxu0 0.0
  %2403 = vmatpush1.msra.mxu0 0.0
  %2404 = vmatprep.subr.mxu0 0.0
  %2405 = vmatpush1.msra.mxu0 0.0
  %2406 = vmatprep.subr.mxu0 0.0
  %2407 = vmatpush1.msra.mxu0 0.0
  %2408 = vmatprep.subr.mxu0 0.0
  %2409 = vmatpush1.msra.mxu0 0.0
  %2410 = vmatprep.subr.mxu0 0.0
  %2411 = vmatpush1.msra.mxu0 0.0
  %2412 = vmatprep.subr.mxu0 0.0
  %2413 = vmatpush1.msra.mxu0 0.0
  %2414 = vmatprep.subr.mxu0 0.0
  %2415 = vmatpush1.msra.mxu0 0.0
  %2416 = vmatprep.subr.mxu0 0.0
  %2417 = vmatpush1.msra.mxu0 0.0
  %2418 = vmatprep.subr.mxu0 0.0
  %2419 = vmatpush1.msra.mxu0 0.0
  %2420 = vmatprep.subr.mxu0 0.0
  %2421 = vmatpush1.msra.mxu0 0.0
  %2422 = vmatprep.subr.mxu0 0.0
  %2423 = vmatpush1.msra.mxu0 0.0
  %2424 = vmatprep.subr.mxu0 0.0
  %2425 = vmatpush1.msra.mxu0 0.0
  %2426 = vmatprep.subr.mxu0 0.0
  %2427 = vmatpush1.msra.mxu0 0.0
  %2428 = vmatprep.subr.mxu0 0.0
  %2429 = vmatpush1.msra.mxu0 0.0
  %2430 = vmatprep.mubr.f32.mxu0 0.0
  %2431 = vmatmul.mubr.f32.gmra.mrb[0].mxu0 %v2349
  %v2432 = vpop.f32.mrb[0].mxu0
  %v2433 = vadd.f32 0.0, %v2432
  %v2434 = vpop.f32.mrb[0].mxu0
  %2435 = vmatprep.mubr.f32.mxu0 0.0
  %2436 = vmatmul.mubr.f32.gmra.mrb[0].mxu0 %v2352
  %v2437 = vpop.f32.mrb[0].mxu0
  %v2438 = vadd.f32 0.0, %v2437
  %v2439 = vpop.f32.mrb[0].mxu0
  %2440 = vmatprep.mubr.f32.mxu0 0.0
  %2441 = vmatmul.mubr.f32.gmra.mrb[0].mxu0 %v2355
  %v2442 = vpop.f32.mrb[0].mxu0
  %v2443 = vadd.f32 0.0, %v2442
  %v2444 = vpop.f32.mrb[0].mxu0
  %2445 = vmatprep.mubr.f32.mxu0 0.0
  %2446 = vmatmul.mubr.f32.gmra.mrb[0].mxu0 %v2358
  %v2447 = vpop.f32.mrb[0].mxu0
  %v2448 = vadd.f32 0.0, %v2447
  %v2449 = vpop.f32.mrb[0].mxu0
  %2450 = vmatprep.mubr.f32.mxu0 0.0
  %2451 = vmatmul.mubr.f32.gmra.mrb[0].mxu0 %v2361
  %v2452 = vpop.f32.mrb[0].mxu0
  %v2453 = vadd.f32 0.0, %v2452
  %v2454 = vpop.f32.mrb[0].mxu0
  %2455 = vmatprep.mubr.f32.mxu0 0.0
  %2456 = vmatmul.mubr.f32.gmra.mrb[0].mxu0 %v2364
  %v2457 = vpop.f32.mrb[0].mxu0
  %v2458 = vadd.f32 0.0, %v2457
  %v2459 = vpop.f32.mrb[0].mxu0
  %2460 = vdwg.mxu0
  %2461 = vmatprep.subr.mxu0 0.0
  %2462 = vmatpush1.msra.mxu0 %v127
  %2463 = vmatprep.subr.mxu0 0.0
  %2464 = vmatpush1.msra.mxu0 %v128
  %2465 = vmatprep.subr.mxu0 0.0
  %2466 = vmatpush1.msra.mxu0 %v129
  %2467 = vmatprep.subr.mxu0 0.0
  %2468 = vmatpush1.msra.mxu0 %v130
  %2469 = vmatprep.subr.mxu0 0.0
  %2470 = vmatpush1.msra.mxu0 0.0
  %2471 = vmatprep.subr.mxu0 0.0
  %2472 = vmatpush1.msra.mxu0 0.0
  %2473 = vmatprep.subr.mxu0 0.0
  %2474 = vmatpush1.msra.mxu0 0.0
  %2475 = vmatprep.subr.mxu0 0.0
  %2476 = vmatpush1.msra.mxu0 0.0
  %2477 = vmatprep.subr.mxu0 0.0
  %2478 = vmatpush1.msra.mxu0 0.0
  %2479 = vmatprep.subr.mxu0 0.0
  %2480 = vmatpush1.msra.mxu0 0.0
  %2481 = vmatprep.subr.mxu0 0.0
  %2482 = vmatpush1.msra.mxu0 0.0
  %2483 = vmatprep.subr.mxu0 0.0
  %2484 = vmatpush1.msra.mxu0 0.0
  %2485 = vmatprep.subr.mxu0 0.0
  %2486 = vmatpush1.msra.mxu0 0.0
  %2487 = vmatprep.subr.mxu0 0.0
  %2488 = vmatpush1.msra.mxu0 0.0
  %2489 = vmatprep.subr.mxu0 0.0
  %2490 = vmatpush1.msra.mxu0 0.0
  %2491 = vmatprep.subr.mxu0 0.0
  %2492 = vmatpush1.msra.mxu0 0.0
  %2493 = vmatprep.subr.mxu0 0.0
  %2494 = vmatpush1.msra.mxu0 0.0
  %2495 = vmatprep.subr.mxu0 0.0
  %2496 = vmatpush1.msra.mxu0 0.0
  %2497 = vmatprep.subr.mxu0 0.0
  %2498 = vmatpush1.msra.mxu0 0.0
  %2499 = vmatprep.subr.mxu0 0.0
  %2500 = vmatpush1.msra.mxu0 0.0
  %2501 = vmatprep.subr.mxu0 0.0
  %2502 = vmatpush1.msra.mxu0 0.0
  %2503 = vmatprep.subr.mxu0 0.0
  %2504 = vmatpush1.msra.mxu0 0.0
  %2505 = vmatprep.subr.mxu0 0.0
  %2506 = vmatpush1.msra.mxu0 0.0
  %2507 = vmatprep.subr.mxu0 0.0
  %2508 = vmatpush1.msra.mxu0 0.0
  %2509 = vmatprep.subr.mxu0 0.0
  %2510 = vmatpush1.msra.mxu0 0.0
  %2511 = vmatprep.subr.mxu0 0.0
  %2512 = vmatpush1.msra.mxu0 0.0
  %2513 = vmatprep.subr.mxu0 0.0
  %2514 = vmatpush1.msra.mxu0 0.0
  %2515 = vmatprep.subr.mxu0 0.0
  %2516 = vmatpush1.msra.mxu0 0.0
  %2517 = vmatprep.subr.mxu0 0.0
  %2518 = vmatpush1.msra.mxu0 0.0
  %2519 = vmatprep.subr.mxu0 0.0
  %2520 = vmatpush1.msra.mxu0 0.0
  %2521 = vmatprep.subr.mxu0 0.0
  %2522 = vmatpush1.msra.mxu0 0.0
  %2523 = vmatprep.subr.mxu0 0.0
  %2524 = vmatpush1.msra.mxu0 0.0
  %2525 = vmatprep.mubr.f32.mxu0 0.0
  %2526 = vmatmul.mubr.f32.gmra.mrb[0].mxu0 %v1686
  %v2527 = vpop.f32.mrb[0].mxu0
  %v2528 = vadd.f32 %v2433, %v2527
  %v2529 = vpop.f32.mrb[0].mxu0
  %2530 = vmatprep.mubr.f32.mxu0 0.0
  %2531 = vmatmul.mubr.f32.gmra.mrb[0].mxu0 %v1689
  %v2532 = vpop.f32.mrb[0].mxu0
  %v2533 = vadd.f32 %v2438, %v2532
  %v2534 = vpop.f32.mrb[0].mxu0
  %2535 = vmatprep.mubr.f32.mxu0 0.0
  %2536 = vmatmul.mubr.f32.gmra.mrb[0].mxu0 %v1692
  %v2537 = vpop.f32.mrb[0].mxu0
  %v2538 = vadd.f32 %v2443, %v2537
  %v2539 = vpop.f32.mrb[0].mxu0
  %2540 = vmatprep.mubr.f32.mxu0 0.0
  %2541 = vmatmul.mubr.f32.gmra.mrb[0].mxu0 %v1695
  %v2542 = vpop.f32.mrb[0].mxu0
  %v2543 = vadd.f32 %v2448, %v2542
  %v2544 = vpop.f32.mrb[0].mxu0
  %2545 = vmatprep.mubr.f32.mxu0 0.0
  %2546 = vmatmul.mubr.f32.gmra.mrb[0].mxu0 %v1698
  %v2547 = vpop.f32.mrb[0].mxu0
  %v2548 = vadd.f32 %v2453, %v2547
  %v2549 = vpop.f32.mrb[0].mxu0
  %2550 = vmatprep.mubr.f32.mxu0 0.0
  %2551 = vmatmul.mubr.f32.gmra.mrb[0].mxu0 %v1701
  %v2552 = vpop.f32.mrb[0].mxu0
  %v2553 = vadd.f32 %v2458, %v2552
  %v2554 = vpop.f32.mrb[0].mxu0
  %2555 = vdwg.mxu0
  %v2557 = vlaneseq
  %v2558 = vshrl.u32 %v2557, 7
  %v2559 = vsub.s32 0, %v2558
  %v2560 = vrot.slane %v133, %v2559
  %v2562 = vadd.f32 %v2528, %v2560
  %v2563 = vadd.f32 %v2533, %v2560
  %v2564 = vadd.f32 %v2538, %v2560
  %v2565 = vadd.f32 %v2543, %v2560
  %v2566 = vadd.f32 %v2548, %v2560
  %v2567 = vadd.f32 %v2553, %v2560
  %v2569 = vlaneseq
  %v2570 = vshrl.u32 %v2569, 7
  %v2571 = vsub.s32 0, %v2570
  %v2572 = vrot.slane %v140, %v2571
  %v2575 = vsel %vm749, %v2562, 0
  %v2578 = vsel %vm749, %v2563, 0
  %v2581 = vsel %vm749, %v2564, 0
  %v2584 = vsel %vm749, %v2565, 0
  %v2587 = vsel %vm749, %v2566, 0
  %v2590 = vsel %vm749, %v2567, 0
  %2592 = vmatprep.subr.mxu0 0.0
  %2593 = vmatpush1.msra.mxu0 %v136
  %2594 = vmatprep.subr.mxu0 0.0
  %2595 = vmatpush1.msra.mxu0 %v137
  %2596 = vmatprep.subr.mxu0 0.0
  %2597 = vmatpush1.msra.mxu0 %v138
  %2598 = vmatprep.subr.mxu0 0.0
  %2599 = vmatpush1.msra.mxu0 %v139
  %2600 = vmatprep.subr.mxu0 0.0
  %2601 = vmatpush1.msra.mxu0 0.0
  %2602 = vmatprep.subr.mxu0 0.0
  %2603 = vmatpush1.msra.mxu0 0.0
  %2604 = vmatprep.subr.mxu0 0.0
  %2605 = vmatpush1.msra.mxu0 0.0
  %2606 = vmatprep.subr.mxu0 0.0
  %2607 = vmatpush1.msra.mxu0 0.0
  %2608 = vmatprep.subr.mxu0 0.0
  %2609 = vmatpush1.msra.mxu0 0.0
  %2610 = vmatprep.subr.mxu0 0.0
  %2611 = vmatpush1.msra.mxu0 0.0
  %2612 = vmatprep.subr.mxu0 0.0
  %2613 = vmatpush1.msra.mxu0 0.0
  %2614 = vmatprep.subr.mxu0 0.0
  %2615 = vmatpush1.msra.mxu0 0.0
  %2616 = vmatprep.subr.mxu0 0.0
  %2617 = vmatpush1.msra.mxu0 0.0
  %2618 = vmatprep.subr.mxu0 0.0
  %2619 = vmatpush1.msra.mxu0 0.0
  %2620 = vmatprep.subr.mxu0 0.0
  %2621 = vmatpush1.msra.mxu0 0.0
  %2622 = vmatprep.subr.mxu0 0.0
  %2623 = vmatpush1.msra.mxu0 0.0
  %2624 = vmatprep.subr.mxu0 0.0
  %2625 = vmatpush1.msra.mxu0 0.0
  %2626 = vmatprep.subr.mxu0 0.0
  %2627 = vmatpush1.msra.mxu0 0.0
  %2628 = vmatprep.subr.mxu0 0.0
  %2629 = vmatpush1.msra.mxu0 0.0
  %2630 = vmatprep.subr.mxu0 0.0
  %2631 = vmatpush1.msra.mxu0 0.0
  %2632 = vmatprep.subr.mxu0 0.0
  %2633 = vmatpush1.msra.mxu0 0.0
  %2634 = vmatprep.subr.mxu0 0.0
  %2635 = vmatpush1.msra.mxu0 0.0
  %2636 = vmatprep.subr.mxu0 0.0
  %2637 = vmatpush1.msra.mxu0 0.0
  %2638 = vmatprep.subr.mxu0 0.0
  %2639 = vmatpush1.msra.mxu0 0.0
  %2640 = vmatprep.subr.mxu0 0.0
  %2641 = vmatpush1.msra.mxu0 0.0
  %2642 = vmatprep.subr.mxu0 0.0
  %2643 = vmatpush1.msra.mxu0 0.0
  %2644 = vmatprep.subr.mxu0 0.0
  %2645 = vmatpush1.msra.mxu0 0.0
  %2646 = vmatprep.subr.mxu0 0.0
  %2647 = vmatpush1.msra.mxu0 0.0
  %2648 = vmatprep.subr.mxu0 0.0
  %2649 = vmatpush1.msra.mxu0 0.0
  %2650 = vmatprep.subr.mxu0 0.0
  %2651 = vmatpush1.msra.mxu0 0.0
  %2652 = vmatprep.subr.mxu0 0.0
  %2653 = vmatpush1.msra.mxu0 0.0
  %2654 = vmatprep.subr.mxu0 0.0
  %2655 = vmatpush1.msra.mxu0 0.0
  %2656 = vmatprep.mubr.f32.mxu0 0.0
  %2657 = vmatmul.mubr.f32.gmra.mrb[0].mxu0 %v2575
  %v2658 = vpop.f32.mrb[0].mxu0
  %v2659 = vadd.f32 %v2572, %v2658
  %v2660 = vpop.f32.mrb[0].mxu0
  %2661 = vmatprep.mubr.f32.mxu0 0.0
  %2662 = vmatmul.mubr.f32.gmra.mrb[0].mxu0 %v2578
  %v2663 = vpop.f32.mrb[0].mxu0
  %v2664 = vadd.f32 %v2572, %v2663
  %v2665 = vpop.f32.mrb[0].mxu0
  %2666 = vmatprep.mubr.f32.mxu0 0.0
  %2667 = vmatmul.mubr.f32.gmra.mrb[0].mxu0 %v2581
  %v2668 = vpop.f32.mrb[0].mxu0
  %v2669 = vadd.f32 %v2572, %v2668
  %v2670 = vpop.f32.mrb[0].mxu0
  %2671 = vmatprep.mubr.f32.mxu0 0.0
  %2672 = vmatmul.mubr.f32.gmra.mrb[0].mxu0 %v2584
  %v2673 = vpop.f32.mrb[0].mxu0
  %v2674 = vadd.f32 %v2572, %v2673
  %v2675 = vpop.f32.mrb[0].mxu0
  %2676 = vmatprep.mubr.f32.mxu0 0.0
  %2677 = vmatmul.mubr.f32.gmra.mrb[0].mxu0 %v2587
  %v2678 = vpop.f32.mrb[0].mxu0
  %v2679 = vadd.f32 %v2572, %v2678
  %v2680 = vpop.f32.mrb[0].mxu0
  %2681 = vmatprep.mubr.f32.mxu0 0.0
  %2682 = vmatmul.mubr.f32.gmra.mrb[0].mxu0 %v2590
  %v2683 = vpop.f32.mrb[0].mxu0
  %v2684 = vadd.f32 %v2572, %v2683
  %v2685 = vpop.f32.mrb[0].mxu0
  %2686 = vdwg.mxu0
  %v2687 = vxor.u32 %v2659, 2147483648
  %v2688 = vxor.u32 %v2664, 2147483648
  %v2689 = vxor.u32 %v2669, 2147483648
  %v2690 = vxor.u32 %v2674, 2147483648
  %v2691 = vxor.u32 %v2679, 2147483648
  %v2692 = vxor.u32 %v2684, 2147483648
  %v2693 = vmul.f32 %v2687, 1.442695
  %v2694 = vpow.pop %v2693
  %v2695 = vmul.f32 %v2688, 1.442695
  %v2696 = vpow.pop %v2695
  %v2697 = vmul.f32 %v2689, 1.442695
  %v2698 = vpow.pop %v2697
  %v2699 = vmul.f32 %v2690, 1.442695
  %v2700 = vpow.pop %v2699
  %v2701 = vmul.f32 %v2691, 1.442695
  %v2702 = vpow.pop %v2701
  %v2703 = vmul.f32 %v2692, 1.442695
  %v2704 = vpow.pop %v2703
  %v2705 = vadd.f32 %v2694, 1.0
  %v2706 = vadd.f32 %v2696, 1.0
  %v2707 = vadd.f32 %v2698, 1.0
  %v2708 = vadd.f32 %v2700, 1.0
  %v2709 = vadd.f32 %v2702, 1.0
  %v2710 = vadd.f32 %v2704, 1.0
  %v2711 = vrcp.pop %v2705
  %v2712 = vmul.f32 1.0, %v2711
  %v2713 = vrcp.pop %v2706
  %v2714 = vmul.f32 1.0, %v2713
  %v2715 = vrcp.pop %v2707
  %v2716 = vmul.f32 1.0, %v2715
  %v2717 = vrcp.pop %v2708
  %v2718 = vmul.f32 1.0, %v2717
  %v2719 = vrcp.pop %v2709
  %v2720 = vmul.f32 1.0, %v2719
  %v2721 = vrcp.pop %v2710
  %v2722 = vmul.f32 1.0, %v2721
  %v2724 = vsel %vm1129, %v2182, 0
  %v2727 = vsel %vm1129, %v2187, 0
  %v2730 = vsel %vm1129, %v2192, 0
  %v2733 = vsel %vm1129, %v2197, 0
  %v2736 = vsel %vm1129, %v2202, 0
  %v2739 = vsel %vm1129, %v2207, 0
  %v2742 = vsel %vm1129, %v2212, 0
  %v2745 = vsel %vm1129, %v2217, 0
  %v2748 = vsel %vm1129, %v2222, 0
  %v2751 = vsel %vm1129, %v2227, 0
  %v2754 = vsel %vm1129, %v2232, 0
  %v2757 = vsel %vm1129, %v2237, 0
  %v2760 = vsel %vm1129, %v2242, 0
  %v2763 = vsel %vm1129, %v2247, 0
  %v2766 = vsel %vm1129, %v2252, 0
  %v2769 = vsel %vm1129, %v2257, 0
  %v2772 = vsel %vm1129, %v2262, 0
  %v2775 = vsel %vm1129, %v2267, 0
  %2777 = vmatprep.subr.mxu0 0.0
  %2778 = vmatpush1.msra.mxu0 %v134
  %2779 = vmatprep.subr.mxu0 0.0
  %2780 = vmatpush1.msra.mxu0 %v135
  %2781 = vmatprep.subr.mxu0 0.0
  %2782 = vmatpush1.msra.mxu0 0.0
  %2783 = vmatprep.subr.mxu0 0.0
  %2784 = vmatpush1.msra.mxu0 0.0
  %2785 = vmatprep.subr.mxu0 0.0
  %2786 = vmatpush1.msra.mxu0 0.0
  %2787 = vmatprep.subr.mxu0 0.0
  %2788 = vmatpush1.msra.mxu0 0.0
  %2789 = vmatprep.subr.mxu0 0.0
  %2790 = vmatpush1.msra.mxu0 0.0
  %2791 = vmatprep.subr.mxu0 0.0
  %2792 = vmatpush1.msra.mxu0 0.0
  %2793 = vmatprep.subr.mxu0 0.0
  %2794 = vmatpush1.msra.mxu0 0.0
  %2795 = vmatprep.subr.mxu0 0.0
  %2796 = vmatpush1.msra.mxu0 0.0
  %2797 = vmatprep.subr.mxu0 0.0
  %2798 = vmatpush1.msra.mxu0 0.0
  %2799 = vmatprep.subr.mxu0 0.0
  %2800 = vmatpush1.msra.mxu0 0.0
  %2801 = vmatprep.subr.mxu0 0.0
  %2802 = vmatpush1.msra.mxu0 0.0
  %2803 = vmatprep.subr.mxu0 0.0
  %2804 = vmatpush1.msra.mxu0 0.0
  %2805 = vmatprep.subr.mxu0 0.0
  %2806 = vmatpush1.msra.mxu0 0.0
  %2807 = vmatprep.subr.mxu0 0.0
  %2808 = vmatpush1.msra.mxu0 0.0
  %2809 = vmatprep.subr.mxu0 0.0
  %2810 = vmatpush1.msra.mxu0 0.0
  %2811 = vmatprep.subr.mxu0 0.0
  %2812 = vmatpush1.msra.mxu0 0.0
  %2813 = vmatprep.subr.mxu0 0.0
  %2814 = vmatpush1.msra.mxu0 0.0
  %2815 = vmatprep.subr.mxu0 0.0
  %2816 = vmatpush1.msra.mxu0 0.0
  %2817 = vmatprep.subr.mxu0 0.0
  %2818 = vmatpush1.msra.mxu0 0.0
  %2819 = vmatprep.subr.mxu0 0.0
  %2820 = vmatpush1.msra.mxu0 0.0
  %2821 = vmatprep.subr.mxu0 0.0
  %2822 = vmatpush1.msra.mxu0 0.0
  %2823 = vmatprep.subr.mxu0 0.0
  %2824 = vmatpush1.msra.mxu0 0.0
  %2825 = vmatprep.subr.mxu0 0.0
  %2826 = vmatpush1.msra.mxu0 0.0
  %2827 = vmatprep.subr.mxu0 0.0
  %2828 = vmatpush1.msra.mxu0 0.0
  %2829 = vmatprep.subr.mxu0 0.0
  %2830 = vmatpush1.msra.mxu0 0.0
  %2831 = vmatprep.subr.mxu0 0.0
  %2832 = vmatpush1.msra.mxu0 0.0
  %2833 = vmatprep.subr.mxu0 0.0
  %2834 = vmatpush1.msra.mxu0 0.0
  %2835 = vmatprep.subr.mxu0 0.0
  %2836 = vmatpush1.msra.mxu0 0.0
  %2837 = vmatprep.subr.mxu0 0.0
  %2838 = vmatpush1.msra.mxu0 0.0
  %2839 = vmatprep.subr.mxu0 0.0
  %2840 = vmatpush1.msra.mxu0 0.0
  %2841 = vmatprep.mubr.f32.mxu0 0.0
  %2842 = vmatmul.mubr.f32.gmra.mrb[0].mxu0 %v2724
  %v2843 = vpop.f32.mrb[0].mxu0
  %v2844 = vadd.f32 0.0, %v2843
  %v2845 = vpop.f32.mrb[0].mxu0
  %2846 = vmatprep.mubr.f32.mxu0 0.0
  %2847 = vmatmul.mubr.f32.gmra.mrb[0].mxu0 %v2727
  %v2848 = vpop.f32.mrb[0].mxu0
  %v2849 = vadd.f32 0.0, %v2848
  %v2850 = vpop.f32.mrb[0].mxu0
  %2851 = vmatprep.mubr.f32.mxu0 0.0
  %2852 = vmatmul.mubr.f32.gmra.mrb[0].mxu0 %v2730
  %v2853 = vpop.f32.mrb[0].mxu0
  %v2854 = vadd.f32 0.0, %v2853
  %v2855 = vpop.f32.mrb[0].mxu0
  %2856 = vmatprep.mubr.f32.mxu0 0.0
  %2857 = vmatmul.mubr.f32.gmra.mrb[0].mxu0 %v2733
  %v2858 = vpop.f32.mrb[0].mxu0
  %v2859 = vadd.f32 0.0, %v2858
  %v2860 = vpop.f32.mrb[0].mxu0
  %2861 = vmatprep.mubr.f32.mxu0 0.0
  %2862 = vmatmul.mubr.f32.gmra.mrb[0].mxu0 %v2736
  %v2863 = vpop.f32.mrb[0].mxu0
  %v2864 = vadd.f32 0.0, %v2863
  %v2865 = vpop.f32.mrb[0].mxu0
  %2866 = vmatprep.mubr.f32.mxu0 0.0
  %2867 = vmatmul.mubr.f32.gmra.mrb[0].mxu0 %v2739
  %v2868 = vpop.f32.mrb[0].mxu0
  %v2869 = vadd.f32 0.0, %v2868
  %v2870 = vpop.f32.mrb[0].mxu0
  %2871 = vmatprep.mubr.f32.mxu0 0.0
  %2872 = vmatmul.mubr.f32.gmra.mrb[0].mxu0 %v2742
  %v2873 = vpop.f32.mrb[0].mxu0
  %v2874 = vadd.f32 0.0, %v2873
  %v2875 = vpop.f32.mrb[0].mxu0
  %2876 = vmatprep.mubr.f32.mxu0 0.0
  %2877 = vmatmul.mubr.f32.gmra.mrb[0].mxu0 %v2745
  %v2878 = vpop.f32.mrb[0].mxu0
  %v2879 = vadd.f32 0.0, %v2878
  %v2880 = vpop.f32.mrb[0].mxu0
  %2881 = vmatprep.mubr.f32.mxu0 0.0
  %2882 = vmatmul.mubr.f32.gmra.mrb[0].mxu0 %v2748
  %v2883 = vpop.f32.mrb[0].mxu0
  %v2884 = vadd.f32 0.0, %v2883
  %v2885 = vpop.f32.mrb[0].mxu0
  %2886 = vmatprep.mubr.f32.mxu0 0.0
  %2887 = vmatmul.mubr.f32.gmra.mrb[0].mxu0 %v2751
  %v2888 = vpop.f32.mrb[0].mxu0
  %v2889 = vadd.f32 0.0, %v2888
  %v2890 = vpop.f32.mrb[0].mxu0
  %2891 = vmatprep.mubr.f32.mxu0 0.0
  %2892 = vmatmul.mubr.f32.gmra.mrb[0].mxu0 %v2754
  %v2893 = vpop.f32.mrb[0].mxu0
  %v2894 = vadd.f32 0.0, %v2893
  %v2895 = vpop.f32.mrb[0].mxu0
  %2896 = vmatprep.mubr.f32.mxu0 0.0
  %2897 = vmatmul.mubr.f32.gmra.mrb[0].mxu0 %v2757
  %v2898 = vpop.f32.mrb[0].mxu0
  %v2899 = vadd.f32 0.0, %v2898
  %v2900 = vpop.f32.mrb[0].mxu0
  %2901 = vmatprep.mubr.f32.mxu0 0.0
  %2902 = vmatmul.mubr.f32.gmra.mrb[0].mxu0 %v2760
  %v2903 = vpop.f32.mrb[0].mxu0
  %v2904 = vadd.f32 0.0, %v2903
  %v2905 = vpop.f32.mrb[0].mxu0
  %2906 = vmatprep.mubr.f32.mxu0 0.0
  %2907 = vmatmul.mubr.f32.gmra.mrb[0].mxu0 %v2763
  %v2908 = vpop.f32.mrb[0].mxu0
  %v2909 = vadd.f32 0.0, %v2908
  %v2910 = vpop.f32.mrb[0].mxu0
  %2911 = vmatprep.mubr.f32.mxu0 0.0
  %2912 = vmatmul.mubr.f32.gmra.mrb[0].mxu0 %v2766
  %v2913 = vpop.f32.mrb[0].mxu0
  %v2914 = vadd.f32 0.0, %v2913
  %v2915 = vpop.f32.mrb[0].mxu0
  %2916 = vmatprep.mubr.f32.mxu0 0.0
  %2917 = vmatmul.mubr.f32.gmra.mrb[0].mxu0 %v2769
  %v2918 = vpop.f32.mrb[0].mxu0
  %v2919 = vadd.f32 0.0, %v2918
  %v2920 = vpop.f32.mrb[0].mxu0
  %2921 = vmatprep.mubr.f32.mxu0 0.0
  %2922 = vmatmul.mubr.f32.gmra.mrb[0].mxu0 %v2772
  %v2923 = vpop.f32.mrb[0].mxu0
  %v2924 = vadd.f32 0.0, %v2923
  %v2925 = vpop.f32.mrb[0].mxu0
  %2926 = vmatprep.mubr.f32.mxu0 0.0
  %2927 = vmatmul.mubr.f32.gmra.mrb[0].mxu0 %v2775
  %v2928 = vpop.f32.mrb[0].mxu0
  %v2929 = vadd.f32 0.0, %v2928
  %v2930 = vpop.f32.mrb[0].mxu0
  %2931 = vdwg.mxu0
  %v2932 = vmul.f32 %v2844, %v2712
  %v2933 = vmul.f32 %v2849, %v2714
  %v2934 = vmul.f32 %v2854, %v2716
  %v2935 = vmul.f32 %v2859, %v2718
  %v2936 = vmul.f32 %v2864, %v2720
  %v2937 = vmul.f32 %v2869, %v2722
  %v2938 = vmul.f32 %v2874, %v2712
  %v2939 = vmul.f32 %v2879, %v2714
  %v2940 = vmul.f32 %v2884, %v2716
  %v2941 = vmul.f32 %v2889, %v2718
  %v2942 = vmul.f32 %v2894, %v2720
  %v2943 = vmul.f32 %v2899, %v2722
  %v2944 = vmul.f32 %v2904, %v2712
  %v2945 = vmul.f32 %v2909, %v2714
  %v2946 = vmul.f32 %v2914, %v2716
  %v2947 = vmul.f32 %v2919, %v2718
  %v2948 = vmul.f32 %v2924, %v2720
  %v2949 = vmul.f32 %v2929, %v2722
  %2950 = vst.msk [vmem:[%s23] sm:$0xff] %vm749, %v2562
  %2951 = vst.msk [vmem:[%s23 + $0x8] sm:$0xff] %vm749, %v2563
  %2952 = vst.msk [vmem:[%s23 + $0x10] sm:$0xff] %vm749, %v2564
  %2953 = vst.msk [vmem:[%s23 + $0x18] sm:$0xff] %vm749, %v2565
  %2954 = vst.msk [vmem:[%s23 + $0x20] sm:$0xff] %vm749, %v2566
  %2955 = vst.msk [vmem:[%s23 + $0x28] sm:$0xff] %vm749, %v2567
  %2956 = vst.msk [vmem:[%s24] sm:$0xff] %vm1129, %v2932
  %2957 = vst.msk [vmem:[%s24 + $0x8] sm:$0xff] %vm1129, %v2933
  %2958 = vst.msk [vmem:[%s24 + $0x10] sm:$0xff] %vm1129, %v2934
  %2959 = vst.msk [vmem:[%s24 + $0x18] sm:$0xff] %vm1129, %v2935
  %2960 = vst.msk [vmem:[%s24 + $0x20] sm:$0xff] %vm1129, %v2936
  %2961 = vst.msk [vmem:[%s24 + $0x28] sm:$0xff] %vm1129, %v2937
  %s2962 = scalar_lea.vmem %s24, 48
  %2963 = vst.msk [vmem:[%s2962] sm:$0xff] %vm1129, %v2938
  %2964 = vst.msk [vmem:[%s2962 + $0x8] sm:$0xff] %vm1129, %v2939
  %2965 = vst.msk [vmem:[%s2962 + $0x10] sm:$0xff] %vm1129, %v2940
  %2966 = vst.msk [vmem:[%s2962 + $0x18] sm:$0xff] %vm1129, %v2941
  %2967 = vst.msk [vmem:[%s2962 + $0x20] sm:$0xff] %vm1129, %v2942
  %2968 = vst.msk [vmem:[%s2962 + $0x28] sm:$0xff] %vm1129, %v2943
  %s2969 = scalar_lea.vmem %s24, 96
  %2970 = vst.msk [vmem:[%s2969] sm:$0xff] %vm1129, %v2944
  %2971 = vst.msk [vmem:[%s2969 + $0x8] sm:$0xff] %vm1129, %v2945
  %2972 = vst.msk [vmem:[%s2969 + $0x10] sm:$0xff] %vm1129, %v2946
  %2973 = vst.msk [vmem:[%s2969 + $0x18] sm:$0xff] %vm1129, %v2947
  %2974 = vst.msk [vmem:[%s2969 + $0x20] sm:$0xff] %vm1129, %v2948
  %2975 = vst.msk [vmem:[%s2969 + $0x28] sm:$0xff] %vm1129, %v2949
  // Predicated region
  $region94: #{gvp_network_forward.7} parent=0 // pred_check
    _
  $region95: #{gvp_network_forward.7} parent=0 // pred_check_branch
    %2977 = sbr.rel (0) target = $region97
  $region96: #{gvp_network_forward.7} parent=0 // pred_region
    _
  $region97: #{gvp_network_forward.7} parent=0 // pred_fallthru
    _
  // Predicated region
  $region98: #{gvp_network_forward.7} parent=0 // pred_check
    _
  $region99: #{gvp_network_forward.7} parent=0 // pred_check_branch
    %2979 = sbr.rel (0) target = $region101
  $region100: #{gvp_network_forward.7} parent=0 // pred_region
    _
  $region101: #{gvp_network_forward.7} parent=0 // pred_fallthru
    _
  // Predicated region
  $region102: #{gvp_network_forward.7} parent=0 // pred_check
    _
  $region103: #{gvp_network_forward.7} parent=0 // pred_check_branch
    %2981 = sbr.rel (0) target = $region105
  $region104: #{gvp_network_forward.7} parent=0 // pred_region
    _
  $region105: #{gvp_network_forward.7} parent=0 // pred_fallthru
    _
  // Predicated region
  $region106: #{gvp_network_forward.7} parent=0 // pred_check
    _
  $region107: #{gvp_network_forward.7} parent=0 // pred_check_branch
    %2983 = sbr.rel (0) target = $region109
  $region108: #{gvp_network_forward.7} parent=0 // pred_region
    _
  $region109: #{gvp_network_forward.7} parent=0 // pred_fallthru
    _

// kernel: gvp_network_forward.11
$region0: #{gvp_network_forward.11}
  #allocation0 [shape = 'u32[]', space=smem, size = 0x4, offset = 0x4, fixed_abs, tag = 'smem constant byte address 0x4 - core index']
  #allocation1 [shape = 'u32[144,128]{1,0:T(1,128)}', space=vmem, size = 0x12000, scoped, tag = 'internal scratch']
  %s0 = inlined_call_operand.vmem [shape: f32[24,32], index: 0, kind: input, shape index: {}]
  %s1 = inlined_call_operand.vmem [shape: f32[3,24,16], index: 1, kind: input, shape index: {}]
  %s2 = inlined_call_operand.vmem [shape: f32[1,32], index: 2, kind: input, shape index: {}]
  %s3 = inlined_call_operand.vmem [shape: f32[1,32], index: 3, kind: input, shape index: {}]
  %s4 = inlined_call_operand.vmem [shape: f32[16,16], index: 4, kind: input, shape index: {}]
  %s5 = inlined_call_operand.vmem [shape: f32[32,8], index: 5, kind: input, shape index: {}]
  %s6 = inlined_call_operand.vmem [shape: f32[16,8], index: 6, kind: input, shape index: {}]
  %s7 = inlined_call_operand.vmem [shape: f32[1,8], index: 7, kind: input, shape index: {}]
  %s8 = inlined_call_operand.vmem [shape: f32[16,2], index: 8, kind: input, shape index: {}]
  %s9 = inlined_call_operand.vmem [shape: f32[8,2], index: 9, kind: input, shape index: {}]
  %s10 = inlined_call_operand.vmem [shape: f32[1,2], index: 10, kind: input, shape index: {}]
  %s11 = inlined_call_operand.vmem [shape: f32[24,8], index: 11, kind: output, shape index: {0}]
  %s12 = inlined_call_operand.vmem [shape: f32[3,24,2], index: 12, kind: output, shape index: {1}]
  %13 = xla_tuple %s11, %s12
  %s14 = sld [smem:[#allocation0]]
  $region62: #{gvp_network_forward.11} parent=0
    _
  %s16 = ssub.s32 1, %s14
  %s17 = scalar_select 0, %s16, %s14
  // Predicated region
  $region2: #{gvp_network_forward.11} parent=0 // pred_check
    _
  $region3: #{gvp_network_forward.11} parent=0 // pred_check_branch
    %19 = sbr.rel (0) target = $region5
  $region4: #{gvp_network_forward.11} parent=0 // pred_region
    _
  $region5: #{gvp_network_forward.11} parent=0 // pred_fallthru
    _
  // Predicated region
  $region6: #{gvp_network_forward.11} parent=0 // pred_check
    _
  $region7: #{gvp_network_forward.11} parent=0 // pred_check_branch
    %21 = sbr.rel (0) target = $region9
  $region8: #{gvp_network_forward.11} parent=0 // pred_region
    _
  $region9: #{gvp_network_forward.11} parent=0 // pred_fallthru
    _
  // Predicated region
  $region10: #{gvp_network_forward.11} parent=0 // pred_check
    _
  $region11: #{gvp_network_forward.11} parent=0 // pred_check_branch
    %23 = sbr.rel (0) target = $region13
  $region12: #{gvp_network_forward.11} parent=0 // pred_region
    _
  $region13: #{gvp_network_forward.11} parent=0 // pred_fallthru
    _
  // Predicated region
  $region14: #{gvp_network_forward.11} parent=0 // pred_check
    _
  $region15: #{gvp_network_forward.11} parent=0 // pred_check_branch
    %25 = sbr.rel (0) target = $region17
  $region16: #{gvp_network_forward.11} parent=0 // pred_region
    _
  $region17: #{gvp_network_forward.11} parent=0 // pred_fallthru
    _
  // Predicated region
  $region18: #{gvp_network_forward.11} parent=0 // pred_check
    _
  $region19: #{gvp_network_forward.11} parent=0 // pred_check_branch
    %27 = sbr.rel (0) target = $region21
  $region20: #{gvp_network_forward.11} parent=0 // pred_region
    _
  $region21: #{gvp_network_forward.11} parent=0 // pred_fallthru
    _
  // Predicated region
  $region22: #{gvp_network_forward.11} parent=0 // pred_check
    _
  $region23: #{gvp_network_forward.11} parent=0 // pred_check_branch
    %29 = sbr.rel (0) target = $region25
  $region24: #{gvp_network_forward.11} parent=0 // pred_region
    _
  $region25: #{gvp_network_forward.11} parent=0 // pred_fallthru
    _
  // Predicated region
  $region26: #{gvp_network_forward.11} parent=0 // pred_check
    _
  $region27: #{gvp_network_forward.11} parent=0 // pred_check_branch
    %31 = sbr.rel (0) target = $region29
  $region28: #{gvp_network_forward.11} parent=0 // pred_region
    _
  $region29: #{gvp_network_forward.11} parent=0 // pred_fallthru
    _
  // Predicated region
  $region30: #{gvp_network_forward.11} parent=0 // pred_check
    _
  $region31: #{gvp_network_forward.11} parent=0 // pred_check_branch
    %33 = sbr.rel (0) target = $region33
  $region32: #{gvp_network_forward.11} parent=0 // pred_region
    _
  $region33: #{gvp_network_forward.11} parent=0 // pred_fallthru
    _
  // Predicated region
  $region34: #{gvp_network_forward.11} parent=0 // pred_check
    _
  $region35: #{gvp_network_forward.11} parent=0 // pred_check_branch
    %35 = sbr.rel (0) target = $region37
  $region36: #{gvp_network_forward.11} parent=0 // pred_region
    _
  $region37: #{gvp_network_forward.11} parent=0 // pred_fallthru
    _
  // Predicated region
  $region38: #{gvp_network_forward.11} parent=0 // pred_check
    _
  $region39: #{gvp_network_forward.11} parent=0 // pred_check_branch
    %37 = sbr.rel (0) target = $region41
  $region40: #{gvp_network_forward.11} parent=0 // pred_region
    _
  $region41: #{gvp_network_forward.11} parent=0 // pred_fallthru
    _
  // Predicated region
  $region42: #{gvp_network_forward.11} parent=0 // pred_check
    _
  $region43: #{gvp_network_forward.11} parent=0 // pred_check_branch
    %39 = sbr.rel (0) target = $region45
  $region44: #{gvp_network_forward.11} parent=0 // pred_region
    _
  $region45: #{gvp_network_forward.11} parent=0 // pred_fallthru
    _
  %v40 = vld [vmem:[%s0] sm:$0xff]
  %v41 = vld [vmem:[%s0 + $0x8] sm:$0xff]
  %v42 = vld [vmem:[%s0 + $0x10] sm:$0xff]
  %v43 = vld [vmem:[%s1] sm:$0xff]
  %v44 = vld [vmem:[%s1 + $0x8] sm:$0xff]
  %v45 = vld [vmem:[%s1 + $0x10] sm:$0xff]
  %s46 = scalar_lea.vmem %s1, 24
  %v47 = vld [vmem:[%s46] sm:$0xff]
  %v48 = vld [vmem:[%s46 + $0x8] sm:$0xff]
  %v49 = vld [vmem:[%s46 + $0x10] sm:$0xff]
  %s50 = scalar_lea.vmem %s1, 48
  %v51 = vld [vmem:[%s50] sm:$0xff]
  %v52 = vld [vmem:[%s50 + $0x8] sm:$0xff]
  %v53 = vld [vmem:[%s50 + $0x10] sm:$0xff]
  %v54 = vld [vmem:[%s2] sm:$0x1]
  %v55 = vld [vmem:[%s3] sm:$0x1]
  %vm56 = vcmask 261120
  %v57 = vsel %vm56, %v40, 0.0
  %58 = vadd.xlane.f32.xlu0 %v57
  %v59 = vpop.xlane.xlu0 %58
  %v60 = vsel %vm56, %v41, 0.0
  %61 = vadd.xlane.f32.xlu0 %v60
  %v62 = vpop.xlane.xlu0 %61
  %v63 = vsel %vm56, %v42, 0.0
  %64 = vadd.xlane.f32.xlu0 %v63
  %v65 = vpop.xlane.xlu0 %64
  %v66 = vrcp.pop 32.0
  %v67 = vmul.f32 %v59, %v66
  %v68 = vmul.f32 %v62, %v66
  %v69 = vmul.f32 %v65, %v66
  %v70 = vsub.f32 %v40, %v67
  %v71 = vsub.f32 %v41, %v68
  %v72 = vsub.f32 %v42, %v69
  %v73 = vmul.f32 %v70, %v70
  %v74 = vmul.f32 %v71, %v71
  %v75 = vmul.f32 %v72, %v72
  %v76 = vsel %vm56, %v73, 0.0
  %77 = vadd.xlane.f32.xlu0 %v76
  %v78 = vpop.xlane.xlu0 %77
  %v79 = vsel %vm56, %v74, 0.0
  %80 = vadd.xlane.f32.xlu0 %v79
  %v81 = vpop.xlane.xlu0 %80
  %v82 = vsel %vm56, %v75, 0.0
  %83 = vadd.xlane.f32.xlu0 %v82
  %v84 = vpop.xlane.xlu0 %83
  %v85 = vmul.f32 %v78, %v66
  %v86 = vmul.f32 %v81, %v66
  %v87 = vmul.f32 %v84, %v66
  %v88 = vadd.f32 %v85, 1e-05
  %v89 = vadd.f32 %v86, 1e-05
  %v90 = vadd.f32 %v87, 1e-05
  %v91 = vrsqrt.pop %v88
  %v92 = vrsqrt.pop %v89
  %v93 = vrsqrt.pop %v90
  %v94 = vmul.f32 %v70, %v91
  %v95 = vmul.f32 %v71, %v92
  %v96 = vmul.f32 %v72, %v93
  %v98 = vlaneseq
  %v99 = vshrl.u32 %v98, 7
  %v100 = vsub.s32 0, %v99
  %v101 = vrot.slane %v54, %v100
  %v103 = vmul.f32 %v94, %v101
  %v104 = vmul.f32 %v95, %v101
  %v105 = vmul.f32 %v96, %v101
  %v107 = vlaneseq
  %v108 = vshrl.u32 %v107, 7
  %v109 = vsub.s32 0, %v108
  %v110 = vrot.slane %v55, %v109
  %v112 = vadd.f32 %v103, %v110
  %v113 = vadd.f32 %v104, %v110
  %v114 = vadd.f32 %v105, %v110
  %v115 = vmul.f32 %v43, %v43
  %v116 = vmul.f32 %v44, %v44
  %v117 = vmul.f32 %v45, %v45
  %v118 = vmul.f32 %v47, %v47
  %v119 = vmul.f32 %v48, %v48
  %v120 = vmul.f32 %v49, %v49
  %v121 = vadd.f32 %v115, %v118
  %v122 = vadd.f32 %v116, %v119
  %v123 = vadd.f32 %v117, %v120
  %v124 = vmul.f32 %v51, %v51
  %v125 = vmul.f32 %v52, %v52
  %v126 = vmul.f32 %v53, %v53
  %v127 = vadd.f32 %v121, %v124
  %v128 = vadd.f32 %v122, %v125
  %v129 = vadd.f32 %v123, %v126
  %v130 = vmax.f32 %v127, 1e-08
  %v131 = vmax.f32 %v128, 1e-08
  %v132 = vmax.f32 %v129, 1e-08
  %vm133 = vcmask 130048
  %v134 = vsel %vm133, %v130, 0.0
  %135 = vadd.xlane.f32.xlu0 %v134
  %v136 = vpop.xlane.xlu0 %135
  %v137 = vsel %vm133, %v131, 0.0
  %138 = vadd.xlane.f32.xlu0 %v137
  %v139 = vpop.xlane.xlu0 %138
  %v140 = vsel %vm133, %v132, 0.0
  %141 = vadd.xlane.f32.xlu0 %v140
  %v142 = vpop.xlane.xlu0 %141
  %v143 = vrcp.pop 16.0
  %v144 = vmul.f32 %v136, %v143
  %v145 = vmul.f32 %v139, %v143
  %v146 = vmul.f32 %v142, %v143
  %v147 = vrsqrt.pop %v144
  %v148 = vrsqrt.pop %v145
  %v149 = vrsqrt.pop %v146
  %v150 = vmul.f32 %v43, %v147
  %v151 = vmul.f32 %v44, %v148
  %v152 = vmul.f32 %v45, %v149
  %v153 = vmul.f32 %v47, %v147
  %v154 = vmul.f32 %v48, %v148
  %v155 = vmul.f32 %v49, %v149
  %v156 = vmul.f32 %v51, %v147
  %v157 = vmul.f32 %v52, %v148
  %v158 = vmul.f32 %v53, %v149
  %v159 = vld [vmem:[%s4] sm:$0xff]
  %v160 = vld [vmem:[%s4 + $0x8] sm:$0xff]
  %v161 = vld [vmem:[%s5] sm:$0xff]
  %v162 = vld [vmem:[%s5 + $0x8] sm:$0xff]
  %v163 = vld [vmem:[%s5 + $0x10] sm:$0xff]
  %v164 = vld [vmem:[%s5 + $0x18] sm:$0xff]
  %v165 = vld [vmem:[%s6] sm:$0xff]
  %v166 = vld [vmem:[%s6 + $0x8] sm:$0xff]
  %v167 = vld [vmem:[%s7] sm:$0x1]
  %v168 = vld [vmem:[%s8] sm:$0xff]
  %v169 = vld [vmem:[%s8 + $0x8] sm:$0xff]
  %v170 = vld [vmem:[%s9] sm:$0xff]
  %v171 = vld [vmem:[%s10] sm:$0x1]
  %v173 = vsel %vm133, %v150, 0
  %v176 = vsel %vm133, %v151, 0
  %v179 = vsel %vm133, %v152, 0
  %v182 = vsel %vm133, %v153, 0
  %v185 = vsel %vm133, %v154, 0
  %v188 = vsel %vm133, %v155, 0
  %v191 = vsel %vm133, %v156, 0
  %v194 = vsel %vm133, %v157, 0
  %v197 = vsel %vm133, %v158, 0
  %199 = vmatprep.subr.mxu0 0.0
  %200 = vmatpush1.msra.mxu0 %v159
  %201 = vmatprep.subr.mxu0 0.0
  %202 = vmatpush1.msra.mxu0 %v160
  %203 = vmatprep.subr.mxu0 0.0
  %204 = vmatpush1.msra.mxu0 0.0
  %205 = vmatprep.subr.mxu0 0.0
  %206 = vmatpush1.msra.mxu0 0.0
  %207 = vmatprep.subr.mxu0 0.0
  %208 = vmatpush1.msra.mxu0 0.0
  %209 = vmatprep.subr.mxu0 0.0
  %210 = vmatpush1.msra.mxu0 0.0
  %211 = vmatprep.subr.mxu0 0.0
  %212 = vmatpush1.msra.mxu0 0.0
  %213 = vmatprep.subr.mxu0 0.0
  %214 = vmatpush1.msra.mxu0 0.0
  %215 = vmatprep.subr.mxu0 0.0
  %216 = vmatpush1.msra.mxu0 0.0
  %217 = vmatprep.subr.mxu0 0.0
  %218 = vmatpush1.msra.mxu0 0.0
  %219 = vmatprep.subr.mxu0 0.0
  %220 = vmatpush1.msra.mxu0 0.0
  %221 = vmatprep.subr.mxu0 0.0
  %222 = vmatpush1.msra.mxu0 0.0
  %223 = vmatprep.subr.mxu0 0.0
  %224 = vmatpush1.msra.mxu0 0.0
  %225 = vmatprep.subr.mxu0 0.0
  %226 = vmatpush1.msra.mxu0 0.0
  %227 = vmatprep.subr.mxu0 0.0
  %228 = vmatpush1.msra.mxu0 0.0
  %229 = vmatprep.subr.mxu0 0.0
  %230 = vmatpush1.msra.mxu0 0.0
  %231 = vmatprep.subr.mxu0 0.0
  %232 = vmatpush1.msra.mxu0 0.0
  %233 = vmatprep.subr.mxu0 0.0
  %234 = vmatpush1.msra.mxu0 0.0
  %235 = vmatprep.subr.mxu0 0.0
  %236 = vmatpush1.msra.mxu0 0.0
  %237 = vmatprep.subr.mxu0 0.0
  %238 = vmatpush1.msra.mxu0 0.0
  %239 = vmatprep.subr.mxu0 0.0
  %240 = vmatpush1.msra.mxu0 0.0
  %241 = vmatprep.subr.mxu0 0.0
  %242 = vmatpush1.msra.mxu0 0.0
  %243 = vmatprep.subr.mxu0 0.0
  %244 = vmatpush1.msra.mxu0 0.0
  %245 = vmatprep.subr.mxu0 0.0
  %246 = vmatpush1.msra.mxu0 0.0
  %247 = vmatprep.subr.mxu0 0.0
  %248 = vmatpush1.msra.mxu0 0.0
  %249 = vmatprep.subr.mxu0 0.0
  %250 = vmatpush1.msra.mxu0 0.0
  %251 = vmatprep.subr.mxu0 0.0
  %252 = vmatpush1.msra.mxu0 0.0
  %253 = vmatprep.subr.mxu0 0.0
  %254 = vmatpush1.msra.mxu0 0.0
  %255 = vmatprep.subr.mxu0 0.0
  %256 = vmatpush1.msra.mxu0 0.0
  %257 = vmatprep.subr.mxu0 0.0
  %258 = vmatpush1.msra.mxu0 0.0
  %259 = vmatprep.subr.mxu0 0.0
  %260 = vmatpush1.msra.mxu0 0.0
  %261 = vmatprep.subr.mxu0 0.0
  %262 = vmatpush1.msra.mxu0 0.0
  %263 = vmatprep.mubr.f32.mxu0 0.0
  %264 = vmatmul.mubr.f32.gmra.mrb[0].mxu0 %v173
  %v265 = vpop.f32.mrb[0].mxu0
  %v266 = vadd.f32 0.0, %v265
  %v267 = vpop.f32.mrb[0].mxu0
  %268 = vmatprep.mubr.f32.mxu0 0.0
  %269 = vmatmul.mubr.f32.gmra.mrb[0].mxu0 %v176
  %v270 = vpop.f32.mrb[0].mxu0
  %v271 = vadd.f32 0.0, %v270
  %v272 = vpop.f32.mrb[0].mxu0
  %273 = vmatprep.mubr.f32.mxu0 0.0
  %274 = vmatmul.mubr.f32.gmra.mrb[0].mxu0 %v179
  %v275 = vpop.f32.mrb[0].mxu0
  %v276 = vadd.f32 0.0, %v275
  %v277 = vpop.f32.mrb[0].mxu0
  %278 = vmatprep.mubr.f32.mxu0 0.0
  %279 = vmatmul.mubr.f32.gmra.mrb[0].mxu0 %v182
  %v280 = vpop.f32.mrb[0].mxu0
  %v281 = vadd.f32 0.0, %v280
  %v282 = vpop.f32.mrb[0].mxu0
  %283 = vmatprep.mubr.f32.mxu0 0.0
  %284 = vmatmul.mubr.f32.gmra.mrb[0].mxu0 %v185
  %v285 = vpop.f32.mrb[0].mxu0
  %v286 = vadd.f32 0.0, %v285
  %v287 = vpop.f32.mrb[0].mxu0
  %288 = vmatprep.mubr.f32.mxu0 0.0
  %289 = vmatmul.mubr.f32.gmra.mrb[0].mxu0 %v188
  %v290 = vpop.f32.mrb[0].mxu0
  %v291 = vadd.f32 0.0, %v290
  %v292 = vpop.f32.mrb[0].mxu0
  %293 = vmatprep.mubr.f32.mxu0 0.0
  %294 = vmatmul.mubr.f32.gmra.mrb[0].mxu0 %v191
  %v295 = vpop.f32.mrb[0].mxu0
  %v296 = vadd.f32 0.0, %v295
  %v297 = vpop.f32.mrb[0].mxu0
  %298 = vmatprep.mubr.f32.mxu0 0.0
  %299 = vmatmul.mubr.f32.gmra.mrb[0].mxu0 %v194
  %v300 = vpop.f32.mrb[0].mxu0
  %v301 = vadd.f32 0.0, %v300
  %v302 = vpop.f32.mrb[0].mxu0
  %303 = vmatprep.mubr.f32.mxu0 0.0
  %304 = vmatmul.mubr.f32.gmra.mrb[0].mxu0 %v197
  %v305 = vpop.f32.mrb[0].mxu0
  %v306 = vadd.f32 0.0, %v305
  %v307 = vpop.f32.mrb[0].mxu0
  %308 = vdwg.mxu0
  %v309 = vmul.f32 %v266, %v266
  %v310 = vmul.f32 %v271, %v271
  %v311 = vmul.f32 %v276, %v276
  %v312 = vmul.f32 %v281, %v281
  %v313 = vmul.f32 %v286, %v286
  %v314 = vmul.f32 %v291, %v291
  %v315 = vadd.f32 %v309, %v312
  %v316 = vadd.f32 %v310, %v313
  %v317 = vadd.f32 %v311, %v314
  %v318 = vmul.f32 %v296, %v296
  %v319 = vmul.f32 %v301, %v301
  %v320 = vmul.f32 %v306, %v306
  %v321 = vadd.f32 %v315, %v318
  %v322 = vadd.f32 %v316, %v319
  %v323 = vadd.f32 %v317, %v320
  %v324 = vmax.f32 %v321, 1e-08
  %v325 = vmax.f32 %v322, 1e-08
  %v326 = vmax.f32 %v323, 1e-08
  %v327 = vrsqrt.pop %v324
  %v328 = vmul.f32 %v324, %v327
  %vm329 = vcmp.eq.f32.partialorder %v324, inf
  %v330 = vsel %vm329, %v324, %v328
  %vm331 = vcmp.eq.f32.partialorder %v324, 0.0
  %v332 = vand.u32 %v324, 2147483648
  %v333 = vsel %vm331, %v332, %v330
  %v334 = vrsqrt.pop %v325
  %v335 = vmul.f32 %v325, %v334
  %vm336 = vcmp.eq.f32.partialorder %v325, inf
  %v337 = vsel %vm336, %v325, %v335
  %vm338 = vcmp.eq.f32.partialorder %v325, 0.0
  %v339 = vand.u32 %v325, 2147483648
  %v340 = vsel %vm338, %v339, %v337
  %v341 = vrsqrt.pop %v326
  %v342 = vmul.f32 %v326, %v341
  %vm343 = vcmp.eq.f32.partialorder %v326, inf
  %v344 = vsel %vm343, %v326, %v342
  %vm345 = vcmp.eq.f32.partialorder %v326, 0.0
  %v346 = vand.u32 %v326, 2147483648
  %v347 = vsel %vm345, %v346, %v344
  %v349 = vsel %vm133, %v333, 0
  %v352 = vsel %vm133, %v340, 0
  %v355 = vsel %vm133, %v347, 0
  %357 = vmatprep.subr.mxu0 0.0
  %358 = vmatpush1.msra.mxu0 %v165
  %359 = vmatprep.subr.mxu0 0.0
  %360 = vmatpush1.msra.mxu0 %v166
  %361 = vmatprep.subr.mxu0 0.0
  %362 = vmatpush1.msra.mxu0 0.0
  %363 = vmatprep.subr.mxu0 0.0
  %364 = vmatpush1.msra.mxu0 0.0
  %365 = vmatprep.subr.mxu0 0.0
  %366 = vmatpush1.msra.mxu0 0.0
  %367 = vmatprep.subr.mxu0 0.0
  %368 = vmatpush1.msra.mxu0 0.0
  %369 = vmatprep.subr.mxu0 0.0
  %370 = vmatpush1.msra.mxu0 0.0
  %371 = vmatprep.subr.mxu0 0.0
  %372 = vmatpush1.msra.mxu0 0.0
  %373 = vmatprep.subr.mxu0 0.0
  %374 = vmatpush1.msra.mxu0 0.0
  %375 = vmatprep.subr.mxu0 0.0
  %376 = vmatpush1.msra.mxu0 0.0
  %377 = vmatprep.subr.mxu0 0.0
  %378 = vmatpush1.msra.mxu0 0.0
  %379 = vmatprep.subr.mxu0 0.0
  %380 = vmatpush1.msra.mxu0 0.0
  %381 = vmatprep.subr.mxu0 0.0
  %382 = vmatpush1.msra.mxu0 0.0
  %383 = vmatprep.subr.mxu0 0.0
  %384 = vmatpush1.msra.mxu0 0.0
  %385 = vmatprep.subr.mxu0 0.0
  %386 = vmatpush1.msra.mxu0 0.0
  %387 = vmatprep.subr.mxu0 0.0
  %388 = vmatpush1.msra.mxu0 0.0
  %389 = vmatprep.subr.mxu0 0.0
  %390 = vmatpush1.msra.mxu0 0.0
  %391 = vmatprep.subr.mxu0 0.0
  %392 = vmatpush1.msra.mxu0 0.0
  %393 = vmatprep.subr.mxu0 0.0
  %394 = vmatpush1.msra.mxu0 0.0
  %395 = vmatprep.subr.mxu0 0.0
  %396 = vmatpush1.msra.mxu0 0.0
  %397 = vmatprep.subr.mxu0 0.0
  %398 = vmatpush1.msra.mxu0 0.0
  %399 = vmatprep.subr.mxu0 0.0
  %400 = vmatpush1.msra.mxu0 0.0
  %401 = vmatprep.subr.mxu0 0.0
  %402 = vmatpush1.msra.mxu0 0.0
  %403 = vmatprep.subr.mxu0 0.0
  %404 = vmatpush1.msra.mxu0 0.0
  %405 = vmatprep.subr.mxu0 0.0
  %406 = vmatpush1.msra.mxu0 0.0
  %407 = vmatprep.subr.mxu0 0.0
  %408 = vmatpush1.msra.mxu0 0.0
  %409 = vmatprep.subr.mxu0 0.0
  %410 = vmatpush1.msra.mxu0 0.0
  %411 = vmatprep.subr.mxu0 0.0
  %412 = vmatpush1.msra.mxu0 0.0
  %413 = vmatprep.subr.mxu0 0.0
  %414 = vmatpush1.msra.mxu0 0.0
  %415 = vmatprep.subr.mxu0 0.0
  %416 = vmatpush1.msra.mxu0 0.0
  %417 = vmatprep.subr.mxu0 0.0
  %418 = vmatpush1.msra.mxu0 0.0
  %419 = vmatprep.subr.mxu0 0.0
  %420 = vmatpush1.msra.mxu0 0.0
  %421 = vmatprep.mubr.f32.mxu0 0.0
  %422 = vmatmul.mubr.f32.gmra.mrb[0].mxu0 %v349
  %v423 = vpop.f32.mrb[0].mxu0
  %v424 = vadd.f32 0.0, %v423
  %v425 = vpop.f32.mrb[0].mxu0
  %426 = vmatprep.mubr.f32.mxu0 0.0
  %427 = vmatmul.mubr.f32.gmra.mrb[0].mxu0 %v352
  %v428 = vpop.f32.mrb[0].mxu0
  %v429 = vadd.f32 0.0, %v428
  %v430 = vpop.f32.mrb[0].mxu0
  %431 = vmatprep.mubr.f32.mxu0 0.0
  %432 = vmatmul.mubr.f32.gmra.mrb[0].mxu0 %v355
  %v433 = vpop.f32.mrb[0].mxu0
  %v434 = vadd.f32 0.0, %v433
  %v435 = vpop.f32.mrb[0].mxu0
  %436 = vdwg.mxu0
  %v438 = vsel %vm56, %v112, 0
  %v441 = vsel %vm56, %v113, 0
  %v444 = vsel %vm56, %v114, 0
  %446 = vmatprep.subr.mxu0 0.0
  %447 = vmatpush1.msra.mxu0 %v161
  %448 = vmatprep.subr.mxu0 0.0
  %449 = vmatpush1.msra.mxu0 %v162
  %450 = vmatprep.subr.mxu0 0.0
  %451 = vmatpush1.msra.mxu0 %v163
  %452 = vmatprep.subr.mxu0 0.0
  %453 = vmatpush1.msra.mxu0 %v164
  %454 = vmatprep.subr.mxu0 0.0
  %455 = vmatpush1.msra.mxu0 0.0
  %456 = vmatprep.subr.mxu0 0.0
  %457 = vmatpush1.msra.mxu0 0.0
  %458 = vmatprep.subr.mxu0 0.0
  %459 = vmatpush1.msra.mxu0 0.0
  %460 = vmatprep.subr.mxu0 0.0
  %461 = vmatpush1.msra.mxu0 0.0
  %462 = vmatprep.subr.mxu0 0.0
  %463 = vmatpush1.msra.mxu0 0.0
  %464 = vmatprep.subr.mxu0 0.0
  %465 = vmatpush1.msra.mxu0 0.0
  %466 = vmatprep.subr.mxu0 0.0
  %467 = vmatpush1.msra.mxu0 0.0
  %468 = vmatprep.subr.mxu0 0.0
  %469 = vmatpush1.msra.mxu0 0.0
  %470 = vmatprep.subr.mxu0 0.0
  %471 = vmatpush1.msra.mxu0 0.0
  %472 = vmatprep.subr.mxu0 0.0
  %473 = vmatpush1.msra.mxu0 0.0
  %474 = vmatprep.subr.mxu0 0.0
  %475 = vmatpush1.msra.mxu0 0.0
  %476 = vmatprep.subr.mxu0 0.0
  %477 = vmatpush1.msra.mxu0 0.0
  %478 = vmatprep.subr.mxu0 0.0
  %479 = vmatpush1.msra.mxu0 0.0
  %480 = vmatprep.subr.mxu0 0.0
  %481 = vmatpush1.msra.mxu0 0.0
  %482 = vmatprep.subr.mxu0 0.0
  %483 = vmatpush1.msra.mxu0 0.0
  %484 = vmatprep.subr.mxu0 0.0
  %485 = vmatpush1.msra.mxu0 0.0
  %486 = vmatprep.subr.mxu0 0.0
  %487 = vmatpush1.msra.mxu0 0.0
  %488 = vmatprep.subr.mxu0 0.0
  %489 = vmatpush1.msra.mxu0 0.0
  %490 = vmatprep.subr.mxu0 0.0
  %491 = vmatpush1.msra.mxu0 0.0
  %492 = vmatprep.subr.mxu0 0.0
  %493 = vmatpush1.msra.mxu0 0.0
  %494 = vmatprep.subr.mxu0 0.0
  %495 = vmatpush1.msra.mxu0 0.0
  %496 = vmatprep.subr.mxu0 0.0
  %497 = vmatpush1.msra.mxu0 0.0
  %498 = vmatprep.subr.mxu0 0.0
  %499 = vmatpush1.msra.mxu0 0.0
  %500 = vmatprep.subr.mxu0 0.0
  %501 = vmatpush1.msra.mxu0 0.0
  %502 = vmatprep.subr.mxu0 0.0
  %503 = vmatpush1.msra.mxu0 0.0
  %504 = vmatprep.subr.mxu0 0.0
  %505 = vmatpush1.msra.mxu0 0.0
  %506 = vmatprep.subr.mxu0 0.0
  %507 = vmatpush1.msra.mxu0 0.0
  %508 = vmatprep.subr.mxu0 0.0
  %509 = vmatpush1.msra.mxu0 0.0
  %510 = vmatprep.mubr.f32.mxu0 0.0
  %511 = vmatmul.mubr.f32.gmra.mrb[0].mxu0 %v438
  %v512 = vpop.f32.mrb[0].mxu0
  %v513 = vadd.f32 %v424, %v512
  %v514 = vpop.f32.mrb[0].mxu0
  %515 = vmatprep.mubr.f32.mxu0 0.0
  %516 = vmatmul.mubr.f32.gmra.mrb[0].mxu0 %v441
  %v517 = vpop.f32.mrb[0].mxu0
  %v518 = vadd.f32 %v429, %v517
  %v519 = vpop.f32.mrb[0].mxu0
  %520 = vmatprep.mubr.f32.mxu0 0.0
  %521 = vmatmul.mubr.f32.gmra.mrb[0].mxu0 %v444
  %v522 = vpop.f32.mrb[0].mxu0
  %v523 = vadd.f32 %v434, %v522
  %v524 = vpop.f32.mrb[0].mxu0
  %525 = vdwg.mxu0
  %v527 = vlaneseq
  %v528 = vshrl.u32 %v527, 7
  %v529 = vsub.s32 0, %v528
  %v530 = vrot.slane %v167, %v529
  %v532 = vadd.f32 %v513, %v530
  %v533 = vadd.f32 %v518, %v530
  %v534 = vadd.f32 %v523, %v530
  %v535 = vxor.u32 %v532, 2147483648
  %v536 = vxor.u32 %v533, 2147483648
  %v537 = vxor.u32 %v534, 2147483648
  %v538 = vmul.f32 %v535, 1.442695
  %v539 = vpow.pop %v538
  %v540 = vmul.f32 %v536, 1.442695
  %v541 = vpow.pop %v540
  %v542 = vmul.f32 %v537, 1.442695
  %v543 = vpow.pop %v542
  %v544 = vadd.f32 %v539, 1.0
  %v545 = vadd.f32 %v541, 1.0
  %v546 = vadd.f32 %v543, 1.0
  %v547 = vrcp.pop %v544
  %v548 = vmul.f32 1.0, %v547
  %v549 = vrcp.pop %v545
  %v550 = vmul.f32 1.0, %v549
  %v551 = vrcp.pop %v546
  %v552 = vmul.f32 1.0, %v551
  %v553 = vmul.f32 %v532, %v548
  %v554 = vmul.f32 %v533, %v550
  %v555 = vmul.f32 %v534, %v552
  %v557 = vlaneseq
  %v558 = vshrl.u32 %v557, 7
  %v559 = vsub.s32 0, %v558
  %v560 = vrot.slane %v171, %v559
  %vm562 = vcmask 64512
  %v564 = vsel %vm562, %v553, 0
  %v567 = vsel %vm562, %v554, 0
  %v570 = vsel %vm562, %v555, 0
  %572 = vmatprep.subr.mxu0 0.0
  %573 = vmatpush1.msra.mxu0 %v170
  %574 = vmatprep.subr.mxu0 0.0
  %575 = vmatpush1.msra.mxu0 0.0
  %576 = vmatprep.subr.mxu0 0.0
  %577 = vmatpush1.msra.mxu0 0.0
  %578 = vmatprep.subr.mxu0 0.0
  %579 = vmatpush1.msra.mxu0 0.0
  %580 = vmatprep.subr.mxu0 0.0
  %581 = vmatpush1.msra.mxu0 0.0
  %582 = vmatprep.subr.mxu0 0.0
  %583 = vmatpush1.msra.mxu0 0.0
  %584 = vmatprep.subr.mxu0 0.0
  %585 = vmatpush1.msra.mxu0 0.0
  %586 = vmatprep.subr.mxu0 0.0
  %587 = vmatpush1.msra.mxu0 0.0
  %588 = vmatprep.subr.mxu0 0.0
  %589 = vmatpush1.msra.mxu0 0.0
  %590 = vmatprep.subr.mxu0 0.0
  %591 = vmatpush1.msra.mxu0 0.0
  %592 = vmatprep.subr.mxu0 0.0
  %593 = vmatpush1.msra.mxu0 0.0
  %594 = vmatprep.subr.mxu0 0.0
  %595 = vmatpush1.msra.mxu0 0.0
  %596 = vmatprep.subr.mxu0 0.0
  %597 = vmatpush1.msra.mxu0 0.0
  %598 = vmatprep.subr.mxu0 0.0
  %599 = vmatpush1.msra.mxu0 0.0
  %600 = vmatprep.subr.mxu0 0.0
  %601 = vmatpush1.msra.mxu0 0.0
  %602 = vmatprep.subr.mxu0 0.0
  %603 = vmatpush1.msra.mxu0 0.0
  %604 = vmatprep.subr.mxu0 0.0
  %605 = vmatpush1.msra.mxu0 0.0
  %606 = vmatprep.subr.mxu0 0.0
  %607 = vmatpush1.msra.mxu0 0.0
  %608 = vmatprep.subr.mxu0 0.0
  %609 = vmatpush1.msra.mxu0 0.0
  %610 = vmatprep.subr.mxu0 0.0
  %611 = vmatpush1.msra.mxu0 0.0
  %612 = vmatprep.subr.mxu0 0.0
  %613 = vmatpush1.msra.mxu0 0.0
  %614 = vmatprep.subr.mxu0 0.0
  %615 = vmatpush1.msra.mxu0 0.0
  %616 = vmatprep.subr.mxu0 0.0
  %617 = vmatpush1.msra.mxu0 0.0
  %618 = vmatprep.subr.mxu0 0.0
  %619 = vmatpush1.msra.mxu0 0.0
  %620 = vmatprep.subr.mxu0 0.0
  %621 = vmatpush1.msra.mxu0 0.0
  %622 = vmatprep.subr.mxu0 0.0
  %623 = vmatpush1.msra.mxu0 0.0
  %624 = vmatprep.subr.mxu0 0.0
  %625 = vmatpush1.msra.mxu0 0.0
  %626 = vmatprep.subr.mxu0 0.0
  %627 = vmatpush1.msra.mxu0 0.0
  %628 = vmatprep.subr.mxu0 0.0
  %629 = vmatpush1.msra.mxu0 0.0
  %630 = vmatprep.subr.mxu0 0.0
  %631 = vmatpush1.msra.mxu0 0.0
  %632 = vmatprep.subr.mxu0 0.0
  %633 = vmatpush1.msra.mxu0 0.0
  %634 = vmatprep.subr.mxu0 0.0
  %635 = vmatpush1.msra.mxu0 0.0
  %636 = vmatprep.mubr.f32.mxu0 0.0
  %637 = vmatmul.mubr.f32.gmra.mrb[0].mxu0 %v564
  %v638 = vpop.f32.mrb[0].mxu0
  %v639 = vadd.f32 %v560, %v638
  %v640 = vpop.f32.mrb[0].mxu0
  %641 = vmatprep.mubr.f32.mxu0 0.0
  %642 = vmatmul.mubr.f32.gmra.mrb[0].mxu0 %v567
  %v643 = vpop.f32.mrb[0].mxu0
  %v644 = vadd.f32 %v560, %v643
  %v645 = vpop.f32.mrb[0].mxu0
  %646 = vmatprep.mubr.f32.mxu0 0.0
  %647 = vmatmul.mubr.f32.gmra.mrb[0].mxu0 %v570
  %v648 = vpop.f32.mrb[0].mxu0
  %v649 = vadd.f32 %v560, %v648
  %v650 = vpop.f32.mrb[0].mxu0
  %651 = vdwg.mxu0
  %v652 = vxor.u32 %v639, 2147483648
  %v653 = vxor.u32 %v644, 2147483648
  %v654 = vxor.u32 %v649, 2147483648
  %v655 = vmul.f32 %v652, 1.442695
  %v656 = vpow.pop %v655
  %v657 = vmul.f32 %v653, 1.442695
  %v658 = vpow.pop %v657
  %v659 = vmul.f32 %v654, 1.442695
  %v660 = vpow.pop %v659
  %v661 = vadd.f32 %v656, 1.0
  %v662 = vadd.f32 %v658, 1.0
  %v663 = vadd.f32 %v660, 1.0
  %v664 = vrcp.pop %v661
  %v665 = vmul.f32 1.0, %v664
  %v666 = vrcp.pop %v662
  %v667 = vmul.f32 1.0, %v666
  %v668 = vrcp.pop %v663
  %v669 = vmul.f32 1.0, %v668
  %v671 = vsel %vm133, %v266, 0
  %v674 = vsel %vm133, %v271, 0
  %v677 = vsel %vm133, %v276, 0
  %v680 = vsel %vm133, %v281, 0
  %v683 = vsel %vm133, %v286, 0
  %v686 = vsel %vm133, %v291, 0
  %v689 = vsel %vm133, %v296, 0
  %v692 = vsel %vm133, %v301, 0
  %v695 = vsel %vm133, %v306, 0
  %697 = vmatprep.subr.mxu0 0.0
  %698 = vmatpush1.msra.mxu0 %v168
  %699 = vmatprep.subr.mxu0 0.0
  %700 = vmatpush1.msra.mxu0 %v169
  %701 = vmatprep.subr.mxu0 0.0
  %702 = vmatpush1.msra.mxu0 0.0
  %703 = vmatprep.subr.mxu0 0.0
  %704 = vmatpush1.msra.mxu0 0.0
  %705 = vmatprep.subr.mxu0 0.0
  %706 = vmatpush1.msra.mxu0 0.0
  %707 = vmatprep.subr.mxu0 0.0
  %708 = vmatpush1.msra.mxu0 0.0
  %709 = vmatprep.subr.mxu0 0.0
  %710 = vmatpush1.msra.mxu0 0.0
  %711 = vmatprep.subr.mxu0 0.0
  %712 = vmatpush1.msra.mxu0 0.0
  %713 = vmatprep.subr.mxu0 0.0
  %714 = vmatpush1.msra.mxu0 0.0
  %715 = vmatprep.subr.mxu0 0.0
  %716 = vmatpush1.msra.mxu0 0.0
  %717 = vmatprep.subr.mxu0 0.0
  %718 = vmatpush1.msra.mxu0 0.0
  %719 = vmatprep.subr.mxu0 0.0
  %720 = vmatpush1.msra.mxu0 0.0
  %721 = vmatprep.subr.mxu0 0.0
  %722 = vmatpush1.msra.mxu0 0.0
  %723 = vmatprep.subr.mxu0 0.0
  %724 = vmatpush1.msra.mxu0 0.0
  %725 = vmatprep.subr.mxu0 0.0
  %726 = vmatpush1.msra.mxu0 0.0
  %727 = vmatprep.subr.mxu0 0.0
  %728 = vmatpush1.msra.mxu0 0.0
  %729 = vmatprep.subr.mxu0 0.0
  %730 = vmatpush1.msra.mxu0 0.0
  %731 = vmatprep.subr.mxu0 0.0
  %732 = vmatpush1.msra.mxu0 0.0
  %733 = vmatprep.subr.mxu0 0.0
  %734 = vmatpush1.msra.mxu0 0.0
  %735 = vmatprep.subr.mxu0 0.0
  %736 = vmatpush1.msra.mxu0 0.0
  %737 = vmatprep.subr.mxu0 0.0
  %738 = vmatpush1.msra.mxu0 0.0
  %739 = vmatprep.subr.mxu0 0.0
  %740 = vmatpush1.msra.mxu0 0.0
  %741 = vmatprep.subr.mxu0 0.0
  %742 = vmatpush1.msra.mxu0 0.0
  %743 = vmatprep.subr.mxu0 0.0
  %744 = vmatpush1.msra.mxu0 0.0
  %745 = vmatprep.subr.mxu0 0.0
  %746 = vmatpush1.msra.mxu0 0.0
  %747 = vmatprep.subr.mxu0 0.0
  %748 = vmatpush1.msra.mxu0 0.0
  %749 = vmatprep.subr.mxu0 0.0
  %750 = vmatpush1.msra.mxu0 0.0
  %751 = vmatprep.subr.mxu0 0.0
  %752 = vmatpush1.msra.mxu0 0.0
  %753 = vmatprep.subr.mxu0 0.0
  %754 = vmatpush1.msra.mxu0 0.0
  %755 = vmatprep.subr.mxu0 0.0
  %756 = vmatpush1.msra.mxu0 0.0
  %757 = vmatprep.subr.mxu0 0.0
  %758 = vmatpush1.msra.mxu0 0.0
  %759 = vmatprep.subr.mxu0 0.0
  %760 = vmatpush1.msra.mxu0 0.0
  %761 = vmatprep.mubr.f32.mxu0 0.0
  %762 = vmatmul.mubr.f32.gmra.mrb[0].mxu0 %v671
  %v763 = vpop.f32.mrb[0].mxu0
  %v764 = vadd.f32 0.0, %v763
  %v765 = vpop.f32.mrb[0].mxu0
  %766 = vmatprep.mubr.f32.mxu0 0.0
  %767 = vmatmul.mubr.f32.gmra.mrb[0].mxu0 %v674
  %v768 = vpop.f32.mrb[0].mxu0
  %v769 = vadd.f32 0.0, %v768
  %v770 = vpop.f32.mrb[0].mxu0
  %771 = vmatprep.mubr.f32.mxu0 0.0
  %772 = vmatmul.mubr.f32.gmra.mrb[0].mxu0 %v677
  %v773 = vpop.f32.mrb[0].mxu0
  %v774 = vadd.f32 0.0, %v773
  %v775 = vpop.f32.mrb[0].mxu0
  %776 = vmatprep.mubr.f32.mxu0 0.0
  %777 = vmatmul.mubr.f32.gmra.mrb[0].mxu0 %v680
  %v778 = vpop.f32.mrb[0].mxu0
  %v779 = vadd.f32 0.0, %v778
  %v780 = vpop.f32.mrb[0].mxu0
  %781 = vmatprep.mubr.f32.mxu0 0.0
  %782 = vmatmul.mubr.f32.gmra.mrb[0].mxu0 %v683
  %v783 = vpop.f32.mrb[0].mxu0
  %v784 = vadd.f32 0.0, %v783
  %v785 = vpop.f32.mrb[0].mxu0
  %786 = vmatprep.mubr.f32.mxu0 0.0
  %787 = vmatmul.mubr.f32.gmra.mrb[0].mxu0 %v686
  %v788 = vpop.f32.mrb[0].mxu0
  %v789 = vadd.f32 0.0, %v788
  %v790 = vpop.f32.mrb[0].mxu0
  %791 = vmatprep.mubr.f32.mxu0 0.0
  %792 = vmatmul.mubr.f32.gmra.mrb[0].mxu0 %v689
  %v793 = vpop.f32.mrb[0].mxu0
  %v794 = vadd.f32 0.0, %v793
  %v795 = vpop.f32.mrb[0].mxu0
  %796 = vmatprep.mubr.f32.mxu0 0.0
  %797 = vmatmul.mubr.f32.gmra.mrb[0].mxu0 %v692
  %v798 = vpop.f32.mrb[0].mxu0
  %v799 = vadd.f32 0.0, %v798
  %v800 = vpop.f32.mrb[0].mxu0
  %801 = vmatprep.mubr.f32.mxu0 0.0
  %802 = vmatmul.mubr.f32.gmra.mrb[0].mxu0 %v695
  %v803 = vpop.f32.mrb[0].mxu0
  %v804 = vadd.f32 0.0, %v803
  %v805 = vpop.f32.mrb[0].mxu0
  %806 = vdwg.mxu0
  %v807 = vmul.f32 %v764, %v665
  %v808 = vmul.f32 %v769, %v667
  %v809 = vmul.f32 %v774, %v669
  %v810 = vmul.f32 %v779, %v665
  %v811 = vmul.f32 %v784, %v667
  %v812 = vmul.f32 %v789, %v669
  %v813 = vmul.f32 %v794, %v665
  %v814 = vmul.f32 %v799, %v667
  %v815 = vmul.f32 %v804, %v669
  %816 = vst.msk [vmem:[%s11] sm:$0xff] %vm562, %v553
  %817 = vst.msk [vmem:[%s11 + $0x8] sm:$0xff] %vm562, %v554
  %818 = vst.msk [vmem:[%s11 + $0x10] sm:$0xff] %vm562, %v555
  %vm819 = vcmask 15360
  %820 = vst.msk [vmem:[%s12] sm:$0xff] %vm819, %v807
  %821 = vst.msk [vmem:[%s12 + $0x8] sm:$0xff] %vm819, %v808
  %822 = vst.msk [vmem:[%s12 + $0x10] sm:$0xff] %vm819, %v809
  %s823 = scalar_lea.vmem %s12, 24
  %824 = vst.msk [vmem:[%s823] sm:$0xff] %vm819, %v810
  %825 = vst.msk [vmem:[%s823 + $0x8] sm:$0xff] %vm819, %v811
  %826 = vst.msk [vmem:[%s823 + $0x10] sm:$0xff] %vm819, %v812
  %s827 = scalar_lea.vmem %s12, 48
  %828 = vst.msk [vmem:[%s827] sm:$0xff] %vm819, %v813
  %829 = vst.msk [vmem:[%s827 + $0x8] sm:$0xff] %vm819, %v814
  %830 = vst.msk [vmem:[%s827 + $0x10] sm:$0xff] %vm819, %v815
  // Predicated region
  $region46: #{gvp_network_forward.11} parent=0 // pred_check
    _
  $region47: #{gvp_network_forward.11} parent=0 // pred_check_branch
    %832 = sbr.rel (0) target = $region49
  $region48: #{gvp_network_forward.11} parent=0 // pred_region
    _
  $region49: #{gvp_network_forward.11} parent=0 // pred_fallthru
    _
  // Predicated region
  $region50: #{gvp_network_forward.11} parent=0 // pred_check
    _
  $region51: #{gvp_network_forward.11} parent=0 // pred_check_branch
    %834 = sbr.rel (0) target = $region53
  $region52: #{gvp_network_forward.11} parent=0 // pred_region
    _
  $region53: #{gvp_network_forward.11} parent=0 // pred_fallthru
    _
  // Predicated region
  $region54: #{gvp_network_forward.11} parent=0 // pred_check
    _
  $region55: #{gvp_network_forward.11} parent=0 // pred_check_branch
    %836 = sbr.rel (0) target = $region57
  $region56: #{gvp_network_forward.11} parent=0 // pred_region
    _
  $region57: #{gvp_network_forward.11} parent=0 // pred_fallthru
    _
  // Predicated region
  $region58: #{gvp_network_forward.11} parent=0 // pred_check
    _
  $region59: #{gvp_network_forward.11} parent=0 // pred_check_branch
    %838 = sbr.rel (0) target = $region61
  $region60: #{gvp_network_forward.11} parent=0 // pred_region
    _
  $region61: #{gvp_network_forward.11} parent=0 // pred_fallthru
    _

// kernel: gvp_network_forward.8
$region0: #{gvp_network_forward.8}
  #allocation0 [shape = 'u32[]', space=smem, size = 0x4, offset = 0x4, fixed_abs, tag = 'smem constant byte address 0x4 - core index']
  #allocation1 [shape = 'u32[144,128]{1,0:T(1,128)}', space=vmem, size = 0x12000, scoped, tag = 'internal scratch']
  %s0 = inlined_call_operand.vmem [shape: f32[24,32], index: 0, kind: input, shape index: {}]
  %s1 = inlined_call_operand.vmem [shape: f32[24,32], index: 1, kind: input, shape index: {}]
  %s2 = inlined_call_operand.vmem [shape: f32[3,24,16], index: 2, kind: input, shape index: {}]
  %s3 = inlined_call_operand.vmem [shape: f32[3,24,16], index: 3, kind: input, shape index: {}]
  %s4 = inlined_call_operand.vmem [shape: f32[1,32], index: 4, kind: input, shape index: {}]
  %s5 = inlined_call_operand.vmem [shape: f32[1,32], index: 5, kind: input, shape index: {}]
  %s6 = inlined_call_operand.vmem [shape: f32[16,32], index: 6, kind: input, shape index: {}]
  %s7 = inlined_call_operand.vmem [shape: f32[32,128], index: 7, kind: input, shape index: {}]
  %s8 = inlined_call_operand.vmem [shape: f32[32,128], index: 8, kind: input, shape index: {}]
  %s9 = inlined_call_operand.vmem [shape: f32[1,128], index: 9, kind: input, shape index: {}]
  %s10 = inlined_call_operand.vmem [shape: f32[32,32], index: 10, kind: input, shape index: {}]
  %s11 = inlined_call_operand.vmem [shape: f32[128,32], index: 11, kind: input, shape index: {}]
  %s12 = inlined_call_operand.vmem [shape: f32[1,32], index: 12, kind: input, shape index: {}]
  %s13 = inlined_call_operand.vmem [shape: f32[32,32], index: 13, kind: input, shape index: {}]
  %s14 = inlined_call_operand.vmem [shape: f32[128,32], index: 14, kind: input, shape index: {}]
  %s15 = inlined_call_operand.vmem [shape: f32[32,32], index: 15, kind: input, shape index: {}]
  %s16 = inlined_call_operand.vmem [shape: f32[1,32], index: 16, kind: input, shape index: {}]
  %s17 = inlined_call_operand.vmem [shape: f32[32,16], index: 17, kind: input, shape index: {}]
  %s18 = inlined_call_operand.vmem [shape: f32[32,16], index: 18, kind: input, shape index: {}]
  %s19 = inlined_call_operand.vmem [shape: f32[1,16], index: 19, kind: input, shape index: {}]
  %s20 = inlined_call_operand.vmem [shape: f32[1,32], index: 20, kind: input, shape index: {}]
  %s21 = inlined_call_operand.vmem [shape: f32[1,32], index: 21, kind: input, shape index: {}]
  %s22 = inlined_call_operand.vmem [shape: f32[24,32], index: 22, kind: output, shape index: {0}]
  %s23 = inlined_call_operand.vmem [shape: f32[3,24,16], index: 23, kind: output, shape index: {1}]
  %24 = xla_tuple %s22, %s23
  %s25 = sld [smem:[#allocation0]]
  $region106: #{gvp_network_forward.8} parent=0
    _
  %s27 = ssub.s32 1, %s25
  %s28 = scalar_select 0, %s27, %s25
  // Predicated region
  $region2: #{gvp_network_forward.8} parent=0 // pred_check
    _
  $region3: #{gvp_network_forward.8} parent=0 // pred_check_branch
    %30 = sbr.rel (0) target = $region5
  $region4: #{gvp_network_forward.8} parent=0 // pred_region
    _
  $region5: #{gvp_network_forward.8} parent=0 // pred_fallthru
    _
  // Predicated region
  $region6: #{gvp_network_forward.8} parent=0 // pred_check
    _
  $region7: #{gvp_network_forward.8} parent=0 // pred_check_branch
    %32 = sbr.rel (0) target = $region9
  $region8: #{gvp_network_forward.8} parent=0 // pred_region
    _
  $region9: #{gvp_network_forward.8} parent=0 // pred_fallthru
    _
  // Predicated region
  $region10: #{gvp_network_forward.8} parent=0 // pred_check
    _
  $region11: #{gvp_network_forward.8} parent=0 // pred_check_branch
    %34 = sbr.rel (0) target = $region13
  $region12: #{gvp_network_forward.8} parent=0 // pred_region
    _
  $region13: #{gvp_network_forward.8} parent=0 // pred_fallthru
    _
  // Predicated region
  $region14: #{gvp_network_forward.8} parent=0 // pred_check
    _
  $region15: #{gvp_network_forward.8} parent=0 // pred_check_branch
    %36 = sbr.rel (0) target = $region17
  $region16: #{gvp_network_forward.8} parent=0 // pred_region
    _
  $region17: #{gvp_network_forward.8} parent=0 // pred_fallthru
    _
  // Predicated region
  $region18: #{gvp_network_forward.8} parent=0 // pred_check
    _
  $region19: #{gvp_network_forward.8} parent=0 // pred_check_branch
    %38 = sbr.rel (0) target = $region21
  $region20: #{gvp_network_forward.8} parent=0 // pred_region
    _
  $region21: #{gvp_network_forward.8} parent=0 // pred_fallthru
    _
  // Predicated region
  $region22: #{gvp_network_forward.8} parent=0 // pred_check
    _
  $region23: #{gvp_network_forward.8} parent=0 // pred_check_branch
    %40 = sbr.rel (0) target = $region25
  $region24: #{gvp_network_forward.8} parent=0 // pred_region
    _
  $region25: #{gvp_network_forward.8} parent=0 // pred_fallthru
    _
  // Predicated region
  $region26: #{gvp_network_forward.8} parent=0 // pred_check
    _
  $region27: #{gvp_network_forward.8} parent=0 // pred_check_branch
    %42 = sbr.rel (0) target = $region29
  $region28: #{gvp_network_forward.8} parent=0 // pred_region
    _
  $region29: #{gvp_network_forward.8} parent=0 // pred_fallthru
    _
  // Predicated region
  $region30: #{gvp_network_forward.8} parent=0 // pred_check
    _
  $region31: #{gvp_network_forward.8} parent=0 // pred_check_branch
    %44 = sbr.rel (0) target = $region33
  $region32: #{gvp_network_forward.8} parent=0 // pred_region
    _
  $region33: #{gvp_network_forward.8} parent=0 // pred_fallthru
    _
  // Predicated region
  $region34: #{gvp_network_forward.8} parent=0 // pred_check
    _
  $region35: #{gvp_network_forward.8} parent=0 // pred_check_branch
    %46 = sbr.rel (0) target = $region37
  $region36: #{gvp_network_forward.8} parent=0 // pred_region
    _
  $region37: #{gvp_network_forward.8} parent=0 // pred_fallthru
    _
  // Predicated region
  $region38: #{gvp_network_forward.8} parent=0 // pred_check
    _
  $region39: #{gvp_network_forward.8} parent=0 // pred_check_branch
    %48 = sbr.rel (0) target = $region41
  $region40: #{gvp_network_forward.8} parent=0 // pred_region
    _
  $region41: #{gvp_network_forward.8} parent=0 // pred_fallthru
    _
  // Predicated region
  $region42: #{gvp_network_forward.8} parent=0 // pred_check
    _
  $region43: #{gvp_network_forward.8} parent=0 // pred_check_branch
    %50 = sbr.rel (0) target = $region45
  $region44: #{gvp_network_forward.8} parent=0 // pred_region
    _
  $region45: #{gvp_network_forward.8} parent=0 // pred_fallthru
    _
  // Predicated region
  $region46: #{gvp_network_forward.8} parent=0 // pred_check
    _
  $region47: #{gvp_network_forward.8} parent=0 // pred_check_branch
    %52 = sbr.rel (0) target = $region49
  $region48: #{gvp_network_forward.8} parent=0 // pred_region
    _
  $region49: #{gvp_network_forward.8} parent=0 // pred_fallthru
    _
  // Predicated region
  $region50: #{gvp_network_forward.8} parent=0 // pred_check
    _
  $region51: #{gvp_network_forward.8} parent=0 // pred_check_branch
    %54 = sbr.rel (0) target = $region53
  $region52: #{gvp_network_forward.8} parent=0 // pred_region
    _
  $region53: #{gvp_network_forward.8} parent=0 // pred_fallthru
    _
  // Predicated region
  $region54: #{gvp_network_forward.8} parent=0 // pred_check
    _
  $region55: #{gvp_network_forward.8} parent=0 // pred_check_branch
    %56 = sbr.rel (0) target = $region57
  $region56: #{gvp_network_forward.8} parent=0 // pred_region
    _
  $region57: #{gvp_network_forward.8} parent=0 // pred_fallthru
    _
  // Predicated region
  $region58: #{gvp_network_forward.8} parent=0 // pred_check
    _
  $region59: #{gvp_network_forward.8} parent=0 // pred_check_branch
    %58 = sbr.rel (0) target = $region61
  $region60: #{gvp_network_forward.8} parent=0 // pred_region
    _
  $region61: #{gvp_network_forward.8} parent=0 // pred_fallthru
    _
  // Predicated region
  $region62: #{gvp_network_forward.8} parent=0 // pred_check
    _
  $region63: #{gvp_network_forward.8} parent=0 // pred_check_branch
    %60 = sbr.rel (0) target = $region65
  $region64: #{gvp_network_forward.8} parent=0 // pred_region
    _
  $region65: #{gvp_network_forward.8} parent=0 // pred_fallthru
    _
  // Predicated region
  $region66: #{gvp_network_forward.8} parent=0 // pred_check
    _
  $region67: #{gvp_network_forward.8} parent=0 // pred_check_branch
    %62 = sbr.rel (0) target = $region69
  $region68: #{gvp_network_forward.8} parent=0 // pred_region
    _
  $region69: #{gvp_network_forward.8} parent=0 // pred_fallthru
    _
  // Predicated region
  $region70: #{gvp_network_forward.8} parent=0 // pred_check
    _
  $region71: #{gvp_network_forward.8} parent=0 // pred_check_branch
    %64 = sbr.rel (0) target = $region73
  $region72: #{gvp_network_forward.8} parent=0 // pred_region
    _
  $region73: #{gvp_network_forward.8} parent=0 // pred_fallthru
    _
  // Predicated region
  $region74: #{gvp_network_forward.8} parent=0 // pred_check
    _
  $region75: #{gvp_network_forward.8} parent=0 // pred_check_branch
    %66 = sbr.rel (0) target = $region77
  $region76: #{gvp_network_forward.8} parent=0 // pred_region
    _
  $region77: #{gvp_network_forward.8} parent=0 // pred_fallthru
    _
  // Predicated region
  $region78: #{gvp_network_forward.8} parent=0 // pred_check
    _
  $region79: #{gvp_network_forward.8} parent=0 // pred_check_branch
    %68 = sbr.rel (0) target = $region81
  $region80: #{gvp_network_forward.8} parent=0 // pred_region
    _
  $region81: #{gvp_network_forward.8} parent=0 // pred_fallthru
    _
  // Predicated region
  $region82: #{gvp_network_forward.8} parent=0 // pred_check
    _
  $region83: #{gvp_network_forward.8} parent=0 // pred_check_branch
    %70 = sbr.rel (0) target = $region85
  $region84: #{gvp_network_forward.8} parent=0 // pred_region
    _
  $region85: #{gvp_network_forward.8} parent=0 // pred_fallthru
    _
  // Predicated region
  $region86: #{gvp_network_forward.8} parent=0 // pred_check
    _
  $region87: #{gvp_network_forward.8} parent=0 // pred_check_branch
    %72 = sbr.rel (0) target = $region89
  $region88: #{gvp_network_forward.8} parent=0 // pred_region
    _
  $region89: #{gvp_network_forward.8} parent=0 // pred_fallthru
    _
  %v73 = vld [vmem:[%s4] sm:$0x1]
  %v74 = vld [vmem:[%s5] sm:$0x1]
  %v75 = vld [vmem:[%s6] sm:$0xff]
  %v76 = vld [vmem:[%s6 + $0x8] sm:$0xff]
  %v77 = vld [vmem:[%s7] sm:$0xff]
  %v78 = vld [vmem:[%s7 + $0x8] sm:$0xff]
  %v79 = vld [vmem:[%s7 + $0x10] sm:$0xff]
  %v80 = vld [vmem:[%s7 + $0x18] sm:$0xff]
  %v81 = vld [vmem:[%s8] sm:$0xff]
  %v82 = vld [vmem:[%s8 + $0x8] sm:$0xff]
  %v83 = vld [vmem:[%s8 + $0x10] sm:$0xff]
  %v84 = vld [vmem:[%s8 + $0x18] sm:$0xff]
  %v85 = vld [vmem:[%s9] sm:$0x1]
  %v86 = vld [vmem:[%s10] sm:$0xff]
  %v87 = vld [vmem:[%s10 + $0x8] sm:$0xff]
  %v88 = vld [vmem:[%s10 + $0x10] sm:$0xff]
  %v89 = vld [vmem:[%s10 + $0x18] sm:$0xff]
  %v90 = vld [vmem:[%s11] sm:$0xff]
  %v91 = vld [vmem:[%s11 + $0x8] sm:$0xff]
  %v92 = vld [vmem:[%s11 + $0x10] sm:$0xff]
  %v93 = vld [vmem:[%s11 + $0x18] sm:$0xff]
  %v94 = vld [vmem:[%s11 + $0x20] sm:$0xff]
  %v95 = vld [vmem:[%s11 + $0x28] sm:$0xff]
  %v96 = vld [vmem:[%s11 + $0x30] sm:$0xff]
  %v97 = vld [vmem:[%s11 + $0x38] sm:$0xff]
  %v98 = vld [vmem:[%s11 + $0x40] sm:$0xff]
  %v99 = vld [vmem:[%s11 + $0x48] sm:$0xff]
  %v100 = vld [vmem:[%s11 + $0x50] sm:$0xff]
  %v101 = vld [vmem:[%s11 + $0x58] sm:$0xff]
  %v102 = vld [vmem:[%s11 + $0x60] sm:$0xff]
  %v103 = vld [vmem:[%s11 + $0x68] sm:$0xff]
  %v104 = vld [vmem:[%s11 + $0x70] sm:$0xff]
  %v105 = vld [vmem:[%s11 + $0x78] sm:$0xff]
  %v106 = vld [vmem:[%s12] sm:$0x1]
  %v107 = vld [vmem:[%s13] sm:$0xff]
  %v108 = vld [vmem:[%s13 + $0x8] sm:$0xff]
  %v109 = vld [vmem:[%s13 + $0x10] sm:$0xff]
  %v110 = vld [vmem:[%s13 + $0x18] sm:$0xff]
  %v111 = vld [vmem:[%s14] sm:$0xff]
  %v112 = vld [vmem:[%s14 + $0x8] sm:$0xff]
  %v113 = vld [vmem:[%s14 + $0x10] sm:$0xff]
  %v114 = vld [vmem:[%s14 + $0x18] sm:$0xff]
  %v115 = vld [vmem:[%s14 + $0x20] sm:$0xff]
  %v116 = vld [vmem:[%s14 + $0x28] sm:$0xff]
  %v117 = vld [vmem:[%s14 + $0x30] sm:$0xff]
  %v118 = vld [vmem:[%s14 + $0x38] sm:$0xff]
  %v119 = vld [vmem:[%s14 + $0x40] sm:$0xff]
  %v120 = vld [vmem:[%s14 + $0x48] sm:$0xff]
  %v121 = vld [vmem:[%s14 + $0x50] sm:$0xff]
  %v122 = vld [vmem:[%s14 + $0x58] sm:$0xff]
  %v123 = vld [vmem:[%s14 + $0x60] sm:$0xff]
  %v124 = vld [vmem:[%s14 + $0x68] sm:$0xff]
  %v125 = vld [vmem:[%s14 + $0x70] sm:$0xff]
  %v126 = vld [vmem:[%s14 + $0x78] sm:$0xff]
  %v127 = vld [vmem:[%s15] sm:$0xff]
  %v128 = vld [vmem:[%s15 + $0x8] sm:$0xff]
  %v129 = vld [vmem:[%s15 + $0x10] sm:$0xff]
  %v130 = vld [vmem:[%s15 + $0x18] sm:$0xff]
  %v131 = vld [vmem:[%s16] sm:$0x1]
  %v132 = vld [vmem:[%s17] sm:$0xff]
  %v133 = vld [vmem:[%s17 + $0x8] sm:$0xff]
  %v134 = vld [vmem:[%s17 + $0x10] sm:$0xff]
  %v135 = vld [vmem:[%s17 + $0x18] sm:$0xff]
  %v136 = vld [vmem:[%s18] sm:$0xff]
  %v137 = vld [vmem:[%s18 + $0x8] sm:$0xff]
  %v138 = vld [vmem:[%s18 + $0x10] sm:$0xff]
  %v139 = vld [vmem:[%s18 + $0x18] sm:$0xff]
  %v140 = vld [vmem:[%s19] sm:$0x1]
  %v141 = vld [vmem:[%s20] sm:$0x1]
  %v142 = vld [vmem:[%s21] sm:$0x1]
  %v143 = vld [vmem:[%s0] sm:$0xff]
  %v144 = vld [vmem:[%s0 + $0x8] sm:$0xff]
  %v145 = vld [vmem:[%s0 + $0x10] sm:$0xff]
  %v146 = vld [vmem:[%s1] sm:$0xff]
  %v147 = vld [vmem:[%s1 + $0x8] sm:$0xff]
  %v148 = vld [vmem:[%s1 + $0x10] sm:$0xff]
  %v149 = vadd.f32 %v143, %v146
  %v150 = vadd.f32 %v144, %v147
  %v151 = vadd.f32 %v145, %v148
  %v152 = vld [vmem:[%s2] sm:$0xff]
  %v153 = vld [vmem:[%s2 + $0x8] sm:$0xff]
  %v154 = vld [vmem:[%s2 + $0x10] sm:$0xff]
  %v155 = vld [vmem:[%s3] sm:$0xff]
  %v156 = vld [vmem:[%s3 + $0x8] sm:$0xff]
  %v157 = vld [vmem:[%s3 + $0x10] sm:$0xff]
  %v158 = vadd.f32 %v152, %v155
  %v159 = vadd.f32 %v153, %v156
  %v160 = vadd.f32 %v154, %v157
  %s161 = scalar_lea.vmem %s2, 24
  %v162 = vld [vmem:[%s161] sm:$0xff]
  %v163 = vld [vmem:[%s161 + $0x8] sm:$0xff]
  %v164 = vld [vmem:[%s161 + $0x10] sm:$0xff]
  %s165 = scalar_lea.vmem %s3, 24
  %v166 = vld [vmem:[%s165] sm:$0xff]
  %v167 = vld [vmem:[%s165 + $0x8] sm:$0xff]
  %v168 = vld [vmem:[%s165 + $0x10] sm:$0xff]
  %v169 = vadd.f32 %v162, %v166
  %v170 = vadd.f32 %v163, %v167
  %v171 = vadd.f32 %v164, %v168
  %s172 = scalar_lea.vmem %s2, 48
  %v173 = vld [vmem:[%s172] sm:$0xff]
  %v174 = vld [vmem:[%s172 + $0x8] sm:$0xff]
  %v175 = vld [vmem:[%s172 + $0x10] sm:$0xff]
  %s176 = scalar_lea.vmem %s3, 48
  %v177 = vld [vmem:[%s176] sm:$0xff]
  %v178 = vld [vmem:[%s176 + $0x8] sm:$0xff]
  %v179 = vld [vmem:[%s176 + $0x10] sm:$0xff]
  %v180 = vadd.f32 %v173, %v177
  %v181 = vadd.f32 %v174, %v178
  %v182 = vadd.f32 %v175, %v179
  %vm183 = vcmask 261120
  %v184 = vsel %vm183, %v149, 0.0
  %185 = vadd.xlane.f32.xlu0 %v184
  %v186 = vpop.xlane.xlu0 %185
  %v187 = vsel %vm183, %v150, 0.0
  %188 = vadd.xlane.f32.xlu0 %v187
  %v189 = vpop.xlane.xlu0 %188
  %v190 = vsel %vm183, %v151, 0.0
  %191 = vadd.xlane.f32.xlu0 %v190
  %v192 = vpop.xlane.xlu0 %191
  %v193 = vrcp.pop 32.0
  %v194 = vmul.f32 %v186, %v193
  %v195 = vmul.f32 %v189, %v193
  %v196 = vmul.f32 %v192, %v193
  %v197 = vsub.f32 %v149, %v194
  %v198 = vsub.f32 %v150, %v195
  %v199 = vsub.f32 %v151, %v196
  %v200 = vmul.f32 %v197, %v197
  %v201 = vmul.f32 %v198, %v198
  %v202 = vmul.f32 %v199, %v199
  %v203 = vsel %vm183, %v200, 0.0
  %204 = vadd.xlane.f32.xlu0 %v203
  %v205 = vpop.xlane.xlu0 %204
  %v206 = vsel %vm183, %v201, 0.0
  %207 = vadd.xlane.f32.xlu0 %v206
  %v208 = vpop.xlane.xlu0 %207
  %v209 = vsel %vm183, %v202, 0.0
  %210 = vadd.xlane.f32.xlu0 %v209
  %v211 = vpop.xlane.xlu0 %210
  %v212 = vmul.f32 %v205, %v193
  %v213 = vmul.f32 %v208, %v193
  %v214 = vmul.f32 %v211, %v193
  %v215 = vadd.f32 %v212, 1e-05
  %v216 = vadd.f32 %v213, 1e-05
  %v217 = vadd.f32 %v214, 1e-05
  %v218 = vrsqrt.pop %v215
  %v219 = vrsqrt.pop %v216
  %v220 = vrsqrt.pop %v217
  %v221 = vmul.f32 %v197, %v218
  %v222 = vmul.f32 %v198, %v219
  %v223 = vmul.f32 %v199, %v220
  %v225 = vlaneseq
  %v226 = vshrl.u32 %v225, 7
  %v227 = vsub.s32 0, %v226
  %v228 = vrot.slane %v73, %v227
  %v230 = vmul.f32 %v221, %v228
  %v231 = vmul.f32 %v222, %v228
  %v232 = vmul.f32 %v223, %v228
  %v234 = vlaneseq
  %v235 = vshrl.u32 %v234, 7
  %v236 = vsub.s32 0, %v235
  %v237 = vrot.slane %v74, %v236
  %v239 = vadd.f32 %v230, %v237
  %v240 = vadd.f32 %v231, %v237
  %v241 = vadd.f32 %v232, %v237
  %v242 = vmul.f32 %v158, %v158
  %v243 = vmul.f32 %v159, %v159
  %v244 = vmul.f32 %v160, %v160
  %v245 = vmul.f32 %v169, %v169
  %v246 = vmul.f32 %v170, %v170
  %v247 = vmul.f32 %v171, %v171
  %v248 = vadd.f32 %v242, %v245
  %v249 = vadd.f32 %v243, %v246
  %v250 = vadd.f32 %v244, %v247
  %v251 = vmul.f32 %v180, %v180
  %v252 = vmul.f32 %v181, %v181
  %v253 = vmul.f32 %v182, %v182
  %v254 = vadd.f32 %v248, %v251
  %v255 = vadd.f32 %v249, %v252
  %v256 = vadd.f32 %v250, %v253
  %v257 = vmax.f32 %v254, 1e-08
  %v258 = vmax.f32 %v255, 1e-08
  %v259 = vmax.f32 %v256, 1e-08
  %vm260 = vcmask 130048
  %v261 = vsel %vm260, %v257, 0.0
  %262 = vadd.xlane.f32.xlu0 %v261
  %v263 = vpop.xlane.xlu0 %262
  %v264 = vsel %vm260, %v258, 0.0
  %265 = vadd.xlane.f32.xlu0 %v264
  %v266 = vpop.xlane.xlu0 %265
  %v267 = vsel %vm260, %v259, 0.0
  %268 = vadd.xlane.f32.xlu0 %v267
  %v269 = vpop.xlane.xlu0 %268
  %v270 = vrcp.pop 16.0
  %v271 = vmul.f32 %v263, %v270
  %v272 = vmul.f32 %v266, %v270
  %v273 = vmul.f32 %v269, %v270
  %v274 = vrsqrt.pop %v271
  %v275 = vrsqrt.pop %v272
  %v276 = vrsqrt.pop %v273
  %v277 = vmul.f32 %v158, %v274
  %v278 = vmul.f32 %v159, %v275
  %v279 = vmul.f32 %v160, %v276
  %v280 = vmul.f32 %v169, %v274
  %v281 = vmul.f32 %v170, %v275
  %v282 = vmul.f32 %v171, %v276
  %v283 = vmul.f32 %v180, %v274
  %v284 = vmul.f32 %v181, %v275
  %v285 = vmul.f32 %v182, %v276
  %v287 = vsel %vm260, %v277, 0
  %v290 = vsel %vm260, %v278, 0
  %v293 = vsel %vm260, %v279, 0
  %v296 = vsel %vm260, %v280, 0
  %v299 = vsel %vm260, %v281, 0
  %v302 = vsel %vm260, %v282, 0
  %v305 = vsel %vm260, %v283, 0
  %v308 = vsel %vm260, %v284, 0
  %v311 = vsel %vm260, %v285, 0
  %313 = vmatprep.subr.mxu0 0.0
  %314 = vmatpush1.msra.mxu0 %v75
  %315 = vmatprep.subr.mxu0 0.0
  %316 = vmatpush1.msra.mxu0 %v76
  %317 = vmatprep.subr.mxu0 0.0
  %318 = vmatpush1.msra.mxu0 0.0
  %319 = vmatprep.subr.mxu0 0.0
  %320 = vmatpush1.msra.mxu0 0.0
  %321 = vmatprep.subr.mxu0 0.0
  %322 = vmatpush1.msra.mxu0 0.0
  %323 = vmatprep.subr.mxu0 0.0
  %324 = vmatpush1.msra.mxu0 0.0
  %325 = vmatprep.subr.mxu0 0.0
  %326 = vmatpush1.msra.mxu0 0.0
  %327 = vmatprep.subr.mxu0 0.0
  %328 = vmatpush1.msra.mxu0 0.0
  %329 = vmatprep.subr.mxu0 0.0
  %330 = vmatpush1.msra.mxu0 0.0
  %331 = vmatprep.subr.mxu0 0.0
  %332 = vmatpush1.msra.mxu0 0.0
  %333 = vmatprep.subr.mxu0 0.0
  %334 = vmatpush1.msra.mxu0 0.0
  %335 = vmatprep.subr.mxu0 0.0
  %336 = vmatpush1.msra.mxu0 0.0
  %337 = vmatprep.subr.mxu0 0.0
  %338 = vmatpush1.msra.mxu0 0.0
  %339 = vmatprep.subr.mxu0 0.0
  %340 = vmatpush1.msra.mxu0 0.0
  %341 = vmatprep.subr.mxu0 0.0
  %342 = vmatpush1.msra.mxu0 0.0
  %343 = vmatprep.subr.mxu0 0.0
  %344 = vmatpush1.msra.mxu0 0.0
  %345 = vmatprep.subr.mxu0 0.0
  %346 = vmatpush1.msra.mxu0 0.0
  %347 = vmatprep.subr.mxu0 0.0
  %348 = vmatpush1.msra.mxu0 0.0
  %349 = vmatprep.subr.mxu0 0.0
  %350 = vmatpush1.msra.mxu0 0.0
  %351 = vmatprep.subr.mxu0 0.0
  %352 = vmatpush1.msra.mxu0 0.0
  %353 = vmatprep.subr.mxu0 0.0
  %354 = vmatpush1.msra.mxu0 0.0
  %355 = vmatprep.subr.mxu0 0.0
  %356 = vmatpush1.msra.mxu0 0.0
  %357 = vmatprep.subr.mxu0 0.0
  %358 = vmatpush1.msra.mxu0 0.0
  %359 = vmatprep.subr.mxu0 0.0
  %360 = vmatpush1.msra.mxu0 0.0
  %361 = vmatprep.subr.mxu0 0.0
  %362 = vmatpush1.msra.mxu0 0.0
  %363 = vmatprep.subr.mxu0 0.0
  %364 = vmatpush1.msra.mxu0 0.0
  %365 = vmatprep.subr.mxu0 0.0
  %366 = vmatpush1.msra.mxu0 0.0
  %367 = vmatprep.subr.mxu0 0.0
  %368 = vmatpush1.msra.mxu0 0.0
  %369 = vmatprep.subr.mxu0 0.0
  %370 = vmatpush1.msra.mxu0 0.0
  %371 = vmatprep.subr.mxu0 0.0
  %372 = vmatpush1.msra.mxu0 0.0
  %373 = vmatprep.subr.mxu0 0.0
  %374 = vmatpush1.msra.mxu0 0.0
  %375 = vmatprep.subr.mxu0 0.0
  %376 = vmatpush1.msra.mxu0 0.0
  %377 = vmatprep.mubr.f32.mxu0 0.0
  %378 = vmatmul.mubr.f32.gmra.mrb[0].mxu0 %v287
  %v379 = vpop.f32.mrb[0].mxu0
  %v380 = vadd.f32 0.0, %v379
  %v381 = vpop.f32.mrb[0].mxu0
  %382 = vmatprep.mubr.f32.mxu0 0.0
  %383 = vmatmul.mubr.f32.gmra.mrb[0].mxu0 %v290
  %v384 = vpop.f32.mrb[0].mxu0
  %v385 = vadd.f32 0.0, %v384
  %v386 = vpop.f32.mrb[0].mxu0
  %387 = vmatprep.mubr.f32.mxu0 0.0
  %388 = vmatmul.mubr.f32.gmra.mrb[0].mxu0 %v293
  %v389 = vpop.f32.mrb[0].mxu0
  %v390 = vadd.f32 0.0, %v389
  %v391 = vpop.f32.mrb[0].mxu0
  %392 = vmatprep.mubr.f32.mxu0 0.0
  %393 = vmatmul.mubr.f32.gmra.mrb[0].mxu0 %v296
  %v394 = vpop.f32.mrb[0].mxu0
  %v395 = vadd.f32 0.0, %v394
  %v396 = vpop.f32.mrb[0].mxu0
  %397 = vmatprep.mubr.f32.mxu0 0.0
  %398 = vmatmul.mubr.f32.gmra.mrb[0].mxu0 %v299
  %v399 = vpop.f32.mrb[0].mxu0
  %v400 = vadd.f32 0.0, %v399
  %v401 = vpop.f32.mrb[0].mxu0
  %402 = vmatprep.mubr.f32.mxu0 0.0
  %403 = vmatmul.mubr.f32.gmra.mrb[0].mxu0 %v302
  %v404 = vpop.f32.mrb[0].mxu0
  %v405 = vadd.f32 0.0, %v404
  %v406 = vpop.f32.mrb[0].mxu0
  %407 = vmatprep.mubr.f32.mxu0 0.0
  %408 = vmatmul.mubr.f32.gmra.mrb[0].mxu0 %v305
  %v409 = vpop.f32.mrb[0].mxu0
  %v410 = vadd.f32 0.0, %v409
  %v411 = vpop.f32.mrb[0].mxu0
  %412 = vmatprep.mubr.f32.mxu0 0.0
  %413 = vmatmul.mubr.f32.gmra.mrb[0].mxu0 %v308
  %v414 = vpop.f32.mrb[0].mxu0
  %v415 = vadd.f32 0.0, %v414
  %v416 = vpop.f32.mrb[0].mxu0
  %417 = vmatprep.mubr.f32.mxu0 0.0
  %418 = vmatmul.mubr.f32.gmra.mrb[0].mxu0 %v311
  %v419 = vpop.f32.mrb[0].mxu0
  %v420 = vadd.f32 0.0, %v419
  %v421 = vpop.f32.mrb[0].mxu0
  %422 = vdwg.mxu0
  %v423 = vmul.f32 %v380, %v380
  %v424 = vmul.f32 %v385, %v385
  %v425 = vmul.f32 %v390, %v390
  %v426 = vmul.f32 %v395, %v395
  %v427 = vmul.f32 %v400, %v400
  %v428 = vmul.f32 %v405, %v405
  %v429 = vadd.f32 %v423, %v426
  %v430 = vadd.f32 %v424, %v427
  %v431 = vadd.f32 %v425, %v428
  %v432 = vmul.f32 %v410, %v410
  %v433 = vmul.f32 %v415, %v415
  %v434 = vmul.f32 %v420, %v420
  %v435 = vadd.f32 %v429, %v432
  %v436 = vadd.f32 %v430, %v433
  %v437 = vadd.f32 %v431, %v434
  %v438 = vmax.f32 %v435, 1e-08
  %v439 = vmax.f32 %v436, 1e-08
  %v440 = vmax.f32 %v437, 1e-08
  %v441 = vrsqrt.pop %v438
  %v442 = vmul.f32 %v438, %v441
  %vm443 = vcmp.eq.f32.partialorder %v438, inf
  %v444 = vsel %vm443, %v438, %v442
  %vm445 = vcmp.eq.f32.partialorder %v438, 0.0
  %v446 = vand.u32 %v438, 2147483648
  %v447 = vsel %vm445, %v446, %v444
  %v448 = vrsqrt.pop %v439
  %v449 = vmul.f32 %v439, %v448
  %vm450 = vcmp.eq.f32.partialorder %v439, inf
  %v451 = vsel %vm450, %v439, %v449
  %vm452 = vcmp.eq.f32.partialorder %v439, 0.0
  %v453 = vand.u32 %v439, 2147483648
  %v454 = vsel %vm452, %v453, %v451
  %v455 = vrsqrt.pop %v440
  %v456 = vmul.f32 %v440, %v455
  %vm457 = vcmp.eq.f32.partialorder %v440, inf
  %v458 = vsel %vm457, %v440, %v456
  %vm459 = vcmp.eq.f32.partialorder %v440, 0.0
  %v460 = vand.u32 %v440, 2147483648
  %v461 = vsel %vm459, %v460, %v458
  %v463 = vsel %vm183, %v447, 0
  %v466 = vsel %vm183, %v454, 0
  %v469 = vsel %vm183, %v461, 0
  %471 = vmatprep.subr.mxu0 0.0
  %472 = vmatpush1.msra.mxu0 %v81
  %473 = vmatprep.subr.mxu0 0.0
  %474 = vmatpush1.msra.mxu0 %v82
  %475 = vmatprep.subr.mxu0 0.0
  %476 = vmatpush1.msra.mxu0 %v83
  %477 = vmatprep.subr.mxu0 0.0
  %478 = vmatpush1.msra.mxu0 %v84
  %479 = vmatprep.subr.mxu0 0.0
  %480 = vmatpush1.msra.mxu0 0.0
  %481 = vmatprep.subr.mxu0 0.0
  %482 = vmatpush1.msra.mxu0 0.0
  %483 = vmatprep.subr.mxu0 0.0
  %484 = vmatpush1.msra.mxu0 0.0
  %485 = vmatprep.subr.mxu0 0.0
  %486 = vmatpush1.msra.mxu0 0.0
  %487 = vmatprep.subr.mxu0 0.0
  %488 = vmatpush1.msra.mxu0 0.0
  %489 = vmatprep.subr.mxu0 0.0
  %490 = vmatpush1.msra.mxu0 0.0
  %491 = vmatprep.subr.mxu0 0.0
  %492 = vmatpush1.msra.mxu0 0.0
  %493 = vmatprep.subr.mxu0 0.0
  %494 = vmatpush1.msra.mxu0 0.0
  %495 = vmatprep.subr.mxu0 0.0
  %496 = vmatpush1.msra.mxu0 0.0
  %497 = vmatprep.subr.mxu0 0.0
  %498 = vmatpush1.msra.mxu0 0.0
  %499 = vmatprep.subr.mxu0 0.0
  %500 = vmatpush1.msra.mxu0 0.0
  %501 = vmatprep.subr.mxu0 0.0
  %502 = vmatpush1.msra.mxu0 0.0
  %503 = vmatprep.subr.mxu0 0.0
  %504 = vmatpush1.msra.mxu0 0.0
  %505 = vmatprep.subr.mxu0 0.0
  %506 = vmatpush1.msra.mxu0 0.0
  %507 = vmatprep.subr.mxu0 0.0
  %508 = vmatpush1.msra.mxu0 0.0
  %509 = vmatprep.subr.mxu0 0.0
  %510 = vmatpush1.msra.mxu0 0.0
  %511 = vmatprep.subr.mxu0 0.0
  %512 = vmatpush1.msra.mxu0 0.0
  %513 = vmatprep.subr.mxu0 0.0
  %514 = vmatpush1.msra.mxu0 0.0
  %515 = vmatprep.subr.mxu0 0.0
  %516 = vmatpush1.msra.mxu0 0.0
  %517 = vmatprep.subr.mxu0 0.0
  %518 = vmatpush1.msra.mxu0 0.0
  %519 = vmatprep.subr.mxu0 0.0
  %520 = vmatpush1.msra.mxu0 0.0
  %521 = vmatprep.subr.mxu0 0.0
  %522 = vmatpush1.msra.mxu0 0.0
  %523 = vmatprep.subr.mxu0 0.0
  %524 = vmatpush1.msra.mxu0 0.0
  %525 = vmatprep.subr.mxu0 0.0
  %526 = vmatpush1.msra.mxu0 0.0
  %527 = vmatprep.subr.mxu0 0.0
  %528 = vmatpush1.msra.mxu0 0.0
  %529 = vmatprep.subr.mxu0 0.0
  %530 = vmatpush1.msra.mxu0 0.0
  %531 = vmatprep.subr.mxu0 0.0
  %532 = vmatpush1.msra.mxu0 0.0
  %533 = vmatprep.subr.mxu0 0.0
  %534 = vmatpush1.msra.mxu0 0.0
  %535 = vmatprep.mubr.f32.mxu0 0.0
  %536 = vmatmul.mubr.f32.gmra.mrb[0].mxu0 %v463
  %v537 = vpop.f32.mrb[0].mxu0
  %v538 = vadd.f32 0.0, %v537
  %v539 = vpop.f32.mrb[0].mxu0
  %540 = vmatprep.mubr.f32.mxu0 0.0
  %541 = vmatmul.mubr.f32.gmra.mrb[0].mxu0 %v466
  %v542 = vpop.f32.mrb[0].mxu0
  %v543 = vadd.f32 0.0, %v542
  %v544 = vpop.f32.mrb[0].mxu0
  %545 = vmatprep.mubr.f32.mxu0 0.0
  %546 = vmatmul.mubr.f32.gmra.mrb[0].mxu0 %v469
  %v547 = vpop.f32.mrb[0].mxu0
  %v548 = vadd.f32 0.0, %v547
  %v549 = vpop.f32.mrb[0].mxu0
  %550 = vdwg.mxu0
  %v552 = vsel %vm183, %v239, 0
  %v555 = vsel %vm183, %v240, 0
  %v558 = vsel %vm183, %v241, 0
  %560 = vmatprep.subr.mxu0 0.0
  %561 = vmatpush1.msra.mxu0 %v77
  %562 = vmatprep.subr.mxu0 0.0
  %563 = vmatpush1.msra.mxu0 %v78
  %564 = vmatprep.subr.mxu0 0.0
  %565 = vmatpush1.msra.mxu0 %v79
  %566 = vmatprep.subr.mxu0 0.0
  %567 = vmatpush1.msra.mxu0 %v80
  %568 = vmatprep.subr.mxu0 0.0
  %569 = vmatpush1.msra.mxu0 0.0
  %570 = vmatprep.subr.mxu0 0.0
  %571 = vmatpush1.msra.mxu0 0.0
  %572 = vmatprep.subr.mxu0 0.0
  %573 = vmatpush1.msra.mxu0 0.0
  %574 = vmatprep.subr.mxu0 0.0
  %575 = vmatpush1.msra.mxu0 0.0
  %576 = vmatprep.subr.mxu0 0.0
  %577 = vmatpush1.msra.mxu0 0.0
  %578 = vmatprep.subr.mxu0 0.0
  %579 = vmatpush1.msra.mxu0 0.0
  %580 = vmatprep.subr.mxu0 0.0
  %581 = vmatpush1.msra.mxu0 0.0
  %582 = vmatprep.subr.mxu0 0.0
  %583 = vmatpush1.msra.mxu0 0.0
  %584 = vmatprep.subr.mxu0 0.0
  %585 = vmatpush1.msra.mxu0 0.0
  %586 = vmatprep.subr.mxu0 0.0
  %587 = vmatpush1.msra.mxu0 0.0
  %588 = vmatprep.subr.mxu0 0.0
  %589 = vmatpush1.msra.mxu0 0.0
  %590 = vmatprep.subr.mxu0 0.0
  %591 = vmatpush1.msra.mxu0 0.0
  %592 = vmatprep.subr.mxu0 0.0
  %593 = vmatpush1.msra.mxu0 0.0
  %594 = vmatprep.subr.mxu0 0.0
  %595 = vmatpush1.msra.mxu0 0.0
  %596 = vmatprep.subr.mxu0 0.0
  %597 = vmatpush1.msra.mxu0 0.0
  %598 = vmatprep.subr.mxu0 0.0
  %599 = vmatpush1.msra.mxu0 0.0
  %600 = vmatprep.subr.mxu0 0.0
  %601 = vmatpush1.msra.mxu0 0.0
  %602 = vmatprep.subr.mxu0 0.0
  %603 = vmatpush1.msra.mxu0 0.0
  %604 = vmatprep.subr.mxu0 0.0
  %605 = vmatpush1.msra.mxu0 0.0
  %606 = vmatprep.subr.mxu0 0.0
  %607 = vmatpush1.msra.mxu0 0.0
  %608 = vmatprep.subr.mxu0 0.0
  %609 = vmatpush1.msra.mxu0 0.0
  %610 = vmatprep.subr.mxu0 0.0
  %611 = vmatpush1.msra.mxu0 0.0
  %612 = vmatprep.subr.mxu0 0.0
  %613 = vmatpush1.msra.mxu0 0.0
  %614 = vmatprep.subr.mxu0 0.0
  %615 = vmatpush1.msra.mxu0 0.0
  %616 = vmatprep.subr.mxu0 0.0
  %617 = vmatpush1.msra.mxu0 0.0
  %618 = vmatprep.subr.mxu0 0.0
  %619 = vmatpush1.msra.mxu0 0.0
  %620 = vmatprep.subr.mxu0 0.0
  %621 = vmatpush1.msra.mxu0 0.0
  %622 = vmatprep.subr.mxu0 0.0
  %623 = vmatpush1.msra.mxu0 0.0
  %624 = vmatprep.mubr.f32.mxu0 0.0
  %625 = vmatmul.mubr.f32.gmra.mrb[0].mxu0 %v552
  %v626 = vpop.f32.mrb[0].mxu0
  %v627 = vadd.f32 %v538, %v626
  %v628 = vpop.f32.mrb[0].mxu0
  %629 = vmatprep.mubr.f32.mxu0 0.0
  %630 = vmatmul.mubr.f32.gmra.mrb[0].mxu0 %v555
  %v631 = vpop.f32.mrb[0].mxu0
  %v632 = vadd.f32 %v543, %v631
  %v633 = vpop.f32.mrb[0].mxu0
  %634 = vmatprep.mubr.f32.mxu0 0.0
  %635 = vmatmul.mubr.f32.gmra.mrb[0].mxu0 %v558
  %v636 = vpop.f32.mrb[0].mxu0
  %v637 = vadd.f32 %v548, %v636
  %v638 = vpop.f32.mrb[0].mxu0
  %639 = vdwg.mxu0
  %v641 = vlaneseq
  %v642 = vshrl.u32 %v641, 7
  %v643 = vsub.s32 0, %v642
  %v644 = vrot.slane %v85, %v643
  %v646 = vadd.f32 %v627, %v644
  %v647 = vadd.f32 %v632, %v644
  %v648 = vadd.f32 %v637, %v644
  %v649 = vxor.u32 %v646, 2147483648
  %v650 = vxor.u32 %v647, 2147483648
  %v651 = vxor.u32 %v648, 2147483648
  %v652 = vmul.f32 %v649, 1.442695
  %v653 = vpow.pop %v652
  %v654 = vmul.f32 %v650, 1.442695
  %v655 = vpow.pop %v654
  %v656 = vmul.f32 %v651, 1.442695
  %v657 = vpow.pop %v656
  %v658 = vadd.f32 %v653, 1.0
  %v659 = vadd.f32 %v655, 1.0
  %v660 = vadd.f32 %v657, 1.0
  %v661 = vrcp.pop %v658
  %v662 = vmul.f32 1.0, %v661
  %v663 = vrcp.pop %v659
  %v664 = vmul.f32 1.0, %v663
  %v665 = vrcp.pop %v660
  %v666 = vmul.f32 1.0, %v665
  %v667 = vmul.f32 %v646, %v662
  %v668 = vmul.f32 %v647, %v664
  %v669 = vmul.f32 %v648, %v666
  %v671 = vlaneseq
  %v672 = vshrl.u32 %v671, 7
  %v673 = vsub.s32 0, %v672
  %v674 = vrot.slane %v106, %v673
  %676 = vmatprep.subr.mxu0 0.0
  %677 = vmatpush1.msra.mxu0 %v90
  %678 = vmatprep.subr.mxu0 0.0
  %679 = vmatpush1.msra.mxu0 %v91
  %680 = vmatprep.subr.mxu0 0.0
  %681 = vmatpush1.msra.mxu0 %v92
  %682 = vmatprep.subr.mxu0 0.0
  %683 = vmatpush1.msra.mxu0 %v93
  %684 = vmatprep.subr.mxu0 0.0
  %685 = vmatpush1.msra.mxu0 %v94
  %686 = vmatprep.subr.mxu0 0.0
  %687 = vmatpush1.msra.mxu0 %v95
  %688 = vmatprep.subr.mxu0 0.0
  %689 = vmatpush1.msra.mxu0 %v96
  %690 = vmatprep.subr.mxu0 0.0
  %691 = vmatpush1.msra.mxu0 %v97
  %692 = vmatprep.subr.mxu0 0.0
  %693 = vmatpush1.msra.mxu0 %v98
  %694 = vmatprep.subr.mxu0 0.0
  %695 = vmatpush1.msra.mxu0 %v99
  %696 = vmatprep.subr.mxu0 0.0
  %697 = vmatpush1.msra.mxu0 %v100
  %698 = vmatprep.subr.mxu0 0.0
  %699 = vmatpush1.msra.mxu0 %v101
  %700 = vmatprep.subr.mxu0 0.0
  %701 = vmatpush1.msra.mxu0 %v102
  %702 = vmatprep.subr.mxu0 0.0
  %703 = vmatpush1.msra.mxu0 %v103
  %704 = vmatprep.subr.mxu0 0.0
  %705 = vmatpush1.msra.mxu0 %v104
  %706 = vmatprep.subr.mxu0 0.0
  %707 = vmatpush1.msra.mxu0 %v105
  %708 = vmatprep.subr.mxu0 0.0
  %709 = vmatpush1.msra.mxu0 0.0
  %710 = vmatprep.subr.mxu0 0.0
  %711 = vmatpush1.msra.mxu0 0.0
  %712 = vmatprep.subr.mxu0 0.0
  %713 = vmatpush1.msra.mxu0 0.0
  %714 = vmatprep.subr.mxu0 0.0
  %715 = vmatpush1.msra.mxu0 0.0
  %716 = vmatprep.subr.mxu0 0.0
  %717 = vmatpush1.msra.mxu0 0.0
  %718 = vmatprep.subr.mxu0 0.0
  %719 = vmatpush1.msra.mxu0 0.0
  %720 = vmatprep.subr.mxu0 0.0
  %721 = vmatpush1.msra.mxu0 0.0
  %722 = vmatprep.subr.mxu0 0.0
  %723 = vmatpush1.msra.mxu0 0.0
  %724 = vmatprep.subr.mxu0 0.0
  %725 = vmatpush1.msra.mxu0 0.0
  %726 = vmatprep.subr.mxu0 0.0
  %727 = vmatpush1.msra.mxu0 0.0
  %728 = vmatprep.subr.mxu0 0.0
  %729 = vmatpush1.msra.mxu0 0.0
  %730 = vmatprep.subr.mxu0 0.0
  %731 = vmatpush1.msra.mxu0 0.0
  %732 = vmatprep.subr.mxu0 0.0
  %733 = vmatpush1.msra.mxu0 0.0
  %734 = vmatprep.subr.mxu0 0.0
  %735 = vmatpush1.msra.mxu0 0.0
  %736 = vmatprep.subr.mxu0 0.0
  %737 = vmatpush1.msra.mxu0 0.0
  %738 = vmatprep.subr.mxu0 0.0
  %739 = vmatpush1.msra.mxu0 0.0
  %740 = vmatprep.mubr.f32.mxu0 0.0
  %741 = vmatmul.mubr.f32.gmra.mrb[0].mxu0 %v667
  %v742 = vpop.f32.mrb[0].mxu0
  %v743 = vadd.f32 %v674, %v742
  %v744 = vpop.f32.mrb[0].mxu0
  %745 = vmatprep.mubr.f32.mxu0 0.0
  %746 = vmatmul.mubr.f32.gmra.mrb[0].mxu0 %v668
  %v747 = vpop.f32.mrb[0].mxu0
  %v748 = vadd.f32 %v674, %v747
  %v749 = vpop.f32.mrb[0].mxu0
  %750 = vmatprep.mubr.f32.mxu0 0.0
  %751 = vmatmul.mubr.f32.gmra.mrb[0].mxu0 %v669
  %v752 = vpop.f32.mrb[0].mxu0
  %v753 = vadd.f32 %v674, %v752
  %v754 = vpop.f32.mrb[0].mxu0
  %755 = vdwg.mxu0
  %v756 = vxor.u32 %v743, 2147483648
  %v757 = vxor.u32 %v748, 2147483648
  %v758 = vxor.u32 %v753, 2147483648
  %v759 = vmul.f32 %v756, 1.442695
  %v760 = vpow.pop %v759
  %v761 = vmul.f32 %v757, 1.442695
  %v762 = vpow.pop %v761
  %v763 = vmul.f32 %v758, 1.442695
  %v764 = vpow.pop %v763
  %v765 = vadd.f32 %v760, 1.0
  %v766 = vadd.f32 %v762, 1.0
  %v767 = vadd.f32 %v764, 1.0
  %v768 = vrcp.pop %v765
  %v769 = vmul.f32 1.0, %v768
  %v770 = vrcp.pop %v766
  %v771 = vmul.f32 1.0, %v770
  %v772 = vrcp.pop %v767
  %v773 = vmul.f32 1.0, %v772
  %v775 = vsel %vm183, %v380, 0
  %v778 = vsel %vm183, %v385, 0
  %v781 = vsel %vm183, %v390, 0
  %v784 = vsel %vm183, %v395, 0
  %v787 = vsel %vm183, %v400, 0
  %v790 = vsel %vm183, %v405, 0
  %v793 = vsel %vm183, %v410, 0
  %v796 = vsel %vm183, %v415, 0
  %v799 = vsel %vm183, %v420, 0
  %801 = vmatprep.subr.mxu0 0.0
  %802 = vmatpush1.msra.mxu0 %v86
  %803 = vmatprep.subr.mxu0 0.0
  %804 = vmatpush1.msra.mxu0 %v87
  %805 = vmatprep.subr.mxu0 0.0
  %806 = vmatpush1.msra.mxu0 %v88
  %807 = vmatprep.subr.mxu0 0.0
  %808 = vmatpush1.msra.mxu0 %v89
  %809 = vmatprep.subr.mxu0 0.0
  %810 = vmatpush1.msra.mxu0 0.0
  %811 = vmatprep.subr.mxu0 0.0
  %812 = vmatpush1.msra.mxu0 0.0
  %813 = vmatprep.subr.mxu0 0.0
  %814 = vmatpush1.msra.mxu0 0.0
  %815 = vmatprep.subr.mxu0 0.0
  %816 = vmatpush1.msra.mxu0 0.0
  %817 = vmatprep.subr.mxu0 0.0
  %818 = vmatpush1.msra.mxu0 0.0
  %819 = vmatprep.subr.mxu0 0.0
  %820 = vmatpush1.msra.mxu0 0.0
  %821 = vmatprep.subr.mxu0 0.0
  %822 = vmatpush1.msra.mxu0 0.0
  %823 = vmatprep.subr.mxu0 0.0
  %824 = vmatpush1.msra.mxu0 0.0
  %825 = vmatprep.subr.mxu0 0.0
  %826 = vmatpush1.msra.mxu0 0.0
  %827 = vmatprep.subr.mxu0 0.0
  %828 = vmatpush1.msra.mxu0 0.0
  %829 = vmatprep.subr.mxu0 0.0
  %830 = vmatpush1.msra.mxu0 0.0
  %831 = vmatprep.subr.mxu0 0.0
  %832 = vmatpush1.msra.mxu0 0.0
  %833 = vmatprep.subr.mxu0 0.0
  %834 = vmatpush1.msra.mxu0 0.0
  %835 = vmatprep.subr.mxu0 0.0
  %836 = vmatpush1.msra.mxu0 0.0
  %837 = vmatprep.subr.mxu0 0.0
  %838 = vmatpush1.msra.mxu0 0.0
  %839 = vmatprep.subr.mxu0 0.0
  %840 = vmatpush1.msra.mxu0 0.0
  %841 = vmatprep.subr.mxu0 0.0
  %842 = vmatpush1.msra.mxu0 0.0
  %843 = vmatprep.subr.mxu0 0.0
  %844 = vmatpush1.msra.mxu0 0.0
  %845 = vmatprep.subr.mxu0 0.0
  %846 = vmatpush1.msra.mxu0 0.0
  %847 = vmatprep.subr.mxu0 0.0
  %848 = vmatpush1.msra.mxu0 0.0
  %849 = vmatprep.subr.mxu0 0.0
  %850 = vmatpush1.msra.mxu0 0.0
  %851 = vmatprep.subr.mxu0 0.0
  %852 = vmatpush1.msra.mxu0 0.0
  %853 = vmatprep.subr.mxu0 0.0
  %854 = vmatpush1.msra.mxu0 0.0
  %855 = vmatprep.subr.mxu0 0.0
  %856 = vmatpush1.msra.mxu0 0.0
  %857 = vmatprep.subr.mxu0 0.0
  %858 = vmatpush1.msra.mxu0 0.0
  %859 = vmatprep.subr.mxu0 0.0
  %860 = vmatpush1.msra.mxu0 0.0
  %861 = vmatprep.subr.mxu0 0.0
  %862 = vmatpush1.msra.mxu0 0.0
  %863 = vmatprep.subr.mxu0 0.0
  %864 = vmatpush1.msra.mxu0 0.0
  %865 = vmatprep.mubr.f32.mxu0 0.0
  %866 = vmatmul.mubr.f32.gmra.mrb[0].mxu0 %v775
  %v867 = vpop.f32.mrb[0].mxu0
  %v868 = vadd.f32 0.0, %v867
  %v869 = vpop.f32.mrb[0].mxu0
  %870 = vmatprep.mubr.f32.mxu0 0.0
  %871 = vmatmul.mubr.f32.gmra.mrb[0].mxu0 %v778
  %v872 = vpop.f32.mrb[0].mxu0
  %v873 = vadd.f32 0.0, %v872
  %v874 = vpop.f32.mrb[0].mxu0
  %875 = vmatprep.mubr.f32.mxu0 0.0
  %876 = vmatmul.mubr.f32.gmra.mrb[0].mxu0 %v781
  %v877 = vpop.f32.mrb[0].mxu0
  %v878 = vadd.f32 0.0, %v877
  %v879 = vpop.f32.mrb[0].mxu0
  %880 = vmatprep.mubr.f32.mxu0 0.0
  %881 = vmatmul.mubr.f32.gmra.mrb[0].mxu0 %v784
  %v882 = vpop.f32.mrb[0].mxu0
  %v883 = vadd.f32 0.0, %v882
  %v884 = vpop.f32.mrb[0].mxu0
  %885 = vmatprep.mubr.f32.mxu0 0.0
  %886 = vmatmul.mubr.f32.gmra.mrb[0].mxu0 %v787
  %v887 = vpop.f32.mrb[0].mxu0
  %v888 = vadd.f32 0.0, %v887
  %v889 = vpop.f32.mrb[0].mxu0
  %890 = vmatprep.mubr.f32.mxu0 0.0
  %891 = vmatmul.mubr.f32.gmra.mrb[0].mxu0 %v790
  %v892 = vpop.f32.mrb[0].mxu0
  %v893 = vadd.f32 0.0, %v892
  %v894 = vpop.f32.mrb[0].mxu0
  %895 = vmatprep.mubr.f32.mxu0 0.0
  %896 = vmatmul.mubr.f32.gmra.mrb[0].mxu0 %v793
  %v897 = vpop.f32.mrb[0].mxu0
  %v898 = vadd.f32 0.0, %v897
  %v899 = vpop.f32.mrb[0].mxu0
  %900 = vmatprep.mubr.f32.mxu0 0.0
  %901 = vmatmul.mubr.f32.gmra.mrb[0].mxu0 %v796
  %v902 = vpop.f32.mrb[0].mxu0
  %v903 = vadd.f32 0.0, %v902
  %v904 = vpop.f32.mrb[0].mxu0
  %905 = vmatprep.mubr.f32.mxu0 0.0
  %906 = vmatmul.mubr.f32.gmra.mrb[0].mxu0 %v799
  %v907 = vpop.f32.mrb[0].mxu0
  %v908 = vadd.f32 0.0, %v907
  %v909 = vpop.f32.mrb[0].mxu0
  %910 = vdwg.mxu0
  %v911 = vmul.f32 %v868, %v769
  %v912 = vmul.f32 %v873, %v771
  %v913 = vmul.f32 %v878, %v773
  %v914 = vmul.f32 %v883, %v769
  %v915 = vmul.f32 %v888, %v771
  %v916 = vmul.f32 %v893, %v773
  %v917 = vmul.f32 %v898, %v769
  %v918 = vmul.f32 %v903, %v771
  %v919 = vmul.f32 %v908, %v773
  %v921 = vsel %vm183, %v911, 0
  %v924 = vsel %vm183, %v912, 0
  %v927 = vsel %vm183, %v913, 0
  %v930 = vsel %vm183, %v914, 0
  %v933 = vsel %vm183, %v915, 0
  %v936 = vsel %vm183, %v916, 0
  %v939 = vsel %vm183, %v917, 0
  %v942 = vsel %vm183, %v918, 0
  %v945 = vsel %vm183, %v919, 0
  %947 = vmatprep.subr.mxu0 0.0
  %948 = vmatpush1.msra.mxu0 %v107
  %949 = vmatprep.subr.mxu0 0.0
  %950 = vmatpush1.msra.mxu0 %v108
  %951 = vmatprep.subr.mxu0 0.0
  %952 = vmatpush1.msra.mxu0 %v109
  %953 = vmatprep.subr.mxu0 0.0
  %954 = vmatpush1.msra.mxu0 %v110
  %955 = vmatprep.subr.mxu0 0.0
  %956 = vmatpush1.msra.mxu0 0.0
  %957 = vmatprep.subr.mxu0 0.0
  %958 = vmatpush1.msra.mxu0 0.0
  %959 = vmatprep.subr.mxu0 0.0
  %960 = vmatpush1.msra.mxu0 0.0
  %961 = vmatprep.subr.mxu0 0.0
  %962 = vmatpush1.msra.mxu0 0.0
  %963 = vmatprep.subr.mxu0 0.0
  %964 = vmatpush1.msra.mxu0 0.0
  %965 = vmatprep.subr.mxu0 0.0
  %966 = vmatpush1.msra.mxu0 0.0
  %967 = vmatprep.subr.mxu0 0.0
  %968 = vmatpush1.msra.mxu0 0.0
  %969 = vmatprep.subr.mxu0 0.0
  %970 = vmatpush1.msra.mxu0 0.0
  %971 = vmatprep.subr.mxu0 0.0
  %972 = vmatpush1.msra.mxu0 0.0
  %973 = vmatprep.subr.mxu0 0.0
  %974 = vmatpush1.msra.mxu0 0.0
  %975 = vmatprep.subr.mxu0 0.0
  %976 = vmatpush1.msra.mxu0 0.0
  %977 = vmatprep.subr.mxu0 0.0
  %978 = vmatpush1.msra.mxu0 0.0
  %979 = vmatprep.subr.mxu0 0.0
  %980 = vmatpush1.msra.mxu0 0.0
  %981 = vmatprep.subr.mxu0 0.0
  %982 = vmatpush1.msra.mxu0 0.0
  %983 = vmatprep.subr.mxu0 0.0
  %984 = vmatpush1.msra.mxu0 0.0
  %985 = vmatprep.subr.mxu0 0.0
  %986 = vmatpush1.msra.mxu0 0.0
  %987 = vmatprep.subr.mxu0 0.0
  %988 = vmatpush1.msra.mxu0 0.0
  %989 = vmatprep.subr.mxu0 0.0
  %990 = vmatpush1.msra.mxu0 0.0
  %991 = vmatprep.subr.mxu0 0.0
  %992 = vmatpush1.msra.mxu0 0.0
  %993 = vmatprep.subr.mxu0 0.0
  %994 = vmatpush1.msra.mxu0 0.0
  %995 = vmatprep.subr.mxu0 0.0
  %996 = vmatpush1.msra.mxu0 0.0
  %997 = vmatprep.subr.mxu0 0.0
  %998 = vmatpush1.msra.mxu0 0.0
  %999 = vmatprep.subr.mxu0 0.0
  %1000 = vmatpush1.msra.mxu0 0.0
  %1001 = vmatprep.subr.mxu0 0.0
  %1002 = vmatpush1.msra.mxu0 0.0
  %1003 = vmatprep.subr.mxu0 0.0
  %1004 = vmatpush1.msra.mxu0 0.0
  %1005 = vmatprep.subr.mxu0 0.0
  %1006 = vmatpush1.msra.mxu0 0.0
  %1007 = vmatprep.subr.mxu0 0.0
  %1008 = vmatpush1.msra.mxu0 0.0
  %1009 = vmatprep.subr.mxu0 0.0
  %1010 = vmatpush1.msra.mxu0 0.0
  %1011 = vmatprep.mubr.f32.mxu0 0.0
  %1012 = vmatmul.mubr.f32.gmra.mrb[0].mxu0 %v921
  %v1013 = vpop.f32.mrb[0].mxu0
  %v1014 = vadd.f32 0.0, %v1013
  %v1015 = vpop.f32.mrb[0].mxu0
  %1016 = vmatprep.mubr.f32.mxu0 0.0
  %1017 = vmatmul.mubr.f32.gmra.mrb[0].mxu0 %v924
  %v1018 = vpop.f32.mrb[0].mxu0
  %v1019 = vadd.f32 0.0, %v1018
  %v1020 = vpop.f32.mrb[0].mxu0
  %1021 = vmatprep.mubr.f32.mxu0 0.0
  %1022 = vmatmul.mubr.f32.gmra.mrb[0].mxu0 %v927
  %v1023 = vpop.f32.mrb[0].mxu0
  %v1024 = vadd.f32 0.0, %v1023
  %v1025 = vpop.f32.mrb[0].mxu0
  %1026 = vmatprep.mubr.f32.mxu0 0.0
  %1027 = vmatmul.mubr.f32.gmra.mrb[0].mxu0 %v930
  %v1028 = vpop.f32.mrb[0].mxu0
  %v1029 = vadd.f32 0.0, %v1028
  %v1030 = vpop.f32.mrb[0].mxu0
  %1031 = vmatprep.mubr.f32.mxu0 0.0
  %1032 = vmatmul.mubr.f32.gmra.mrb[0].mxu0 %v933
  %v1033 = vpop.f32.mrb[0].mxu0
  %v1034 = vadd.f32 0.0, %v1033
  %v1035 = vpop.f32.mrb[0].mxu0
  %1036 = vmatprep.mubr.f32.mxu0 0.0
  %1037 = vmatmul.mubr.f32.gmra.mrb[0].mxu0 %v936
  %v1038 = vpop.f32.mrb[0].mxu0
  %v1039 = vadd.f32 0.0, %v1038
  %v1040 = vpop.f32.mrb[0].mxu0
  %1041 = vmatprep.mubr.f32.mxu0 0.0
  %1042 = vmatmul.mubr.f32.gmra.mrb[0].mxu0 %v939
  %v1043 = vpop.f32.mrb[0].mxu0
  %v1044 = vadd.f32 0.0, %v1043
  %v1045 = vpop.f32.mrb[0].mxu0
  %1046 = vmatprep.mubr.f32.mxu0 0.0
  %1047 = vmatmul.mubr.f32.gmra.mrb[0].mxu0 %v942
  %v1048 = vpop.f32.mrb[0].mxu0
  %v1049 = vadd.f32 0.0, %v1048
  %v1050 = vpop.f32.mrb[0].mxu0
  %1051 = vmatprep.mubr.f32.mxu0 0.0
  %1052 = vmatmul.mubr.f32.gmra.mrb[0].mxu0 %v945
  %v1053 = vpop.f32.mrb[0].mxu0
  %v1054 = vadd.f32 0.0, %v1053
  %v1055 = vpop.f32.mrb[0].mxu0
  %1056 = vdwg.mxu0
  %v1057 = vmul.f32 %v1014, %v1014
  %v1058 = vmul.f32 %v1019, %v1019
  %v1059 = vmul.f32 %v1024, %v1024
  %v1060 = vmul.f32 %v1029, %v1029
  %v1061 = vmul.f32 %v1034, %v1034
  %v1062 = vmul.f32 %v1039, %v1039
  %v1063 = vadd.f32 %v1057, %v1060
  %v1064 = vadd.f32 %v1058, %v1061
  %v1065 = vadd.f32 %v1059, %v1062
  %v1066 = vmul.f32 %v1044, %v1044
  %v1067 = vmul.f32 %v1049, %v1049
  %v1068 = vmul.f32 %v1054, %v1054
  %v1069 = vadd.f32 %v1063, %v1066
  %v1070 = vadd.f32 %v1064, %v1067
  %v1071 = vadd.f32 %v1065, %v1068
  %v1072 = vmax.f32 %v1069, 1e-08
  %v1073 = vmax.f32 %v1070, 1e-08
  %v1074 = vmax.f32 %v1071, 1e-08
  %v1075 = vrsqrt.pop %v1072
  %v1076 = vmul.f32 %v1072, %v1075
  %vm1077 = vcmp.eq.f32.partialorder %v1072, inf
  %v1078 = vsel %vm1077, %v1072, %v1076
  %vm1079 = vcmp.eq.f32.partialorder %v1072, 0.0
  %v1080 = vand.u32 %v1072, 2147483648
  %v1081 = vsel %vm1079, %v1080, %v1078
  %v1082 = vrsqrt.pop %v1073
  %v1083 = vmul.f32 %v1073, %v1082
  %vm1084 = vcmp.eq.f32.partialorder %v1073, inf
  %v1085 = vsel %vm1084, %v1073, %v1083
  %vm1086 = vcmp.eq.f32.partialorder %v1073, 0.0
  %v1087 = vand.u32 %v1073, 2147483648
  %v1088 = vsel %vm1086, %v1087, %v1085
  %v1089 = vrsqrt.pop %v1074
  %v1090 = vmul.f32 %v1074, %v1089
  %vm1091 = vcmp.eq.f32.partialorder %v1074, inf
  %v1092 = vsel %vm1091, %v1074, %v1090
  %vm1093 = vcmp.eq.f32.partialorder %v1074, 0.0
  %v1094 = vand.u32 %v1074, 2147483648
  %v1095 = vsel %vm1093, %v1094, %v1092
  %v1097 = vsel %vm183, %v1081, 0
  %v1100 = vsel %vm183, %v1088, 0
  %v1103 = vsel %vm183, %v1095, 0
  %1105 = vmatprep.subr.mxu0 0.0
  %1106 = vmatpush1.msra.mxu0 %v127
  %1107 = vmatprep.subr.mxu0 0.0
  %1108 = vmatpush1.msra.mxu0 %v128
  %1109 = vmatprep.subr.mxu0 0.0
  %1110 = vmatpush1.msra.mxu0 %v129
  %1111 = vmatprep.subr.mxu0 0.0
  %1112 = vmatpush1.msra.mxu0 %v130
  %1113 = vmatprep.subr.mxu0 0.0
  %1114 = vmatpush1.msra.mxu0 0.0
  %1115 = vmatprep.subr.mxu0 0.0
  %1116 = vmatpush1.msra.mxu0 0.0
  %1117 = vmatprep.subr.mxu0 0.0
  %1118 = vmatpush1.msra.mxu0 0.0
  %1119 = vmatprep.subr.mxu0 0.0
  %1120 = vmatpush1.msra.mxu0 0.0
  %1121 = vmatprep.subr.mxu0 0.0
  %1122 = vmatpush1.msra.mxu0 0.0
  %1123 = vmatprep.subr.mxu0 0.0
  %1124 = vmatpush1.msra.mxu0 0.0
  %1125 = vmatprep.subr.mxu0 0.0
  %1126 = vmatpush1.msra.mxu0 0.0
  %1127 = vmatprep.subr.mxu0 0.0
  %1128 = vmatpush1.msra.mxu0 0.0
  %1129 = vmatprep.subr.mxu0 0.0
  %1130 = vmatpush1.msra.mxu0 0.0
  %1131 = vmatprep.subr.mxu0 0.0
  %1132 = vmatpush1.msra.mxu0 0.0
  %1133 = vmatprep.subr.mxu0 0.0
  %1134 = vmatpush1.msra.mxu0 0.0
  %1135 = vmatprep.subr.mxu0 0.0
  %1136 = vmatpush1.msra.mxu0 0.0
  %1137 = vmatprep.subr.mxu0 0.0
  %1138 = vmatpush1.msra.mxu0 0.0
  %1139 = vmatprep.subr.mxu0 0.0
  %1140 = vmatpush1.msra.mxu0 0.0
  %1141 = vmatprep.subr.mxu0 0.0
  %1142 = vmatpush1.msra.mxu0 0.0
  %1143 = vmatprep.subr.mxu0 0.0
  %1144 = vmatpush1.msra.mxu0 0.0
  %1145 = vmatprep.subr.mxu0 0.0
  %1146 = vmatpush1.msra.mxu0 0.0
  %1147 = vmatprep.subr.mxu0 0.0
  %1148 = vmatpush1.msra.mxu0 0.0
  %1149 = vmatprep.subr.mxu0 0.0
  %1150 = vmatpush1.msra.mxu0 0.0
  %1151 = vmatprep.subr.mxu0 0.0
  %1152 = vmatpush1.msra.mxu0 0.0
  %1153 = vmatprep.subr.mxu0 0.0
  %1154 = vmatpush1.msra.mxu0 0.0
  %1155 = vmatprep.subr.mxu0 0.0
  %1156 = vmatpush1.msra.mxu0 0.0
  %1157 = vmatprep.subr.mxu0 0.0
  %1158 = vmatpush1.msra.mxu0 0.0
  %1159 = vmatprep.subr.mxu0 0.0
  %1160 = vmatpush1.msra.mxu0 0.0
  %1161 = vmatprep.subr.mxu0 0.0
  %1162 = vmatpush1.msra.mxu0 0.0
  %1163 = vmatprep.subr.mxu0 0.0
  %1164 = vmatpush1.msra.mxu0 0.0
  %1165 = vmatprep.subr.mxu0 0.0
  %1166 = vmatpush1.msra.mxu0 0.0
  %1167 = vmatprep.subr.mxu0 0.0
  %1168 = vmatpush1.msra.mxu0 0.0
  %1169 = vmatprep.mubr.f32.mxu0 0.0
  %1170 = vmatmul.mubr.f32.gmra.mrb[0].mxu0 %v1097
  %v1171 = vpop.f32.mrb[0].mxu0
  %v1172 = vadd.f32 0.0, %v1171
  %v1173 = vpop.f32.mrb[0].mxu0
  %1174 = vmatprep.mubr.f32.mxu0 0.0
  %1175 = vmatmul.mubr.f32.gmra.mrb[0].mxu0 %v1100
  %v1176 = vpop.f32.mrb[0].mxu0
  %v1177 = vadd.f32 0.0, %v1176
  %v1178 = vpop.f32.mrb[0].mxu0
  %1179 = vmatprep.mubr.f32.mxu0 0.0
  %1180 = vmatmul.mubr.f32.gmra.mrb[0].mxu0 %v1103
  %v1181 = vpop.f32.mrb[0].mxu0
  %v1182 = vadd.f32 0.0, %v1181
  %v1183 = vpop.f32.mrb[0].mxu0
  %1184 = vdwg.mxu0
  %1185 = vmatprep.subr.mxu0 0.0
  %1186 = vmatpush1.msra.mxu0 %v111
  %1187 = vmatprep.subr.mxu0 0.0
  %1188 = vmatpush1.msra.mxu0 %v112
  %1189 = vmatprep.subr.mxu0 0.0
  %1190 = vmatpush1.msra.mxu0 %v113
  %1191 = vmatprep.subr.mxu0 0.0
  %1192 = vmatpush1.msra.mxu0 %v114
  %1193 = vmatprep.subr.mxu0 0.0
  %1194 = vmatpush1.msra.mxu0 %v115
  %1195 = vmatprep.subr.mxu0 0.0
  %1196 = vmatpush1.msra.mxu0 %v116
  %1197 = vmatprep.subr.mxu0 0.0
  %1198 = vmatpush1.msra.mxu0 %v117
  %1199 = vmatprep.subr.mxu0 0.0
  %1200 = vmatpush1.msra.mxu0 %v118
  %1201 = vmatprep.subr.mxu0 0.0
  %1202 = vmatpush1.msra.mxu0 %v119
  %1203 = vmatprep.subr.mxu0 0.0
  %1204 = vmatpush1.msra.mxu0 %v120
  %1205 = vmatprep.subr.mxu0 0.0
  %1206 = vmatpush1.msra.mxu0 %v121
  %1207 = vmatprep.subr.mxu0 0.0
  %1208 = vmatpush1.msra.mxu0 %v122
  %1209 = vmatprep.subr.mxu0 0.0
  %1210 = vmatpush1.msra.mxu0 %v123
  %1211 = vmatprep.subr.mxu0 0.0
  %1212 = vmatpush1.msra.mxu0 %v124
  %1213 = vmatprep.subr.mxu0 0.0
  %1214 = vmatpush1.msra.mxu0 %v125
  %1215 = vmatprep.subr.mxu0 0.0
  %1216 = vmatpush1.msra.mxu0 %v126
  %1217 = vmatprep.subr.mxu0 0.0
  %1218 = vmatpush1.msra.mxu0 0.0
  %1219 = vmatprep.subr.mxu0 0.0
  %1220 = vmatpush1.msra.mxu0 0.0
  %1221 = vmatprep.subr.mxu0 0.0
  %1222 = vmatpush1.msra.mxu0 0.0
  %1223 = vmatprep.subr.mxu0 0.0
  %1224 = vmatpush1.msra.mxu0 0.0
  %1225 = vmatprep.subr.mxu0 0.0
  %1226 = vmatpush1.msra.mxu0 0.0
  %1227 = vmatprep.subr.mxu0 0.0
  %1228 = vmatpush1.msra.mxu0 0.0
  %1229 = vmatprep.subr.mxu0 0.0
  %1230 = vmatpush1.msra.mxu0 0.0
  %1231 = vmatprep.subr.mxu0 0.0
  %1232 = vmatpush1.msra.mxu0 0.0
  %1233 = vmatprep.subr.mxu0 0.0
  %1234 = vmatpush1.msra.mxu0 0.0
  %1235 = vmatprep.subr.mxu0 0.0
  %1236 = vmatpush1.msra.mxu0 0.0
  %1237 = vmatprep.subr.mxu0 0.0
  %1238 = vmatpush1.msra.mxu0 0.0
  %1239 = vmatprep.subr.mxu0 0.0
  %1240 = vmatpush1.msra.mxu0 0.0
  %1241 = vmatprep.subr.mxu0 0.0
  %1242 = vmatpush1.msra.mxu0 0.0
  %1243 = vmatprep.subr.mxu0 0.0
  %1244 = vmatpush1.msra.mxu0 0.0
  %1245 = vmatprep.subr.mxu0 0.0
  %1246 = vmatpush1.msra.mxu0 0.0
  %1247 = vmatprep.subr.mxu0 0.0
  %1248 = vmatpush1.msra.mxu0 0.0
  %1249 = vmatprep.mubr.f32.mxu0 0.0
  %1250 = vmatmul.mubr.f32.gmra.mrb[0].mxu0 %v667
  %v1251 = vpop.f32.mrb[0].mxu0
  %v1252 = vadd.f32 %v1172, %v1251
  %v1253 = vpop.f32.mrb[0].mxu0
  %1254 = vmatprep.mubr.f32.mxu0 0.0
  %1255 = vmatmul.mubr.f32.gmra.mrb[0].mxu0 %v668
  %v1256 = vpop.f32.mrb[0].mxu0
  %v1257 = vadd.f32 %v1177, %v1256
  %v1258 = vpop.f32.mrb[0].mxu0
  %1259 = vmatprep.mubr.f32.mxu0 0.0
  %1260 = vmatmul.mubr.f32.gmra.mrb[0].mxu0 %v669
  %v1261 = vpop.f32.mrb[0].mxu0
  %v1262 = vadd.f32 %v1182, %v1261
  %v1263 = vpop.f32.mrb[0].mxu0
  %1264 = vdwg.mxu0
  %v1266 = vlaneseq
  %v1267 = vshrl.u32 %v1266, 7
  %v1268 = vsub.s32 0, %v1267
  %v1269 = vrot.slane %v131, %v1268
  %v1271 = vadd.f32 %v1252, %v1269
  %v1272 = vadd.f32 %v1257, %v1269
  %v1273 = vadd.f32 %v1262, %v1269
  %v1275 = vlaneseq
  %v1276 = vshrl.u32 %v1275, 7
  %v1277 = vsub.s32 0, %v1276
  %v1278 = vrot.slane %v140, %v1277
  %v1281 = vsel %vm183, %v1271, 0
  %v1284 = vsel %vm183, %v1272, 0
  %v1287 = vsel %vm183, %v1273, 0
  %1289 = vmatprep.subr.mxu0 0.0
  %1290 = vmatpush1.msra.mxu0 %v136
  %1291 = vmatprep.subr.mxu0 0.0
  %1292 = vmatpush1.msra.mxu0 %v137
  %1293 = vmatprep.subr.mxu0 0.0
  %1294 = vmatpush1.msra.mxu0 %v138
  %1295 = vmatprep.subr.mxu0 0.0
  %1296 = vmatpush1.msra.mxu0 %v139
  %1297 = vmatprep.subr.mxu0 0.0
  %1298 = vmatpush1.msra.mxu0 0.0
  %1299 = vmatprep.subr.mxu0 0.0
  %1300 = vmatpush1.msra.mxu0 0.0
  %1301 = vmatprep.subr.mxu0 0.0
  %1302 = vmatpush1.msra.mxu0 0.0
  %1303 = vmatprep.subr.mxu0 0.0
  %1304 = vmatpush1.msra.mxu0 0.0
  %1305 = vmatprep.subr.mxu0 0.0
  %1306 = vmatpush1.msra.mxu0 0.0
  %1307 = vmatprep.subr.mxu0 0.0
  %1308 = vmatpush1.msra.mxu0 0.0
  %1309 = vmatprep.subr.mxu0 0.0
  %1310 = vmatpush1.msra.mxu0 0.0
  %1311 = vmatprep.subr.mxu0 0.0
  %1312 = vmatpush1.msra.mxu0 0.0
  %1313 = vmatprep.subr.mxu0 0.0
  %1314 = vmatpush1.msra.mxu0 0.0
  %1315 = vmatprep.subr.mxu0 0.0
  %1316 = vmatpush1.msra.mxu0 0.0
  %1317 = vmatprep.subr.mxu0 0.0
  %1318 = vmatpush1.msra.mxu0 0.0
  %1319 = vmatprep.subr.mxu0 0.0
  %1320 = vmatpush1.msra.mxu0 0.0
  %1321 = vmatprep.subr.mxu0 0.0
  %1322 = vmatpush1.msra.mxu0 0.0
  %1323 = vmatprep.subr.mxu0 0.0
  %1324 = vmatpush1.msra.mxu0 0.0
  %1325 = vmatprep.subr.mxu0 0.0
  %1326 = vmatpush1.msra.mxu0 0.0
  %1327 = vmatprep.subr.mxu0 0.0
  %1328 = vmatpush1.msra.mxu0 0.0
  %1329 = vmatprep.subr.mxu0 0.0
  %1330 = vmatpush1.msra.mxu0 0.0
  %1331 = vmatprep.subr.mxu0 0.0
  %1332 = vmatpush1.msra.mxu0 0.0
  %1333 = vmatprep.subr.mxu0 0.0
  %1334 = vmatpush1.msra.mxu0 0.0
  %1335 = vmatprep.subr.mxu0 0.0
  %1336 = vmatpush1.msra.mxu0 0.0
  %1337 = vmatprep.subr.mxu0 0.0
  %1338 = vmatpush1.msra.mxu0 0.0
  %1339 = vmatprep.subr.mxu0 0.0
  %1340 = vmatpush1.msra.mxu0 0.0
  %1341 = vmatprep.subr.mxu0 0.0
  %1342 = vmatpush1.msra.mxu0 0.0
  %1343 = vmatprep.subr.mxu0 0.0
  %1344 = vmatpush1.msra.mxu0 0.0
  %1345 = vmatprep.subr.mxu0 0.0
  %1346 = vmatpush1.msra.mxu0 0.0
  %1347 = vmatprep.subr.mxu0 0.0
  %1348 = vmatpush1.msra.mxu0 0.0
  %1349 = vmatprep.subr.mxu0 0.0
  %1350 = vmatpush1.msra.mxu0 0.0
  %1351 = vmatprep.subr.mxu0 0.0
  %1352 = vmatpush1.msra.mxu0 0.0
  %1353 = vmatprep.mubr.f32.mxu0 0.0
  %1354 = vmatmul.mubr.f32.gmra.mrb[0].mxu0 %v1281
  %v1355 = vpop.f32.mrb[0].mxu0
  %v1356 = vadd.f32 %v1278, %v1355
  %v1357 = vpop.f32.mrb[0].mxu0
  %1358 = vmatprep.mubr.f32.mxu0 0.0
  %1359 = vmatmul.mubr.f32.gmra.mrb[0].mxu0 %v1284
  %v1360 = vpop.f32.mrb[0].mxu0
  %v1361 = vadd.f32 %v1278, %v1360
  %v1362 = vpop.f32.mrb[0].mxu0
  %1363 = vmatprep.mubr.f32.mxu0 0.0
  %1364 = vmatmul.mubr.f32.gmra.mrb[0].mxu0 %v1287
  %v1365 = vpop.f32.mrb[0].mxu0
  %v1366 = vadd.f32 %v1278, %v1365
  %v1367 = vpop.f32.mrb[0].mxu0
  %1368 = vdwg.mxu0
  %v1369 = vxor.u32 %v1356, 2147483648
  %v1370 = vxor.u32 %v1361, 2147483648
  %v1371 = vxor.u32 %v1366, 2147483648
  %v1372 = vmul.f32 %v1369, 1.442695
  %v1373 = vpow.pop %v1372
  %v1374 = vmul.f32 %v1370, 1.442695
  %v1375 = vpow.pop %v1374
  %v1376 = vmul.f32 %v1371, 1.442695
  %v1377 = vpow.pop %v1376
  %v1378 = vadd.f32 %v1373, 1.0
  %v1379 = vadd.f32 %v1375, 1.0
  %v1380 = vadd.f32 %v1377, 1.0
  %v1381 = vrcp.pop %v1378
  %v1382 = vmul.f32 1.0, %v1381
  %v1383 = vrcp.pop %v1379
  %v1384 = vmul.f32 1.0, %v1383
  %v1385 = vrcp.pop %v1380
  %v1386 = vmul.f32 1.0, %v1385
  %v1388 = vsel %vm183, %v1014, 0
  %v1391 = vsel %vm183, %v1019, 0
  %v1394 = vsel %vm183, %v1024, 0
  %v1397 = vsel %vm183, %v1029, 0
  %v1400 = vsel %vm183, %v1034, 0
  %v1403 = vsel %vm183, %v1039, 0
  %v1406 = vsel %vm183, %v1044, 0
  %v1409 = vsel %vm183, %v1049, 0
  %v1412 = vsel %vm183, %v1054, 0
  %1414 = vmatprep.subr.mxu0 0.0
  %1415 = vmatpush1.msra.mxu0 %v132
  %1416 = vmatprep.subr.mxu0 0.0
  %1417 = vmatpush1.msra.mxu0 %v133
  %1418 = vmatprep.subr.mxu0 0.0
  %1419 = vmatpush1.msra.mxu0 %v134
  %1420 = vmatprep.subr.mxu0 0.0
  %1421 = vmatpush1.msra.mxu0 %v135
  %1422 = vmatprep.subr.mxu0 0.0
  %1423 = vmatpush1.msra.mxu0 0.0
  %1424 = vmatprep.subr.mxu0 0.0
  %1425 = vmatpush1.msra.mxu0 0.0
  %1426 = vmatprep.subr.mxu0 0.0
  %1427 = vmatpush1.msra.mxu0 0.0
  %1428 = vmatprep.subr.mxu0 0.0
  %1429 = vmatpush1.msra.mxu0 0.0
  %1430 = vmatprep.subr.mxu0 0.0
  %1431 = vmatpush1.msra.mxu0 0.0
  %1432 = vmatprep.subr.mxu0 0.0
  %1433 = vmatpush1.msra.mxu0 0.0
  %1434 = vmatprep.subr.mxu0 0.0
  %1435 = vmatpush1.msra.mxu0 0.0
  %1436 = vmatprep.subr.mxu0 0.0
  %1437 = vmatpush1.msra.mxu0 0.0
  %1438 = vmatprep.subr.mxu0 0.0
  %1439 = vmatpush1.msra.mxu0 0.0
  %1440 = vmatprep.subr.mxu0 0.0
  %1441 = vmatpush1.msra.mxu0 0.0
  %1442 = vmatprep.subr.mxu0 0.0
  %1443 = vmatpush1.msra.mxu0 0.0
  %1444 = vmatprep.subr.mxu0 0.0
  %1445 = vmatpush1.msra.mxu0 0.0
  %1446 = vmatprep.subr.mxu0 0.0
  %1447 = vmatpush1.msra.mxu0 0.0
  %1448 = vmatprep.subr.mxu0 0.0
  %1449 = vmatpush1.msra.mxu0 0.0
  %1450 = vmatprep.subr.mxu0 0.0
  %1451 = vmatpush1.msra.mxu0 0.0
  %1452 = vmatprep.subr.mxu0 0.0
  %1453 = vmatpush1.msra.mxu0 0.0
  %1454 = vmatprep.subr.mxu0 0.0
  %1455 = vmatpush1.msra.mxu0 0.0
  %1456 = vmatprep.subr.mxu0 0.0
  %1457 = vmatpush1.msra.mxu0 0.0
  %1458 = vmatprep.subr.mxu0 0.0
  %1459 = vmatpush1.msra.mxu0 0.0
  %1460 = vmatprep.subr.mxu0 0.0
  %1461 = vmatpush1.msra.mxu0 0.0
  %1462 = vmatprep.subr.mxu0 0.0
  %1463 = vmatpush1.msra.mxu0 0.0
  %1464 = vmatprep.subr.mxu0 0.0
  %1465 = vmatpush1.msra.mxu0 0.0
  %1466 = vmatprep.subr.mxu0 0.0
  %1467 = vmatpush1.msra.mxu0 0.0
  %1468 = vmatprep.subr.mxu0 0.0
  %1469 = vmatpush1.msra.mxu0 0.0
  %1470 = vmatprep.subr.mxu0 0.0
  %1471 = vmatpush1.msra.mxu0 0.0
  %1472 = vmatprep.subr.mxu0 0.0
  %1473 = vmatpush1.msra.mxu0 0.0
  %1474 = vmatprep.subr.mxu0 0.0
  %1475 = vmatpush1.msra.mxu0 0.0
  %1476 = vmatprep.subr.mxu0 0.0
  %1477 = vmatpush1.msra.mxu0 0.0
  %1478 = vmatprep.mubr.f32.mxu0 0.0
  %1479 = vmatmul.mubr.f32.gmra.mrb[0].mxu0 %v1388
  %v1480 = vpop.f32.mrb[0].mxu0
  %v1481 = vadd.f32 0.0, %v1480
  %v1482 = vpop.f32.mrb[0].mxu0
  %1483 = vmatprep.mubr.f32.mxu0 0.0
  %1484 = vmatmul.mubr.f32.gmra.mrb[0].mxu0 %v1391
  %v1485 = vpop.f32.mrb[0].mxu0
  %v1486 = vadd.f32 0.0, %v1485
  %v1487 = vpop.f32.mrb[0].mxu0
  %1488 = vmatprep.mubr.f32.mxu0 0.0
  %1489 = vmatmul.mubr.f32.gmra.mrb[0].mxu0 %v1394
  %v1490 = vpop.f32.mrb[0].mxu0
  %v1491 = vadd.f32 0.0, %v1490
  %v1492 = vpop.f32.mrb[0].mxu0
  %1493 = vmatprep.mubr.f32.mxu0 0.0
  %1494 = vmatmul.mubr.f32.gmra.mrb[0].mxu0 %v1397
  %v1495 = vpop.f32.mrb[0].mxu0
  %v1496 = vadd.f32 0.0, %v1495
  %v1497 = vpop.f32.mrb[0].mxu0
  %1498 = vmatprep.mubr.f32.mxu0 0.0
  %1499 = vmatmul.mubr.f32.gmra.mrb[0].mxu0 %v1400
  %v1500 = vpop.f32.mrb[0].mxu0
  %v1501 = vadd.f32 0.0, %v1500
  %v1502 = vpop.f32.mrb[0].mxu0
  %1503 = vmatprep.mubr.f32.mxu0 0.0
  %1504 = vmatmul.mubr.f32.gmra.mrb[0].mxu0 %v1403
  %v1505 = vpop.f32.mrb[0].mxu0
  %v1506 = vadd.f32 0.0, %v1505
  %v1507 = vpop.f32.mrb[0].mxu0
  %1508 = vmatprep.mubr.f32.mxu0 0.0
  %1509 = vmatmul.mubr.f32.gmra.mrb[0].mxu0 %v1406
  %v1510 = vpop.f32.mrb[0].mxu0
  %v1511 = vadd.f32 0.0, %v1510
  %v1512 = vpop.f32.mrb[0].mxu0
  %1513 = vmatprep.mubr.f32.mxu0 0.0
  %1514 = vmatmul.mubr.f32.gmra.mrb[0].mxu0 %v1409
  %v1515 = vpop.f32.mrb[0].mxu0
  %v1516 = vadd.f32 0.0, %v1515
  %v1517 = vpop.f32.mrb[0].mxu0
  %1518 = vmatprep.mubr.f32.mxu0 0.0
  %1519 = vmatmul.mubr.f32.gmra.mrb[0].mxu0 %v1412
  %v1520 = vpop.f32.mrb[0].mxu0
  %v1521 = vadd.f32 0.0, %v1520
  %v1522 = vpop.f32.mrb[0].mxu0
  %1523 = vdwg.mxu0
  %v1524 = vmul.f32 %v1481, %v1382
  %v1525 = vmul.f32 %v1486, %v1384
  %v1526 = vmul.f32 %v1491, %v1386
  %v1527 = vmul.f32 %v1496, %v1382
  %v1528 = vmul.f32 %v1501, %v1384
  %v1529 = vmul.f32 %v1506, %v1386
  %v1530 = vmul.f32 %v1511, %v1382
  %v1531 = vmul.f32 %v1516, %v1384
  %v1532 = vmul.f32 %v1521, %v1386
  %v1533 = vadd.f32 %v239, %v1271
  %v1534 = vadd.f32 %v240, %v1272
  %v1535 = vadd.f32 %v241, %v1273
  %v1536 = vadd.f32 %v277, %v1524
  %v1537 = vadd.f32 %v278, %v1525
  %v1538 = vadd.f32 %v279, %v1526
  %v1539 = vadd.f32 %v280, %v1527
  %v1540 = vadd.f32 %v281, %v1528
  %v1541 = vadd.f32 %v282, %v1529
  %v1542 = vadd.f32 %v283, %v1530
  %v1543 = vadd.f32 %v284, %v1531
  %v1544 = vadd.f32 %v285, %v1532
  %v1545 = vsel %vm183, %v1533, 0.0
  %1546 = vadd.xlane.f32.xlu0 %v1545
  %v1547 = vpop.xlane.xlu0 %1546
  %v1548 = vsel %vm183, %v1534, 0.0
  %1549 = vadd.xlane.f32.xlu0 %v1548
  %v1550 = vpop.xlane.xlu0 %1549
  %v1551 = vsel %vm183, %v1535, 0.0
  %1552 = vadd.xlane.f32.xlu0 %v1551
  %v1553 = vpop.xlane.xlu0 %1552
  %v1554 = vmul.f32 %v1547, %v193
  %v1555 = vmul.f32 %v1550, %v193
  %v1556 = vmul.f32 %v1553, %v193
  %v1557 = vsub.f32 %v1533, %v1554
  %v1558 = vsub.f32 %v1534, %v1555
  %v1559 = vsub.f32 %v1535, %v1556
  %v1560 = vmul.f32 %v1557, %v1557
  %v1561 = vmul.f32 %v1558, %v1558
  %v1562 = vmul.f32 %v1559, %v1559
  %v1563 = vsel %vm183, %v1560, 0.0
  %1564 = vadd.xlane.f32.xlu0 %v1563
  %v1565 = vpop.xlane.xlu0 %1564
  %v1566 = vsel %vm183, %v1561, 0.0
  %1567 = vadd.xlane.f32.xlu0 %v1566
  %v1568 = vpop.xlane.xlu0 %1567
  %v1569 = vsel %vm183, %v1562, 0.0
  %1570 = vadd.xlane.f32.xlu0 %v1569
  %v1571 = vpop.xlane.xlu0 %1570
  %v1572 = vmul.f32 %v1565, %v193
  %v1573 = vmul.f32 %v1568, %v193
  %v1574 = vmul.f32 %v1571, %v193
  %v1575 = vadd.f32 %v1572, 1e-05
  %v1576 = vadd.f32 %v1573, 1e-05
  %v1577 = vadd.f32 %v1574, 1e-05
  %v1578 = vrsqrt.pop %v1575
  %v1579 = vrsqrt.pop %v1576
  %v1580 = vrsqrt.pop %v1577
  %v1581 = vmul.f32 %v1557, %v1578
  %v1582 = vmul.f32 %v1558, %v1579
  %v1583 = vmul.f32 %v1559, %v1580
  %v1585 = vlaneseq
  %v1586 = vshrl.u32 %v1585, 7
  %v1587 = vsub.s32 0, %v1586
  %v1588 = vrot.slane %v141, %v1587
  %v1590 = vmul.f32 %v1581, %v1588
  %v1591 = vmul.f32 %v1582, %v1588
  %v1592 = vmul.f32 %v1583, %v1588
  %v1594 = vlaneseq
  %v1595 = vshrl.u32 %v1594, 7
  %v1596 = vsub.s32 0, %v1595
  %v1597 = vrot.slane %v142, %v1596
  %v1599 = vadd.f32 %v1590, %v1597
  %v1600 = vadd.f32 %v1591, %v1597
  %v1601 = vadd.f32 %v1592, %v1597
  %v1602 = vmul.f32 %v1536, %v1536
  %v1603 = vmul.f32 %v1537, %v1537
  %v1604 = vmul.f32 %v1538, %v1538
  %v1605 = vmul.f32 %v1539, %v1539
  %v1606 = vmul.f32 %v1540, %v1540
  %v1607 = vmul.f32 %v1541, %v1541
  %v1608 = vadd.f32 %v1602, %v1605
  %v1609 = vadd.f32 %v1603, %v1606
  %v1610 = vadd.f32 %v1604, %v1607
  %v1611 = vmul.f32 %v1542, %v1542
  %v1612 = vmul.f32 %v1543, %v1543
  %v1613 = vmul.f32 %v1544, %v1544
  %v1614 = vadd.f32 %v1608, %v1611
  %v1615 = vadd.f32 %v1609, %v1612
  %v1616 = vadd.f32 %v1610, %v1613
  %v1617 = vmax.f32 %v1614, 1e-08
  %v1618 = vmax.f32 %v1615, 1e-08
  %v1619 = vmax.f32 %v1616, 1e-08
  %v1620 = vsel %vm260, %v1617, 0.0
  %1621 = vadd.xlane.f32.xlu0 %v1620
  %v1622 = vpop.xlane.xlu0 %1621
  %v1623 = vsel %vm260, %v1618, 0.0
  %1624 = vadd.xlane.f32.xlu0 %v1623
  %v1625 = vpop.xlane.xlu0 %1624
  %v1626 = vsel %vm260, %v1619, 0.0
  %1627 = vadd.xlane.f32.xlu0 %v1626
  %v1628 = vpop.xlane.xlu0 %1627
  %v1629 = vmul.f32 %v1622, %v270
  %v1630 = vmul.f32 %v1625, %v270
  %v1631 = vmul.f32 %v1628, %v270
  %v1632 = vrsqrt.pop %v1629
  %v1633 = vrsqrt.pop %v1630
  %v1634 = vrsqrt.pop %v1631
  %v1635 = vmul.f32 %v1536, %v1632
  %v1636 = vmul.f32 %v1537, %v1633
  %v1637 = vmul.f32 %v1538, %v1634
  %v1638 = vmul.f32 %v1539, %v1632
  %v1639 = vmul.f32 %v1540, %v1633
  %v1640 = vmul.f32 %v1541, %v1634
  %v1641 = vmul.f32 %v1542, %v1632
  %v1642 = vmul.f32 %v1543, %v1633
  %v1643 = vmul.f32 %v1544, %v1634
  %1644 = vst.msk [vmem:[%s22] sm:$0xff] %vm183, %v1599
  %1645 = vst.msk [vmem:[%s22 + $0x8] sm:$0xff] %vm183, %v1600
  %1646 = vst.msk [vmem:[%s22 + $0x10] sm:$0xff] %vm183, %v1601
  %1647 = vst.msk [vmem:[%s23] sm:$0xff] %vm260, %v1635
  %1648 = vst.msk [vmem:[%s23 + $0x8] sm:$0xff] %vm260, %v1636
  %1649 = vst.msk [vmem:[%s23 + $0x10] sm:$0xff] %vm260, %v1637
  %s1650 = scalar_lea.vmem %s23, 24
  %1651 = vst.msk [vmem:[%s1650] sm:$0xff] %vm260, %v1638
  %1652 = vst.msk [vmem:[%s1650 + $0x8] sm:$0xff] %vm260, %v1639
  %1653 = vst.msk [vmem:[%s1650 + $0x10] sm:$0xff] %vm260, %v1640
  %s1654 = scalar_lea.vmem %s23, 48
  %1655 = vst.msk [vmem:[%s1654] sm:$0xff] %vm260, %v1641
  %1656 = vst.msk [vmem:[%s1654 + $0x8] sm:$0xff] %vm260, %v1642
  %1657 = vst.msk [vmem:[%s1654 + $0x10] sm:$0xff] %vm260, %v1643
  // Predicated region
  $region90: #{gvp_network_forward.8} parent=0 // pred_check
    _
  $region91: #{gvp_network_forward.8} parent=0 // pred_check_branch
    %1659 = sbr.rel (0) target = $region93
  $region92: #{gvp_network_forward.8} parent=0 // pred_region
    _
  $region93: #{gvp_network_forward.8} parent=0 // pred_fallthru
    _
  // Predicated region
  $region94: #{gvp_network_forward.8} parent=0 // pred_check
    _
  $region95: #{gvp_network_forward.8} parent=0 // pred_check_branch
    %1661 = sbr.rel (0) target = $region97
  $region96: #{gvp_network_forward.8} parent=0 // pred_region
    _
  $region97: #{gvp_network_forward.8} parent=0 // pred_fallthru
    _
  // Predicated region
  $region98: #{gvp_network_forward.8} parent=0 // pred_check
    _
  $region99: #{gvp_network_forward.8} parent=0 // pred_check_branch
    %1663 = sbr.rel (0) target = $region101
  $region100: #{gvp_network_forward.8} parent=0 // pred_region
    _
  $region101: #{gvp_network_forward.8} parent=0 // pred_fallthru
    _
  // Predicated region
  $region102: #{gvp_network_forward.8} parent=0 // pred_check
    _
  $region103: #{gvp_network_forward.8} parent=0 // pred_check_branch
    %1665 = sbr.rel (0) target = $region105
  $region104: #{gvp_network_forward.8} parent=0 // pred_region
    _
  $region105: #{gvp_network_forward.8} parent=0 // pred_fallthru
    _

</llo_original>
